<compile_context>
chip_gen: v7x
topology: tpu7x:2x2x1
jax: 0.10.0
libtpu: 0.0.40
codegen_flags: <defaults>
</compile_context>

<pallas_src>
import functools

import jax
import jax.numpy as jnp
import numpy as np
from jax import lax
from jax.experimental import pallas as pl
from jax.experimental.pallas import tpu as pltpu

MATMUL_DTYPE = jnp.bfloat16     # MXU operand dtype; accumulation / BN stats stay f32
BN_EPS = 1e-5


# ------------------------------- small helpers ------------------------------ #

def _vmem_limit_bytes():
    try:
        kind = jax.devices()[0].device_kind.lower()
    except Exception:
        kind = ""
    if "v7" in kind:
        return 40 * 1024 * 1024     # v7x: 64 MiB / TensorCore -> leave headroom
    return 96 * 1024 * 1024         # v5e / v6e: 128 MiB VMEM


def _compiler_params(n_grid_axes):
    return pltpu.CompilerParams(
        dimension_semantics=("parallel",) * n_grid_axes,
        vmem_limit_bytes=_vmem_limit_bytes(),
    )


def _largest_divisor_leq(n, target):
    for t in range(min(target, n), 0, -1):
        if n % t == 0:
            return t
    return 1


def _slabs(x_nhwc, th):
    """(N, Hs, Ws, C) -> (N, Hs//th, th+2, Ws+2, C) halo'd slabs with the 3x3-conv zero
    padding baked in.  Read ~1x / write ~(th+2)/th x; replaces the 9x host-side im2col."""
    xp = jnp.pad(x_nhwc, ((0, 0), (1, 1), (1, 1), (0, 0)))
    ht = x_nhwc.shape[1] // th
    return jnp.stack([xp[:, i * th:i * th + th + 2] for i in range(ht)], axis=1)


# ------------------------------- Pallas kernels ----------------------------- #

def _convt2x2_kernel(x_ref, w_ref, b_ref, o_ref):
    """ConvTranspose2d(k=2, s=2) as ONE matmul.
    x_ref: (Tr, Cin) bf16   w_ref: (Cin, 4*Cout) bf16  [col = (2*di+dj)*Cout + co]
    b_ref: (1, 4*Cout) f32  o_ref: (Tr, 4*Cout) bf16
    """
    acc = jnp.dot(x_ref[...], w_ref[...], preferred_element_type=jnp.float32)
    o_ref[...] = (acc + b_ref[...]).astype(o_ref.dtype)


def _conv1_fused_kernel(up_ref, enc_ref, w_ref, b_ref, y_ref, sum_ref, ssd_ref):
    """3x3 conv over the *virtual* concat [up, enc]: in-kernel im2col of both halo'd
    slabs, ONE MXU matmul over the folded 9*(Cu+Ce) contraction dim, plus per-tile
    BatchNorm partial statistics (sum + sum of squared deviations from the tile mean).

    up_ref:  (th+2, W+2, Cu) bf16    enc_ref: (th+2, W+2, Ce) bf16
    w_ref:   (9*(Cu+Ce), Co) bf16    b_ref:   (1, Co) f32
    y_ref:   (th, W, Co) bf16        sum_ref/ssd_ref: (1, Co) f32
    """
    th, wd, co = y_ref.shape
    up = up_ref[...]
    enc = enc_ref[...]
    taps = [up[kh:kh + th, kw:kw + wd, :] for kh in range(3) for kw in range(3)]
    taps += [enc[kh:kh + th, kw:kw + wd, :] for kh in range(3) for kw in range(3)]
    lhs = jnp.concatenate(taps, axis=-1).reshape(th * wd, -1)
    acc = jnp.dot(lhs, w_ref[...], preferred_element_type=jnp.float32) + b_ref[...]
    y_ref[...] = acc.reshape(th, wd, co).astype(y_ref.dtype)
    s = jnp.sum(acc, axis=0, keepdims=True)
    d = acc - s * (1.0 / (th * wd))
    sum_ref[...] = s
    ssd_ref[...] = jnp.sum(d * d, axis=0, keepdims=True)


def _conv2_bnfused_kernel(y1_ref, scale_ref, shift_ref, w_ref, b_ref,
                          y_ref, sum_ref, ssd_ref, *, h_total):
    """Stage-1 BN-apply + ReLU fused into conv2's prologue (applied to the loaded halo'd
    slab; conv zero-padding positions are re-masked to 0 via an iota mask), then in-kernel
    im2col + ONE MXU matmul + per-tile BN partial statistics.

    y1_ref: (th+2, W+2, C1) bf16     scale_ref/shift_ref: (1, C1) f32
    w_ref:  (9*C1, Co) bf16          b_ref: (1, Co) f32
    y_ref:  (th, W, Co) f32          sum_ref/ssd_ref: (1, Co) f32
    """
    th, wd, co = y_ref.shape
    t = pl.program_id(1)
    a = y1_ref[...].astype(jnp.float32) * scale_ref[...] + shift_ref[...]
    a = jnp.maximum(a, 0.0)
    sh = y1_ref.shape
    ri = lax.broadcasted_iota(jnp.int32, (sh[0], sh[1], 1), 0) + t * th
    cj = lax.broadcasted_iota(jnp.int32, (sh[0], sh[1], 1), 1)
    valid = (ri >= 1) & (ri <= h_total) & (cj >= 1) & (cj <= wd)
    a = jnp.where(valid, a, 0.0).astype(MATMUL_DTYPE)
    taps = [a[kh:kh + th, kw:kw + wd, :] for kh in range(3) for kw in range(3)]
    lhs = jnp.concatenate(taps, axis=-1).reshape(th * wd, -1)
    acc = jnp.dot(lhs, w_ref[...], preferred_element_type=jnp.float32) + b_ref[...]
    y_ref[...] = acc.reshape(th, wd, co).astype(y_ref.dtype)
    s = jnp.sum(acc, axis=0, keepdims=True)
    d = acc - s * (1.0 / (th * wd))
    sum_ref[...] = s
    ssd_ref[...] = jnp.sum(d * d, axis=0, keepdims=True)


def _bn_relu_kernel(y_ref, scale_ref, shift_ref, o_ref):
    """Final (stage-2) BN apply + ReLU: y*scale + shift, max(0, .) in f32."""
    o_ref[...] = jnp.maximum(
        y_ref[...] * scale_ref[...] + shift_ref[...], 0.0).astype(o_ref.dtype)


# -------------------------------- JAX wrappers ------------------------------ #

def conv_transpose_2x2(x_nhwc, w4, b4):
    """w4: (Cin, 4*Cout) bf16; b4: (1, 4*Cout) f32 (pre-packed once)."""
    N, H, W, Cin = x_nhwc.shape
    Cout = w4.shape[1] // 4
    rows = N * H * W

    tr = 512
    while tr > 16 and (rows + tr - 1) // tr < 4:   # >= 4 grid steps (v7x megacore + pipelining)
        tr //= 2
    rows_p = ((rows + tr - 1) // tr) * tr

    x2d = x_nhwc.reshape(rows, Cin).astype(MATMUL_DTYPE)
    if rows_p != rows:
        x2d = jnp.pad(x2d, ((0, rows_p - rows), (0, 0)))

    cost = pl.CostEstimate(
        flops=2 * rows_p * Cin * 4 * Cout, transcendentals=0,
        bytes_accessed=rows_p * Cin * 2 + Cin * 4 * Cout * 2 + 4 * Cout * 4
                       + rows_p * 4 * Cout * 2)

    out = pl.pallas_call(
        _convt2x2_kernel,
        grid=(rows_p // tr,),
        in_specs=[
            pl.BlockSpec((tr, Cin), lambda i: (i, 0)),
            pl.BlockSpec((Cin, 4 * Cout), lambda i: (0, 0)),
            pl.BlockSpec((1, 4 * Cout), lambda i: (0, 0)),
        ],
        out_specs=pl.BlockSpec((tr, 4 * Cout), lambda i: (i, 0)),
        out_shape=jax.ShapeDtypeStruct((rows_p, 4 * Cout), MATMUL_DTYPE),
        compiler_params=_compiler_params(1),
        cost_estimate=cost,
    )(x2d, w4, b4)

    # Cheap layout glue (Cout-sized, NOT 128-padded): de-interleave the 2x2 parities.
    up = out[:rows].reshape(N, H, W, 2, 2, Cout)
    up = jnp.transpose(up, (0, 1, 3, 2, 4, 5)).reshape(N, 2 * H, 2 * W, Cout)
    return up


def conv1_fused(up_nhwc, enc_nhwc, w1f, b1, th):
    N, H2, W2, Cu = up_nhwc.shape
    Ce = enc_nhwc.shape[-1]
    Co = w1f.shape[-1]
    K = w1f.shape[0]
    HT = H2 // th

    up_s = _slabs(up_nhwc.astype(MATMUL_DTYPE), th)
    enc_s = _slabs(enc_nhwc.astype(MATMUL_DTYPE), th)

    cost = pl.CostEstimate(
        flops=2 * N * H2 * W2 * K * Co + 6 * N * H2 * W2 * Co,
        transcendentals=0,
        bytes_accessed=(up_s.size + enc_s.size) * 2 + K * Co * 2
                       + N * H2 * W2 * Co * 2 + 2 * N * HT * Co * 4)

    return pl.pallas_call(
        _conv1_fused_kernel,
        grid=(N, HT),
        in_specs=[
            pl.BlockSpec((None, None, th + 2, W2 + 2, Cu), lambda n, t: (n, t, 0, 0, 0)),
            pl.BlockSpec((None, None, th + 2, W2 + 2, Ce), lambda n, t: (n, t, 0, 0, 0)),
            pl.BlockSpec((K, Co), lambda n, t: (0, 0)),
            pl.BlockSpec((1, Co), lambda n, t: (0, 0)),
        ],
        out_specs=(
            pl.BlockSpec((None, th, W2, Co), lambda n, t: (n, t, 0, 0)),
            pl.BlockSpec((None, None, 1, Co), lambda n, t: (n, t, 0, 0)),
            pl.BlockSpec((None, None, 1, Co), lambda n, t: (n, t, 0, 0)),
        ),
        out_shape=(
            jax.ShapeDtypeStruct((N, H2, W2, Co), MATMUL_DTYPE),   # bf16 intermediate
            jax.ShapeDtypeStruct((N, HT, 1, Co), jnp.float32),
            jax.ShapeDtypeStruct((N, HT, 1, Co), jnp.float32),
        ),
        compiler_params=_compiler_params(2),
        cost_estimate=cost,
    )(up_s, enc_s, w1f, b1)


def conv2_bn_fused(y1_nhwc, scale1, shift1, w2f, b2, th):
    N, H2, W2, C1 = y1_nhwc.shape
    Co = w2f.shape[-1]
    K = w2f.shape[0]
    HT = H2 // th

    y1_s = _slabs(y1_nhwc, th)

    cost = pl.CostEstimate(
        flops=2 * N * H2 * W2 * K * Co + 12 * N * H2 * W2 * C1,
        transcendentals=0,
        bytes_accessed=y1_s.size * 2 + K * Co * 2 + 2 * C1 * 4
                       + N * H2 * W2 * Co * 4 + 2 * N * HT * Co * 4)

    kernel = functools.partial(_conv2_bnfused_kernel, h_total=H2)

    return pl.pallas_call(
        kernel,
        grid=(N, HT),
        in_specs=[
            pl.BlockSpec((None, None, th + 2, W2 + 2, C1), lambda n, t: (n, t, 0, 0, 0)),
            pl.BlockSpec((1, C1), lambda n, t: (0, 0)),
            pl.BlockSpec((1, C1), lambda n, t: (0, 0)),
            pl.BlockSpec((K, Co), lambda n, t: (0, 0)),
            pl.BlockSpec((1, Co), lambda n, t: (0, 0)),
        ],
        out_specs=(
            pl.BlockSpec((None, th, W2, Co), lambda n, t: (n, t, 0, 0)),
            pl.BlockSpec((None, None, 1, Co), lambda n, t: (n, t, 0, 0)),
            pl.BlockSpec((None, None, 1, Co), lambda n, t: (n, t, 0, 0)),
        ),
        out_shape=(
            jax.ShapeDtypeStruct((N, H2, W2, Co), jnp.float32),
            jax.ShapeDtypeStruct((N, HT, 1, Co), jnp.float32),
            jax.ShapeDtypeStruct((N, HT, 1, Co), jnp.float32),
        ),
        compiler_params=_compiler_params(2),
        cost_estimate=cost,
    )(y1_s, scale1, shift1, w2f, b2)


def bn_relu(y_nhwc, scale, shift, th):
    N, H2, W2, Co = y_nhwc.shape
    HT = H2 // th
    cost = pl.CostEstimate(
        flops=3 * N * H2 * W2 * Co, transcendentals=0,
        bytes_accessed=N * H2 * W2 * Co * 8 + 2 * Co * 4)
    return pl.pallas_call(
        _bn_relu_kernel,
        grid=(N, HT),
        in_specs=[
            pl.BlockSpec((None, th, W2, Co), lambda n, t: (n, t, 0, 0)),
            pl.BlockSpec((1, Co), lambda n, t: (0, 0)),
            pl.BlockSpec((1, Co), lambda n, t: (0, 0)),
        ],
        out_specs=pl.BlockSpec((None, th, W2, Co), lambda n, t: (n, t, 0, 0)),
        out_shape=jax.ShapeDtypeStruct((N, H2, W2, Co), jnp.float32),
        compiler_params=_compiler_params(2),
        cost_estimate=cost,
    )(y_nhwc, scale, shift)


def _bn_scale_shift(sums, ssds, cnt_per_tile, gamma, beta, eps=BN_EPS):
    """Global training-mode BN stats from per-tile partials (Chan's parallel-variance
    combine; avoids the catastrophic E[x^2]-mean^2 cancellation).  Tiny XLA reduce."""
    c = sums.shape[-1]
    s = sums.reshape(-1, c)
    d = ssds.reshape(-1, c)
    total = s.shape[0] * cnt_per_tile
    mean = jnp.sum(s, axis=0) / total
    m_t = s / cnt_per_tile
    var = (jnp.sum(d, axis=0)
           + cnt_per_tile * jnp.sum((m_t - mean) ** 2, axis=0)) / total   # biased var
    scale = gamma.astype(jnp.float32) * lax.rsqrt(var + eps)
    shift = beta.astype(jnp.float32) - mean * scale
    return scale.reshape(1, c), shift.reshape(1, c)


def pack_params(params):
    """Fold/transpose/cast all weights ONCE (hoisted out of the per-call forward)."""
    wt, bt = params["wt"], params["bt"]
    cin, cout = wt.shape[0], wt.shape[1]
    w4 = jnp.transpose(wt, (0, 2, 3, 1)).reshape(cin, 4 * cout).astype(MATMUL_DTYPE)
    b4 = jnp.broadcast_to(bt.astype(jnp.float32)[None, :], (4, cout)).reshape(1, 4 * cout)

    def fold3x3(w):                       # (Co, Ci, 3, 3) -> (9*Ci, Co), row = (kh*3+kw)*Ci + ci
        co, ci = w.shape[0], w.shape[1]
        return jnp.transpose(w, (2, 3, 1, 0)).reshape(9 * ci, co).astype(MATMUL_DTYPE)

    w1 = params["w1"]
    cu = cout                             # conv1 input channels = [up(cout), enc(cout)]
    w1f = jnp.concatenate([fold3x3(w1[:, :cu]), fold3x3(w1[:, cu:])], axis=0)

    return {
        "w4": w4, "b4": b4,
        "w1f": w1f, "b1": params["b1"].astype(jnp.float32).reshape(1, -1),
        "g1": params["g1"].astype(jnp.float32), "beta1": params["beta1"].astype(jnp.float32),
        "w2f": fold3x3(params["w2"]), "b2": params["b2"].astype(jnp.float32).reshape(1, -1),
        "g2": params["g2"].astype(jnp.float32), "beta2": params["beta2"].astype(jnp.float32),
    }


def decoder_block_forward(inputs_nchw, enc_nchw, packed):
    """Matches decoder_block.forward(inputs, enc_out); NCHW in, NCHW out (f32)."""
    x = jnp.transpose(inputs_nchw, (0, 2, 3, 1))
    enc = jnp.transpose(enc_nchw, (0, 2, 3, 1))

    up = conv_transpose_2x2(x, packed["w4"], packed["b4"])          # (N, 2H, 2W, Cout) bf16
    N, H2, W2, _ = up.shape
    th = _largest_divisor_leq(H2, 16)                               # spatial row-tile

    # stage 1: conv3x3 over the virtual concat [up, enc] + BN1 partial stats
    y1, s1, d1 = conv1_fused(up, enc, packed["w1f"], packed["b1"], th)
    scale1, shift1 = _bn_scale_shift(s1, d1, th * W2, packed["g1"], packed["beta1"])

    # stage 2: BN1-apply + ReLU fused into conv2's prologue + BN2 partial stats
    y2, s2, d2 = conv2_bn_fused(y1, scale1, shift1, packed["w2f"], packed["b2"], th)
    scale2, shift2 = _bn_scale_shift(s2, d2, th * W2, packed["g2"], packed["beta2"])

    out = bn_relu(y2, scale2, shift2, th)                           # (N, 2H, 2W, Cout) f32
    return jnp.transpose(out, (0, 3, 1, 2))


# --------------------------- pure-JAX f32 reference -------------------------- #

def ref_decoder_block(inputs, enc, params):
    wt = params["wt"]
    up = jnp.einsum("ncij,cokl->noikjl", inputs, wt)       # (N, Cout, H, 2, W, 2)
    N, Co, H, _, W, _ = up.shape
    up = up.reshape(N, Co, 2 * H, 2 * W) + params["bt"][None, :, None, None]
    cat = jnp.concatenate([up, enc], axis=1)

    def conv_bn_relu(h, w, b, g, be):
        y = lax.conv_general_dilated(h, w, window_strides=(1, 1),
                                     padding=((1, 1), (1, 1)),
                                     dimension_numbers=("NCHW", "OIHW", "NCHW"))
        y = y + b[None, :, None, None]
        mean = jnp.mean(y, axis=(0, 2, 3), keepdims=True)
        var = jnp.mean((y - mean) ** 2, axis=(0, 2, 3), keepdims=True)
        y = (y - mean) / jnp.sqrt(var + 1e-5)
        y = y * g[None, :, None, None] + be[None, :, None, None]
        return jnp.maximum(y, 0.0)

    h = conv_bn_relu(cat, params["w1"], params["b1"], params["g1"], params["beta1"])
    h = conv_bn_relu(h, params["w2"], params["b2"], params["g2"], params["beta2"])
    return h


# ------------------------------------ main ----------------------------------- #

if __name__ == "__main__":
    key = jax.random.PRNGKey(0)
    N, chan_in, chan_out = 2, 8, 8
    H = W = 16  # ConvTranspose upsamples to 32x32

    ks = jax.random.split(key, 12)
    inputs = jax.random.normal(ks[0], (N, chan_in, H, W), jnp.float32)
    enc_out = jax.random.normal(ks[1], (N, chan_out, 2 * H, 2 * W), jnp.float32)

    params = {
        # ConvTranspose2d(chan_in, chan_out, k=2, s=2): weight (Cin, Cout, 2, 2)
        "wt": 0.2 * jax.random.normal(ks[2], (chan_in, chan_out, 2, 2), jnp.float32),
        "bt": 0.1 * jax.random.normal(ks[3], (chan_out,), jnp.float32),
        # Conv2d(2*chan_out, chan_out, 3, padding=1) + BN
        "w1": 0.2 * jax.random.normal(ks[4], (chan_out, 2 * chan_out, 3, 3), jnp.float32),
        "b1": 0.1 * jax.random.normal(ks[5], (chan_out,), jnp.float32),
        "g1": 1.0 + 0.1 * jax.random.normal(ks[6], (chan_out,), jnp.float32),
        "beta1": 0.1 * jax.random.normal(ks[7], (chan_out,), jnp.float32),
        # Conv2d(chan_out, chan_out, 3, padding=1) + BN
        "w2": 0.2 * jax.random.normal(ks[8], (chan_out, chan_out, 3, 3), jnp.float32),
        "b2": 0.1 * jax.random.normal(ks[9], (chan_out,), jnp.float32),
        "g2": 1.0 + 0.1 * jax.random.normal(ks[10], (chan_out,), jnp.float32),
        "beta2": 0.1 * jax.random.normal(ks[11], (chan_out,), jnp.float32),
    }

    packed = pack_params(params)                 # weight repacking hoisted out of the forward
    fwd = jax.jit(decoder_block_forward)
    out = jax.block_until_ready(fwd(inputs, enc_out, packed))
    assert out.shape == (N, chan_out, 2 * H, 2 * W)

    # f32 reference; tolerance covers the bf16 MXU operands / bf16 stage-1 intermediate
    # (all accumulation and BN statistics stay f32).
    ref = ref_decoder_block(inputs, enc_out, params)
    out_np, ref_np = np.asarray(out, np.float32), np.asarray(ref, np.float32)
    np.testing.assert_allclose(out_np, ref_np, atol=1e-1, rtol=1e-1)
    assert float(np.mean(np.abs(out_np - ref_np))) < 3e-2
    print("KERNEL_OK")
</pallas_src>

<mosaic_0001>
module attributes {stable_mosaic.version = 11 : i64} {
  func.func @_convt2x2_kernel(%arg0: i32, %arg1: memref<128x8xbf16, #tpu.memory_space<vmem>>, %arg2: memref<8x32xbf16, #tpu.memory_space<vmem>>, %arg3: memref<1x32xf32, #tpu.memory_space<vmem>>, %arg4: memref<128x32xbf16, #tpu.memory_space<vmem>>) attributes {dimension_semantics = [#tpu.dimension_semantics<parallel>], iteration_bounds = array<i64: 4>, scalar_prefetch = 0 : i64, scratch_operands = 0 : i64, tpu.core_type = #tpu.core_type<tc>, window_params = [{transform_indices = @transform_0, window_bounds = array<i64: 128, 8>}, {pipeline_mode = #tpu.pipeline_mode<synchronous>, transform_indices = @transform_1, window_bounds = array<i64: 8, 32>}, {pipeline_mode = #tpu.pipeline_mode<synchronous>, transform_indices = @transform_2, window_bounds = array<i64: 1, 32>}, {transform_indices = @transform_3, window_bounds = array<i64: 128, 32>}]} {
    %c0 = arith.constant 0 : index
    %c0_0 = arith.constant 0 : index
    %0 = vector.load %arg1[%c0, %c0_0] : memref<128x8xbf16, #tpu.memory_space<vmem>>, vector<128x8xbf16>
    %c0_1 = arith.constant 0 : index
    %c0_2 = arith.constant 0 : index
    %1 = vector.load %arg2[%c0_1, %c0_2] : memref<8x32xbf16, #tpu.memory_space<vmem>>, vector<8x32xbf16>
    %cst = arith.constant dense<0.000000e+00> : vector<128x32xf32>
    %2 = tpu.matmul %0, %1, %cst {dimension_numbers = #tpu.dot_dimension_numbers<[1], [0], [0], [1], [0, 0, 1, 1], [], []>} : vector<128x8xbf16>, vector<8x32xbf16>, vector<128x32xf32> -> vector<128x32xf32>
    %c0_3 = arith.constant 0 : index
    %c0_4 = arith.constant 0 : index
    %3 = vector.load %arg3[%c0_3, %c0_4] : memref<1x32xf32, #tpu.memory_space<vmem>>, vector<1x32xf32>
    %4 = vector.broadcast %3 : vector<1x32xf32> to vector<128x32xf32>
    %5 = arith.addf %2, %4 : vector<128x32xf32>
    %6 = arith.truncf %5 : vector<128x32xf32> to vector<128x32xbf16>
    %c0_5 = arith.constant 0 : index
    %c0_6 = arith.constant 0 : index
    %7 = vector.load %arg4[%c0_5, %c0_6] : memref<128x32xbf16, #tpu.memory_space<vmem>>, vector<128x32xbf16>
    tpu.vector_store %arg4[%c0_5, %c0_6], %6 {strides = array<i32>} : memref<128x32xbf16, #tpu.memory_space<vmem>>, vector<128x32xbf16>,
    return
  }
  func.func @transform_0(%arg0: i32) -> (i32, i32) {
    %c0_i32 = arith.constant 0 : i32
    %c0_i32_0 = arith.constant 0 : i32
    return %arg0, %c0_i32 : i32, i32
  }
  func.func @transform_1(%arg0: i32) -> (i32, i32) {
    %c0_i32 = arith.constant 0 : i32
    %c0_i32_0 = arith.constant 0 : i32
    %c0_i32_1 = arith.constant 0 : i32
    return %c0_i32, %c0_i32_0 : i32, i32
  }
  func.func @transform_2(%arg0: i32) -> (i32, i32) {
    %c0_i32 = arith.constant 0 : i32
    %c0_i32_0 = arith.constant 0 : i32
    %c0_i32_1 = arith.constant 0 : i32
    return %c0_i32, %c0_i32_0 : i32, i32
  }
  func.func @transform_3(%arg0: i32) -> (i32, i32) {
    %c0_i32 = arith.constant 0 : i32
    %c0_i32_0 = arith.constant 0 : i32
    return %arg0, %c0_i32 : i32, i32
  }
}

module attributes {stable_mosaic.version = 11 : i64} {
  func.func @_conv1_fused_kernel(%arg0: i32, %arg1: i32, %arg2: memref<1x1x18x34x8xbf16, #tpu.memory_space<vmem>>, %arg3: memref<1x1x18x34x8xbf16, #tpu.memory_space<vmem>>, %arg4: memref<144x8xbf16, #tpu.memory_space<vmem>>, %arg5: memref<1x8xf32, #tpu.memory_space<vmem>>, %arg6: memref<1x16x32x8xbf16, #tpu.memory_space<vmem>>, %arg7: memref<1x1x1x8xf32, #tpu.memory_space<vmem>>, %arg8: memref<1x1x1x8xf32, #tpu.memory_space<vmem>>) attributes {dimension_semantics = [#tpu.dimension_semantics<parallel>, #tpu.dimension_semantics<parallel>], iteration_bounds = array<i64: 2, 2>, scalar_prefetch = 0 : i64, scratch_operands = 0 : i64, tpu.core_type = #tpu.core_type<tc>, window_params = [{transform_indices = @transform_0, window_bounds = array<i64: 1, 1, 18, 34, 8>}, {transform_indices = @transform_1, window_bounds = array<i64: 1, 1, 18, 34, 8>}, {pipeline_mode = #tpu.pipeline_mode<synchronous>, transform_indices = @transform_2, window_bounds = array<i64: 144, 8>}, {pipeline_mode = #tpu.pipeline_mode<synchronous>, transform_indices = @transform_3, window_bounds = array<i64: 1, 8>}, {transform_indices = @transform_4, window_bounds = array<i64: 1, 16, 32, 8>}, {transform_indices = @transform_5, window_bounds = array<i64: 1, 1, 1, 8>}, {transform_indices = @transform_6, window_bounds = array<i64: 1, 1, 1, 8>}]} {
    %c0 = arith.constant 0 : index
    %c0_0 = arith.constant 0 : index
    %c0_1 = arith.constant 0 : index
    %c0_2 = arith.constant 0 : index
    %c0_3 = arith.constant 0 : index
    %0 = vector.load %arg2[%c0, %c0_0, %c0_1, %c0_2, %c0_3] : memref<1x1x18x34x8xbf16, #tpu.memory_space<vmem>>, vector<1x1x18x34x8xbf16>
    %1 = vector.shape_cast %0 : vector<1x1x18x34x8xbf16> to vector<18x34x8xbf16>
    %c0_4 = arith.constant 0 : index
    %c0_5 = arith.constant 0 : index
    %c0_6 = arith.constant 0 : index
    %c0_7 = arith.constant 0 : index
    %c0_8 = arith.constant 0 : index
    %2 = vector.load %arg3[%c0_4, %c0_5, %c0_6, %c0_7, %c0_8] : memref<1x1x18x34x8xbf16, #tpu.memory_space<vmem>>, vector<1x1x18x34x8xbf16>
    %3 = vector.shape_cast %2 : vector<1x1x18x34x8xbf16> to vector<18x34x8xbf16>
    %4 = vector.extract_strided_slice %1 {offsets = [0, 0, 0], sizes = [16, 32, 8], strides = [1, 1, 1]} : vector<18x34x8xbf16> to vector<16x32x8xbf16>
    %5 = vector.extract_strided_slice %1 {offsets = [0, 1, 0], sizes = [16, 32, 8], strides = [1, 1, 1]} : vector<18x34x8xbf16> to vector<16x32x8xbf16>
    %6 = vector.extract_strided_slice %1 {offsets = [0, 2, 0], sizes = [16, 32, 8], strides = [1, 1, 1]} : vector<18x34x8xbf16> to vector<16x32x8xbf16>
    %7 = vector.extract_strided_slice %1 {offsets = [1, 0, 0], sizes = [16, 32, 8], strides = [1, 1, 1]} : vector<18x34x8xbf16> to vector<16x32x8xbf16>
    %8 = vector.extract_strided_slice %1 {offsets = [1, 1, 0], sizes = [16, 32, 8], strides = [1, 1, 1]} : vector<18x34x8xbf16> to vector<16x32x8xbf16>
    %9 = vector.extract_strided_slice %1 {offsets = [1, 2, 0], sizes = [16, 32, 8], strides = [1, 1, 1]} : vector<18x34x8xbf16> to vector<16x32x8xbf16>
    %10 = vector.extract_strided_slice %1 {offsets = [2, 0, 0], sizes = [16, 32, 8], strides = [1, 1, 1]} : vector<18x34x8xbf16> to vector<16x32x8xbf16>
    %11 = vector.extract_strided_slice %1 {offsets = [2, 1, 0], sizes = [16, 32, 8], strides = [1, 1, 1]} : vector<18x34x8xbf16> to vector<16x32x8xbf16>
    %12 = vector.extract_strided_slice %1 {offsets = [2, 2, 0], sizes = [16, 32, 8], strides = [1, 1, 1]} : vector<18x34x8xbf16> to vector<16x32x8xbf16>
    %13 = vector.extract_strided_slice %3 {offsets = [0, 0, 0], sizes = [16, 32, 8], strides = [1, 1, 1]} : vector<18x34x8xbf16> to vector<16x32x8xbf16>
    %14 = vector.extract_strided_slice %3 {offsets = [0, 1, 0], sizes = [16, 32, 8], strides = [1, 1, 1]} : vector<18x34x8xbf16> to vector<16x32x8xbf16>
    %15 = vector.extract_strided_slice %3 {offsets = [0, 2, 0], sizes = [16, 32, 8], strides = [1, 1, 1]} : vector<18x34x8xbf16> to vector<16x32x8xbf16>
    %16 = vector.extract_strided_slice %3 {offsets = [1, 0, 0], sizes = [16, 32, 8], strides = [1, 1, 1]} : vector<18x34x8xbf16> to vector<16x32x8xbf16>
    %17 = vector.extract_strided_slice %3 {offsets = [1, 1, 0], sizes = [16, 32, 8], strides = [1, 1, 1]} : vector<18x34x8xbf16> to vector<16x32x8xbf16>
    %18 = vector.extract_strided_slice %3 {offsets = [1, 2, 0], sizes = [16, 32, 8], strides = [1, 1, 1]} : vector<18x34x8xbf16> to vector<16x32x8xbf16>
    %19 = vector.extract_strided_slice %3 {offsets = [2, 0, 0], sizes = [16, 32, 8], strides = [1, 1, 1]} : vector<18x34x8xbf16> to vector<16x32x8xbf16>
    %20 = vector.extract_strided_slice %3 {offsets = [2, 1, 0], sizes = [16, 32, 8], strides = [1, 1, 1]} : vector<18x34x8xbf16> to vector<16x32x8xbf16>
    %21 = vector.extract_strided_slice %3 {offsets = [2, 2, 0], sizes = [16, 32, 8], strides = [1, 1, 1]} : vector<18x34x8xbf16> to vector<16x32x8xbf16>
    %22 = tpu.concatenate %4, %5, %6, %7, %8, %9, %10, %11, %12, %13, %14, %15, %16, %17, %18, %19 in 2 : vector<16x32x8xbf16>, vector<16x32x8xbf16>, vector<16x32x8xbf16>, vector<16x32x8xbf16>, vector<16x32x8xbf16>, vector<16x32x8xbf16>, vector<16x32x8xbf16>, vector<16x32x8xbf16>, vector<16x32x8xbf16>, vector<16x32x8xbf16>, vector<16x32x8xbf16>, vector<16x32x8xbf16>, vector<16x32x8xbf16>, vector<16x32x8xbf16>, vector<16x32x8xbf16>, vector<16x32x8xbf16> -> vector<16x32x128xbf16>
    %23 = tpu.concatenate %20, %21 in 2 : vector<16x32x8xbf16>, vector<16x32x8xbf16> -> vector<16x32x16xbf16>
    %24 = tpu.concatenate %22, %23 in 2 : vector<16x32x128xbf16>, vector<16x32x16xbf16> -> vector<16x32x144xbf16>
    %25 = vector.shape_cast %24 : vector<16x32x144xbf16> to vector<512x144xbf16>
    %c0_9 = arith.constant 0 : index
    %c0_10 = arith.constant 0 : index
    %26 = vector.load %arg4[%c0_9, %c0_10] : memref<144x8xbf16, #tpu.memory_space<vmem>>, vector<144x8xbf16>
    %cst = arith.constant dense<0.000000e+00> : vector<512x8xf32>
    %27 = tpu.matmul %25, %26, %cst {dimension_numbers = #tpu.dot_dimension_numbers<[1], [0], [0], [1], [0, 0, 1, 1], [], []>} : vector<512x144xbf16>, vector<144x8xbf16>, vector<512x8xf32> -> vector<512x8xf32>
    %c0_11 = arith.constant 0 : index
    %c0_12 = arith.constant 0 : index
    %28 = vector.load %arg5[%c0_11, %c0_12] : memref<1x8xf32, #tpu.memory_space<vmem>>, vector<1x8xf32>
    %29 = vector.broadcast %28 : vector<1x8xf32> to vector<512x8xf32>
    %30 = arith.addf %27, %29 : vector<512x8xf32>
    %31 = vector.shape_cast %30 : vector<512x8xf32> to vector<16x32x8xf32>
    %32 = arith.truncf %31 : vector<16x32x8xf32> to vector<16x32x8xbf16>
    %c0_13 = arith.constant 0 : index
    %c0_14 = arith.constant 0 : index
    %c0_15 = arith.constant 0 : index
    %c0_16 = arith.constant 0 : index
    %33 = vector.load %arg6[%c0_13, %c0_14, %c0_15, %c0_16] : memref<1x16x32x8xbf16, #tpu.memory_space<vmem>>, vector<1x16x32x8xbf16>
    %34 = vector.shape_cast %33 : vector<1x16x32x8xbf16> to vector<16x32x8xbf16>
    %35 = vector.shape_cast %32 : vector<16x32x8xbf16> to vector<1x16x32x8xbf16>
    tpu.vector_store %arg6[%c0_13, %c0_14, %c0_15, %c0_16], %35 {strides = array<i32>} : memref<1x16x32x8xbf16, #tpu.memory_space<vmem>>, vector<1x16x32x8xbf16>,
    %cst_17 = arith.constant dense<0.000000e+00> : vector<8xf32>
    %36 = vector.multi_reduction <add>, %30, %cst_17 [0] : vector<512x8xf32> to vector<8xf32>
    %37 = vector.shape_cast %36 : vector<8xf32> to vector<1x8xf32>
    %cst_18 = arith.constant 0.001953125 : f32
    %38 = vector.broadcast %cst_18 : f32 to vector<1x8xf32>
    %39 = arith.mulf %37, %38 : vector<1x8xf32>
    %40 = vector.broadcast %39 : vector<1x8xf32> to vector<512x8xf32>
    %41 = arith.subf %30, %40 : vector<512x8xf32>
    %c0_19 = arith.constant 0 : index
    %c0_20 = arith.constant 0 : index
    %c0_21 = arith.constant 0 : index
    %c0_22 = arith.constant 0 : index
    %42 = vector.load %arg7[%c0_19, %c0_20, %c0_21, %c0_22] : memref<1x1x1x8xf32, #tpu.memory_space<vmem>>, vector<1x1x1x8xf32>
    %43 = vector.shape_cast %42 : vector<1x1x1x8xf32> to vector<1x8xf32>
    %44 = vector.shape_cast %37 : vector<1x8xf32> to vector<1x1x1x8xf32>
    tpu.vector_store %arg7[%c0_19, %c0_20, %c0_21, %c0_22], %44 {strides = array<i32>} : memref<1x1x1x8xf32, #tpu.memory_space<vmem>>, vector<1x1x1x8xf32>,
    %45 = arith.mulf %41, %41 : vector<512x8xf32>
    %cst_23 = arith.constant dense<0.000000e+00> : vector<8xf32>
    %46 = vector.multi_reduction <add>, %45, %cst_23 [0] : vector<512x8xf32> to vector<8xf32>
    %47 = vector.shape_cast %46 : vector<8xf32> to vector<1x8xf32>
    %c0_24 = arith.constant 0 : index
    %c0_25 = arith.constant 0 : index
    %c0_26 = arith.constant 0 : index
    %c0_27 = arith.constant 0 : index
    %48 = vector.load %arg8[%c0_24, %c0_25, %c0_26, %c0_27] : memref<1x1x1x8xf32, #tpu.memory_space<vmem>>, vector<1x1x1x8xf32>
    %49 = vector.shape_cast %48 : vector<1x1x1x8xf32> to vector<1x8xf32>
    %50 = vector.shape_cast %47 : vector<1x8xf32> to vector<1x1x1x8xf32>
    tpu.vector_store %arg8[%c0_24, %c0_25, %c0_26, %c0_27], %50 {strides = array<i32>} : memref<1x1x1x8xf32, #tpu.memory_space<vmem>>, vector<1x1x1x8xf32>,
    return
  }
  func.func @transform_0(%arg0: i32, %arg1: i32) -> (i32, i32, i32, i32, i32) {
    %c0_i32 = arith.constant 0 : i32
    %c0_i32_0 = arith.constant 0 : i32
    %c0_i32_1 = arith.constant 0 : i32
    %c0_i32_2 = arith.constant 0 : i32
    return %arg0, %arg1, %c0_i32, %c0_i32_0, %c0_i32_1 : i32, i32, i32, i32, i32
  }
  func.func @transform_1(%arg0: i32, %arg1: i32) -> (i32, i32, i32, i32, i32) {
    %c0_i32 = arith.constant 0 : i32
    %c0_i32_0 = arith.constant 0 : i32
    %c0_i32_1 = arith.constant 0 : i32
    %c0_i32_2 = arith.constant 0 : i32
    return %arg0, %arg1, %c0_i32, %c0_i32_0, %c0_i32_1 : i32, i32, i32, i32, i32
  }
  func.func @transform_2(%arg0: i32, %arg1: i32) -> (i32, i32) {
    %c0_i32 = arith.constant 0 : i32
    %c0_i32_0 = arith.constant 0 : i32
    %c0_i32_1 = arith.constant 0 : i32
    return %c0_i32, %c0_i32_0 : i32, i32
  }
  func.func @transform_3(%arg0: i32, %arg1: i32) -> (i32, i32) {
    %c0_i32 = arith.constant 0 : i32
    %c0_i32_0 = arith.constant 0 : i32
    %c0_i32_1 = arith.constant 0 : i32
    return %c0_i32, %c0_i32_0 : i32, i32
  }
  func.func @transform_4(%arg0: i32, %arg1: i32) -> (i32, i32, i32, i32) {
    %c0_i32 = arith.constant 0 : i32
    %c0_i32_0 = arith.constant 0 : i32
    %c0_i32_1 = arith.constant 0 : i32
    return %arg0, %arg1, %c0_i32, %c0_i32_0 : i32, i32, i32, i32
  }
  func.func @transform_5(%arg0: i32, %arg1: i32) -> (i32, i32, i32, i32) {
    %c0_i32 = arith.constant 0 : i32
    %c0_i32_0 = arith.constant 0 : i32
    %c0_i32_1 = arith.constant 0 : i32
    return %arg0, %arg1, %c0_i32, %c0_i32_0 : i32, i32, i32, i32
  }
  func.func @transform_6(%arg0: i32, %arg1: i32) -> (i32, i32, i32, i32) {
    %c0_i32 = arith.constant 0 : i32
    %c0_i32_0 = arith.constant 0 : i32
    %c0_i32_1 = arith.constant 0 : i32
    return %arg0, %arg1, %c0_i32, %c0_i32_0 : i32, i32, i32, i32
  }
}

module attributes {stable_mosaic.version = 11 : i64} {
  func.func @_bn_relu_kernel(%arg0: i32, %arg1: i32, %arg2: memref<1x16x32x8xf32, #tpu.memory_space<vmem>>, %arg3: memref<1x8xf32, #tpu.memory_space<vmem>>, %arg4: memref<1x8xf32, #tpu.memory_space<vmem>>, %arg5: memref<1x16x32x8xf32, #tpu.memory_space<vmem>>) attributes {dimension_semantics = [#tpu.dimension_semantics<parallel>, #tpu.dimension_semantics<parallel>], iteration_bounds = array<i64: 2, 2>, scalar_prefetch = 0 : i64, scratch_operands = 0 : i64, tpu.core_type = #tpu.core_type<tc>, window_params = [{transform_indices = @transform_0, window_bounds = array<i64: 1, 16, 32, 8>}, {pipeline_mode = #tpu.pipeline_mode<synchronous>, transform_indices = @transform_1, window_bounds = array<i64: 1, 8>}, {pipeline_mode = #tpu.pipeline_mode<synchronous>, transform_indices = @transform_2, window_bounds = array<i64: 1, 8>}, {transform_indices = @transform_3, window_bounds = array<i64: 1, 16, 32, 8>}]} {
    %c0 = arith.constant 0 : index
    %c0_0 = arith.constant 0 : index
    %c0_1 = arith.constant 0 : index
    %c0_2 = arith.constant 0 : index
    %0 = vector.load %arg2[%c0, %c0_0, %c0_1, %c0_2] : memref<1x16x32x8xf32, #tpu.memory_space<vmem>>, vector<1x16x32x8xf32>
    %1 = vector.shape_cast %0 : vector<1x16x32x8xf32> to vector<16x32x8xf32>
    %c0_3 = arith.constant 0 : index
    %c0_4 = arith.constant 0 : index
    %2 = vector.load %arg3[%c0_3, %c0_4] : memref<1x8xf32, #tpu.memory_space<vmem>>, vector<1x8xf32>
    %3 = vector.shape_cast %2 : vector<1x8xf32> to vector<1x1x8xf32>
    %4 = vector.broadcast %3 : vector<1x1x8xf32> to vector<16x32x8xf32>
    %5 = arith.mulf %1, %4 : vector<16x32x8xf32>
    %c0_5 = arith.constant 0 : index
    %c0_6 = arith.constant 0 : index
    %6 = vector.load %arg4[%c0_5, %c0_6] : memref<1x8xf32, #tpu.memory_space<vmem>>, vector<1x8xf32>
    %7 = vector.shape_cast %6 : vector<1x8xf32> to vector<1x1x8xf32>
    %8 = vector.broadcast %7 : vector<1x1x8xf32> to vector<16x32x8xf32>
    %9 = arith.addf %5, %8 : vector<16x32x8xf32>
    %cst = arith.constant 0.000000e+00 : f32
    %10 = vector.broadcast %cst : f32 to vector<16x32x8xf32>
    %11 = arith.maximumf %9, %10 : vector<16x32x8xf32>
    %c0_7 = arith.constant 0 : index
    %c0_8 = arith.constant 0 : index
    %c0_9 = arith.constant 0 : index
    %c0_10 = arith.constant 0 : index
    %12 = vector.load %arg5[%c0_7, %c0_8, %c0_9, %c0_10] : memref<1x16x32x8xf32, #tpu.memory_space<vmem>>, vector<1x16x32x8xf32>
    %13 = vector.shape_cast %12 : vector<1x16x32x8xf32> to vector<16x32x8xf32>
    %14 = vector.shape_cast %11 : vector<16x32x8xf32> to vector<1x16x32x8xf32>
    tpu.vector_store %arg5[%c0_7, %c0_8, %c0_9, %c0_10], %14 {strides = array<i32>} : memref<1x16x32x8xf32, #tpu.memory_space<vmem>>, vector<1x16x32x8xf32>,
    return
  }
  func.func @transform_0(%arg0: i32, %arg1: i32) -> (i32, i32, i32, i32) {
    %c0_i32 = arith.constant 0 : i32
    %c0_i32_0 = arith.constant 0 : i32
    %c0_i32_1 = arith.constant 0 : i32
    return %arg0, %arg1, %c0_i32, %c0_i32_0 : i32, i32, i32, i32
  }
  func.func @transform_1(%arg0: i32, %arg1: i32) -> (i32, i32) {
    %c0_i32 = arith.constant 0 : i32
    %c0_i32_0 = arith.constant 0 : i32
    %c0_i32_1 = arith.constant 0 : i32
    return %c0_i32, %c0_i32_0 : i32, i32
  }
  func.func @transform_2(%arg0: i32, %arg1: i32) -> (i32, i32) {
    %c0_i32 = arith.constant 0 : i32
    %c0_i32_0 = arith.constant 0 : i32
    %c0_i32_1 = arith.constant 0 : i32
    return %c0_i32, %c0_i32_0 : i32, i32
  }
  func.func @transform_3(%arg0: i32, %arg1: i32) -> (i32, i32, i32, i32) {
    %c0_i32 = arith.constant 0 : i32
    %c0_i32_0 = arith.constant 0 : i32
    %c0_i32_1 = arith.constant 0 : i32
    return %arg0, %arg1, %c0_i32, %c0_i32_0 : i32, i32, i32, i32
  }
}

module attributes {stable_mosaic.version = 11 : i64} {
  func.func @_conv2_bnfused_kernel(%arg0: i32, %arg1: i32, %arg2: memref<1x1x18x34x8xbf16, #tpu.memory_space<vmem>>, %arg3: memref<1x8xf32, #tpu.memory_space<vmem>>, %arg4: memref<1x8xf32, #tpu.memory_space<vmem>>, %arg5: memref<72x8xbf16, #tpu.memory_space<vmem>>, %arg6: memref<1x8xf32, #tpu.memory_space<vmem>>, %arg7: memref<1x16x32x8xf32, #tpu.memory_space<vmem>>, %arg8: memref<1x1x1x8xf32, #tpu.memory_space<vmem>>, %arg9: memref<1x1x1x8xf32, #tpu.memory_space<vmem>>) attributes {dimension_semantics = [#tpu.dimension_semantics<parallel>, #tpu.dimension_semantics<parallel>], iteration_bounds = array<i64: 2, 2>, scalar_prefetch = 0 : i64, scratch_operands = 0 : i64, tpu.core_type = #tpu.core_type<tc>, window_params = [{transform_indices = @transform_0, window_bounds = array<i64: 1, 1, 18, 34, 8>}, {pipeline_mode = #tpu.pipeline_mode<synchronous>, transform_indices = @transform_1, window_bounds = array<i64: 1, 8>}, {pipeline_mode = #tpu.pipeline_mode<synchronous>, transform_indices = @transform_2, window_bounds = array<i64: 1, 8>}, {pipeline_mode = #tpu.pipeline_mode<synchronous>, transform_indices = @transform_3, window_bounds = array<i64: 72, 8>}, {pipeline_mode = #tpu.pipeline_mode<synchronous>, transform_indices = @transform_4, window_bounds = array<i64: 1, 8>}, {transform_indices = @transform_5, window_bounds = array<i64: 1, 16, 32, 8>}, {transform_indices = @transform_6, window_bounds = array<i64: 1, 1, 1, 8>}, {transform_indices = @transform_7, window_bounds = array<i64: 1, 1, 1, 8>}]} {
    %c0 = arith.constant 0 : index
    %c0_0 = arith.constant 0 : index
    %c0_1 = arith.constant 0 : index
    %c0_2 = arith.constant 0 : index
    %c0_3 = arith.constant 0 : index
    %0 = vector.load %arg2[%c0, %c0_0, %c0_1, %c0_2, %c0_3] : memref<1x1x18x34x8xbf16, #tpu.memory_space<vmem>>, vector<1x1x18x34x8xbf16>
    %1 = vector.shape_cast %0 : vector<1x1x18x34x8xbf16> to vector<18x34x8xbf16>
    %2 = arith.extf %1 : vector<18x34x8xbf16> to vector<18x34x8xf32>
    %c0_4 = arith.constant 0 : index
    %c0_5 = arith.constant 0 : index
    %3 = vector.load %arg3[%c0_4, %c0_5] : memref<1x8xf32, #tpu.memory_space<vmem>>, vector<1x8xf32>
    %4 = vector.shape_cast %3 : vector<1x8xf32> to vector<1x1x8xf32>
    %5 = vector.broadcast %4 : vector<1x1x8xf32> to vector<18x34x8xf32>
    %6 = arith.mulf %2, %5 : vector<18x34x8xf32>
    %c0_6 = arith.constant 0 : index
    %c0_7 = arith.constant 0 : index
    %7 = vector.load %arg4[%c0_6, %c0_7] : memref<1x8xf32, #tpu.memory_space<vmem>>, vector<1x8xf32>
    %8 = vector.shape_cast %7 : vector<1x8xf32> to vector<1x1x8xf32>
    %9 = vector.broadcast %8 : vector<1x1x8xf32> to vector<18x34x8xf32>
    %10 = arith.addf %6, %9 : vector<18x34x8xf32>
    %cst = arith.constant 0.000000e+00 : f32
    %11 = vector.broadcast %cst : f32 to vector<18x34x8xf32>
    %12 = arith.maximumf %10, %11 : vector<18x34x8xf32>
    %13 = tpu.iota {dimensions = array<i32: 0>} : vector<18x34x1xi32>
    %c16_i32 = arith.constant 16 : i32
    %14 = arith.muli %arg1, %c16_i32 : i32
    %15 = vector.broadcast %14 : i32 to vector<18x34x1xi32>
    %16 = arith.addi %13, %15 : vector<18x34x1xi32>
    %17 = tpu.iota {dimensions = array<i32: 1>} : vector<18x34x1xi32>
    %c1_i32 = arith.constant 1 : i32
    %18 = vector.broadcast %c1_i32 : i32 to vector<18x34x1xi32>
    %19 = arith.cmpi sge, %16, %18 : vector<18x34x1xi32>
    %c32_i32 = arith.constant 32 : i32
    %20 = vector.broadcast %c32_i32 : i32 to vector<18x34x1xi32>
    %21 = arith.cmpi sle, %16, %20 : vector<18x34x1xi32>
    %22 = arith.andi %19, %21 : vector<18x34x1xi1>
    %c1_i32_8 = arith.constant 1 : i32
    %23 = vector.broadcast %c1_i32_8 : i32 to vector<18x34x1xi32>
    %24 = arith.cmpi sge, %17, %23 : vector<18x34x1xi32>
    %25 = arith.andi %22, %24 : vector<18x34x1xi1>
    %c32_i32_9 = arith.constant 32 : i32
    %26 = vector.broadcast %c32_i32_9 : i32 to vector<18x34x1xi32>
    %27 = arith.cmpi sle, %17, %26 : vector<18x34x1xi32>
    %28 = arith.andi %25, %27 : vector<18x34x1xi1>
    %cst_10 = arith.constant 0.000000e+00 : f32
    %29 = vector.shape_cast %28 : vector<18x34x1xi1> to vector<18x34x1xi1>
    %30 = vector.broadcast %29 : vector<18x34x1xi1> to vector<18x34x8xi1>
    %31 = vector.broadcast %cst_10 : f32 to vector<18x34x8xf32>
    %32 = arith.select %30, %12, %31 : vector<18x34x8xi1>, vector<18x34x8xf32>
    %33 = arith.truncf %32 : vector<18x34x8xf32> to vector<18x34x8xbf16>
    %34 = vector.extract_strided_slice %33 {offsets = [0, 0, 0], sizes = [16, 32, 8], strides = [1, 1, 1]} : vector<18x34x8xbf16> to vector<16x32x8xbf16>
    %35 = vector.extract_strided_slice %33 {offsets = [0, 1, 0], sizes = [16, 32, 8], strides = [1, 1, 1]} : vector<18x34x8xbf16> to vector<16x32x8xbf16>
    %36 = vector.extract_strided_slice %33 {offsets = [0, 2, 0], sizes = [16, 32, 8], strides = [1, 1, 1]} : vector<18x34x8xbf16> to vector<16x32x8xbf16>
    %37 = vector.extract_strided_slice %33 {offsets = [1, 0, 0], sizes = [16, 32, 8], strides = [1, 1, 1]} : vector<18x34x8xbf16> to vector<16x32x8xbf16>
    %38 = vector.extract_strided_slice %33 {offsets = [1, 1, 0], sizes = [16, 32, 8], strides = [1, 1, 1]} : vector<18x34x8xbf16> to vector<16x32x8xbf16>
    %39 = vector.extract_strided_slice %33 {offsets = [1, 2, 0], sizes = [16, 32, 8], strides = [1, 1, 1]} : vector<18x34x8xbf16> to vector<16x32x8xbf16>
    %40 = vector.extract_strided_slice %33 {offsets = [2, 0, 0], sizes = [16, 32, 8], strides = [1, 1, 1]} : vector<18x34x8xbf16> to vector<16x32x8xbf16>
    %41 = vector.extract_strided_slice %33 {offsets = [2, 1, 0], sizes = [16, 32, 8], strides = [1, 1, 1]} : vector<18x34x8xbf16> to vector<16x32x8xbf16>
    %42 = vector.extract_strided_slice %33 {offsets = [2, 2, 0], sizes = [16, 32, 8], strides = [1, 1, 1]} : vector<18x34x8xbf16> to vector<16x32x8xbf16>
    %43 = tpu.concatenate %34, %35, %36, %37, %38, %39, %40, %41, %42 in 2 : vector<16x32x8xbf16>, vector<16x32x8xbf16>, vector<16x32x8xbf16>, vector<16x32x8xbf16>, vector<16x32x8xbf16>, vector<16x32x8xbf16>, vector<16x32x8xbf16>, vector<16x32x8xbf16>, vector<16x32x8xbf16> -> vector<16x32x72xbf16>
    %44 = vector.shape_cast %43 : vector<16x32x72xbf16> to vector<512x72xbf16>
    %c0_11 = arith.constant 0 : index
    %c0_12 = arith.constant 0 : index
    %45 = vector.load %arg5[%c0_11, %c0_12] : memref<72x8xbf16, #tpu.memory_space<vmem>>, vector<72x8xbf16>
    %cst_13 = arith.constant dense<0.000000e+00> : vector<512x8xf32>
    %46 = tpu.matmul %44, %45, %cst_13 {dimension_numbers = #tpu.dot_dimension_numbers<[1], [0], [0], [1], [0, 0, 1, 1], [], []>} : vector<512x72xbf16>, vector<72x8xbf16>, vector<512x8xf32> -> vector<512x8xf32>
    %c0_14 = arith.constant 0 : index
    %c0_15 = arith.constant 0 : index
    %47 = vector.load %arg6[%c0_14, %c0_15] : memref<1x8xf32, #tpu.memory_space<vmem>>, vector<1x8xf32>
    %48 = vector.broadcast %47 : vector<1x8xf32> to vector<512x8xf32>
    %49 = arith.addf %46, %48 : vector<512x8xf32>
    %50 = vector.shape_cast %49 : vector<512x8xf32> to vector<16x32x8xf32>
    %c0_16 = arith.constant 0 : index
    %c0_17 = arith.constant 0 : index
    %c0_18 = arith.constant 0 : index
    %c0_19 = arith.constant 0 : index
    %51 = vector.load %arg7[%c0_16, %c0_17, %c0_18, %c0_19] : memref<1x16x32x8xf32, #tpu.memory_space<vmem>>, vector<1x16x32x8xf32>
    %52 = vector.shape_cast %51 : vector<1x16x32x8xf32> to vector<16x32x8xf32>
    %53 = vector.shape_cast %50 : vector<16x32x8xf32> to vector<1x16x32x8xf32>
    tpu.vector_store %arg7[%c0_16, %c0_17, %c0_18, %c0_19], %53 {strides = array<i32>} : memref<1x16x32x8xf32, #tpu.memory_space<vmem>>, vector<1x16x32x8xf32>,
    %cst_20 = arith.constant dense<0.000000e+00> : vector<8xf32>
    %54 = vector.multi_reduction <add>, %49, %cst_20 [0] : vector<512x8xf32> to vector<8xf32>
    %55 = vector.shape_cast %54 : vector<8xf32> to vector<1x8xf32>
    %cst_21 = arith.constant 0.001953125 : f32
    %56 = vector.broadcast %cst_21 : f32 to vector<1x8xf32>
    %57 = arith.mulf %55, %56 : vector<1x8xf32>
    %58 = vector.broadcast %57 : vector<1x8xf32> to vector<512x8xf32>
    %59 = arith.subf %49, %58 : vector<512x8xf32>
    %c0_22 = arith.constant 0 : index
    %c0_23 = arith.constant 0 : index
    %c0_24 = arith.constant 0 : index
    %c0_25 = arith.constant 0 : index
    %60 = vector.load %arg8[%c0_22, %c0_23, %c0_24, %c0_25] : memref<1x1x1x8xf32, #tpu.memory_space<vmem>>, vector<1x1x1x8xf32>
    %61 = vector.shape_cast %60 : vector<1x1x1x8xf32> to vector<1x8xf32>
    %62 = vector.shape_cast %55 : vector<1x8xf32> to vector<1x1x1x8xf32>
    tpu.vector_store %arg8[%c0_22, %c0_23, %c0_24, %c0_25], %62 {strides = array<i32>} : memref<1x1x1x8xf32, #tpu.memory_space<vmem>>, vector<1x1x1x8xf32>,
    %63 = arith.mulf %59, %59 : vector<512x8xf32>
    %cst_26 = arith.constant dense<0.000000e+00> : vector<8xf32>
    %64 = vector.multi_reduction <add>, %63, %cst_26 [0] : vector<512x8xf32> to vector<8xf32>
    %65 = vector.shape_cast %64 : vector<8xf32> to vector<1x8xf32>
    %c0_27 = arith.constant 0 : index
    %c0_28 = arith.constant 0 : index
    %c0_29 = arith.constant 0 : index
    %c0_30 = arith.constant 0 : index
    %66 = vector.load %arg9[%c0_27, %c0_28, %c0_29, %c0_30] : memref<1x1x1x8xf32, #tpu.memory_space<vmem>>, vector<1x1x1x8xf32>
    %67 = vector.shape_cast %66 : vector<1x1x1x8xf32> to vector<1x8xf32>
    %68 = vector.shape_cast %65 : vector<1x8xf32> to vector<1x1x1x8xf32>
    tpu.vector_store %arg9[%c0_27, %c0_28, %c0_29, %c0_30], %68 {strides = array<i32>} : memref<1x1x1x8xf32, #tpu.memory_space<vmem>>, vector<1x1x1x8xf32>,
    return
  }
  func.func @transform_0(%arg0: i32, %arg1: i32) -> (i32, i32, i32, i32, i32) {
    %c0_i32 = arith.constant 0 : i32
    %c0_i32_0 = arith.constant 0 : i32
    %c0_i32_1 = arith.constant 0 : i32
    %c0_i32_2 = arith.constant 0 : i32
    return %arg0, %arg1, %c0_i32, %c0_i32_0, %c0_i32_1 : i32, i32, i32, i32, i32
  }
  func.func @transform_1(%arg0: i32, %arg1: i32) -> (i32, i32) {
    %c0_i32 = arith.constant 0 : i32
    %c0_i32_0 = arith.constant 0 : i32
    %c0_i32_1 = arith.constant 0 : i32
    return %c0_i32, %c0_i32_0 : i32, i32
  }
  func.func @transform_2(%arg0: i32, %arg1: i32) -> (i32, i32) {
    %c0_i32 = arith.constant 0 : i32
    %c0_i32_0 = arith.constant 0 : i32
    %c0_i32_1 = arith.constant 0 : i32
    return %c0_i32, %c0_i32_0 : i32, i32
  }
  func.func @transform_3(%arg0: i32, %arg1: i32) -> (i32, i32) {
    %c0_i32 = arith.constant 0 : i32
    %c0_i32_0 = arith.constant 0 : i32
    %c0_i32_1 = arith.constant 0 : i32
    return %c0_i32, %c0_i32_0 : i32, i32
  }
  func.func @transform_4(%arg0: i32, %arg1: i32) -> (i32, i32) {
    %c0_i32 = arith.constant 0 : i32
    %c0_i32_0 = arith.constant 0 : i32
    %c0_i32_1 = arith.constant 0 : i32
    return %c0_i32, %c0_i32_0 : i32, i32
  }
  func.func @transform_5(%arg0: i32, %arg1: i32) -> (i32, i32, i32, i32) {
    %c0_i32 = arith.constant 0 : i32
    %c0_i32_0 = arith.constant 0 : i32
    %c0_i32_1 = arith.constant 0 : i32
    return %arg0, %arg1, %c0_i32, %c0_i32_0 : i32, i32, i32, i32
  }
  func.func @transform_6(%arg0: i32, %arg1: i32) -> (i32, i32, i32, i32) {
    %c0_i32 = arith.constant 0 : i32
    %c0_i32_0 = arith.constant 0 : i32
    %c0_i32_1 = arith.constant 0 : i32
    return %arg0, %arg1, %c0_i32, %c0_i32_0 : i32, i32, i32, i32
  }
  func.func @transform_7(%arg0: i32, %arg1: i32) -> (i32, i32, i32, i32) {
    %c0_i32 = arith.constant 0 : i32
    %c0_i32_0 = arith.constant 0 : i32
    %c0_i32_1 = arith.constant 0 : i32
    return %arg0, %arg1, %c0_i32, %c0_i32_0 : i32, i32, i32, i32
  }
}

</mosaic_0001>

<llo_original>
// kernel: decoder_block_forward.4
$region0: #{decoder_block_forward.4}
  #allocation0 [shape = 'u32[]', space=smem, size = 0x4, offset = 0x4, fixed_abs, tag = 'smem constant byte address 0x4 - core index']
  #allocation1 [shape = 'u32[144,128]{1,0:T(1,128)}', space=vmem, size = 0x12000, scoped, tag = 'internal scratch']
  %s0 = inlined_call_operand.hbm [shape: bf16[512,8], index: 0, kind: input, shape index: {}]
  %s1 = inlined_call_operand.hbm [shape: bf16[8,32], index: 1, kind: input, shape index: {}]
  %s2 = inlined_call_operand.hbm [shape: f32[1,32], index: 2, kind: input, shape index: {}]
  %s3 = inlined_call_operand.hbm [shape: bf16[512,32], index: 3, kind: output, shape index: {}]
  %s4 = sld [smem:[#allocation0]]
  $region57: #{decoder_block_forward.4} parent=0
    _
  %s6 = ssub.s32 1, %s4
  %s7 = scalar_select 0, %s6, %s4
  $region1: #{decoder_block_forward.4} parent=0
    #allocation2 [shape = 'u8[65536]{0}', space=vmem, size = 0x10000, scoped, tag = 'input window, operand 0']
    #allocation3 [shape = 's32[2]{0}', space=sflag, size = 0x8, scoped, tag = 'scoped memory for decoder_block_forward.4']
    #allocation4 [shape = 's32[2]{0}', space=sflag, size = 0x8, scoped, tag = 'scoped memory for decoder_block_forward.4']
    #allocation5 [shape = 'u8[2048]{0}', space=vmem, size = 0x800, scoped, tag = 'input window, operand 1, single buffered']
    #allocation6 [shape = 's32[1]{0}', space=sflag, size = 0x4, scoped, tag = 'scoped memory for decoder_block_forward.4']
    #allocation7 [shape = 'u8[512]{0}', space=vmem, size = 0x400, scoped, tag = 'input window, operand 2, single buffered']
    #allocation8 [shape = 'u8[65536]{0}', space=vmem, size = 0x10000, scoped, tag = 'output window, operand 0']
    %8 = vsyncpa [#allocation3], 0
    %s9 = scalar_lea.sflag [#allocation3], 1
    %10 = vsyncpa %s9, 0
    %11 = vsyncpa [#allocation6], 0
    %12 = vsyncpa [#allocation4], 0
    %s13 = scalar_lea.sflag [#allocation4], 1
    %14 = vsyncpa %s13, 0
    loop: start=0, step=1, limit=6
    $region2: #{decoder_block_forward.4} parent=1 // loop_pre_header
      _
    $region3: #{decoder_block_forward.4} parent=1 // loop_header
      %s16 = sphi 0, %s20
      %p17 = scmp.ge.s32.totalorder %s16, 6
      %s26 = sphi 0, %s28
      %s29 = sphi 0, %s26
      %s30 = sphi 0, %s29
      %s46 = sphi 0, %s30
      %s50 = sphi 0, %s50
      %s52 = sphi 0, %s50
      %s53 = sphi 0, %s52
      %s67 = sphi 0, %s53
      %s71 = sphi 0, %s71
      %s73 = sphi 0, %s71
      %s74 = sphi 0, %s73
      %s88 = sphi 0, %s74
      %s94 = sphi 0, %s96
      %s97 = sphi 0, %s94
      %s98 = sphi 0, %s97
      %s114 = sphi 0, %s98
    $region4: #{decoder_block_forward.4} parent=1 // loop_header_branch
      %19 = sbr.rel (%p17) target = $region8
    $region5: #{decoder_block_forward.4} parent=1 // loop_body
      %s21 = ssub.s32 %s16, 1
      %s22 = ssub.s32 %s16, 2
      %s23 = sadd.s32 %s16, 1
      %s24 = ssub.s32 %s16, %s23
      %p25 = scmp.eq.s32.totalorder %s24, 0
      %s27 = sadd.s32 %s26, 1
      %s28 = scalar_select %p25, %s26, %s27
      %p31 = pneg %p25
      %p32 = scmp.eq.s32.totalorder %s16, 3
      %p33 = por %p31, %p32
      %p34 = scmp.ne.s32.totalorder %s26, %s29
      %p35 = scmp.eq.s32.totalorder %s16, 0
      %p36 = por %p34, %p35
      %p37 = scmp.ne.s32.totalorder %s26, %s29
      %p38 = scmp.eq.s32.totalorder %s21, 3
      %p39 = por %p37, %p38
      %p40 = scmp.ne.s32.totalorder %s29, %s30
      %p41 = scmp.eq.s32.totalorder %s21, 0
      %p42 = por %p40, %p41
      %p43 = scmp.ne.s32.totalorder %s29, %s30
      %p44 = scmp.eq.s32.totalorder %s22, 3
      %p45 = por %p43, %p44
      %p47 = scmp.ne.s32.totalorder %s30, %s46
      %p48 = scmp.eq.s32.totalorder %s22, 0
      %p49 = por %p47, %p48
      %s51 = sadd.s32 %s50, 1
      %p54 = scmp.eq.s32.totalorder %s16, 3
      %p55 = scmp.ne.s32.totalorder %s50, %s52
      %p56 = scmp.eq.s32.totalorder %s16, 0
      %p57 = por %p55, %p56
      %p58 = scmp.ne.s32.totalorder %s50, %s52
      %p59 = scmp.eq.s32.totalorder %s21, 3
      %p60 = por %p58, %p59
      %p61 = scmp.ne.s32.totalorder %s52, %s53
      %p62 = scmp.eq.s32.totalorder %s21, 0
      %p63 = por %p61, %p62
      %p64 = scmp.ne.s32.totalorder %s52, %s53
      %p65 = scmp.eq.s32.totalorder %s22, 3
      %p66 = por %p64, %p65
      %p68 = scmp.ne.s32.totalorder %s53, %s67
      %p69 = scmp.eq.s32.totalorder %s22, 0
      %p70 = por %p68, %p69
      %s72 = sadd.s32 %s71, 1
      %p75 = scmp.eq.s32.totalorder %s16, 3
      %p76 = scmp.ne.s32.totalorder %s71, %s73
      %p77 = scmp.eq.s32.totalorder %s16, 0
      %p78 = por %p76, %p77
      %p79 = scmp.ne.s32.totalorder %s71, %s73
      %p80 = scmp.eq.s32.totalorder %s21, 3
      %p81 = por %p79, %p80
      %p82 = scmp.ne.s32.totalorder %s73, %s74
      %p83 = scmp.eq.s32.totalorder %s21, 0
      %p84 = por %p82, %p83
      %p85 = scmp.ne.s32.totalorder %s73, %s74
      %p86 = scmp.eq.s32.totalorder %s22, 3
      %p87 = por %p85, %p86
      %p89 = scmp.ne.s32.totalorder %s74, %s88
      %p90 = scmp.eq.s32.totalorder %s22, 0
      %p91 = por %p89, %p90
      %s92 = ssub.s32 %s16, %s23
      %p93 = scmp.eq.s32.totalorder %s92, 0
      %s95 = sadd.s32 %s94, 1
      %s96 = scalar_select %p93, %s94, %s95
      %p99 = pneg %p93
      %p100 = scmp.eq.s32.totalorder %s16, 3
      %p101 = por %p99, %p100
      %p102 = scmp.ne.s32.totalorder %s94, %s97
      %p103 = scmp.eq.s32.totalorder %s16, 0
      %p104 = por %p102, %p103
      %p105 = scmp.ne.s32.totalorder %s94, %s97
      %p106 = scmp.eq.s32.totalorder %s21, 3
      %p107 = por %p105, %p106
      %p108 = scmp.ne.s32.totalorder %s97, %s98
      %p109 = scmp.eq.s32.totalorder %s21, 0
      %p110 = por %p108, %p109
      %p111 = scmp.ne.s32.totalorder %s97, %s98
      %p112 = scmp.eq.s32.totalorder %s22, 3
      %p113 = por %p111, %p112
      %p115 = scmp.ne.s32.totalorder %s98, %s114
      %p116 = scmp.eq.s32.totalorder %s22, 0
      %p117 = por %p115, %p116
      %p118 = scmp.le.s32.totalorder 1, %s16
      %p119 = scmp.lt.s32.totalorder %s16, 5
      %p120 = pnand %p118, %p119
      %p121 = pneg %p120
      // Predicated region
      $region9: #{decoder_block_forward.4} parent=5 // pred_check
        _
      $region10: #{decoder_block_forward.4} parent=5 // pred_check_branch
        %123 = sbr.rel (%p120) target = $region12
      $region11: #{decoder_block_forward.4} parent=5 // pred_region
        %s124 = ssub.s32 %s16, 1
        // Predicated region
        $region13: #{decoder_block_forward.4} parent=11 // pred_check
          %p125 = pneg %p63
        $region14: #{decoder_block_forward.4} parent=11 // pred_check_branch
          %127 = sbr.rel (%p125) target = $region16
        $region15: #{decoder_block_forward.4} parent=11 // pred_region
          %s129 = ssub.s32 64, 64
          %130 = vsyncadd [#allocation6], %s129
          %s132 = sshll.u32 [#allocation5], 4
          %s133 = int_to_ptr.vmem [resolvable:$true] %s132
          %135 = dma.hbm_to_vmem [thread:$0]  %s1, 64, %s133, [#allocation6]
        $region16: #{decoder_block_forward.4} parent=11 // pred_fallthru
          _
        // Predicated region
        $region17: #{decoder_block_forward.4} parent=11 // pred_check
          %p136 = pneg %p84
        $region18: #{decoder_block_forward.4} parent=11 // pred_check_branch
          %138 = sbr.rel (%p136) target = $region20
        $region19: #{decoder_block_forward.4} parent=11 // pred_region
          %s140 = ssub.s32 16, 16
          %141 = vsyncadd [#allocation6], %s140
          %s143 = sshll.u32 [#allocation7], 4
          %s144 = int_to_ptr.vmem [resolvable:$true] %s143
          %146 = dma.hbm_to_vmem [thread:$0]  %s2, 16, %s144, [#allocation6]
        $region20: #{decoder_block_forward.4} parent=11 // pred_fallthru
          _
      $region12: #{decoder_block_forward.4} parent=5 // pred_fallthru
        _
      %p147 = scmp.lt.s32.totalorder %s16, 4
      // Predicated region
      $region21: #{decoder_block_forward.4} parent=5 // pred_check
        %p148 = pneg %p147
      $region22: #{decoder_block_forward.4} parent=5 // pred_check_branch
        %150 = sbr.rel (%p148) target = $region24
      $region23: #{decoder_block_forward.4} parent=5 // pred_region
        // Predicated region
        $region25: #{decoder_block_forward.4} parent=23 // pred_check
          %p151 = pneg %p36
        $region26: #{decoder_block_forward.4} parent=23 // pred_check_branch
          %153 = sbr.rel (%p151) target = $region28
        $region27: #{decoder_block_forward.4} parent=23 // pred_region
          %s154 = sand.u32 %s26, 1
          %s155 = scalar_lea.sflag [#allocation3], %s154
          %s156 = sand.u32 %s26, 1
          %s157 = smul.addr %s156, 64
          %s158 = scalar_lea.vmem [#allocation2], %s157
          %s159 = smul.u32 16, %s16
          %s161 = ssub.s32 1024, 1024
          %162 = vsyncadd %s155, %s161
          %s163 = smul.addr %s159, 64
          %s164 = scalar_lea.hbm %s0, %s163
          %s165 = sshll.u32 %s158, 4
          %s166 = int_to_ptr.vmem [resolvable:$true] %s165
          %171 = dma.hbm_to_vmem [thread:$0]  %s164, 1024, %s166, %s155, 64, 64, 4
        $region28: #{decoder_block_forward.4} parent=23 // pred_fallthru
          _
      $region24: #{decoder_block_forward.4} parent=5 // pred_fallthru
        _
      %p172 = scmp.le.s32.totalorder 1, %s16
      %p173 = scmp.lt.s32.totalorder %s16, 5
      %p174 = pnand %p172, %p173
      %p175 = pneg %p174
      // Predicated region
      $region29: #{decoder_block_forward.4} parent=5 // pred_check
        _
      $region30: #{decoder_block_forward.4} parent=5 // pred_check_branch
        %177 = sbr.rel (%p174) target = $region32
      $region31: #{decoder_block_forward.4} parent=5 // pred_region
        %s178 = ssub.s32 %s16, 1
        %s179 = sand.u32 %s29, 1
        %s180 = scalar_lea.sflag [#allocation3], %s179
        %s181 = sand.u32 %s29, 1
        %s182 = smul.addr %s181, 64
        %s183 = scalar_lea.vmem [#allocation2], %s182
        // Predicated region
        $region33: #{decoder_block_forward.4} parent=31 // pred_check
          %p184 = pneg %p42
        $region34: #{decoder_block_forward.4} parent=31 // pred_check_branch
          %186 = sbr.rel (%p184) target = $region36
        $region35: #{decoder_block_forward.4} parent=31 // pred_region
          %187 = dma.done %s180, 1024
        $region36: #{decoder_block_forward.4} parent=31 // pred_fallthru
          _
        // Predicated region
        $region37: #{decoder_block_forward.4} parent=31 // pred_check
          %p188 = pneg %p63
        $region38: #{decoder_block_forward.4} parent=31 // pred_check_branch
          %190 = sbr.rel (%p188) target = $region40
        $region39: #{decoder_block_forward.4} parent=31 // pred_region
          %191 = dma.done [#allocation6], 64
        $region40: #{decoder_block_forward.4} parent=31 // pred_fallthru
          _
        // Predicated region
        $region41: #{decoder_block_forward.4} parent=31 // pred_check
          %p192 = pneg %p84
        $region42: #{decoder_block_forward.4} parent=31 // pred_check_branch
          %194 = sbr.rel (%p192) target = $region44
        $region43: #{decoder_block_forward.4} parent=31 // pred_region
          %195 = dma.done [#allocation6], 16
        $region44: #{decoder_block_forward.4} parent=31 // pred_fallthru
          _
        %s196 = sand.u32 %s29, 1
        %s197 = scalar_lea.sflag [#allocation3], %s196
        %s198 = sand.u32 %s29, 1
        %s199 = smul.addr %s198, 64
        %s200 = scalar_lea.vmem [#allocation2], %s199
        %p201 = pneg %p42
        %p202 = pneg %p39
        %p203 = pneg %p63
        %p204 = pneg %p60
        %p205 = pneg %p84
        %p206 = pneg %p81
        %p207 = pneg %p110
        %p208 = pneg %p107
        %s209 = sand.u32 %s97, 1
        %s210 = scalar_lea.sflag [#allocation4], %s209
        %s211 = sand.u32 %s97, 1
        %s212 = smul.addr %s211, 64
        %s213 = scalar_lea.vmem [#allocation8], %s212
        %s214 = smul.u32 16, %s21
        %s215 = smul.u32 16, %s21
        %v217 = vld [vmem:[%s183] sm:$0xf]
        %v218 = vld [vmem:[%s183 + $0x4] sm:$0xf]
        %v219 = vld [vmem:[%s183 + $0x8] sm:$0xf]
        %v220 = vld [vmem:[%s183 + $0xc] sm:$0xf]
        %v221 = vld [vmem:[%s183 + $0x10] sm:$0xf]
        %v222 = vld [vmem:[%s183 + $0x14] sm:$0xf]
        %v223 = vld [vmem:[%s183 + $0x18] sm:$0xf]
        %v224 = vld [vmem:[%s183 + $0x1c] sm:$0xf]
        %v225 = vld [vmem:[%s183 + $0x20] sm:$0xf]
        %v226 = vld [vmem:[%s183 + $0x24] sm:$0xf]
        %v227 = vld [vmem:[%s183 + $0x28] sm:$0xf]
        %v228 = vld [vmem:[%s183 + $0x2c] sm:$0xf]
        %v229 = vld [vmem:[%s183 + $0x30] sm:$0xf]
        %v230 = vld [vmem:[%s183 + $0x34] sm:$0xf]
        %v231 = vld [vmem:[%s183 + $0x38] sm:$0xf]
        %v232 = vld [vmem:[%s183 + $0x3c] sm:$0xf]
        %v233 = vld [vmem:[#allocation5] sm:$0xf]
        %v234 = vld [vmem:[#allocation7] sm:$0x1]
        %v236 = vlaneseq
        %v237 = vshrl.u32 %v236, 7
        %v238 = vsub.s32 0, %v237
        %v239 = vrot.slane %v234, %v238
        %v257 = vunpack.c.l.b16 %v217
        %v258 = vunpack.c.l.b16 %v218
        %v259 = vunpack.c.l.b16 %v219
        %v260 = vunpack.c.l.b16 %v220
        %v261 = vunpack.c.l.b16 %v221
        %v262 = vunpack.c.l.b16 %v222
        %v263 = vunpack.c.l.b16 %v223
        %v264 = vunpack.c.l.b16 %v224
        %v265 = vunpack.c.l.b16 %v225
        %v266 = vunpack.c.l.b16 %v226
        %v267 = vunpack.c.l.b16 %v227
        %v268 = vunpack.c.l.b16 %v228
        %v269 = vunpack.c.l.b16 %v229
        %v270 = vunpack.c.l.b16 %v230
        %v271 = vunpack.c.l.b16 %v231
        %v272 = vunpack.c.l.b16 %v232
        %v273 = vpack.c.b16 %v258, %v257
        %v274 = vpack.c.b16 %v260, %v259
        %v275 = vpack.c.b16 %v262, %v261
        %v276 = vpack.c.b16 %v264, %v263
        %v277 = vpack.c.b16 %v266, %v265
        %v278 = vpack.c.b16 %v268, %v267
        %v279 = vpack.c.b16 %v270, %v269
        %v280 = vpack.c.b16 %v272, %v271
        %vm281 = vcmask 64512
        %v283 = vsel %vm281, %v273, 0
        %v286 = vsel %vm281, %v274, 0
        %v289 = vsel %vm281, %v275, 0
        %v292 = vsel %vm281, %v276, 0
        %v295 = vsel %vm281, %v277, 0
        %v298 = vsel %vm281, %v278, 0
        %v301 = vsel %vm281, %v279, 0
        %v304 = vsel %vm281, %v280, 0
        %vm306 = vcmask 1043456
        %v308 = vsel %vm306, %v233, 0
        %310 = vmatprep.subr.bf16.mxu0 0
        %311 = vmatpush1.bf16.msra.mxu0 %v308
        %312 = vmatprep.subr.bf16.mxu0 0
        %313 = vmatpush1.bf16.msra.mxu0 0
        %314 = vmatprep.subr.bf16.mxu0 0
        %315 = vmatpush1.bf16.msra.mxu0 0
        %316 = vmatprep.subr.bf16.mxu0 0
        %317 = vmatpush1.bf16.msra.mxu0 0
        %318 = vmatprep.subr.bf16.mxu0 0
        %319 = vmatpush1.bf16.msra.mxu0 0
        %320 = vmatprep.subr.bf16.mxu0 0
        %321 = vmatpush1.bf16.msra.mxu0 0
        %322 = vmatprep.subr.bf16.mxu0 0
        %323 = vmatpush1.bf16.msra.mxu0 0
        %324 = vmatprep.subr.bf16.mxu0 0
        %325 = vmatpush1.bf16.msra.mxu0 0
        %326 = vmatprep.subr.bf16.mxu0 0
        %327 = vmatpush1.bf16.msra.mxu0 0
        %328 = vmatprep.subr.bf16.mxu0 0
        %329 = vmatpush1.bf16.msra.mxu0 0
        %330 = vmatprep.subr.bf16.mxu0 0
        %331 = vmatpush1.bf16.msra.mxu0 0
        %332 = vmatprep.subr.bf16.mxu0 0
        %333 = vmatpush1.bf16.msra.mxu0 0
        %334 = vmatprep.subr.bf16.mxu0 0
        %335 = vmatpush1.bf16.msra.mxu0 0
        %336 = vmatprep.subr.bf16.mxu0 0
        %337 = vmatpush1.bf16.msra.mxu0 0
        %338 = vmatprep.subr.bf16.mxu0 0
        %339 = vmatpush1.bf16.msra.mxu0 0
        %340 = vmatprep.subr.bf16.mxu0 0
        %341 = vmatpush1.bf16.msra.mxu0 0
        %342 = vmatprep.mubr.bf16.mxu0 0
        %343 = vmatmul.mubr.bf16.gmra.mrb[0].mxu0 %v283
        %v344 = vpop.f32.mrb[0].mxu0
        %v345 = vadd.f32 %v239, %v344
        %v346 = vpop.f32.mrb[0].mxu0
        %v347 = vpop.f32.mrb[0].mxu0
        %v348 = vadd.f32 %v239, %v347
        %v349 = vpop.f32.mrb[0].mxu0
        %350 = vmatprep.mubr.bf16.mxu0 0
        %351 = vmatmul.mubr.bf16.gmra.mrb[0].mxu0 %v286
        %v352 = vpop.f32.mrb[0].mxu0
        %v353 = vadd.f32 %v239, %v352
        %v354 = vpop.f32.mrb[0].mxu0
        %v355 = vpop.f32.mrb[0].mxu0
        %v356 = vadd.f32 %v239, %v355
        %v357 = vpop.f32.mrb[0].mxu0
        %358 = vmatprep.mubr.bf16.mxu0 0
        %359 = vmatmul.mubr.bf16.gmra.mrb[0].mxu0 %v289
        %v360 = vpop.f32.mrb[0].mxu0
        %v361 = vadd.f32 %v239, %v360
        %v362 = vpop.f32.mrb[0].mxu0
        %v363 = vpop.f32.mrb[0].mxu0
        %v364 = vadd.f32 %v239, %v363
        %v365 = vpop.f32.mrb[0].mxu0
        %366 = vmatprep.mubr.bf16.mxu0 0
        %367 = vmatmul.mubr.bf16.gmra.mrb[0].mxu0 %v292
        %v368 = vpop.f32.mrb[0].mxu0
        %v369 = vadd.f32 %v239, %v368
        %v370 = vpop.f32.mrb[0].mxu0
        %v371 = vpop.f32.mrb[0].mxu0
        %v372 = vadd.f32 %v239, %v371
        %v373 = vpop.f32.mrb[0].mxu0
        %374 = vmatprep.mubr.bf16.mxu0 0
        %375 = vmatmul.mubr.bf16.gmra.mrb[0].mxu0 %v295
        %v376 = vpop.f32.mrb[0].mxu0
        %v377 = vadd.f32 %v239, %v376
        %v378 = vpop.f32.mrb[0].mxu0
        %v379 = vpop.f32.mrb[0].mxu0
        %v380 = vadd.f32 %v239, %v379
        %v381 = vpop.f32.mrb[0].mxu0
        %382 = vmatprep.mubr.bf16.mxu0 0
        %383 = vmatmul.mubr.bf16.gmra.mrb[0].mxu0 %v298
        %v384 = vpop.f32.mrb[0].mxu0
        %v385 = vadd.f32 %v239, %v384
        %v386 = vpop.f32.mrb[0].mxu0
        %v387 = vpop.f32.mrb[0].mxu0
        %v388 = vadd.f32 %v239, %v387
        %v389 = vpop.f32.mrb[0].mxu0
        %390 = vmatprep.mubr.bf16.mxu0 0
        %391 = vmatmul.mubr.bf16.gmra.mrb[0].mxu0 %v301
        %v392 = vpop.f32.mrb[0].mxu0
        %v393 = vadd.f32 %v239, %v392
        %v394 = vpop.f32.mrb[0].mxu0
        %v395 = vpop.f32.mrb[0].mxu0
        %v396 = vadd.f32 %v239, %v395
        %v397 = vpop.f32.mrb[0].mxu0
        %398 = vmatprep.mubr.bf16.mxu0 0
        %399 = vmatmul.mubr.bf16.gmra.mrb[0].mxu0 %v304
        %v400 = vpop.f32.mrb[0].mxu0
        %v401 = vadd.f32 %v239, %v400
        %v402 = vpop.f32.mrb[0].mxu0
        %v403 = vpop.f32.mrb[0].mxu0
        %v404 = vadd.f32 %v239, %v403
        %v405 = vpop.f32.mrb[0].mxu0
        %406 = vdwg.mxu0
        %v407 = vpack.c.bf16 %v348, %v345
        %v408 = vpack.c.bf16 %v356, %v353
        %v409 = vpack.c.bf16 %v364, %v361
        %v410 = vpack.c.bf16 %v372, %v369
        %v411 = vpack.c.bf16 %v380, %v377
        %v412 = vpack.c.bf16 %v388, %v385
        %v413 = vpack.c.bf16 %v396, %v393
        %v414 = vpack.c.bf16 %v404, %v401
        %v423 = vunpack.c.l.b16 %v407
        %v424 = vunpack.c.h.b16 %v407
        %v425 = vunpack.c.l.b16 %v408
        %v426 = vunpack.c.h.b16 %v408
        %v427 = vunpack.c.l.b16 %v409
        %v428 = vunpack.c.h.b16 %v409
        %v429 = vunpack.c.l.b16 %v410
        %v430 = vunpack.c.h.b16 %v410
        %v431 = vunpack.c.l.b16 %v411
        %v432 = vunpack.c.h.b16 %v411
        %v433 = vunpack.c.l.b16 %v412
        %v434 = vunpack.c.h.b16 %v412
        %v435 = vunpack.c.l.b16 %v413
        %v436 = vunpack.c.h.b16 %v413
        %v437 = vunpack.c.l.b16 %v414
        %v438 = vunpack.c.h.b16 %v414
        %v439 = vpack.c.b16 %v423, %v423
        %v440 = vpack.c.b16 %v424, %v424
        %v441 = vpack.c.b16 %v425, %v425
        %v442 = vpack.c.b16 %v426, %v426
        %v443 = vpack.c.b16 %v427, %v427
        %v444 = vpack.c.b16 %v428, %v428
        %v445 = vpack.c.b16 %v429, %v429
        %v446 = vpack.c.b16 %v430, %v430
        %v447 = vpack.c.b16 %v431, %v431
        %v448 = vpack.c.b16 %v432, %v432
        %v449 = vpack.c.b16 %v433, %v433
        %v450 = vpack.c.b16 %v434, %v434
        %v451 = vpack.c.b16 %v435, %v435
        %v452 = vpack.c.b16 %v436, %v436
        %v453 = vpack.c.b16 %v437, %v437
        %v454 = vpack.c.b16 %v438, %v438
        %vm471 = vcmask 257024
        %472 = vst.msk [vmem:[%s213] sm:$0xf] %vm471, %v439
        %473 = vst.msk [vmem:[%s213 + $0x4] sm:$0xf] %vm471, %v440
        %474 = vst.msk [vmem:[%s213 + $0x8] sm:$0xf] %vm471, %v441
        %475 = vst.msk [vmem:[%s213 + $0xc] sm:$0xf] %vm471, %v442
        %476 = vst.msk [vmem:[%s213 + $0x10] sm:$0xf] %vm471, %v443
        %477 = vst.msk [vmem:[%s213 + $0x14] sm:$0xf] %vm471, %v444
        %478 = vst.msk [vmem:[%s213 + $0x18] sm:$0xf] %vm471, %v445
        %479 = vst.msk [vmem:[%s213 + $0x1c] sm:$0xf] %vm471, %v446
        %480 = vst.msk [vmem:[%s213 + $0x20] sm:$0xf] %vm471, %v447
        %481 = vst.msk [vmem:[%s213 + $0x24] sm:$0xf] %vm471, %v448
        %482 = vst.msk [vmem:[%s213 + $0x28] sm:$0xf] %vm471, %v449
        %483 = vst.msk [vmem:[%s213 + $0x2c] sm:$0xf] %vm471, %v450
        %484 = vst.msk [vmem:[%s213 + $0x30] sm:$0xf] %vm471, %v451
        %485 = vst.msk [vmem:[%s213 + $0x34] sm:$0xf] %vm471, %v452
        %486 = vst.msk [vmem:[%s213 + $0x38] sm:$0xf] %vm471, %v453
        %487 = vst.msk [vmem:[%s213 + $0x3c] sm:$0xf] %vm471, %v454
        %s488 = sand.u32 %s97, 1
        %s489 = scalar_lea.sflag [#allocation4], %s488
        %s490 = sand.u32 %s97, 1
        %s491 = smul.addr %s490, 64
        %s492 = scalar_lea.vmem [#allocation8], %s491
        // Predicated region
        $region45: #{decoder_block_forward.4} parent=31 // pred_check
          %p493 = pneg %p107
        $region46: #{decoder_block_forward.4} parent=31 // pred_check_branch
          %495 = sbr.rel (%p493) target = $region48
        $region47: #{decoder_block_forward.4} parent=31 // pred_region
          %s496 = smul.u32 16, %s21
          %s498 = ssub.s32 1024, 1024
          %499 = vsyncadd %s489, %s498
          %s500 = smul.addr %s496, 64
          %s501 = scalar_lea.hbm %s3, %s500
          %s502 = sshll.u32 %s492, 4
          %s503 = int_to_ptr.vmem [resolvable:$true] %s502
          %508 = dma.vmem_to_hbm [thread:$0]  %s503, 1024, %s501, %s489, 64, 64, 4
        $region48: #{decoder_block_forward.4} parent=31 // pred_fallthru
          _
      $region32: #{decoder_block_forward.4} parent=5 // pred_fallthru
        _
      %p509 = scmp.le.s32.totalorder 2, %s16
      // Predicated region
      $region49: #{decoder_block_forward.4} parent=5 // pred_check
        %p510 = pneg %p509
      $region50: #{decoder_block_forward.4} parent=5 // pred_check_branch
        %512 = sbr.rel (%p510) target = $region52
      $region51: #{decoder_block_forward.4} parent=5 // pred_region
        %s513 = ssub.s32 %s16, 2
        // Predicated region
        $region53: #{decoder_block_forward.4} parent=51 // pred_check
          %p514 = pneg %p113
        $region54: #{decoder_block_forward.4} parent=51 // pred_check_branch
          %516 = sbr.rel (%p514) target = $region56
        $region55: #{decoder_block_forward.4} parent=51 // pred_region
          %s517 = sand.u32 %s98, 1
          %s518 = scalar_lea.sflag [#allocation4], %s517
          %s519 = sand.u32 %s98, 1
          %s520 = smul.addr %s519, 64
          %s521 = scalar_lea.vmem [#allocation8], %s520
          %522 = dma.done %s518, 1024
        $region56: #{decoder_block_forward.4} parent=51 // pred_fallthru
          _
      $region52: #{decoder_block_forward.4} parent=5 // pred_fallthru
        _
    $region6: #{decoder_block_forward.4} parent=1 // loop_footer
      %s20 = sadd.s32 1, %s16
    $region7: #{decoder_block_forward.4} parent=1 // loop_footer_branch
      %15 = sbr.rel target = $region3
    $region8: #{decoder_block_forward.4} parent=1 // loop_exit
      _
    %523 = vsyncpa [#allocation3], 1
    %s524 = scalar_lea.sflag [#allocation3], 1
    %525 = vsyncpa %s524, 1
    %526 = vsyncpa [#allocation6], 1
    %527 = vsyncpa [#allocation4], 1
    %s528 = scalar_lea.sflag [#allocation4], 1
    %529 = vsyncpa %s528, 1

// kernel: decoder_block_forward.7
$region0: #{decoder_block_forward.7}
  #allocation0 [shape = 'u32[]', space=smem, size = 0x4, offset = 0x4, fixed_abs, tag = 'smem constant byte address 0x4 - core index']
  #allocation1 [shape = 'u32[144,128]{1,0:T(1,128)}', space=vmem, size = 0x12000, scoped, tag = 'internal scratch']
  %s0 = inlined_call_operand.hbm [shape: f32[2,32,32,8], index: 0, kind: input, shape index: {}]
  %s1 = inlined_call_operand.hbm [shape: f32[1,8], index: 1, kind: input, shape index: {}]
  %s2 = inlined_call_operand.hbm [shape: f32[1,8], index: 2, kind: input, shape index: {}]
  %s3 = inlined_call_operand.hbm [shape: f32[2,32,32,8], index: 3, kind: output, shape index: {}]
  %s4 = sld [smem:[#allocation0]]
  $region57: #{decoder_block_forward.7} parent=0
    _
  %s6 = ssub.s32 1, %s4
  %s7 = scalar_select 0, %s6, %s4
  $region1: #{decoder_block_forward.7} parent=0
    #allocation2 [shape = 'u8[524288]{0}', space=vmem, size = 0x80000, scoped, tag = 'input window, operand 0']
    #allocation3 [shape = 's32[2]{0}', space=sflag, size = 0x8, scoped, tag = 'scoped memory for decoder_block_forward.7']
    #allocation4 [shape = 's32[2]{0}', space=sflag, size = 0x8, scoped, tag = 'scoped memory for decoder_block_forward.7']
    #allocation5 [shape = 'u8[512]{0}', space=vmem, size = 0x400, scoped, tag = 'input window, operand 1, single buffered']
    #allocation6 [shape = 's32[1]{0}', space=sflag, size = 0x4, scoped, tag = 'scoped memory for decoder_block_forward.7']
    #allocation7 [shape = 'u8[512]{0}', space=vmem, size = 0x400, scoped, tag = 'input window, operand 2, single buffered']
    #allocation8 [shape = 'u8[524288]{0}', space=vmem, size = 0x80000, scoped, tag = 'output window, operand 0']
    %8 = vsyncpa [#allocation3], 0
    %s9 = scalar_lea.sflag [#allocation3], 1
    %10 = vsyncpa %s9, 0
    %11 = vsyncpa [#allocation6], 0
    %12 = vsyncpa [#allocation4], 0
    %s13 = scalar_lea.sflag [#allocation4], 1
    %14 = vsyncpa %s13, 0
    loop: start=0, step=1, limit=6
    $region2: #{decoder_block_forward.7} parent=1 // loop_pre_header
      _
    $region3: #{decoder_block_forward.7} parent=1 // loop_header
      %s16 = sphi 0, %s20
      %p17 = scmp.ge.s32.totalorder %s16, 6
      %s23 = sphi 0, %s35
      %s24 = sphi 0, %s31
      %s25 = sphi 0, %s23
      %s26 = sphi 0, %s24
      %s27 = sphi 0, %s25
      %s28 = sphi 0, %s26
      %s40 = sphi 0, %s42
      %s43 = sphi 0, %s40
      %s44 = sphi 0, %s43
      %s60 = sphi 0, %s44
      %s64 = sphi 0, %s64
      %s66 = sphi 0, %s64
      %s67 = sphi 0, %s66
      %s81 = sphi 0, %s67
      %s85 = sphi 0, %s85
      %s87 = sphi 0, %s85
      %s88 = sphi 0, %s87
      %s102 = sphi 0, %s88
      %s110 = sphi 0, %s112
      %s113 = sphi 0, %s110
      %s114 = sphi 0, %s113
      %s130 = sphi 0, %s114
    $region4: #{decoder_block_forward.7} parent=1 // loop_header_branch
      %19 = sbr.rel (%p17) target = $region8
    $region5: #{decoder_block_forward.7} parent=1 // loop_body
      %s21 = ssub.s32 %s16, 1
      %s22 = ssub.s32 %s16, 2
      %s29 = sadd.s32 1, %s24
      %p30 = scmp.ge.s32.totalorder %s29, 2
      %s31 = scalar_select %p30, 0, %s29
      %s32 = sadd.s32 1, %s23
      %s33 = scalar_select %p30, %s32, %s23
      %p34 = scmp.ge.s32.totalorder %s33, 2
      %s35 = scalar_select %p34, 0, %s33
      %s36 = ssub.s32 %s23, %s35
      %s37 = ssub.s32 %s24, %s31
      %s38 = sor.u32 %s36, %s37
      %p39 = scmp.eq.s32.totalorder %s38, 0
      %s41 = sadd.s32 %s40, 1
      %s42 = scalar_select %p39, %s40, %s41
      %p45 = pneg %p39
      %p46 = scmp.eq.s32.totalorder %s16, 3
      %p47 = por %p45, %p46
      %p48 = scmp.ne.s32.totalorder %s40, %s43
      %p49 = scmp.eq.s32.totalorder %s16, 0
      %p50 = por %p48, %p49
      %p51 = scmp.ne.s32.totalorder %s40, %s43
      %p52 = scmp.eq.s32.totalorder %s21, 3
      %p53 = por %p51, %p52
      %p54 = scmp.ne.s32.totalorder %s43, %s44
      %p55 = scmp.eq.s32.totalorder %s21, 0
      %p56 = por %p54, %p55
      %p57 = scmp.ne.s32.totalorder %s43, %s44
      %p58 = scmp.eq.s32.totalorder %s22, 3
      %p59 = por %p57, %p58
      %p61 = scmp.ne.s32.totalorder %s44, %s60
      %p62 = scmp.eq.s32.totalorder %s22, 0
      %p63 = por %p61, %p62
      %s65 = sadd.s32 %s64, 1
      %p68 = scmp.eq.s32.totalorder %s16, 3
      %p69 = scmp.ne.s32.totalorder %s64, %s66
      %p70 = scmp.eq.s32.totalorder %s16, 0
      %p71 = por %p69, %p70
      %p72 = scmp.ne.s32.totalorder %s64, %s66
      %p73 = scmp.eq.s32.totalorder %s21, 3
      %p74 = por %p72, %p73
      %p75 = scmp.ne.s32.totalorder %s66, %s67
      %p76 = scmp.eq.s32.totalorder %s21, 0
      %p77 = por %p75, %p76
      %p78 = scmp.ne.s32.totalorder %s66, %s67
      %p79 = scmp.eq.s32.totalorder %s22, 3
      %p80 = por %p78, %p79
      %p82 = scmp.ne.s32.totalorder %s67, %s81
      %p83 = scmp.eq.s32.totalorder %s22, 0
      %p84 = por %p82, %p83
      %s86 = sadd.s32 %s85, 1
      %p89 = scmp.eq.s32.totalorder %s16, 3
      %p90 = scmp.ne.s32.totalorder %s85, %s87
      %p91 = scmp.eq.s32.totalorder %s16, 0
      %p92 = por %p90, %p91
      %p93 = scmp.ne.s32.totalorder %s85, %s87
      %p94 = scmp.eq.s32.totalorder %s21, 3
      %p95 = por %p93, %p94
      %p96 = scmp.ne.s32.totalorder %s87, %s88
      %p97 = scmp.eq.s32.totalorder %s21, 0
      %p98 = por %p96, %p97
      %p99 = scmp.ne.s32.totalorder %s87, %s88
      %p100 = scmp.eq.s32.totalorder %s22, 3
      %p101 = por %p99, %p100
      %p103 = scmp.ne.s32.totalorder %s88, %s102
      %p104 = scmp.eq.s32.totalorder %s22, 0
      %p105 = por %p103, %p104
      %s106 = ssub.s32 %s23, %s35
      %s107 = ssub.s32 %s24, %s31
      %s108 = sor.u32 %s106, %s107
      %p109 = scmp.eq.s32.totalorder %s108, 0
      %s111 = sadd.s32 %s110, 1
      %s112 = scalar_select %p109, %s110, %s111
      %p115 = pneg %p109
      %p116 = scmp.eq.s32.totalorder %s16, 3
      %p117 = por %p115, %p116
      %p118 = scmp.ne.s32.totalorder %s110, %s113
      %p119 = scmp.eq.s32.totalorder %s16, 0
      %p120 = por %p118, %p119
      %p121 = scmp.ne.s32.totalorder %s110, %s113
      %p122 = scmp.eq.s32.totalorder %s21, 3
      %p123 = por %p121, %p122
      %p124 = scmp.ne.s32.totalorder %s113, %s114
      %p125 = scmp.eq.s32.totalorder %s21, 0
      %p126 = por %p124, %p125
      %p127 = scmp.ne.s32.totalorder %s113, %s114
      %p128 = scmp.eq.s32.totalorder %s22, 3
      %p129 = por %p127, %p128
      %p131 = scmp.ne.s32.totalorder %s114, %s130
      %p132 = scmp.eq.s32.totalorder %s22, 0
      %p133 = por %p131, %p132
      %p134 = scmp.le.s32.totalorder 1, %s16
      %p135 = scmp.lt.s32.totalorder %s16, 5
      %p136 = pnand %p134, %p135
      %p137 = pneg %p136
      // Predicated region
      $region9: #{decoder_block_forward.7} parent=5 // pred_check
        _
      $region10: #{decoder_block_forward.7} parent=5 // pred_check_branch
        %139 = sbr.rel (%p136) target = $region12
      $region11: #{decoder_block_forward.7} parent=5 // pred_region
        %s140 = ssub.s32 %s16, 1
        // Predicated region
        $region13: #{decoder_block_forward.7} parent=11 // pred_check
          %p141 = pneg %p77
        $region14: #{decoder_block_forward.7} parent=11 // pred_check_branch
          %143 = sbr.rel (%p141) target = $region16
        $region15: #{decoder_block_forward.7} parent=11 // pred_region
          %s145 = ssub.s32 16, 16
          %146 = vsyncadd [#allocation6], %s145
          %s148 = sshll.u32 [#allocation5], 4
          %s149 = int_to_ptr.vmem [resolvable:$true] %s148
          %151 = dma.hbm_to_vmem [thread:$0]  %s1, 16, %s149, [#allocation6]
        $region16: #{decoder_block_forward.7} parent=11 // pred_fallthru
          _
        // Predicated region
        $region17: #{decoder_block_forward.7} parent=11 // pred_check
          %p152 = pneg %p98
        $region18: #{decoder_block_forward.7} parent=11 // pred_check_branch
          %154 = sbr.rel (%p152) target = $region20
        $region19: #{decoder_block_forward.7} parent=11 // pred_region
          %s156 = ssub.s32 16, 16
          %157 = vsyncadd [#allocation6], %s156
          %s159 = sshll.u32 [#allocation7], 4
          %s160 = int_to_ptr.vmem [resolvable:$true] %s159
          %162 = dma.hbm_to_vmem [thread:$0]  %s2, 16, %s160, [#allocation6]
        $region20: #{decoder_block_forward.7} parent=11 // pred_fallthru
          _
      $region12: #{decoder_block_forward.7} parent=5 // pred_fallthru
        _
      %p163 = scmp.lt.s32.totalorder %s16, 4
      // Predicated region
      $region21: #{decoder_block_forward.7} parent=5 // pred_check
        %p164 = pneg %p163
      $region22: #{decoder_block_forward.7} parent=5 // pred_check_branch
        %166 = sbr.rel (%p164) target = $region24
      $region23: #{decoder_block_forward.7} parent=5 // pred_region
        // Predicated region
        $region25: #{decoder_block_forward.7} parent=23 // pred_check
          %p167 = pneg %p50
        $region26: #{decoder_block_forward.7} parent=23 // pred_check_branch
          %169 = sbr.rel (%p167) target = $region28
        $region27: #{decoder_block_forward.7} parent=23 // pred_region
          %s170 = sand.u32 %s40, 1
          %s171 = scalar_lea.sflag [#allocation3], %s170
          %s172 = sand.u32 %s40, 1
          %s173 = smul.addr %s172, 512
          %s174 = scalar_lea.vmem [#allocation2], %s173
          %s175 = smul.u32 16, %s24
          %s177 = ssub.s32 8192, 8192
          %178 = vsyncadd %s171, %s177
          %s179 = smul.addr %s175, 4
          %s180 = smul.addr %s23, 128
          %s181 = sadd.s32 %s179, %s180
          %s182 = smul.addr %s181, 128
          %s183 = scalar_lea.hbm %s0, %s182
          %s184 = sshll.u32 %s174, 4
          %s185 = int_to_ptr.vmem [resolvable:$true] %s184
          %190 = dma.hbm_to_vmem [thread:$0]  %s183, 8192, %s185, %s171, 128, 128, 8
        $region28: #{decoder_block_forward.7} parent=23 // pred_fallthru
          _
      $region24: #{decoder_block_forward.7} parent=5 // pred_fallthru
        _
      %p191 = scmp.le.s32.totalorder 1, %s16
      %p192 = scmp.lt.s32.totalorder %s16, 5
      %p193 = pnand %p191, %p192
      %p194 = pneg %p193
      // Predicated region
      $region29: #{decoder_block_forward.7} parent=5 // pred_check
        _
      $region30: #{decoder_block_forward.7} parent=5 // pred_check_branch
        %196 = sbr.rel (%p193) target = $region32
      $region31: #{decoder_block_forward.7} parent=5 // pred_region
        %s197 = ssub.s32 %s16, 1
        %s198 = sand.u32 %s43, 1
        %s199 = scalar_lea.sflag [#allocation3], %s198
        %s200 = sand.u32 %s43, 1
        %s201 = smul.addr %s200, 512
        %s202 = scalar_lea.vmem [#allocation2], %s201
        // Predicated region
        $region33: #{decoder_block_forward.7} parent=31 // pred_check
          %p203 = pneg %p56
        $region34: #{decoder_block_forward.7} parent=31 // pred_check_branch
          %205 = sbr.rel (%p203) target = $region36
        $region35: #{decoder_block_forward.7} parent=31 // pred_region
          %206 = dma.done %s199, 8192
        $region36: #{decoder_block_forward.7} parent=31 // pred_fallthru
          _
        // Predicated region
        $region37: #{decoder_block_forward.7} parent=31 // pred_check
          %p207 = pneg %p77
        $region38: #{decoder_block_forward.7} parent=31 // pred_check_branch
          %209 = sbr.rel (%p207) target = $region40
        $region39: #{decoder_block_forward.7} parent=31 // pred_region
          %210 = dma.done [#allocation6], 16
        $region40: #{decoder_block_forward.7} parent=31 // pred_fallthru
          _
        // Predicated region
        $region41: #{decoder_block_forward.7} parent=31 // pred_check
          %p211 = pneg %p98
        $region42: #{decoder_block_forward.7} parent=31 // pred_check_branch
          %213 = sbr.rel (%p211) target = $region44
        $region43: #{decoder_block_forward.7} parent=31 // pred_region
          %214 = dma.done [#allocation6], 16
        $region44: #{decoder_block_forward.7} parent=31 // pred_fallthru
          _
        %s215 = sand.u32 %s43, 1
        %s216 = scalar_lea.sflag [#allocation3], %s215
        %s217 = sand.u32 %s43, 1
        %s218 = smul.addr %s217, 512
        %s219 = scalar_lea.vmem [#allocation2], %s218
        %p220 = pneg %p56
        %p221 = pneg %p53
        %p222 = pneg %p77
        %p223 = pneg %p74
        %p224 = pneg %p98
        %p225 = pneg %p95
        %p226 = pneg %p126
        %p227 = pneg %p123
        %s228 = sand.u32 %s113, 1
        %s229 = scalar_lea.sflag [#allocation4], %s228
        %s230 = sand.u32 %s113, 1
        %s231 = smul.addr %s230, 512
        %s232 = scalar_lea.vmem [#allocation8], %s231
        %s233 = smul.u32 16, %s26
        %s234 = smul.u32 16, %s26
        %v235 = vld [vmem:[%s202] sm:$0xff]
        %v236 = vld [vmem:[%s202 + $0x8] sm:$0xff]
        %v237 = vld [vmem:[%s202 + $0x10] sm:$0xff]
        %v238 = vld [vmem:[%s202 + $0x18] sm:$0xff]
        %v239 = vld [vmem:[%s202 + $0x20] sm:$0xff]
        %v240 = vld [vmem:[%s202 + $0x28] sm:$0xff]
        %v241 = vld [vmem:[%s202 + $0x30] sm:$0xff]
        %v242 = vld [vmem:[%s202 + $0x38] sm:$0xff]
        %v243 = vld [vmem:[%s202 + $0x40] sm:$0xff]
        %v244 = vld [vmem:[%s202 + $0x48] sm:$0xff]
        %v245 = vld [vmem:[%s202 + $0x50] sm:$0xff]
        %v246 = vld [vmem:[%s202 + $0x58] sm:$0xff]
        %v247 = vld [vmem:[%s202 + $0x60] sm:$0xff]
        %v248 = vld [vmem:[%s202 + $0x68] sm:$0xff]
        %v249 = vld [vmem:[%s202 + $0x70] sm:$0xff]
        %v250 = vld [vmem:[%s202 + $0x78] sm:$0xff]
        %v251 = vld [vmem:[%s202 + $0x80] sm:$0xff]
        %v252 = vld [vmem:[%s202 + $0x88] sm:$0xff]
        %v253 = vld [vmem:[%s202 + $0x90] sm:$0xff]
        %v254 = vld [vmem:[%s202 + $0x98] sm:$0xff]
        %v255 = vld [vmem:[%s202 + $0xa0] sm:$0xff]
        %v256 = vld [vmem:[%s202 + $0xa8] sm:$0xff]
        %v257 = vld [vmem:[%s202 + $0xb0] sm:$0xff]
        %v258 = vld [vmem:[%s202 + $0xb8] sm:$0xff]
        %v259 = vld [vmem:[%s202 + $0xc0] sm:$0xff]
        %v260 = vld [vmem:[%s202 + $0xc8] sm:$0xff]
        %v261 = vld [vmem:[%s202 + $0xd0] sm:$0xff]
        %v262 = vld [vmem:[%s202 + $0xd8] sm:$0xff]
        %v263 = vld [vmem:[%s202 + $0xe0] sm:$0xff]
        %v264 = vld [vmem:[%s202 + $0xe8] sm:$0xff]
        %v265 = vld [vmem:[%s202 + $0xf0] sm:$0xff]
        %v266 = vld [vmem:[%s202 + $0xf8] sm:$0xff]
        %v267 = vld [vmem:[%s202 + $0x100] sm:$0xff]
        %v268 = vld [vmem:[%s202 + $0x108] sm:$0xff]
        %v269 = vld [vmem:[%s202 + $0x110] sm:$0xff]
        %v270 = vld [vmem:[%s202 + $0x118] sm:$0xff]
        %v271 = vld [vmem:[%s202 + $0x120] sm:$0xff]
        %v272 = vld [vmem:[%s202 + $0x128] sm:$0xff]
        %v273 = vld [vmem:[%s202 + $0x130] sm:$0xff]
        %v274 = vld [vmem:[%s202 + $0x138] sm:$0xff]
        %v275 = vld [vmem:[%s202 + $0x140] sm:$0xff]
        %v276 = vld [vmem:[%s202 + $0x148] sm:$0xff]
        %v277 = vld [vmem:[%s202 + $0x150] sm:$0xff]
        %v278 = vld [vmem:[%s202 + $0x158] sm:$0xff]
        %v279 = vld [vmem:[%s202 + $0x160] sm:$0xff]
        %v280 = vld [vmem:[%s202 + $0x168] sm:$0xff]
        %v281 = vld [vmem:[%s202 + $0x170] sm:$0xff]
        %v282 = vld [vmem:[%s202 + $0x178] sm:$0xff]
        %v283 = vld [vmem:[%s202 + $0x180] sm:$0xff]
        %v284 = vld [vmem:[%s202 + $0x188] sm:$0xff]
        %v285 = vld [vmem:[%s202 + $0x190] sm:$0xff]
        %v286 = vld [vmem:[%s202 + $0x198] sm:$0xff]
        %v287 = vld [vmem:[%s202 + $0x1a0] sm:$0xff]
        %v288 = vld [vmem:[%s202 + $0x1a8] sm:$0xff]
        %v289 = vld [vmem:[%s202 + $0x1b0] sm:$0xff]
        %v290 = vld [vmem:[%s202 + $0x1b8] sm:$0xff]
        %v291 = vld [vmem:[%s202 + $0x1c0] sm:$0xff]
        %v292 = vld [vmem:[%s202 + $0x1c8] sm:$0xff]
        %v293 = vld [vmem:[%s202 + $0x1d0] sm:$0xff]
        %v294 = vld [vmem:[%s202 + $0x1d8] sm:$0xff]
        %v295 = vld [vmem:[%s202 + $0x1e0] sm:$0xff]
        %v296 = vld [vmem:[%s202 + $0x1e8] sm:$0xff]
        %v297 = vld [vmem:[%s202 + $0x1f0] sm:$0xff]
        %v298 = vld [vmem:[%s202 + $0x1f8] sm:$0xff]
        %v299 = vld [vmem:[#allocation5] sm:$0x1]
        %v301 = vlaneseq
        %v302 = vshrl.u32 %v301, 7
        %v303 = vsub.s32 0, %v302
        %v304 = vrot.slane %v299, %v303
        %v306 = vmul.f32 %v235, %v304
        %v307 = vmul.f32 %v236, %v304
        %v308 = vmul.f32 %v237, %v304
        %v309 = vmul.f32 %v238, %v304
        %v310 = vmul.f32 %v239, %v304
        %v311 = vmul.f32 %v240, %v304
        %v312 = vmul.f32 %v241, %v304
        %v313 = vmul.f32 %v242, %v304
        %v314 = vmul.f32 %v243, %v304
        %v315 = vmul.f32 %v244, %v304
        %v316 = vmul.f32 %v245, %v304
        %v317 = vmul.f32 %v246, %v304
        %v318 = vmul.f32 %v247, %v304
        %v319 = vmul.f32 %v248, %v304
        %v320 = vmul.f32 %v249, %v304
        %v321 = vmul.f32 %v250, %v304
        %v322 = vmul.f32 %v251, %v304
        %v323 = vmul.f32 %v252, %v304
        %v324 = vmul.f32 %v253, %v304
        %v325 = vmul.f32 %v254, %v304
        %v326 = vmul.f32 %v255, %v304
        %v327 = vmul.f32 %v256, %v304
        %v328 = vmul.f32 %v257, %v304
        %v329 = vmul.f32 %v258, %v304
        %v330 = vmul.f32 %v259, %v304
        %v331 = vmul.f32 %v260, %v304
        %v332 = vmul.f32 %v261, %v304
        %v333 = vmul.f32 %v262, %v304
        %v334 = vmul.f32 %v263, %v304
        %v335 = vmul.f32 %v264, %v304
        %v336 = vmul.f32 %v265, %v304
        %v337 = vmul.f32 %v266, %v304
        %v338 = vmul.f32 %v267, %v304
        %v339 = vmul.f32 %v268, %v304
        %v340 = vmul.f32 %v269, %v304
        %v341 = vmul.f32 %v270, %v304
        %v342 = vmul.f32 %v271, %v304
        %v343 = vmul.f32 %v272, %v304
        %v344 = vmul.f32 %v273, %v304
        %v345 = vmul.f32 %v274, %v304
        %v346 = vmul.f32 %v275, %v304
        %v347 = vmul.f32 %v276, %v304
        %v348 = vmul.f32 %v277, %v304
        %v349 = vmul.f32 %v278, %v304
        %v350 = vmul.f32 %v279, %v304
        %v351 = vmul.f32 %v280, %v304
        %v352 = vmul.f32 %v281, %v304
        %v353 = vmul.f32 %v282, %v304
        %v354 = vmul.f32 %v283, %v304
        %v355 = vmul.f32 %v284, %v304
        %v356 = vmul.f32 %v285, %v304
        %v357 = vmul.f32 %v286, %v304
        %v358 = vmul.f32 %v287, %v304
        %v359 = vmul.f32 %v288, %v304
        %v360 = vmul.f32 %v289, %v304
        %v361 = vmul.f32 %v290, %v304
        %v362 = vmul.f32 %v291, %v304
        %v363 = vmul.f32 %v292, %v304
        %v364 = vmul.f32 %v293, %v304
        %v365 = vmul.f32 %v294, %v304
        %v366 = vmul.f32 %v295, %v304
        %v367 = vmul.f32 %v296, %v304
        %v368 = vmul.f32 %v297, %v304
        %v369 = vmul.f32 %v298, %v304
        %v370 = vld [vmem:[#allocation7] sm:$0x1]
        %v372 = vlaneseq
        %v373 = vshrl.u32 %v372, 7
        %v374 = vsub.s32 0, %v373
        %v375 = vrot.slane %v370, %v374
        %v377 = vadd.f32 %v306, %v375
        %v378 = vadd.f32 %v307, %v375
        %v379 = vadd.f32 %v308, %v375
        %v380 = vadd.f32 %v309, %v375
        %v381 = vadd.f32 %v310, %v375
        %v382 = vadd.f32 %v311, %v375
        %v383 = vadd.f32 %v312, %v375
        %v384 = vadd.f32 %v313, %v375
        %v385 = vadd.f32 %v314, %v375
        %v386 = vadd.f32 %v315, %v375
        %v387 = vadd.f32 %v316, %v375
        %v388 = vadd.f32 %v317, %v375
        %v389 = vadd.f32 %v318, %v375
        %v390 = vadd.f32 %v319, %v375
        %v391 = vadd.f32 %v320, %v375
        %v392 = vadd.f32 %v321, %v375
        %v393 = vadd.f32 %v322, %v375
        %v394 = vadd.f32 %v323, %v375
        %v395 = vadd.f32 %v324, %v375
        %v396 = vadd.f32 %v325, %v375
        %v397 = vadd.f32 %v326, %v375
        %v398 = vadd.f32 %v327, %v375
        %v399 = vadd.f32 %v328, %v375
        %v400 = vadd.f32 %v329, %v375
        %v401 = vadd.f32 %v330, %v375
        %v402 = vadd.f32 %v331, %v375
        %v403 = vadd.f32 %v332, %v375
        %v404 = vadd.f32 %v333, %v375
        %v405 = vadd.f32 %v334, %v375
        %v406 = vadd.f32 %v335, %v375
        %v407 = vadd.f32 %v336, %v375
        %v408 = vadd.f32 %v337, %v375
        %v409 = vadd.f32 %v338, %v375
        %v410 = vadd.f32 %v339, %v375
        %v411 = vadd.f32 %v340, %v375
        %v412 = vadd.f32 %v341, %v375
        %v413 = vadd.f32 %v342, %v375
        %v414 = vadd.f32 %v343, %v375
        %v415 = vadd.f32 %v344, %v375
        %v416 = vadd.f32 %v345, %v375
        %v417 = vadd.f32 %v346, %v375
        %v418 = vadd.f32 %v347, %v375
        %v419 = vadd.f32 %v348, %v375
        %v420 = vadd.f32 %v349, %v375
        %v421 = vadd.f32 %v350, %v375
        %v422 = vadd.f32 %v351, %v375
        %v423 = vadd.f32 %v352, %v375
        %v424 = vadd.f32 %v353, %v375
        %v425 = vadd.f32 %v354, %v375
        %v426 = vadd.f32 %v355, %v375
        %v427 = vadd.f32 %v356, %v375
        %v428 = vadd.f32 %v357, %v375
        %v429 = vadd.f32 %v358, %v375
        %v430 = vadd.f32 %v359, %v375
        %v431 = vadd.f32 %v360, %v375
        %v432 = vadd.f32 %v361, %v375
        %v433 = vadd.f32 %v362, %v375
        %v434 = vadd.f32 %v363, %v375
        %v435 = vadd.f32 %v364, %v375
        %v436 = vadd.f32 %v365, %v375
        %v437 = vadd.f32 %v366, %v375
        %v438 = vadd.f32 %v367, %v375
        %v439 = vadd.f32 %v368, %v375
        %v440 = vadd.f32 %v369, %v375
        %v441 = vmax.f32 %v377, 0.0
        %v442 = vmax.f32 %v378, 0.0
        %v443 = vmax.f32 %v379, 0.0
        %v444 = vmax.f32 %v380, 0.0
        %v445 = vmax.f32 %v381, 0.0
        %v446 = vmax.f32 %v382, 0.0
        %v447 = vmax.f32 %v383, 0.0
        %v448 = vmax.f32 %v384, 0.0
        %v449 = vmax.f32 %v385, 0.0
        %v450 = vmax.f32 %v386, 0.0
        %v451 = vmax.f32 %v387, 0.0
        %v452 = vmax.f32 %v388, 0.0
        %v453 = vmax.f32 %v389, 0.0
        %v454 = vmax.f32 %v390, 0.0
        %v455 = vmax.f32 %v391, 0.0
        %v456 = vmax.f32 %v392, 0.0
        %v457 = vmax.f32 %v393, 0.0
        %v458 = vmax.f32 %v394, 0.0
        %v459 = vmax.f32 %v395, 0.0
        %v460 = vmax.f32 %v396, 0.0
        %v461 = vmax.f32 %v397, 0.0
        %v462 = vmax.f32 %v398, 0.0
        %v463 = vmax.f32 %v399, 0.0
        %v464 = vmax.f32 %v400, 0.0
        %v465 = vmax.f32 %v401, 0.0
        %v466 = vmax.f32 %v402, 0.0
        %v467 = vmax.f32 %v403, 0.0
        %v468 = vmax.f32 %v404, 0.0
        %v469 = vmax.f32 %v405, 0.0
        %v470 = vmax.f32 %v406, 0.0
        %v471 = vmax.f32 %v407, 0.0
        %v472 = vmax.f32 %v408, 0.0
        %v473 = vmax.f32 %v409, 0.0
        %v474 = vmax.f32 %v410, 0.0
        %v475 = vmax.f32 %v411, 0.0
        %v476 = vmax.f32 %v412, 0.0
        %v477 = vmax.f32 %v413, 0.0
        %v478 = vmax.f32 %v414, 0.0
        %v479 = vmax.f32 %v415, 0.0
        %v480 = vmax.f32 %v416, 0.0
        %v481 = vmax.f32 %v417, 0.0
        %v482 = vmax.f32 %v418, 0.0
        %v483 = vmax.f32 %v419, 0.0
        %v484 = vmax.f32 %v420, 0.0
        %v485 = vmax.f32 %v421, 0.0
        %v486 = vmax.f32 %v422, 0.0
        %v487 = vmax.f32 %v423, 0.0
        %v488 = vmax.f32 %v424, 0.0
        %v489 = vmax.f32 %v425, 0.0
        %v490 = vmax.f32 %v426, 0.0
        %v491 = vmax.f32 %v427, 0.0
        %v492 = vmax.f32 %v428, 0.0
        %v493 = vmax.f32 %v429, 0.0
        %v494 = vmax.f32 %v430, 0.0
        %v495 = vmax.f32 %v431, 0.0
        %v496 = vmax.f32 %v432, 0.0
        %v497 = vmax.f32 %v433, 0.0
        %v498 = vmax.f32 %v434, 0.0
        %v499 = vmax.f32 %v435, 0.0
        %v500 = vmax.f32 %v436, 0.0
        %v501 = vmax.f32 %v437, 0.0
        %v502 = vmax.f32 %v438, 0.0
        %v503 = vmax.f32 %v439, 0.0
        %v504 = vmax.f32 %v440, 0.0
        %vm505 = vcmask 64512
        %506 = vst.msk [vmem:[%s232] sm:$0xff] %vm505, %v441
        %507 = vst.msk [vmem:[%s232 + $0x8] sm:$0xff] %vm505, %v442
        %508 = vst.msk [vmem:[%s232 + $0x10] sm:$0xff] %vm505, %v443
        %509 = vst.msk [vmem:[%s232 + $0x18] sm:$0xff] %vm505, %v444
        %510 = vst.msk [vmem:[%s232 + $0x20] sm:$0xff] %vm505, %v445
        %511 = vst.msk [vmem:[%s232 + $0x28] sm:$0xff] %vm505, %v446
        %512 = vst.msk [vmem:[%s232 + $0x30] sm:$0xff] %vm505, %v447
        %513 = vst.msk [vmem:[%s232 + $0x38] sm:$0xff] %vm505, %v448
        %514 = vst.msk [vmem:[%s232 + $0x40] sm:$0xff] %vm505, %v449
        %515 = vst.msk [vmem:[%s232 + $0x48] sm:$0xff] %vm505, %v450
        %516 = vst.msk [vmem:[%s232 + $0x50] sm:$0xff] %vm505, %v451
        %517 = vst.msk [vmem:[%s232 + $0x58] sm:$0xff] %vm505, %v452
        %518 = vst.msk [vmem:[%s232 + $0x60] sm:$0xff] %vm505, %v453
        %519 = vst.msk [vmem:[%s232 + $0x68] sm:$0xff] %vm505, %v454
        %520 = vst.msk [vmem:[%s232 + $0x70] sm:$0xff] %vm505, %v455
        %521 = vst.msk [vmem:[%s232 + $0x78] sm:$0xff] %vm505, %v456
        %522 = vst.msk [vmem:[%s232 + $0x80] sm:$0xff] %vm505, %v457
        %523 = vst.msk [vmem:[%s232 + $0x88] sm:$0xff] %vm505, %v458
        %524 = vst.msk [vmem:[%s232 + $0x90] sm:$0xff] %vm505, %v459
        %525 = vst.msk [vmem:[%s232 + $0x98] sm:$0xff] %vm505, %v460
        %526 = vst.msk [vmem:[%s232 + $0xa0] sm:$0xff] %vm505, %v461
        %527 = vst.msk [vmem:[%s232 + $0xa8] sm:$0xff] %vm505, %v462
        %528 = vst.msk [vmem:[%s232 + $0xb0] sm:$0xff] %vm505, %v463
        %529 = vst.msk [vmem:[%s232 + $0xb8] sm:$0xff] %vm505, %v464
        %530 = vst.msk [vmem:[%s232 + $0xc0] sm:$0xff] %vm505, %v465
        %531 = vst.msk [vmem:[%s232 + $0xc8] sm:$0xff] %vm505, %v466
        %532 = vst.msk [vmem:[%s232 + $0xd0] sm:$0xff] %vm505, %v467
        %533 = vst.msk [vmem:[%s232 + $0xd8] sm:$0xff] %vm505, %v468
        %534 = vst.msk [vmem:[%s232 + $0xe0] sm:$0xff] %vm505, %v469
        %535 = vst.msk [vmem:[%s232 + $0xe8] sm:$0xff] %vm505, %v470
        %536 = vst.msk [vmem:[%s232 + $0xf0] sm:$0xff] %vm505, %v471
        %537 = vst.msk [vmem:[%s232 + $0xf8] sm:$0xff] %vm505, %v472
        %538 = vst.msk [vmem:[%s232 + $0x100] sm:$0xff] %vm505, %v473
        %539 = vst.msk [vmem:[%s232 + $0x108] sm:$0xff] %vm505, %v474
        %540 = vst.msk [vmem:[%s232 + $0x110] sm:$0xff] %vm505, %v475
        %541 = vst.msk [vmem:[%s232 + $0x118] sm:$0xff] %vm505, %v476
        %542 = vst.msk [vmem:[%s232 + $0x120] sm:$0xff] %vm505, %v477
        %543 = vst.msk [vmem:[%s232 + $0x128] sm:$0xff] %vm505, %v478
        %544 = vst.msk [vmem:[%s232 + $0x130] sm:$0xff] %vm505, %v479
        %545 = vst.msk [vmem:[%s232 + $0x138] sm:$0xff] %vm505, %v480
        %546 = vst.msk [vmem:[%s232 + $0x140] sm:$0xff] %vm505, %v481
        %547 = vst.msk [vmem:[%s232 + $0x148] sm:$0xff] %vm505, %v482
        %548 = vst.msk [vmem:[%s232 + $0x150] sm:$0xff] %vm505, %v483
        %549 = vst.msk [vmem:[%s232 + $0x158] sm:$0xff] %vm505, %v484
        %550 = vst.msk [vmem:[%s232 + $0x160] sm:$0xff] %vm505, %v485
        %551 = vst.msk [vmem:[%s232 + $0x168] sm:$0xff] %vm505, %v486
        %552 = vst.msk [vmem:[%s232 + $0x170] sm:$0xff] %vm505, %v487
        %553 = vst.msk [vmem:[%s232 + $0x178] sm:$0xff] %vm505, %v488
        %554 = vst.msk [vmem:[%s232 + $0x180] sm:$0xff] %vm505, %v489
        %555 = vst.msk [vmem:[%s232 + $0x188] sm:$0xff] %vm505, %v490
        %556 = vst.msk [vmem:[%s232 + $0x190] sm:$0xff] %vm505, %v491
        %557 = vst.msk [vmem:[%s232 + $0x198] sm:$0xff] %vm505, %v492
        %558 = vst.msk [vmem:[%s232 + $0x1a0] sm:$0xff] %vm505, %v493
        %559 = vst.msk [vmem:[%s232 + $0x1a8] sm:$0xff] %vm505, %v494
        %560 = vst.msk [vmem:[%s232 + $0x1b0] sm:$0xff] %vm505, %v495
        %561 = vst.msk [vmem:[%s232 + $0x1b8] sm:$0xff] %vm505, %v496
        %562 = vst.msk [vmem:[%s232 + $0x1c0] sm:$0xff] %vm505, %v497
        %563 = vst.msk [vmem:[%s232 + $0x1c8] sm:$0xff] %vm505, %v498
        %564 = vst.msk [vmem:[%s232 + $0x1d0] sm:$0xff] %vm505, %v499
        %565 = vst.msk [vmem:[%s232 + $0x1d8] sm:$0xff] %vm505, %v500
        %566 = vst.msk [vmem:[%s232 + $0x1e0] sm:$0xff] %vm505, %v501
        %567 = vst.msk [vmem:[%s232 + $0x1e8] sm:$0xff] %vm505, %v502
        %568 = vst.msk [vmem:[%s232 + $0x1f0] sm:$0xff] %vm505, %v503
        %569 = vst.msk [vmem:[%s232 + $0x1f8] sm:$0xff] %vm505, %v504
        %s570 = sand.u32 %s113, 1
        %s571 = scalar_lea.sflag [#allocation4], %s570
        %s572 = sand.u32 %s113, 1
        %s573 = smul.addr %s572, 512
        %s574 = scalar_lea.vmem [#allocation8], %s573
        // Predicated region
        $region45: #{decoder_block_forward.7} parent=31 // pred_check
          %p575 = pneg %p123
        $region46: #{decoder_block_forward.7} parent=31 // pred_check_branch
          %577 = sbr.rel (%p575) target = $region48
        $region47: #{decoder_block_forward.7} parent=31 // pred_region
          %s578 = smul.u32 16, %s26
          %s580 = ssub.s32 8192, 8192
          %581 = vsyncadd %s571, %s580
          %s582 = smul.addr %s578, 4
          %s583 = smul.addr %s25, 128
          %s584 = sadd.s32 %s582, %s583
          %s585 = smul.addr %s584, 128
          %s586 = scalar_lea.hbm %s3, %s585
          %s587 = sshll.u32 %s574, 4
          %s588 = int_to_ptr.vmem [resolvable:$true] %s587
          %593 = dma.vmem_to_hbm [thread:$0]  %s588, 8192, %s586, %s571, 128, 128, 8
        $region48: #{decoder_block_forward.7} parent=31 // pred_fallthru
          _
      $region32: #{decoder_block_forward.7} parent=5 // pred_fallthru
        _
      %p594 = scmp.le.s32.totalorder 2, %s16
      // Predicated region
      $region49: #{decoder_block_forward.7} parent=5 // pred_check
        %p595 = pneg %p594
      $region50: #{decoder_block_forward.7} parent=5 // pred_check_branch
        %597 = sbr.rel (%p595) target = $region52
      $region51: #{decoder_block_forward.7} parent=5 // pred_region
        %s598 = ssub.s32 %s16, 2
        // Predicated region
        $region53: #{decoder_block_forward.7} parent=51 // pred_check
          %p599 = pneg %p129
        $region54: #{decoder_block_forward.7} parent=51 // pred_check_branch
          %601 = sbr.rel (%p599) target = $region56
        $region55: #{decoder_block_forward.7} parent=51 // pred_region
          %s602 = sand.u32 %s114, 1
          %s603 = scalar_lea.sflag [#allocation4], %s602
          %s604 = sand.u32 %s114, 1
          %s605 = smul.addr %s604, 512
          %s606 = scalar_lea.vmem [#allocation8], %s605
          %607 = dma.done %s603, 8192
        $region56: #{decoder_block_forward.7} parent=51 // pred_fallthru
          _
      $region52: #{decoder_block_forward.7} parent=5 // pred_fallthru
        _
    $region6: #{decoder_block_forward.7} parent=1 // loop_footer
      %s20 = sadd.s32 1, %s16
    $region7: #{decoder_block_forward.7} parent=1 // loop_footer_branch
      %15 = sbr.rel target = $region3
    $region8: #{decoder_block_forward.7} parent=1 // loop_exit
      _
    %608 = vsyncpa [#allocation3], 1
    %s609 = scalar_lea.sflag [#allocation3], 1
    %610 = vsyncpa %s609, 1
    %611 = vsyncpa [#allocation6], 1
    %612 = vsyncpa [#allocation4], 1
    %s613 = scalar_lea.sflag [#allocation4], 1
    %614 = vsyncpa %s613, 1

// kernel: decoder_block_forward.5
$region0: #{decoder_block_forward.5}
  #allocation0 [shape = 'u32[]', space=smem, size = 0x4, offset = 0x4, fixed_abs, tag = 'smem constant byte address 0x4 - core index']
  #allocation1 [shape = 'u32[144,128]{1,0:T(1,128)}', space=vmem, size = 0x12000, scoped, tag = 'internal scratch']
  %s0 = inlined_call_operand.hbm [shape: bf16[2,2,18,34,8], index: 0, kind: input, shape index: {}]
  %s1 = inlined_call_operand.hbm [shape: bf16[2,2,18,34,8], index: 1, kind: input, shape index: {}]
  %s2 = inlined_call_operand.hbm [shape: bf16[144,8], index: 2, kind: input, shape index: {}]
  %s3 = inlined_call_operand.hbm [shape: f32[1,8], index: 3, kind: input, shape index: {}]
  %s4 = inlined_call_operand.hbm [shape: bf16[2,32,32,8], index: 4, kind: output, shape index: {0}]
  %s5 = inlined_call_operand.hbm [shape: f32[2,2,1,8], index: 5, kind: output, shape index: {1}]
  %s6 = inlined_call_operand.hbm [shape: f32[2,2,1,8], index: 6, kind: output, shape index: {2}]
  %7 = xla_tuple %s4, %s5, %s6
  %s8 = sld [smem:[#allocation0]]
  $region81: #{decoder_block_forward.5} parent=0
    _
  %s10 = ssub.s32 1, %s8
  %s11 = scalar_select 0, %s10, %s8
  $region1: #{decoder_block_forward.5} parent=0
    #allocation2 [shape = 'u8[368640]{0}', space=vmem, size = 0x5a000, scoped, tag = 'input window, operand 0']
    #allocation3 [shape = 's32[2]{0}', space=sflag, size = 0x8, scoped, tag = 'scoped memory for decoder_block_forward.5']
    #allocation4 [shape = 's32[2]{0}', space=sflag, size = 0x8, scoped, tag = 'scoped memory for decoder_block_forward.5']
    #allocation5 [shape = 'u8[368640]{0}', space=vmem, size = 0x5a000, scoped, tag = 'input window, operand 1']
    #allocation6 [shape = 's32[2]{0}', space=sflag, size = 0x8, scoped, tag = 'scoped memory for decoder_block_forward.5']
    #allocation7 [shape = 'u8[36864]{0}', space=vmem, size = 0x9000, scoped, tag = 'input window, operand 2, single buffered']
    #allocation8 [shape = 'u8[512]{0}', space=vmem, size = 0x400, scoped, tag = 'input window, operand 3, single buffered']
    #allocation9 [shape = 's32[1]{0}', space=sflag, size = 0x4, scoped, tag = 'scoped memory for decoder_block_forward.5']
    #allocation10 [shape = 'u8[262144]{0}', space=vmem, size = 0x40000, scoped, tag = 'output window, operand 0']
    #allocation11 [shape = 'u8[1024]{0}', space=vmem, size = 0x400, scoped, tag = 'output window, operand 1']
    #allocation12 [shape = 's32[2]{0}', space=sflag, size = 0x8, scoped, tag = 'scoped memory for decoder_block_forward.5']
    #allocation13 [shape = 'u8[1024]{0}', space=vmem, size = 0x400, scoped, tag = 'output window, operand 2']
    %12 = vsyncpa [#allocation3], 0
    %s13 = scalar_lea.sflag [#allocation3], 1
    %14 = vsyncpa %s13, 0
    %15 = vsyncpa [#allocation6], 0
    %s16 = scalar_lea.sflag [#allocation6], 1
    %17 = vsyncpa %s16, 0
    %18 = vsyncpa [#allocation9], 0
    %19 = vsyncpa [#allocation4], 0
    %s20 = scalar_lea.sflag [#allocation4], 1
    %21 = vsyncpa %s20, 0
    %22 = vsyncpa [#allocation12], 0
    %s23 = scalar_lea.sflag [#allocation12], 1
    %24 = vsyncpa %s23, 0
    loop: start=0, step=1, limit=6
    $region2: #{decoder_block_forward.5} parent=1 // loop_pre_header
      _
    $region3: #{decoder_block_forward.5} parent=1 // loop_header
      %s26 = sphi 0, %s30
      %p27 = scmp.ge.s32.totalorder %s26, 6
      %s33 = sphi 0, %s45
      %s34 = sphi 0, %s41
      %s35 = sphi 0, %s33
      %s36 = sphi 0, %s34
      %s37 = sphi 0, %s35
      %s38 = sphi 0, %s36
      %s50 = sphi 0, %s52
      %s53 = sphi 0, %s50
      %s54 = sphi 0, %s53
      %s70 = sphi 0, %s54
      %s78 = sphi 0, %s80
      %s81 = sphi 0, %s78
      %s82 = sphi 0, %s81
      %s98 = sphi 0, %s82
      %s102 = sphi 0, %s102
      %s104 = sphi 0, %s102
      %s105 = sphi 0, %s104
      %s119 = sphi 0, %s105
      %s123 = sphi 0, %s123
      %s125 = sphi 0, %s123
      %s126 = sphi 0, %s125
      %s140 = sphi 0, %s126
      %s148 = sphi 0, %s150
      %s151 = sphi 0, %s148
      %s152 = sphi 0, %s151
      %s168 = sphi 0, %s152
      %s176 = sphi 0, %s178
      %s179 = sphi 0, %s176
      %s180 = sphi 0, %s179
      %s196 = sphi 0, %s180
      %s204 = sphi 0, %s206
      %s207 = sphi 0, %s204
      %s208 = sphi 0, %s207
      %s224 = sphi 0, %s208
    $region4: #{decoder_block_forward.5} parent=1 // loop_header_branch
      %29 = sbr.rel (%p27) target = $region8
    $region5: #{decoder_block_forward.5} parent=1 // loop_body
      %s31 = ssub.s32 %s26, 1
      %s32 = ssub.s32 %s26, 2
      %s39 = sadd.s32 1, %s34
      %p40 = scmp.ge.s32.totalorder %s39, 2
      %s41 = scalar_select %p40, 0, %s39
      %s42 = sadd.s32 1, %s33
      %s43 = scalar_select %p40, %s42, %s33
      %p44 = scmp.ge.s32.totalorder %s43, 2
      %s45 = scalar_select %p44, 0, %s43
      %s46 = ssub.s32 %s33, %s45
      %s47 = ssub.s32 %s34, %s41
      %s48 = sor.u32 %s46, %s47
      %p49 = scmp.eq.s32.totalorder %s48, 0
      %s51 = sadd.s32 %s50, 1
      %s52 = scalar_select %p49, %s50, %s51
      %p55 = pneg %p49
      %p56 = scmp.eq.s32.totalorder %s26, 3
      %p57 = por %p55, %p56
      %p58 = scmp.ne.s32.totalorder %s50, %s53
      %p59 = scmp.eq.s32.totalorder %s26, 0
      %p60 = por %p58, %p59
      %p61 = scmp.ne.s32.totalorder %s50, %s53
      %p62 = scmp.eq.s32.totalorder %s31, 3
      %p63 = por %p61, %p62
      %p64 = scmp.ne.s32.totalorder %s53, %s54
      %p65 = scmp.eq.s32.totalorder %s31, 0
      %p66 = por %p64, %p65
      %p67 = scmp.ne.s32.totalorder %s53, %s54
      %p68 = scmp.eq.s32.totalorder %s32, 3
      %p69 = por %p67, %p68
      %p71 = scmp.ne.s32.totalorder %s54, %s70
      %p72 = scmp.eq.s32.totalorder %s32, 0
      %p73 = por %p71, %p72
      %s74 = ssub.s32 %s33, %s45
      %s75 = ssub.s32 %s34, %s41
      %s76 = sor.u32 %s74, %s75
      %p77 = scmp.eq.s32.totalorder %s76, 0
      %s79 = sadd.s32 %s78, 1
      %s80 = scalar_select %p77, %s78, %s79
      %p83 = pneg %p77
      %p84 = scmp.eq.s32.totalorder %s26, 3
      %p85 = por %p83, %p84
      %p86 = scmp.ne.s32.totalorder %s78, %s81
      %p87 = scmp.eq.s32.totalorder %s26, 0
      %p88 = por %p86, %p87
      %p89 = scmp.ne.s32.totalorder %s78, %s81
      %p90 = scmp.eq.s32.totalorder %s31, 3
      %p91 = por %p89, %p90
      %p92 = scmp.ne.s32.totalorder %s81, %s82
      %p93 = scmp.eq.s32.totalorder %s31, 0
      %p94 = por %p92, %p93
      %p95 = scmp.ne.s32.totalorder %s81, %s82
      %p96 = scmp.eq.s32.totalorder %s32, 3
      %p97 = por %p95, %p96
      %p99 = scmp.ne.s32.totalorder %s82, %s98
      %p100 = scmp.eq.s32.totalorder %s32, 0
      %p101 = por %p99, %p100
      %s103 = sadd.s32 %s102, 1
      %p106 = scmp.eq.s32.totalorder %s26, 3
      %p107 = scmp.ne.s32.totalorder %s102, %s104
      %p108 = scmp.eq.s32.totalorder %s26, 0
      %p109 = por %p107, %p108
      %p110 = scmp.ne.s32.totalorder %s102, %s104
      %p111 = scmp.eq.s32.totalorder %s31, 3
      %p112 = por %p110, %p111
      %p113 = scmp.ne.s32.totalorder %s104, %s105
      %p114 = scmp.eq.s32.totalorder %s31, 0
      %p115 = por %p113, %p114
      %p116 = scmp.ne.s32.totalorder %s104, %s105
      %p117 = scmp.eq.s32.totalorder %s32, 3
      %p118 = por %p116, %p117
      %p120 = scmp.ne.s32.totalorder %s105, %s119
      %p121 = scmp.eq.s32.totalorder %s32, 0
      %p122 = por %p120, %p121
      %s124 = sadd.s32 %s123, 1
      %p127 = scmp.eq.s32.totalorder %s26, 3
      %p128 = scmp.ne.s32.totalorder %s123, %s125
      %p129 = scmp.eq.s32.totalorder %s26, 0
      %p130 = por %p128, %p129
      %p131 = scmp.ne.s32.totalorder %s123, %s125
      %p132 = scmp.eq.s32.totalorder %s31, 3
      %p133 = por %p131, %p132
      %p134 = scmp.ne.s32.totalorder %s125, %s126
      %p135 = scmp.eq.s32.totalorder %s31, 0
      %p136 = por %p134, %p135
      %p137 = scmp.ne.s32.totalorder %s125, %s126
      %p138 = scmp.eq.s32.totalorder %s32, 3
      %p139 = por %p137, %p138
      %p141 = scmp.ne.s32.totalorder %s126, %s140
      %p142 = scmp.eq.s32.totalorder %s32, 0
      %p143 = por %p141, %p142
      %s144 = ssub.s32 %s33, %s45
      %s145 = ssub.s32 %s34, %s41
      %s146 = sor.u32 %s144, %s145
      %p147 = scmp.eq.s32.totalorder %s146, 0
      %s149 = sadd.s32 %s148, 1
      %s150 = scalar_select %p147, %s148, %s149
      %p153 = pneg %p147
      %p154 = scmp.eq.s32.totalorder %s26, 3
      %p155 = por %p153, %p154
      %p156 = scmp.ne.s32.totalorder %s148, %s151
      %p157 = scmp.eq.s32.totalorder %s26, 0
      %p158 = por %p156, %p157
      %p159 = scmp.ne.s32.totalorder %s148, %s151
      %p160 = scmp.eq.s32.totalorder %s31, 3
      %p161 = por %p159, %p160
      %p162 = scmp.ne.s32.totalorder %s151, %s152
      %p163 = scmp.eq.s32.totalorder %s31, 0
      %p164 = por %p162, %p163
      %p165 = scmp.ne.s32.totalorder %s151, %s152
      %p166 = scmp.eq.s32.totalorder %s32, 3
      %p167 = por %p165, %p166
      %p169 = scmp.ne.s32.totalorder %s152, %s168
      %p170 = scmp.eq.s32.totalorder %s32, 0
      %p171 = por %p169, %p170
      %s172 = ssub.s32 %s33, %s45
      %s173 = ssub.s32 %s34, %s41
      %s174 = sor.u32 %s172, %s173
      %p175 = scmp.eq.s32.totalorder %s174, 0
      %s177 = sadd.s32 %s176, 1
      %s178 = scalar_select %p175, %s176, %s177
      %p181 = pneg %p175
      %p182 = scmp.eq.s32.totalorder %s26, 3
      %p183 = por %p181, %p182
      %p184 = scmp.ne.s32.totalorder %s176, %s179
      %p185 = scmp.eq.s32.totalorder %s26, 0
      %p186 = por %p184, %p185
      %p187 = scmp.ne.s32.totalorder %s176, %s179
      %p188 = scmp.eq.s32.totalorder %s31, 3
      %p189 = por %p187, %p188
      %p190 = scmp.ne.s32.totalorder %s179, %s180
      %p191 = scmp.eq.s32.totalorder %s31, 0
      %p192 = por %p190, %p191
      %p193 = scmp.ne.s32.totalorder %s179, %s180
      %p194 = scmp.eq.s32.totalorder %s32, 3
      %p195 = por %p193, %p194
      %p197 = scmp.ne.s32.totalorder %s180, %s196
      %p198 = scmp.eq.s32.totalorder %s32, 0
      %p199 = por %p197, %p198
      %s200 = ssub.s32 %s33, %s45
      %s201 = ssub.s32 %s34, %s41
      %s202 = sor.u32 %s200, %s201
      %p203 = scmp.eq.s32.totalorder %s202, 0
      %s205 = sadd.s32 %s204, 1
      %s206 = scalar_select %p203, %s204, %s205
      %p209 = pneg %p203
      %p210 = scmp.eq.s32.totalorder %s26, 3
      %p211 = por %p209, %p210
      %p212 = scmp.ne.s32.totalorder %s204, %s207
      %p213 = scmp.eq.s32.totalorder %s26, 0
      %p214 = por %p212, %p213
      %p215 = scmp.ne.s32.totalorder %s204, %s207
      %p216 = scmp.eq.s32.totalorder %s31, 3
      %p217 = por %p215, %p216
      %p218 = scmp.ne.s32.totalorder %s207, %s208
      %p219 = scmp.eq.s32.totalorder %s31, 0
      %p220 = por %p218, %p219
      %p221 = scmp.ne.s32.totalorder %s207, %s208
      %p222 = scmp.eq.s32.totalorder %s32, 3
      %p223 = por %p221, %p222
      %p225 = scmp.ne.s32.totalorder %s208, %s224
      %p226 = scmp.eq.s32.totalorder %s32, 0
      %p227 = por %p225, %p226
      %p228 = scmp.le.s32.totalorder 1, %s26
      %p229 = scmp.lt.s32.totalorder %s26, 5
      %p230 = pnand %p228, %p229
      %p231 = pneg %p230
      // Predicated region
      $region9: #{decoder_block_forward.5} parent=5 // pred_check
        _
      $region10: #{decoder_block_forward.5} parent=5 // pred_check_branch
        %233 = sbr.rel (%p230) target = $region12
      $region11: #{decoder_block_forward.5} parent=5 // pred_region
        %s234 = ssub.s32 %s26, 1
        // Predicated region
        $region13: #{decoder_block_forward.5} parent=11 // pred_check
          %p235 = pneg %p115
        $region14: #{decoder_block_forward.5} parent=11 // pred_check_branch
          %237 = sbr.rel (%p235) target = $region16
        $region15: #{decoder_block_forward.5} parent=11 // pred_region
          %s239 = ssub.s32 1152, 1152
          %240 = vsyncadd [#allocation6], %s239
          %s241 = sshll.u32 [#allocation7], 4
          %s242 = int_to_ptr.vmem [resolvable:$true] %s241
          %247 = dma.hbm_to_vmem [thread:$0]  %s2, 1152, %s242, [#allocation6], 64, 64, 4
        $region16: #{decoder_block_forward.5} parent=11 // pred_fallthru
          _
        // Predicated region
        $region17: #{decoder_block_forward.5} parent=11 // pred_check
          %p248 = pneg %p136
        $region18: #{decoder_block_forward.5} parent=11 // pred_check_branch
          %250 = sbr.rel (%p248) target = $region20
        $region19: #{decoder_block_forward.5} parent=11 // pred_region
          %s252 = ssub.s32 16, 16
          %253 = vsyncadd [#allocation9], %s252
          %s255 = sshll.u32 [#allocation8], 4
          %s256 = int_to_ptr.vmem [resolvable:$true] %s255
          %258 = dma.hbm_to_vmem [thread:$0]  %s3, 16, %s256, [#allocation9]
        $region20: #{decoder_block_forward.5} parent=11 // pred_fallthru
          _
      $region12: #{decoder_block_forward.5} parent=5 // pred_fallthru
        _
      %p259 = scmp.lt.s32.totalorder %s26, 4
      // Predicated region
      $region21: #{decoder_block_forward.5} parent=5 // pred_check
        %p260 = pneg %p259
      $region22: #{decoder_block_forward.5} parent=5 // pred_check_branch
        %262 = sbr.rel (%p260) target = $region24
      $region23: #{decoder_block_forward.5} parent=5 // pred_region
        // Predicated region
        $region25: #{decoder_block_forward.5} parent=23 // pred_check
          %p263 = pneg %p60
        $region26: #{decoder_block_forward.5} parent=23 // pred_check_branch
          %265 = sbr.rel (%p263) target = $region28
        $region27: #{decoder_block_forward.5} parent=23 // pred_region
          %s266 = sand.u32 %s50, 1
          %s267 = scalar_lea.sflag [#allocation3], %s266
          %s268 = sand.u32 %s50, 1
          %s269 = smul.addr %s268, 360
          %s270 = scalar_lea.vmem [#allocation2], %s269
          %s272 = ssub.s32 5760, 5760
          %273 = vsyncadd %s267, %s272
          %s274 = smul.addr %s34, 90
          %s275 = smul.addr %s33, 180
          %s276 = sadd.s32 %s274, %s275
          %s277 = smul.addr %s276, 64
          %s278 = scalar_lea.hbm %s0, %s277
          %s279 = sshll.u32 %s270, 4
          %s280 = int_to_ptr.vmem [resolvable:$true] %s279
          %285 = dma.hbm_to_vmem [thread:$0]  %s278, 5760, %s280, %s267, 64, 64, 4
        $region28: #{decoder_block_forward.5} parent=23 // pred_fallthru
          _
        // Predicated region
        $region29: #{decoder_block_forward.5} parent=23 // pred_check
          %p286 = pneg %p88
        $region30: #{decoder_block_forward.5} parent=23 // pred_check_branch
          %288 = sbr.rel (%p286) target = $region32
        $region31: #{decoder_block_forward.5} parent=23 // pred_region
          %s289 = sand.u32 %s26, 1
          %s290 = scalar_lea.sflag [#allocation6], %s289
          %s291 = sand.u32 %s78, 1
          %s292 = smul.addr %s291, 360
          %s293 = scalar_lea.vmem [#allocation5], %s292
          %s295 = ssub.s32 5760, 5760
          %296 = vsyncadd %s290, %s295
          %s297 = smul.addr %s34, 90
          %s298 = smul.addr %s33, 180
          %s299 = sadd.s32 %s297, %s298
          %s300 = smul.addr %s299, 64
          %s301 = scalar_lea.hbm %s1, %s300
          %s302 = sshll.u32 %s293, 4
          %s303 = int_to_ptr.vmem [resolvable:$true] %s302
          %308 = dma.hbm_to_vmem [thread:$0]  %s301, 5760, %s303, %s290, 64, 64, 4
        $region32: #{decoder_block_forward.5} parent=23 // pred_fallthru
          _
      $region24: #{decoder_block_forward.5} parent=5 // pred_fallthru
        _
      %p309 = scmp.le.s32.totalorder 1, %s26
      %p310 = scmp.lt.s32.totalorder %s26, 5
      %p311 = pnand %p309, %p310
      %p312 = pneg %p311
      // Predicated region
      $region33: #{decoder_block_forward.5} parent=5 // pred_check
        _
      $region34: #{decoder_block_forward.5} parent=5 // pred_check_branch
        %314 = sbr.rel (%p311) target = $region36
      $region35: #{decoder_block_forward.5} parent=5 // pred_region
        %s315 = ssub.s32 %s26, 1
        %s316 = sand.u32 %s53, 1
        %s317 = scalar_lea.sflag [#allocation3], %s316
        %s318 = sand.u32 %s53, 1
        %s319 = smul.addr %s318, 360
        %s320 = scalar_lea.vmem [#allocation2], %s319
        // Predicated region
        $region37: #{decoder_block_forward.5} parent=35 // pred_check
          %p321 = pneg %p66
        $region38: #{decoder_block_forward.5} parent=35 // pred_check_branch
          %323 = sbr.rel (%p321) target = $region40
        $region39: #{decoder_block_forward.5} parent=35 // pred_region
          %324 = dma.done %s317, 5760
        $region40: #{decoder_block_forward.5} parent=35 // pred_fallthru
          _
        %s325 = sand.u32 %s31, 1
        %s326 = scalar_lea.sflag [#allocation6], %s325
        %s327 = sand.u32 %s81, 1
        %s328 = smul.addr %s327, 360
        %s329 = scalar_lea.vmem [#allocation5], %s328
        // Predicated region
        $region41: #{decoder_block_forward.5} parent=35 // pred_check
          %p330 = pneg %p94
        $region42: #{decoder_block_forward.5} parent=35 // pred_check_branch
          %332 = sbr.rel (%p330) target = $region44
        $region43: #{decoder_block_forward.5} parent=35 // pred_region
          %333 = dma.done %s326, 5760
        $region44: #{decoder_block_forward.5} parent=35 // pred_fallthru
          _
        // Predicated region
        $region45: #{decoder_block_forward.5} parent=35 // pred_check
          %p334 = pneg %p115
        $region46: #{decoder_block_forward.5} parent=35 // pred_check_branch
          %336 = sbr.rel (%p334) target = $region48
        $region47: #{decoder_block_forward.5} parent=35 // pred_region
          %337 = dma.done [#allocation6], 1152
        $region48: #{decoder_block_forward.5} parent=35 // pred_fallthru
          _
        // Predicated region
        $region49: #{decoder_block_forward.5} parent=35 // pred_check
          %p338 = pneg %p136
        $region50: #{decoder_block_forward.5} parent=35 // pred_check_branch
          %340 = sbr.rel (%p338) target = $region52
        $region51: #{decoder_block_forward.5} parent=35 // pred_region
          %341 = dma.done [#allocation9], 16
        $region52: #{decoder_block_forward.5} parent=35 // pred_fallthru
          _
        %s342 = sand.u32 %s53, 1
        %s343 = scalar_lea.sflag [#allocation3], %s342
        %s344 = sand.u32 %s53, 1
        %s345 = smul.addr %s344, 360
        %s346 = scalar_lea.vmem [#allocation2], %s345
        %p347 = pneg %p66
        %p348 = pneg %p63
        %s349 = sand.u32 %s31, 1
        %s350 = scalar_lea.sflag [#allocation6], %s349
        %s351 = sand.u32 %s81, 1
        %s352 = smul.addr %s351, 360
        %s353 = scalar_lea.vmem [#allocation5], %s352
        %p354 = pneg %p94
        %p355 = pneg %p91
        %p356 = pneg %p115
        %p357 = pneg %p112
        %p358 = pneg %p136
        %p359 = pneg %p133
        %p360 = pneg %p164
        %p361 = pneg %p161
        %s362 = sand.u32 %s151, 1
        %s363 = scalar_lea.sflag [#allocation4], %s362
        %s364 = sand.u32 %s151, 1
        %s365 = smul.addr %s364, 256
        %s366 = scalar_lea.vmem [#allocation10], %s365
        %p367 = pneg %p192
        %p368 = pneg %p189
        %s369 = sand.u32 %s31, 1
        %s370 = scalar_lea.sflag [#allocation12], %s369
        %s371 = sand.u32 %s179, 1
        %s372 = scalar_lea.vmem [#allocation11], %s371
        %p373 = pneg %p220
        %p374 = pneg %p217
        %s375 = sand.u32 %s31, 1
        %s376 = scalar_lea.sflag [#allocation12], %s375
        %s377 = sand.u32 %s207, 1
        %s378 = scalar_lea.vmem [#allocation13], %s377
        %s379 = smul.u32 16, %s36
        %v381 = vld [vmem:[%s320] sm:$0xf]
        %v382 = vld [vmem:[%s320 + $0x4] sm:$0xf]
        %v383 = vld [vmem:[%s320 + $0x8] sm:$0xf]
        %v384 = vld [vmem:[%s320 + $0xc] sm:$0xf]
        %v385 = vld [vmem:[%s320 + $0x10] sm:$0x1]
        %v386 = vld [vmem:[%s320 + $0x14] sm:$0xf]
        %v387 = vld [vmem:[%s320 + $0x18] sm:$0xf]
        %v388 = vld [vmem:[%s320 + $0x1c] sm:$0xf]
        %v389 = vld [vmem:[%s320 + $0x20] sm:$0xf]
        %v390 = vld [vmem:[%s320 + $0x24] sm:$0x1]
        %v391 = vld [vmem:[%s320 + $0x28] sm:$0xf]
        %v392 = vld [vmem:[%s320 + $0x2c] sm:$0xf]
        %v393 = vld [vmem:[%s320 + $0x30] sm:$0xf]
        %v394 = vld [vmem:[%s320 + $0x34] sm:$0xf]
        %v395 = vld [vmem:[%s320 + $0x38] sm:$0x1]
        %v396 = vld [vmem:[%s320 + $0x3c] sm:$0xf]
        %v397 = vld [vmem:[%s320 + $0x40] sm:$0xf]
        %v398 = vld [vmem:[%s320 + $0x44] sm:$0xf]
        %v399 = vld [vmem:[%s320 + $0x48] sm:$0xf]
        %v400 = vld [vmem:[%s320 + $0x4c] sm:$0x1]
        %v401 = vld [vmem:[%s320 + $0x50] sm:$0xf]
        %v402 = vld [vmem:[%s320 + $0x54] sm:$0xf]
        %v403 = vld [vmem:[%s320 + $0x58] sm:$0xf]
        %v404 = vld [vmem:[%s320 + $0x5c] sm:$0xf]
        %v405 = vld [vmem:[%s320 + $0x60] sm:$0x1]
        %v406 = vld [vmem:[%s320 + $0x64] sm:$0xf]
        %v407 = vld [vmem:[%s320 + $0x68] sm:$0xf]
        %v408 = vld [vmem:[%s320 + $0x6c] sm:$0xf]
        %v409 = vld [vmem:[%s320 + $0x70] sm:$0xf]
        %v410 = vld [vmem:[%s320 + $0x74] sm:$0x1]
        %v411 = vld [vmem:[%s320 + $0x78] sm:$0xf]
        %v412 = vld [vmem:[%s320 + $0x7c] sm:$0xf]
        %v413 = vld [vmem:[%s320 + $0x80] sm:$0xf]
        %v414 = vld [vmem:[%s320 + $0x84] sm:$0xf]
        %v415 = vld [vmem:[%s320 + $0x88] sm:$0x1]
        %v416 = vld [vmem:[%s320 + $0x8c] sm:$0xf]
        %v417 = vld [vmem:[%s320 + $0x90] sm:$0xf]
        %v418 = vld [vmem:[%s320 + $0x94] sm:$0xf]
        %v419 = vld [vmem:[%s320 + $0x98] sm:$0xf]
        %v420 = vld [vmem:[%s320 + $0x9c] sm:$0x1]
        %v421 = vld [vmem:[%s320 + $0xa0] sm:$0xf]
        %v422 = vld [vmem:[%s320 + $0xa4] sm:$0xf]
        %v423 = vld [vmem:[%s320 + $0xa8] sm:$0xf]
        %v424 = vld [vmem:[%s320 + $0xac] sm:$0xf]
        %v425 = vld [vmem:[%s320 + $0xb0] sm:$0x1]
        %v426 = vld [vmem:[%s320 + $0xb4] sm:$0xf]
        %v427 = vld [vmem:[%s320 + $0xb8] sm:$0xf]
        %v428 = vld [vmem:[%s320 + $0xbc] sm:$0xf]
        %v429 = vld [vmem:[%s320 + $0xc0] sm:$0xf]
        %v430 = vld [vmem:[%s320 + $0xc4] sm:$0x1]
        %v431 = vld [vmem:[%s320 + $0xc8] sm:$0xf]
        %v432 = vld [vmem:[%s320 + $0xcc] sm:$0xf]
        %v433 = vld [vmem:[%s320 + $0xd0] sm:$0xf]
        %v434 = vld [vmem:[%s320 + $0xd4] sm:$0xf]
        %v435 = vld [vmem:[%s320 + $0xd8] sm:$0x1]
        %v436 = vld [vmem:[%s320 + $0xdc] sm:$0xf]
        %v437 = vld [vmem:[%s320 + $0xe0] sm:$0xf]
        %v438 = vld [vmem:[%s320 + $0xe4] sm:$0xf]
        %v439 = vld [vmem:[%s320 + $0xe8] sm:$0xf]
        %v440 = vld [vmem:[%s320 + $0xec] sm:$0x1]
        %v441 = vld [vmem:[%s320 + $0xf0] sm:$0xf]
        %v442 = vld [vmem:[%s320 + $0xf4] sm:$0xf]
        %v443 = vld [vmem:[%s320 + $0xf8] sm:$0xf]
        %v444 = vld [vmem:[%s320 + $0xfc] sm:$0xf]
        %v445 = vld [vmem:[%s320 + $0x100] sm:$0x1]
        %v446 = vld [vmem:[%s320 + $0x104] sm:$0xf]
        %v447 = vld [vmem:[%s320 + $0x108] sm:$0xf]
        %v448 = vld [vmem:[%s320 + $0x10c] sm:$0xf]
        %v449 = vld [vmem:[%s320 + $0x110] sm:$0xf]
        %v450 = vld [vmem:[%s320 + $0x114] sm:$0x1]
        %v451 = vld [vmem:[%s320 + $0x118] sm:$0xf]
        %v452 = vld [vmem:[%s320 + $0x11c] sm:$0xf]
        %v453 = vld [vmem:[%s320 + $0x120] sm:$0xf]
        %v454 = vld [vmem:[%s320 + $0x124] sm:$0xf]
        %v455 = vld [vmem:[%s320 + $0x128] sm:$0x1]
        %v456 = vld [vmem:[%s320 + $0x12c] sm:$0xf]
        %v457 = vld [vmem:[%s320 + $0x130] sm:$0xf]
        %v458 = vld [vmem:[%s320 + $0x134] sm:$0xf]
        %v459 = vld [vmem:[%s320 + $0x138] sm:$0xf]
        %v460 = vld [vmem:[%s320 + $0x13c] sm:$0x1]
        %v461 = vld [vmem:[%s320 + $0x140] sm:$0xf]
        %v462 = vld [vmem:[%s320 + $0x144] sm:$0xf]
        %v463 = vld [vmem:[%s320 + $0x148] sm:$0xf]
        %v464 = vld [vmem:[%s320 + $0x14c] sm:$0xf]
        %v465 = vld [vmem:[%s320 + $0x150] sm:$0x1]
        %v466 = vld [vmem:[%s320 + $0x154] sm:$0xf]
        %v467 = vld [vmem:[%s320 + $0x158] sm:$0xf]
        %v468 = vld [vmem:[%s320 + $0x15c] sm:$0xf]
        %v469 = vld [vmem:[%s320 + $0x160] sm:$0xf]
        %v470 = vld [vmem:[%s320 + $0x164] sm:$0x1]
        %v471 = vld [vmem:[%s329] sm:$0xf]
        %v472 = vld [vmem:[%s329 + $0x4] sm:$0xf]
        %v473 = vld [vmem:[%s329 + $0x8] sm:$0xf]
        %v474 = vld [vmem:[%s329 + $0xc] sm:$0xf]
        %v475 = vld [vmem:[%s329 + $0x10] sm:$0x1]
        %v476 = vld [vmem:[%s329 + $0x14] sm:$0xf]
        %v477 = vld [vmem:[%s329 + $0x18] sm:$0xf]
        %v478 = vld [vmem:[%s329 + $0x1c] sm:$0xf]
        %v479 = vld [vmem:[%s329 + $0x20] sm:$0xf]
        %v480 = vld [vmem:[%s329 + $0x24] sm:$0x1]
        %v481 = vld [vmem:[%s329 + $0x28] sm:$0xf]
        %v482 = vld [vmem:[%s329 + $0x2c] sm:$0xf]
        %v483 = vld [vmem:[%s329 + $0x30] sm:$0xf]
        %v484 = vld [vmem:[%s329 + $0x34] sm:$0xf]
        %v485 = vld [vmem:[%s329 + $0x38] sm:$0x1]
        %v486 = vld [vmem:[%s329 + $0x3c] sm:$0xf]
        %v487 = vld [vmem:[%s329 + $0x40] sm:$0xf]
        %v488 = vld [vmem:[%s329 + $0x44] sm:$0xf]
        %v489 = vld [vmem:[%s329 + $0x48] sm:$0xf]
        %v490 = vld [vmem:[%s329 + $0x4c] sm:$0x1]
        %v491 = vld [vmem:[%s329 + $0x50] sm:$0xf]
        %v492 = vld [vmem:[%s329 + $0x54] sm:$0xf]
        %v493 = vld [vmem:[%s329 + $0x58] sm:$0xf]
        %v494 = vld [vmem:[%s329 + $0x5c] sm:$0xf]
        %v495 = vld [vmem:[%s329 + $0x60] sm:$0x1]
        %v496 = vld [vmem:[%s329 + $0x64] sm:$0xf]
        %v497 = vld [vmem:[%s329 + $0x68] sm:$0xf]
        %v498 = vld [vmem:[%s329 + $0x6c] sm:$0xf]
        %v499 = vld [vmem:[%s329 + $0x70] sm:$0xf]
        %v500 = vld [vmem:[%s329 + $0x74] sm:$0x1]
        %v501 = vld [vmem:[%s329 + $0x78] sm:$0xf]
        %v502 = vld [vmem:[%s329 + $0x7c] sm:$0xf]
        %v503 = vld [vmem:[%s329 + $0x80] sm:$0xf]
        %v504 = vld [vmem:[%s329 + $0x84] sm:$0xf]
        %v505 = vld [vmem:[%s329 + $0x88] sm:$0x1]
        %v506 = vld [vmem:[%s329 + $0x8c] sm:$0xf]
        %v507 = vld [vmem:[%s329 + $0x90] sm:$0xf]
        %v508 = vld [vmem:[%s329 + $0x94] sm:$0xf]
        %v509 = vld [vmem:[%s329 + $0x98] sm:$0xf]
        %v510 = vld [vmem:[%s329 + $0x9c] sm:$0x1]
        %v511 = vld [vmem:[%s329 + $0xa0] sm:$0xf]
        %v512 = vld [vmem:[%s329 + $0xa4] sm:$0xf]
        %v513 = vld [vmem:[%s329 + $0xa8] sm:$0xf]
        %v514 = vld [vmem:[%s329 + $0xac] sm:$0xf]
        %v515 = vld [vmem:[%s329 + $0xb0] sm:$0x1]
        %v516 = vld [vmem:[%s329 + $0xb4] sm:$0xf]
        %v517 = vld [vmem:[%s329 + $0xb8] sm:$0xf]
        %v518 = vld [vmem:[%s329 + $0xbc] sm:$0xf]
        %v519 = vld [vmem:[%s329 + $0xc0] sm:$0xf]
        %v520 = vld [vmem:[%s329 + $0xc4] sm:$0x1]
        %v521 = vld [vmem:[%s329 + $0xc8] sm:$0xf]
        %v522 = vld [vmem:[%s329 + $0xcc] sm:$0xf]
        %v523 = vld [vmem:[%s329 + $0xd0] sm:$0xf]
        %v524 = vld [vmem:[%s329 + $0xd4] sm:$0xf]
        %v525 = vld [vmem:[%s329 + $0xd8] sm:$0x1]
        %v526 = vld [vmem:[%s329 + $0xdc] sm:$0xf]
        %v527 = vld [vmem:[%s329 + $0xe0] sm:$0xf]
        %v528 = vld [vmem:[%s329 + $0xe4] sm:$0xf]
        %v529 = vld [vmem:[%s329 + $0xe8] sm:$0xf]
        %v530 = vld [vmem:[%s329 + $0xec] sm:$0x1]
        %v531 = vld [vmem:[%s329 + $0xf0] sm:$0xf]
        %v532 = vld [vmem:[%s329 + $0xf4] sm:$0xf]
        %v533 = vld [vmem:[%s329 + $0xf8] sm:$0xf]
        %v534 = vld [vmem:[%s329 + $0xfc] sm:$0xf]
        %v535 = vld [vmem:[%s329 + $0x100] sm:$0x1]
        %v536 = vld [vmem:[%s329 + $0x104] sm:$0xf]
        %v537 = vld [vmem:[%s329 + $0x108] sm:$0xf]
        %v538 = vld [vmem:[%s329 + $0x10c] sm:$0xf]
        %v539 = vld [vmem:[%s329 + $0x110] sm:$0xf]
        %v540 = vld [vmem:[%s329 + $0x114] sm:$0x1]
        %v541 = vld [vmem:[%s329 + $0x118] sm:$0xf]
        %v542 = vld [vmem:[%s329 + $0x11c] sm:$0xf]
        %v543 = vld [vmem:[%s329 + $0x120] sm:$0xf]
        %v544 = vld [vmem:[%s329 + $0x124] sm:$0xf]
        %v545 = vld [vmem:[%s329 + $0x128] sm:$0x1]
        %v546 = vld [vmem:[%s329 + $0x12c] sm:$0xf]
        %v547 = vld [vmem:[%s329 + $0x130] sm:$0xf]
        %v548 = vld [vmem:[%s329 + $0x134] sm:$0xf]
        %v549 = vld [vmem:[%s329 + $0x138] sm:$0xf]
        %v550 = vld [vmem:[%s329 + $0x13c] sm:$0x1]
        %v551 = vld [vmem:[%s329 + $0x140] sm:$0xf]
        %v552 = vld [vmem:[%s329 + $0x144] sm:$0xf]
        %v553 = vld [vmem:[%s329 + $0x148] sm:$0xf]
        %v554 = vld [vmem:[%s329 + $0x14c] sm:$0xf]
        %v555 = vld [vmem:[%s329 + $0x150] sm:$0x1]
        %v556 = vld [vmem:[%s329 + $0x154] sm:$0xf]
        %v557 = vld [vmem:[%s329 + $0x158] sm:$0xf]
        %v558 = vld [vmem:[%s329 + $0x15c] sm:$0xf]
        %v559 = vld [vmem:[%s329 + $0x160] sm:$0xf]
        %v560 = vld [vmem:[%s329 + $0x164] sm:$0x1]
        %v625 = vunpack.c.l.b16 %v381
        %v626 = vunpack.c.l.b16 %v382
        %v627 = vunpack.c.l.b16 %v383
        %v628 = vunpack.c.l.b16 %v384
        %v629 = vunpack.c.l.b16 %v386
        %v630 = vunpack.c.l.b16 %v387
        %v631 = vunpack.c.l.b16 %v388
        %v632 = vunpack.c.l.b16 %v389
        %v633 = vunpack.c.l.b16 %v391
        %v634 = vunpack.c.l.b16 %v392
        %v635 = vunpack.c.l.b16 %v393
        %v636 = vunpack.c.l.b16 %v394
        %v637 = vunpack.c.l.b16 %v396
        %v638 = vunpack.c.l.b16 %v397
        %v639 = vunpack.c.l.b16 %v398
        %v640 = vunpack.c.l.b16 %v399
        %v641 = vunpack.c.l.b16 %v401
        %v642 = vunpack.c.l.b16 %v402
        %v643 = vunpack.c.l.b16 %v403
        %v644 = vunpack.c.l.b16 %v404
        %v645 = vunpack.c.l.b16 %v406
        %v646 = vunpack.c.l.b16 %v407
        %v647 = vunpack.c.l.b16 %v408
        %v648 = vunpack.c.l.b16 %v409
        %v649 = vunpack.c.l.b16 %v411
        %v650 = vunpack.c.l.b16 %v412
        %v651 = vunpack.c.l.b16 %v413
        %v652 = vunpack.c.l.b16 %v414
        %v653 = vunpack.c.l.b16 %v416
        %v654 = vunpack.c.l.b16 %v417
        %v655 = vunpack.c.l.b16 %v418
        %v656 = vunpack.c.l.b16 %v419
        %v657 = vunpack.c.l.b16 %v421
        %v658 = vunpack.c.l.b16 %v422
        %v659 = vunpack.c.l.b16 %v423
        %v660 = vunpack.c.l.b16 %v424
        %v661 = vunpack.c.l.b16 %v426
        %v662 = vunpack.c.l.b16 %v427
        %v663 = vunpack.c.l.b16 %v428
        %v664 = vunpack.c.l.b16 %v429
        %v665 = vunpack.c.l.b16 %v431
        %v666 = vunpack.c.l.b16 %v432
        %v667 = vunpack.c.l.b16 %v433
        %v668 = vunpack.c.l.b16 %v434
        %v669 = vunpack.c.l.b16 %v436
        %v670 = vunpack.c.l.b16 %v437
        %v671 = vunpack.c.l.b16 %v438
        %v672 = vunpack.c.l.b16 %v439
        %v673 = vunpack.c.l.b16 %v441
        %v674 = vunpack.c.l.b16 %v442
        %v675 = vunpack.c.l.b16 %v443
        %v676 = vunpack.c.l.b16 %v444
        %v677 = vunpack.c.l.b16 %v446
        %v678 = vunpack.c.l.b16 %v447
        %v679 = vunpack.c.l.b16 %v448
        %v680 = vunpack.c.l.b16 %v449
        %v681 = vunpack.c.l.b16 %v451
        %v682 = vunpack.c.l.b16 %v452
        %v683 = vunpack.c.l.b16 %v453
        %v684 = vunpack.c.l.b16 %v454
        %v685 = vunpack.c.l.b16 %v456
        %v686 = vunpack.c.l.b16 %v457
        %v687 = vunpack.c.l.b16 %v458
        %v688 = vunpack.c.l.b16 %v459
        %v689 = vpack.c.b16 %v626, %v625
        %v690 = vpack.c.b16 %v628, %v627
        %v691 = vpack.c.b16 %v630, %v629
        %v692 = vpack.c.b16 %v632, %v631
        %v693 = vpack.c.b16 %v634, %v633
        %v694 = vpack.c.b16 %v636, %v635
        %v695 = vpack.c.b16 %v638, %v637
        %v696 = vpack.c.b16 %v640, %v639
        %v697 = vpack.c.b16 %v642, %v641
        %v698 = vpack.c.b16 %v644, %v643
        %v699 = vpack.c.b16 %v646, %v645
        %v700 = vpack.c.b16 %v648, %v647
        %v701 = vpack.c.b16 %v650, %v649
        %v702 = vpack.c.b16 %v652, %v651
        %v703 = vpack.c.b16 %v654, %v653
        %v704 = vpack.c.b16 %v656, %v655
        %v705 = vpack.c.b16 %v658, %v657
        %v706 = vpack.c.b16 %v660, %v659
        %v707 = vpack.c.b16 %v662, %v661
        %v708 = vpack.c.b16 %v664, %v663
        %v709 = vpack.c.b16 %v666, %v665
        %v710 = vpack.c.b16 %v668, %v667
        %v711 = vpack.c.b16 %v670, %v669
        %v712 = vpack.c.b16 %v672, %v671
        %v713 = vpack.c.b16 %v674, %v673
        %v714 = vpack.c.b16 %v676, %v675
        %v715 = vpack.c.b16 %v678, %v677
        %v716 = vpack.c.b16 %v680, %v679
        %v717 = vpack.c.b16 %v682, %v681
        %v718 = vpack.c.b16 %v684, %v683
        %v719 = vpack.c.b16 %v686, %v685
        %v720 = vpack.c.b16 %v688, %v687
        %v737 = vunpack.c.l.b16 %v385
        %v738 = vunpack.c.l.b16 %v390
        %v739 = vunpack.c.l.b16 %v395
        %v740 = vunpack.c.l.b16 %v400
        %v741 = vunpack.c.l.b16 %v405
        %v742 = vunpack.c.l.b16 %v410
        %v743 = vunpack.c.l.b16 %v415
        %v744 = vunpack.c.l.b16 %v420
        %v745 = vunpack.c.l.b16 %v425
        %v746 = vunpack.c.l.b16 %v430
        %v747 = vunpack.c.l.b16 %v435
        %v748 = vunpack.c.l.b16 %v440
        %v749 = vunpack.c.l.b16 %v445
        %v750 = vunpack.c.l.b16 %v450
        %v751 = vunpack.c.l.b16 %v455
        %v752 = vunpack.c.l.b16 %v460
        %v753 = vpack.c.b16 %v737, %v737
        %v754 = vpack.c.b16 %v738, %v738
        %v755 = vpack.c.b16 %v739, %v739
        %v756 = vpack.c.b16 %v740, %v740
        %v757 = vpack.c.b16 %v741, %v741
        %v758 = vpack.c.b16 %v742, %v742
        %v759 = vpack.c.b16 %v743, %v743
        %v760 = vpack.c.b16 %v744, %v744
        %v761 = vpack.c.b16 %v745, %v745
        %v762 = vpack.c.b16 %v746, %v746
        %v763 = vpack.c.b16 %v747, %v747
        %v764 = vpack.c.b16 %v748, %v748
        %v765 = vpack.c.b16 %v749, %v749
        %v766 = vpack.c.b16 %v750, %v750
        %v767 = vpack.c.b16 %v751, %v751
        %v768 = vpack.c.b16 %v752, %v752
        %vm769 = vsmask.f32 7424
        %v771 = vshrl.u32 %v689, 16
        %v773 = vshll.u32 %v689, 16
        %v775 = vrot.slane %v773, 1
        %v776 = vor.u32 %v771, %v775
        %v778 = vshll.u32 %v690, 16
        %v780 = vrot.slane %v778, 1
        %v781 = vsel %vm769, %v776, %v780
        %v782 = vshrl.u32 %v690, 16
        %v784 = vor.u32 %v782, %v780
        %v786 = vshll.u32 %v753, 16
        %v788 = vrot.slane %v786, 1
        %v789 = vsel %vm769, %v784, %v788
        %v791 = vshrl.u32 %v691, 16
        %v793 = vshll.u32 %v691, 16
        %v795 = vrot.slane %v793, 1
        %v796 = vor.u32 %v791, %v795
        %v798 = vshll.u32 %v692, 16
        %v800 = vrot.slane %v798, 1
        %v801 = vsel %vm769, %v796, %v800
        %v802 = vshrl.u32 %v692, 16
        %v804 = vor.u32 %v802, %v800
        %v806 = vshll.u32 %v754, 16
        %v808 = vrot.slane %v806, 1
        %v809 = vsel %vm769, %v804, %v808
        %v811 = vshrl.u32 %v693, 16
        %v813 = vshll.u32 %v693, 16
        %v815 = vrot.slane %v813, 1
        %v816 = vor.u32 %v811, %v815
        %v818 = vshll.u32 %v694, 16
        %v820 = vrot.slane %v818, 1
        %v821 = vsel %vm769, %v816, %v820
        %v822 = vshrl.u32 %v694, 16
        %v824 = vor.u32 %v822, %v820
        %v826 = vshll.u32 %v755, 16
        %v828 = vrot.slane %v826, 1
        %v829 = vsel %vm769, %v824, %v828
        %v831 = vshrl.u32 %v695, 16
        %v833 = vshll.u32 %v695, 16
        %v835 = vrot.slane %v833, 1
        %v836 = vor.u32 %v831, %v835
        %v838 = vshll.u32 %v696, 16
        %v840 = vrot.slane %v838, 1
        %v841 = vsel %vm769, %v836, %v840
        %v842 = vshrl.u32 %v696, 16
        %v844 = vor.u32 %v842, %v840
        %v846 = vshll.u32 %v756, 16
        %v848 = vrot.slane %v846, 1
        %v849 = vsel %vm769, %v844, %v848
        %v851 = vshrl.u32 %v697, 16
        %v853 = vshll.u32 %v697, 16
        %v855 = vrot.slane %v853, 1
        %v856 = vor.u32 %v851, %v855
        %v858 = vshll.u32 %v698, 16
        %v860 = vrot.slane %v858, 1
        %v861 = vsel %vm769, %v856, %v860
        %v862 = vshrl.u32 %v698, 16
        %v864 = vor.u32 %v862, %v860
        %v866 = vshll.u32 %v757, 16
        %v868 = vrot.slane %v866, 1
        %v869 = vsel %vm769, %v864, %v868
        %v871 = vshrl.u32 %v699, 16
        %v873 = vshll.u32 %v699, 16
        %v875 = vrot.slane %v873, 1
        %v876 = vor.u32 %v871, %v875
        %v878 = vshll.u32 %v700, 16
        %v880 = vrot.slane %v878, 1
        %v881 = vsel %vm769, %v876, %v880
        %v882 = vshrl.u32 %v700, 16
        %v884 = vor.u32 %v882, %v880
        %v886 = vshll.u32 %v758, 16
        %v888 = vrot.slane %v886, 1
        %v889 = vsel %vm769, %v884, %v888
        %v891 = vshrl.u32 %v701, 16
        %v893 = vshll.u32 %v701, 16
        %v895 = vrot.slane %v893, 1
        %v896 = vor.u32 %v891, %v895
        %v898 = vshll.u32 %v702, 16
        %v900 = vrot.slane %v898, 1
        %v901 = vsel %vm769, %v896, %v900
        %v902 = vshrl.u32 %v702, 16
        %v904 = vor.u32 %v902, %v900
        %v906 = vshll.u32 %v759, 16
        %v908 = vrot.slane %v906, 1
        %v909 = vsel %vm769, %v904, %v908
        %v911 = vshrl.u32 %v703, 16
        %v913 = vshll.u32 %v703, 16
        %v915 = vrot.slane %v913, 1
        %v916 = vor.u32 %v911, %v915
        %v918 = vshll.u32 %v704, 16
        %v920 = vrot.slane %v918, 1
        %v921 = vsel %vm769, %v916, %v920
        %v922 = vshrl.u32 %v704, 16
        %v924 = vor.u32 %v922, %v920
        %v926 = vshll.u32 %v760, 16
        %v928 = vrot.slane %v926, 1
        %v929 = vsel %vm769, %v924, %v928
        %v931 = vshrl.u32 %v705, 16
        %v933 = vshll.u32 %v705, 16
        %v935 = vrot.slane %v933, 1
        %v936 = vor.u32 %v931, %v935
        %v938 = vshll.u32 %v706, 16
        %v940 = vrot.slane %v938, 1
        %v941 = vsel %vm769, %v936, %v940
        %v942 = vshrl.u32 %v706, 16
        %v944 = vor.u32 %v942, %v940
        %v946 = vshll.u32 %v761, 16
        %v948 = vrot.slane %v946, 1
        %v949 = vsel %vm769, %v944, %v948
        %v951 = vshrl.u32 %v707, 16
        %v953 = vshll.u32 %v707, 16
        %v955 = vrot.slane %v953, 1
        %v956 = vor.u32 %v951, %v955
        %v958 = vshll.u32 %v708, 16
        %v960 = vrot.slane %v958, 1
        %v961 = vsel %vm769, %v956, %v960
        %v962 = vshrl.u32 %v708, 16
        %v964 = vor.u32 %v962, %v960
        %v966 = vshll.u32 %v762, 16
        %v968 = vrot.slane %v966, 1
        %v969 = vsel %vm769, %v964, %v968
        %v971 = vshrl.u32 %v709, 16
        %v973 = vshll.u32 %v709, 16
        %v975 = vrot.slane %v973, 1
        %v976 = vor.u32 %v971, %v975
        %v978 = vshll.u32 %v710, 16
        %v980 = vrot.slane %v978, 1
        %v981 = vsel %vm769, %v976, %v980
        %v982 = vshrl.u32 %v710, 16
        %v984 = vor.u32 %v982, %v980
        %v986 = vshll.u32 %v763, 16
        %v988 = vrot.slane %v986, 1
        %v989 = vsel %vm769, %v984, %v988
        %v991 = vshrl.u32 %v711, 16
        %v993 = vshll.u32 %v711, 16
        %v995 = vrot.slane %v993, 1
        %v996 = vor.u32 %v991, %v995
        %v998 = vshll.u32 %v712, 16
        %v1000 = vrot.slane %v998, 1
        %v1001 = vsel %vm769, %v996, %v1000
        %v1002 = vshrl.u32 %v712, 16
        %v1004 = vor.u32 %v1002, %v1000
        %v1006 = vshll.u32 %v764, 16
        %v1008 = vrot.slane %v1006, 1
        %v1009 = vsel %vm769, %v1004, %v1008
        %v1011 = vshrl.u32 %v713, 16
        %v1013 = vshll.u32 %v713, 16
        %v1015 = vrot.slane %v1013, 1
        %v1016 = vor.u32 %v1011, %v1015
        %v1018 = vshll.u32 %v714, 16
        %v1020 = vrot.slane %v1018, 1
        %v1021 = vsel %vm769, %v1016, %v1020
        %v1022 = vshrl.u32 %v714, 16
        %v1024 = vor.u32 %v1022, %v1020
        %v1026 = vshll.u32 %v765, 16
        %v1028 = vrot.slane %v1026, 1
        %v1029 = vsel %vm769, %v1024, %v1028
        %v1031 = vshrl.u32 %v715, 16
        %v1033 = vshll.u32 %v715, 16
        %v1035 = vrot.slane %v1033, 1
        %v1036 = vor.u32 %v1031, %v1035
        %v1038 = vshll.u32 %v716, 16
        %v1040 = vrot.slane %v1038, 1
        %v1041 = vsel %vm769, %v1036, %v1040
        %v1042 = vshrl.u32 %v716, 16
        %v1044 = vor.u32 %v1042, %v1040
        %v1046 = vshll.u32 %v766, 16
        %v1048 = vrot.slane %v1046, 1
        %v1049 = vsel %vm769, %v1044, %v1048
        %v1051 = vshrl.u32 %v717, 16
        %v1053 = vshll.u32 %v717, 16
        %v1055 = vrot.slane %v1053, 1
        %v1056 = vor.u32 %v1051, %v1055
        %v1058 = vshll.u32 %v718, 16
        %v1060 = vrot.slane %v1058, 1
        %v1061 = vsel %vm769, %v1056, %v1060
        %v1062 = vshrl.u32 %v718, 16
        %v1064 = vor.u32 %v1062, %v1060
        %v1066 = vshll.u32 %v767, 16
        %v1068 = vrot.slane %v1066, 1
        %v1069 = vsel %vm769, %v1064, %v1068
        %v1071 = vshrl.u32 %v719, 16
        %v1073 = vshll.u32 %v719, 16
        %v1075 = vrot.slane %v1073, 1
        %v1076 = vor.u32 %v1071, %v1075
        %v1078 = vshll.u32 %v720, 16
        %v1080 = vrot.slane %v1078, 1
        %v1081 = vsel %vm769, %v1076, %v1080
        %v1082 = vshrl.u32 %v720, 16
        %v1084 = vor.u32 %v1082, %v1080
        %v1086 = vshll.u32 %v768, 16
        %v1088 = vrot.slane %v1086, 1
        %v1089 = vsel %vm769, %v1084, %v1088
        %1090 = vrot.lane.b32.xlu0 %v781, 8
        %v1091 = vpop.permute.xlu0 %1090
        %1092 = vrot.lane.b32.xlu0 %v789, 8
        %v1093 = vpop.permute.xlu0 %1092
        %1094 = vrot.lane.b32.xlu0 %v801, 8
        %v1095 = vpop.permute.xlu0 %1094
        %1096 = vrot.lane.b32.xlu0 %v809, 8
        %v1097 = vpop.permute.xlu0 %1096
        %1098 = vrot.lane.b32.xlu0 %v821, 8
        %v1099 = vpop.permute.xlu0 %1098
        %1100 = vrot.lane.b32.xlu0 %v829, 8
        %v1101 = vpop.permute.xlu0 %1100
        %1102 = vrot.lane.b32.xlu0 %v841, 8
        %v1103 = vpop.permute.xlu0 %1102
        %1104 = vrot.lane.b32.xlu0 %v849, 8
        %v1105 = vpop.permute.xlu0 %1104
        %1106 = vrot.lane.b32.xlu0 %v861, 8
        %v1107 = vpop.permute.xlu0 %1106
        %1108 = vrot.lane.b32.xlu0 %v869, 8
        %v1109 = vpop.permute.xlu0 %1108
        %1110 = vrot.lane.b32.xlu0 %v881, 8
        %v1111 = vpop.permute.xlu0 %1110
        %1112 = vrot.lane.b32.xlu0 %v889, 8
        %v1113 = vpop.permute.xlu0 %1112
        %1114 = vrot.lane.b32.xlu0 %v901, 8
        %v1115 = vpop.permute.xlu0 %1114
        %1116 = vrot.lane.b32.xlu0 %v909, 8
        %v1117 = vpop.permute.xlu0 %1116
        %1118 = vrot.lane.b32.xlu0 %v921, 8
        %v1119 = vpop.permute.xlu0 %1118
        %1120 = vrot.lane.b32.xlu0 %v929, 8
        %v1121 = vpop.permute.xlu0 %1120
        %1122 = vrot.lane.b32.xlu0 %v941, 8
        %v1123 = vpop.permute.xlu0 %1122
        %1124 = vrot.lane.b32.xlu0 %v949, 8
        %v1125 = vpop.permute.xlu0 %1124
        %1126 = vrot.lane.b32.xlu0 %v961, 8
        %v1127 = vpop.permute.xlu0 %1126
        %1128 = vrot.lane.b32.xlu0 %v969, 8
        %v1129 = vpop.permute.xlu0 %1128
        %1130 = vrot.lane.b32.xlu0 %v981, 8
        %v1131 = vpop.permute.xlu0 %1130
        %1132 = vrot.lane.b32.xlu0 %v989, 8
        %v1133 = vpop.permute.xlu0 %1132
        %1134 = vrot.lane.b32.xlu0 %v1001, 8
        %v1135 = vpop.permute.xlu0 %1134
        %1136 = vrot.lane.b32.xlu0 %v1009, 8
        %v1137 = vpop.permute.xlu0 %1136
        %1138 = vrot.lane.b32.xlu0 %v1021, 8
        %v1139 = vpop.permute.xlu0 %1138
        %1140 = vrot.lane.b32.xlu0 %v1029, 8
        %v1141 = vpop.permute.xlu0 %1140
        %1142 = vrot.lane.b32.xlu0 %v1041, 8
        %v1143 = vpop.permute.xlu0 %1142
        %1144 = vrot.lane.b32.xlu0 %v1049, 8
        %v1145 = vpop.permute.xlu0 %1144
        %1146 = vrot.lane.b32.xlu0 %v1061, 8
        %v1147 = vpop.permute.xlu0 %1146
        %1148 = vrot.lane.b32.xlu0 %v1069, 8
        %v1149 = vpop.permute.xlu0 %1148
        %1150 = vrot.lane.b32.xlu0 %v1081, 8
        %v1151 = vpop.permute.xlu0 %1150
        %1152 = vrot.lane.b32.xlu0 %v1089, 8
        %v1153 = vpop.permute.xlu0 %1152
        %vm1154 = vcmask 1046528
        %v1155 = vrot.slane %v689, 1
        %v1156 = vrot.slane %v690, 1
        %v1157 = vsel %vm1154, %v1155, %v1156
        %v1158 = vrot.slane %v753, 1
        %v1159 = vsel %vm1154, %v1156, %v1158
        %v1160 = vrot.slane %v691, 1
        %v1161 = vrot.slane %v692, 1
        %v1162 = vsel %vm1154, %v1160, %v1161
        %v1163 = vrot.slane %v754, 1
        %v1164 = vsel %vm1154, %v1161, %v1163
        %v1165 = vrot.slane %v693, 1
        %v1166 = vrot.slane %v694, 1
        %v1167 = vsel %vm1154, %v1165, %v1166
        %v1168 = vrot.slane %v755, 1
        %v1169 = vsel %vm1154, %v1166, %v1168
        %v1170 = vrot.slane %v695, 1
        %v1171 = vrot.slane %v696, 1
        %v1172 = vsel %vm1154, %v1170, %v1171
        %v1173 = vrot.slane %v756, 1
        %v1174 = vsel %vm1154, %v1171, %v1173
        %v1175 = vrot.slane %v697, 1
        %v1176 = vrot.slane %v698, 1
        %v1177 = vsel %vm1154, %v1175, %v1176
        %v1178 = vrot.slane %v757, 1
        %v1179 = vsel %vm1154, %v1176, %v1178
        %v1180 = vrot.slane %v699, 1
        %v1181 = vrot.slane %v700, 1
        %v1182 = vsel %vm1154, %v1180, %v1181
        %v1183 = vrot.slane %v758, 1
        %v1184 = vsel %vm1154, %v1181, %v1183
        %v1185 = vrot.slane %v701, 1
        %v1186 = vrot.slane %v702, 1
        %v1187 = vsel %vm1154, %v1185, %v1186
        %v1188 = vrot.slane %v759, 1
        %v1189 = vsel %vm1154, %v1186, %v1188
        %v1190 = vrot.slane %v703, 1
        %v1191 = vrot.slane %v704, 1
        %v1192 = vsel %vm1154, %v1190, %v1191
        %v1193 = vrot.slane %v760, 1
        %v1194 = vsel %vm1154, %v1191, %v1193
        %v1195 = vrot.slane %v705, 1
        %v1196 = vrot.slane %v706, 1
        %v1197 = vsel %vm1154, %v1195, %v1196
        %v1198 = vrot.slane %v761, 1
        %v1199 = vsel %vm1154, %v1196, %v1198
        %v1200 = vrot.slane %v707, 1
        %v1201 = vrot.slane %v708, 1
        %v1202 = vsel %vm1154, %v1200, %v1201
        %v1203 = vrot.slane %v762, 1
        %v1204 = vsel %vm1154, %v1201, %v1203
        %v1205 = vrot.slane %v709, 1
        %v1206 = vrot.slane %v710, 1
        %v1207 = vsel %vm1154, %v1205, %v1206
        %v1208 = vrot.slane %v763, 1
        %v1209 = vsel %vm1154, %v1206, %v1208
        %v1210 = vrot.slane %v711, 1
        %v1211 = vrot.slane %v712, 1
        %v1212 = vsel %vm1154, %v1210, %v1211
        %v1213 = vrot.slane %v764, 1
        %v1214 = vsel %vm1154, %v1211, %v1213
        %v1215 = vrot.slane %v713, 1
        %v1216 = vrot.slane %v714, 1
        %v1217 = vsel %vm1154, %v1215, %v1216
        %v1218 = vrot.slane %v765, 1
        %v1219 = vsel %vm1154, %v1216, %v1218
        %v1220 = vrot.slane %v715, 1
        %v1221 = vrot.slane %v716, 1
        %v1222 = vsel %vm1154, %v1220, %v1221
        %v1223 = vrot.slane %v766, 1
        %v1224 = vsel %vm1154, %v1221, %v1223
        %v1225 = vrot.slane %v717, 1
        %v1226 = vrot.slane %v718, 1
        %v1227 = vsel %vm1154, %v1225, %v1226
        %v1228 = vrot.slane %v767, 1
        %v1229 = vsel %vm1154, %v1226, %v1228
        %v1230 = vrot.slane %v719, 1
        %v1231 = vrot.slane %v720, 1
        %v1232 = vsel %vm1154, %v1230, %v1231
        %v1233 = vrot.slane %v768, 1
        %v1234 = vsel %vm1154, %v1231, %v1233
        %1235 = vrot.lane.b32.xlu0 %v1157, 16
        %v1236 = vpop.permute.xlu0 %1235
        %1237 = vrot.lane.b32.xlu0 %v1159, 16
        %v1238 = vpop.permute.xlu0 %1237
        %1239 = vrot.lane.b32.xlu0 %v1162, 16
        %v1240 = vpop.permute.xlu0 %1239
        %1241 = vrot.lane.b32.xlu0 %v1164, 16
        %v1242 = vpop.permute.xlu0 %1241
        %1243 = vrot.lane.b32.xlu0 %v1167, 16
        %v1244 = vpop.permute.xlu0 %1243
        %1245 = vrot.lane.b32.xlu0 %v1169, 16
        %v1246 = vpop.permute.xlu0 %1245
        %1247 = vrot.lane.b32.xlu0 %v1172, 16
        %v1248 = vpop.permute.xlu0 %1247
        %1249 = vrot.lane.b32.xlu0 %v1174, 16
        %v1250 = vpop.permute.xlu0 %1249
        %1251 = vrot.lane.b32.xlu0 %v1177, 16
        %v1252 = vpop.permute.xlu0 %1251
        %1253 = vrot.lane.b32.xlu0 %v1179, 16
        %v1254 = vpop.permute.xlu0 %1253
        %1255 = vrot.lane.b32.xlu0 %v1182, 16
        %v1256 = vpop.permute.xlu0 %1255
        %1257 = vrot.lane.b32.xlu0 %v1184, 16
        %v1258 = vpop.permute.xlu0 %1257
        %1259 = vrot.lane.b32.xlu0 %v1187, 16
        %v1260 = vpop.permute.xlu0 %1259
        %1261 = vrot.lane.b32.xlu0 %v1189, 16
        %v1262 = vpop.permute.xlu0 %1261
        %1263 = vrot.lane.b32.xlu0 %v1192, 16
        %v1264 = vpop.permute.xlu0 %1263
        %1265 = vrot.lane.b32.xlu0 %v1194, 16
        %v1266 = vpop.permute.xlu0 %1265
        %1267 = vrot.lane.b32.xlu0 %v1197, 16
        %v1268 = vpop.permute.xlu0 %1267
        %1269 = vrot.lane.b32.xlu0 %v1199, 16
        %v1270 = vpop.permute.xlu0 %1269
        %1271 = vrot.lane.b32.xlu0 %v1202, 16
        %v1272 = vpop.permute.xlu0 %1271
        %1273 = vrot.lane.b32.xlu0 %v1204, 16
        %v1274 = vpop.permute.xlu0 %1273
        %1275 = vrot.lane.b32.xlu0 %v1207, 16
        %v1276 = vpop.permute.xlu0 %1275
        %1277 = vrot.lane.b32.xlu0 %v1209, 16
        %v1278 = vpop.permute.xlu0 %1277
        %1279 = vrot.lane.b32.xlu0 %v1212, 16
        %v1280 = vpop.permute.xlu0 %1279
        %1281 = vrot.lane.b32.xlu0 %v1214, 16
        %v1282 = vpop.permute.xlu0 %1281
        %1283 = vrot.lane.b32.xlu0 %v1217, 16
        %v1284 = vpop.permute.xlu0 %1283
        %1285 = vrot.lane.b32.xlu0 %v1219, 16
        %v1286 = vpop.permute.xlu0 %1285
        %1287 = vrot.lane.b32.xlu0 %v1222, 16
        %v1288 = vpop.permute.xlu0 %1287
        %1289 = vrot.lane.b32.xlu0 %v1224, 16
        %v1290 = vpop.permute.xlu0 %1289
        %1291 = vrot.lane.b32.xlu0 %v1227, 16
        %v1292 = vpop.permute.xlu0 %1291
        %1293 = vrot.lane.b32.xlu0 %v1229, 16
        %v1294 = vpop.permute.xlu0 %1293
        %1295 = vrot.lane.b32.xlu0 %v1232, 16
        %v1296 = vpop.permute.xlu0 %1295
        %1297 = vrot.lane.b32.xlu0 %v1234, 16
        %v1298 = vpop.permute.xlu0 %1297
        %v1303 = vunpack.c.l.b16 %v461
        %v1304 = vunpack.c.l.b16 %v462
        %v1305 = vunpack.c.l.b16 %v463
        %v1306 = vunpack.c.l.b16 %v464
        %v1307 = vpack.c.b16 %v1304, %v1303
        %v1308 = vpack.c.b16 %v1306, %v1305
        %1309 = vrot.lane.b32.xlu0 %v691, 24
        %v1310 = vpop.permute.xlu0 %1309
        %1311 = vrot.lane.b32.xlu0 %v692, 24
        %v1312 = vpop.permute.xlu0 %1311
        %1313 = vrot.lane.b32.xlu0 %v693, 24
        %v1314 = vpop.permute.xlu0 %1313
        %1315 = vrot.lane.b32.xlu0 %v694, 24
        %v1316 = vpop.permute.xlu0 %1315
        %1317 = vrot.lane.b32.xlu0 %v695, 24
        %v1318 = vpop.permute.xlu0 %1317
        %1319 = vrot.lane.b32.xlu0 %v696, 24
        %v1320 = vpop.permute.xlu0 %1319
        %1321 = vrot.lane.b32.xlu0 %v697, 24
        %v1322 = vpop.permute.xlu0 %1321
        %1323 = vrot.lane.b32.xlu0 %v698, 24
        %v1324 = vpop.permute.xlu0 %1323
        %1325 = vrot.lane.b32.xlu0 %v699, 24
        %v1326 = vpop.permute.xlu0 %1325
        %1327 = vrot.lane.b32.xlu0 %v700, 24
        %v1328 = vpop.permute.xlu0 %1327
        %1329 = vrot.lane.b32.xlu0 %v701, 24
        %v1330 = vpop.permute.xlu0 %1329
        %1331 = vrot.lane.b32.xlu0 %v702, 24
        %v1332 = vpop.permute.xlu0 %1331
        %1333 = vrot.lane.b32.xlu0 %v703, 24
        %v1334 = vpop.permute.xlu0 %1333
        %1335 = vrot.lane.b32.xlu0 %v704, 24
        %v1336 = vpop.permute.xlu0 %1335
        %1337 = vrot.lane.b32.xlu0 %v705, 24
        %v1338 = vpop.permute.xlu0 %1337
        %1339 = vrot.lane.b32.xlu0 %v706, 24
        %v1340 = vpop.permute.xlu0 %1339
        %1341 = vrot.lane.b32.xlu0 %v707, 24
        %v1342 = vpop.permute.xlu0 %1341
        %1343 = vrot.lane.b32.xlu0 %v708, 24
        %v1344 = vpop.permute.xlu0 %1343
        %1345 = vrot.lane.b32.xlu0 %v709, 24
        %v1346 = vpop.permute.xlu0 %1345
        %1347 = vrot.lane.b32.xlu0 %v710, 24
        %v1348 = vpop.permute.xlu0 %1347
        %1349 = vrot.lane.b32.xlu0 %v711, 24
        %v1350 = vpop.permute.xlu0 %1349
        %1351 = vrot.lane.b32.xlu0 %v712, 24
        %v1352 = vpop.permute.xlu0 %1351
        %1353 = vrot.lane.b32.xlu0 %v713, 24
        %v1354 = vpop.permute.xlu0 %1353
        %1355 = vrot.lane.b32.xlu0 %v714, 24
        %v1356 = vpop.permute.xlu0 %1355
        %1357 = vrot.lane.b32.xlu0 %v715, 24
        %v1358 = vpop.permute.xlu0 %1357
        %1359 = vrot.lane.b32.xlu0 %v716, 24
        %v1360 = vpop.permute.xlu0 %1359
        %1361 = vrot.lane.b32.xlu0 %v717, 24
        %v1362 = vpop.permute.xlu0 %1361
        %1363 = vrot.lane.b32.xlu0 %v718, 24
        %v1364 = vpop.permute.xlu0 %1363
        %1365 = vrot.lane.b32.xlu0 %v719, 24
        %v1366 = vpop.permute.xlu0 %1365
        %1367 = vrot.lane.b32.xlu0 %v720, 24
        %v1368 = vpop.permute.xlu0 %1367
        %1369 = vrot.lane.b32.xlu0 %v1307, 24
        %v1370 = vpop.permute.xlu0 %1369
        %1371 = vrot.lane.b32.xlu0 %v1308, 24
        %v1372 = vpop.permute.xlu0 %1371
        %v1374 = vunpack.c.l.b16 %v465
        %v1375 = vpack.c.b16 %v1374, %v1374
        %v1377 = vshrl.u32 %v1307, 16
        %v1379 = vshll.u32 %v1307, 16
        %v1381 = vrot.slane %v1379, 1
        %v1382 = vor.u32 %v1377, %v1381
        %v1384 = vshll.u32 %v1308, 16
        %v1386 = vrot.slane %v1384, 1
        %v1387 = vsel %vm769, %v1382, %v1386
        %v1388 = vshrl.u32 %v1308, 16
        %v1390 = vor.u32 %v1388, %v1386
        %v1392 = vshll.u32 %v1375, 16
        %v1394 = vrot.slane %v1392, 1
        %v1395 = vsel %vm769, %v1390, %v1394
        %1396 = vrot.lane.b32.xlu0 %v801, 32
        %v1397 = vpop.permute.xlu0 %1396
        %1398 = vrot.lane.b32.xlu0 %v809, 32
        %v1399 = vpop.permute.xlu0 %1398
        %1400 = vrot.lane.b32.xlu0 %v821, 32
        %v1401 = vpop.permute.xlu0 %1400
        %1402 = vrot.lane.b32.xlu0 %v829, 32
        %v1403 = vpop.permute.xlu0 %1402
        %1404 = vrot.lane.b32.xlu0 %v841, 32
        %v1405 = vpop.permute.xlu0 %1404
        %1406 = vrot.lane.b32.xlu0 %v849, 32
        %v1407 = vpop.permute.xlu0 %1406
        %1408 = vrot.lane.b32.xlu0 %v861, 32
        %v1409 = vpop.permute.xlu0 %1408
        %1410 = vrot.lane.b32.xlu0 %v869, 32
        %v1411 = vpop.permute.xlu0 %1410
        %1412 = vrot.lane.b32.xlu0 %v881, 32
        %v1413 = vpop.permute.xlu0 %1412
        %1414 = vrot.lane.b32.xlu0 %v889, 32
        %v1415 = vpop.permute.xlu0 %1414
        %1416 = vrot.lane.b32.xlu0 %v901, 32
        %v1417 = vpop.permute.xlu0 %1416
        %1418 = vrot.lane.b32.xlu0 %v909, 32
        %v1419 = vpop.permute.xlu0 %1418
        %1420 = vrot.lane.b32.xlu0 %v921, 32
        %v1421 = vpop.permute.xlu0 %1420
        %1422 = vrot.lane.b32.xlu0 %v929, 32
        %v1423 = vpop.permute.xlu0 %1422
        %1424 = vrot.lane.b32.xlu0 %v941, 32
        %v1425 = vpop.permute.xlu0 %1424
        %1426 = vrot.lane.b32.xlu0 %v949, 32
        %v1427 = vpop.permute.xlu0 %1426
        %1428 = vrot.lane.b32.xlu0 %v961, 32
        %v1429 = vpop.permute.xlu0 %1428
        %1430 = vrot.lane.b32.xlu0 %v969, 32
        %v1431 = vpop.permute.xlu0 %1430
        %1432 = vrot.lane.b32.xlu0 %v981, 32
        %v1433 = vpop.permute.xlu0 %1432
        %1434 = vrot.lane.b32.xlu0 %v989, 32
        %v1435 = vpop.permute.xlu0 %1434
        %1436 = vrot.lane.b32.xlu0 %v1001, 32
        %v1437 = vpop.permute.xlu0 %1436
        %1438 = vrot.lane.b32.xlu0 %v1009, 32
        %v1439 = vpop.permute.xlu0 %1438
        %1440 = vrot.lane.b32.xlu0 %v1021, 32
        %v1441 = vpop.permute.xlu0 %1440
        %1442 = vrot.lane.b32.xlu0 %v1029, 32
        %v1443 = vpop.permute.xlu0 %1442
        %1444 = vrot.lane.b32.xlu0 %v1041, 32
        %v1445 = vpop.permute.xlu0 %1444
        %1446 = vrot.lane.b32.xlu0 %v1049, 32
        %v1447 = vpop.permute.xlu0 %1446
        %1448 = vrot.lane.b32.xlu0 %v1061, 32
        %v1449 = vpop.permute.xlu0 %1448
        %1450 = vrot.lane.b32.xlu0 %v1069, 32
        %v1451 = vpop.permute.xlu0 %1450
        %1452 = vrot.lane.b32.xlu0 %v1081, 32
        %v1453 = vpop.permute.xlu0 %1452
        %1454 = vrot.lane.b32.xlu0 %v1089, 32
        %v1455 = vpop.permute.xlu0 %1454
        %1456 = vrot.lane.b32.xlu0 %v1387, 32
        %v1457 = vpop.permute.xlu0 %1456
        %1458 = vrot.lane.b32.xlu0 %v1395, 32
        %v1459 = vpop.permute.xlu0 %1458
        %v1460 = vrot.slane %v1307, 1
        %v1461 = vrot.slane %v1308, 1
        %v1462 = vsel %vm1154, %v1460, %v1461
        %v1463 = vrot.slane %v1375, 1
        %v1464 = vsel %vm1154, %v1461, %v1463
        %1465 = vrot.lane.b32.xlu0 %v1162, 40
        %v1466 = vpop.permute.xlu0 %1465
        %1467 = vrot.lane.b32.xlu0 %v1164, 40
        %v1468 = vpop.permute.xlu0 %1467
        %1469 = vrot.lane.b32.xlu0 %v1167, 40
        %v1470 = vpop.permute.xlu0 %1469
        %1471 = vrot.lane.b32.xlu0 %v1169, 40
        %v1472 = vpop.permute.xlu0 %1471
        %1473 = vrot.lane.b32.xlu0 %v1172, 40
        %v1474 = vpop.permute.xlu0 %1473
        %1475 = vrot.lane.b32.xlu0 %v1174, 40
        %v1476 = vpop.permute.xlu0 %1475
        %1477 = vrot.lane.b32.xlu0 %v1177, 40
        %v1478 = vpop.permute.xlu0 %1477
        %1479 = vrot.lane.b32.xlu0 %v1179, 40
        %v1480 = vpop.permute.xlu0 %1479
        %1481 = vrot.lane.b32.xlu0 %v1182, 40
        %v1482 = vpop.permute.xlu0 %1481
        %1483 = vrot.lane.b32.xlu0 %v1184, 40
        %v1484 = vpop.permute.xlu0 %1483
        %1485 = vrot.lane.b32.xlu0 %v1187, 40
        %v1486 = vpop.permute.xlu0 %1485
        %1487 = vrot.lane.b32.xlu0 %v1189, 40
        %v1488 = vpop.permute.xlu0 %1487
        %1489 = vrot.lane.b32.xlu0 %v1192, 40
        %v1490 = vpop.permute.xlu0 %1489
        %1491 = vrot.lane.b32.xlu0 %v1194, 40
        %v1492 = vpop.permute.xlu0 %1491
        %1493 = vrot.lane.b32.xlu0 %v1197, 40
        %v1494 = vpop.permute.xlu0 %1493
        %1495 = vrot.lane.b32.xlu0 %v1199, 40
        %v1496 = vpop.permute.xlu0 %1495
        %1497 = vrot.lane.b32.xlu0 %v1202, 40
        %v1498 = vpop.permute.xlu0 %1497
        %1499 = vrot.lane.b32.xlu0 %v1204, 40
        %v1500 = vpop.permute.xlu0 %1499
        %1501 = vrot.lane.b32.xlu0 %v1207, 40
        %v1502 = vpop.permute.xlu0 %1501
        %1503 = vrot.lane.b32.xlu0 %v1209, 40
        %v1504 = vpop.permute.xlu0 %1503
        %1505 = vrot.lane.b32.xlu0 %v1212, 40
        %v1506 = vpop.permute.xlu0 %1505
        %1507 = vrot.lane.b32.xlu0 %v1214, 40
        %v1508 = vpop.permute.xlu0 %1507
        %1509 = vrot.lane.b32.xlu0 %v1217, 40
        %v1510 = vpop.permute.xlu0 %1509
        %1511 = vrot.lane.b32.xlu0 %v1219, 40
        %v1512 = vpop.permute.xlu0 %1511
        %1513 = vrot.lane.b32.xlu0 %v1222, 40
        %v1514 = vpop.permute.xlu0 %1513
        %1515 = vrot.lane.b32.xlu0 %v1224, 40
        %v1516 = vpop.permute.xlu0 %1515
        %1517 = vrot.lane.b32.xlu0 %v1227, 40
        %v1518 = vpop.permute.xlu0 %1517
        %1519 = vrot.lane.b32.xlu0 %v1229, 40
        %v1520 = vpop.permute.xlu0 %1519
        %1521 = vrot.lane.b32.xlu0 %v1232, 40
        %v1522 = vpop.permute.xlu0 %1521
        %1523 = vrot.lane.b32.xlu0 %v1234, 40
        %v1524 = vpop.permute.xlu0 %1523
        %1525 = vrot.lane.b32.xlu0 %v1462, 40
        %v1526 = vpop.permute.xlu0 %1525
        %1527 = vrot.lane.b32.xlu0 %v1464, 40
        %v1528 = vpop.permute.xlu0 %1527
        %v1533 = vunpack.c.l.b16 %v466
        %v1534 = vunpack.c.l.b16 %v467
        %v1535 = vunpack.c.l.b16 %v468
        %v1536 = vunpack.c.l.b16 %v469
        %v1537 = vpack.c.b16 %v1534, %v1533
        %v1538 = vpack.c.b16 %v1536, %v1535
        %1539 = vrot.lane.b32.xlu0 %v693, 48
        %v1540 = vpop.permute.xlu0 %1539
        %1541 = vrot.lane.b32.xlu0 %v694, 48
        %v1542 = vpop.permute.xlu0 %1541
        %1543 = vrot.lane.b32.xlu0 %v695, 48
        %v1544 = vpop.permute.xlu0 %1543
        %1545 = vrot.lane.b32.xlu0 %v696, 48
        %v1546 = vpop.permute.xlu0 %1545
        %1547 = vrot.lane.b32.xlu0 %v697, 48
        %v1548 = vpop.permute.xlu0 %1547
        %1549 = vrot.lane.b32.xlu0 %v698, 48
        %v1550 = vpop.permute.xlu0 %1549
        %1551 = vrot.lane.b32.xlu0 %v699, 48
        %v1552 = vpop.permute.xlu0 %1551
        %1553 = vrot.lane.b32.xlu0 %v700, 48
        %v1554 = vpop.permute.xlu0 %1553
        %1555 = vrot.lane.b32.xlu0 %v701, 48
        %v1556 = vpop.permute.xlu0 %1555
        %1557 = vrot.lane.b32.xlu0 %v702, 48
        %v1558 = vpop.permute.xlu0 %1557
        %1559 = vrot.lane.b32.xlu0 %v703, 48
        %v1560 = vpop.permute.xlu0 %1559
        %1561 = vrot.lane.b32.xlu0 %v704, 48
        %v1562 = vpop.permute.xlu0 %1561
        %1563 = vrot.lane.b32.xlu0 %v705, 48
        %v1564 = vpop.permute.xlu0 %1563
        %1565 = vrot.lane.b32.xlu0 %v706, 48
        %v1566 = vpop.permute.xlu0 %1565
        %1567 = vrot.lane.b32.xlu0 %v707, 48
        %v1568 = vpop.permute.xlu0 %1567
        %1569 = vrot.lane.b32.xlu0 %v708, 48
        %v1570 = vpop.permute.xlu0 %1569
        %1571 = vrot.lane.b32.xlu0 %v709, 48
        %v1572 = vpop.permute.xlu0 %1571
        %1573 = vrot.lane.b32.xlu0 %v710, 48
        %v1574 = vpop.permute.xlu0 %1573
        %1575 = vrot.lane.b32.xlu0 %v711, 48
        %v1576 = vpop.permute.xlu0 %1575
        %1577 = vrot.lane.b32.xlu0 %v712, 48
        %v1578 = vpop.permute.xlu0 %1577
        %1579 = vrot.lane.b32.xlu0 %v713, 48
        %v1580 = vpop.permute.xlu0 %1579
        %1581 = vrot.lane.b32.xlu0 %v714, 48
        %v1582 = vpop.permute.xlu0 %1581
        %1583 = vrot.lane.b32.xlu0 %v715, 48
        %v1584 = vpop.permute.xlu0 %1583
        %1585 = vrot.lane.b32.xlu0 %v716, 48
        %v1586 = vpop.permute.xlu0 %1585
        %1587 = vrot.lane.b32.xlu0 %v717, 48
        %v1588 = vpop.permute.xlu0 %1587
        %1589 = vrot.lane.b32.xlu0 %v718, 48
        %v1590 = vpop.permute.xlu0 %1589
        %1591 = vrot.lane.b32.xlu0 %v719, 48
        %v1592 = vpop.permute.xlu0 %1591
        %1593 = vrot.lane.b32.xlu0 %v720, 48
        %v1594 = vpop.permute.xlu0 %1593
        %1595 = vrot.lane.b32.xlu0 %v1307, 48
        %v1596 = vpop.permute.xlu0 %1595
        %1597 = vrot.lane.b32.xlu0 %v1308, 48
        %v1598 = vpop.permute.xlu0 %1597
        %1599 = vrot.lane.b32.xlu0 %v1537, 48
        %v1600 = vpop.permute.xlu0 %1599
        %1601 = vrot.lane.b32.xlu0 %v1538, 48
        %v1602 = vpop.permute.xlu0 %1601
        %v1604 = vunpack.c.l.b16 %v470
        %v1605 = vpack.c.b16 %v1604, %v1604
        %v1607 = vshrl.u32 %v1537, 16
        %v1609 = vshll.u32 %v1537, 16
        %v1611 = vrot.slane %v1609, 1
        %v1612 = vor.u32 %v1607, %v1611
        %v1614 = vshll.u32 %v1538, 16
        %v1616 = vrot.slane %v1614, 1
        %v1617 = vsel %vm769, %v1612, %v1616
        %v1618 = vshrl.u32 %v1538, 16
        %v1620 = vor.u32 %v1618, %v1616
        %v1622 = vshll.u32 %v1605, 16
        %v1624 = vrot.slane %v1622, 1
        %v1625 = vsel %vm769, %v1620, %v1624
        %1626 = vrot.lane.b32.xlu0 %v821, 56
        %v1627 = vpop.permute.xlu0 %1626
        %1628 = vrot.lane.b32.xlu0 %v829, 56
        %v1629 = vpop.permute.xlu0 %1628
        %1630 = vrot.lane.b32.xlu0 %v841, 56
        %v1631 = vpop.permute.xlu0 %1630
        %1632 = vrot.lane.b32.xlu0 %v849, 56
        %v1633 = vpop.permute.xlu0 %1632
        %1634 = vrot.lane.b32.xlu0 %v861, 56
        %v1635 = vpop.permute.xlu0 %1634
        %1636 = vrot.lane.b32.xlu0 %v869, 56
        %v1637 = vpop.permute.xlu0 %1636
        %1638 = vrot.lane.b32.xlu0 %v881, 56
        %v1639 = vpop.permute.xlu0 %1638
        %1640 = vrot.lane.b32.xlu0 %v889, 56
        %v1641 = vpop.permute.xlu0 %1640
        %1642 = vrot.lane.b32.xlu0 %v901, 56
        %v1643 = vpop.permute.xlu0 %1642
        %1644 = vrot.lane.b32.xlu0 %v909, 56
        %v1645 = vpop.permute.xlu0 %1644
        %1646 = vrot.lane.b32.xlu0 %v921, 56
        %v1647 = vpop.permute.xlu0 %1646
        %1648 = vrot.lane.b32.xlu0 %v929, 56
        %v1649 = vpop.permute.xlu0 %1648
        %1650 = vrot.lane.b32.xlu0 %v941, 56
        %v1651 = vpop.permute.xlu0 %1650
        %1652 = vrot.lane.b32.xlu0 %v949, 56
        %v1653 = vpop.permute.xlu0 %1652
        %1654 = vrot.lane.b32.xlu0 %v961, 56
        %v1655 = vpop.permute.xlu0 %1654
        %1656 = vrot.lane.b32.xlu0 %v969, 56
        %v1657 = vpop.permute.xlu0 %1656
        %1658 = vrot.lane.b32.xlu0 %v981, 56
        %v1659 = vpop.permute.xlu0 %1658
        %1660 = vrot.lane.b32.xlu0 %v989, 56
        %v1661 = vpop.permute.xlu0 %1660
        %1662 = vrot.lane.b32.xlu0 %v1001, 56
        %v1663 = vpop.permute.xlu0 %1662
        %1664 = vrot.lane.b32.xlu0 %v1009, 56
        %v1665 = vpop.permute.xlu0 %1664
        %1666 = vrot.lane.b32.xlu0 %v1021, 56
        %v1667 = vpop.permute.xlu0 %1666
        %1668 = vrot.lane.b32.xlu0 %v1029, 56
        %v1669 = vpop.permute.xlu0 %1668
        %1670 = vrot.lane.b32.xlu0 %v1041, 56
        %v1671 = vpop.permute.xlu0 %1670
        %1672 = vrot.lane.b32.xlu0 %v1049, 56
        %v1673 = vpop.permute.xlu0 %1672
        %1674 = vrot.lane.b32.xlu0 %v1061, 56
        %v1675 = vpop.permute.xlu0 %1674
        %1676 = vrot.lane.b32.xlu0 %v1069, 56
        %v1677 = vpop.permute.xlu0 %1676
        %1678 = vrot.lane.b32.xlu0 %v1081, 56
        %v1679 = vpop.permute.xlu0 %1678
        %1680 = vrot.lane.b32.xlu0 %v1089, 56
        %v1681 = vpop.permute.xlu0 %1680
        %1682 = vrot.lane.b32.xlu0 %v1387, 56
        %v1683 = vpop.permute.xlu0 %1682
        %1684 = vrot.lane.b32.xlu0 %v1395, 56
        %v1685 = vpop.permute.xlu0 %1684
        %1686 = vrot.lane.b32.xlu0 %v1617, 56
        %v1687 = vpop.permute.xlu0 %1686
        %1688 = vrot.lane.b32.xlu0 %v1625, 56
        %v1689 = vpop.permute.xlu0 %1688
        %v1690 = vrot.slane %v1537, 1
        %v1691 = vrot.slane %v1538, 1
        %v1692 = vsel %vm1154, %v1690, %v1691
        %v1693 = vrot.slane %v1605, 1
        %v1694 = vsel %vm1154, %v1691, %v1693
        %1695 = vrot.lane.b32.xlu0 %v1167, 64
        %v1696 = vpop.permute.xlu0 %1695
        %1697 = vrot.lane.b32.xlu0 %v1169, 64
        %v1698 = vpop.permute.xlu0 %1697
        %1699 = vrot.lane.b32.xlu0 %v1172, 64
        %v1700 = vpop.permute.xlu0 %1699
        %1701 = vrot.lane.b32.xlu0 %v1174, 64
        %v1702 = vpop.permute.xlu0 %1701
        %1703 = vrot.lane.b32.xlu0 %v1177, 64
        %v1704 = vpop.permute.xlu0 %1703
        %1705 = vrot.lane.b32.xlu0 %v1179, 64
        %v1706 = vpop.permute.xlu0 %1705
        %1707 = vrot.lane.b32.xlu0 %v1182, 64
        %v1708 = vpop.permute.xlu0 %1707
        %1709 = vrot.lane.b32.xlu0 %v1184, 64
        %v1710 = vpop.permute.xlu0 %1709
        %1711 = vrot.lane.b32.xlu0 %v1187, 64
        %v1712 = vpop.permute.xlu0 %1711
        %1713 = vrot.lane.b32.xlu0 %v1189, 64
        %v1714 = vpop.permute.xlu0 %1713
        %1715 = vrot.lane.b32.xlu0 %v1192, 64
        %v1716 = vpop.permute.xlu0 %1715
        %1717 = vrot.lane.b32.xlu0 %v1194, 64
        %v1718 = vpop.permute.xlu0 %1717
        %1719 = vrot.lane.b32.xlu0 %v1197, 64
        %v1720 = vpop.permute.xlu0 %1719
        %1721 = vrot.lane.b32.xlu0 %v1199, 64
        %v1722 = vpop.permute.xlu0 %1721
        %1723 = vrot.lane.b32.xlu0 %v1202, 64
        %v1724 = vpop.permute.xlu0 %1723
        %1725 = vrot.lane.b32.xlu0 %v1204, 64
        %v1726 = vpop.permute.xlu0 %1725
        %1727 = vrot.lane.b32.xlu0 %v1207, 64
        %v1728 = vpop.permute.xlu0 %1727
        %1729 = vrot.lane.b32.xlu0 %v1209, 64
        %v1730 = vpop.permute.xlu0 %1729
        %1731 = vrot.lane.b32.xlu0 %v1212, 64
        %v1732 = vpop.permute.xlu0 %1731
        %1733 = vrot.lane.b32.xlu0 %v1214, 64
        %v1734 = vpop.permute.xlu0 %1733
        %1735 = vrot.lane.b32.xlu0 %v1217, 64
        %v1736 = vpop.permute.xlu0 %1735
        %1737 = vrot.lane.b32.xlu0 %v1219, 64
        %v1738 = vpop.permute.xlu0 %1737
        %1739 = vrot.lane.b32.xlu0 %v1222, 64
        %v1740 = vpop.permute.xlu0 %1739
        %1741 = vrot.lane.b32.xlu0 %v1224, 64
        %v1742 = vpop.permute.xlu0 %1741
        %1743 = vrot.lane.b32.xlu0 %v1227, 64
        %v1744 = vpop.permute.xlu0 %1743
        %1745 = vrot.lane.b32.xlu0 %v1229, 64
        %v1746 = vpop.permute.xlu0 %1745
        %1747 = vrot.lane.b32.xlu0 %v1232, 64
        %v1748 = vpop.permute.xlu0 %1747
        %1749 = vrot.lane.b32.xlu0 %v1234, 64
        %v1750 = vpop.permute.xlu0 %1749
        %1751 = vrot.lane.b32.xlu0 %v1462, 64
        %v1752 = vpop.permute.xlu0 %1751
        %1753 = vrot.lane.b32.xlu0 %v1464, 64
        %v1754 = vpop.permute.xlu0 %1753
        %1755 = vrot.lane.b32.xlu0 %v1692, 64
        %v1756 = vpop.permute.xlu0 %1755
        %1757 = vrot.lane.b32.xlu0 %v1694, 64
        %v1758 = vpop.permute.xlu0 %1757
        %v1823 = vunpack.c.l.b16 %v471
        %v1824 = vunpack.c.l.b16 %v472
        %v1825 = vunpack.c.l.b16 %v473
        %v1826 = vunpack.c.l.b16 %v474
        %v1827 = vunpack.c.l.b16 %v476
        %v1828 = vunpack.c.l.b16 %v477
        %v1829 = vunpack.c.l.b16 %v478
        %v1830 = vunpack.c.l.b16 %v479
        %v1831 = vunpack.c.l.b16 %v481
        %v1832 = vunpack.c.l.b16 %v482
        %v1833 = vunpack.c.l.b16 %v483
        %v1834 = vunpack.c.l.b16 %v484
        %v1835 = vunpack.c.l.b16 %v486
        %v1836 = vunpack.c.l.b16 %v487
        %v1837 = vunpack.c.l.b16 %v488
        %v1838 = vunpack.c.l.b16 %v489
        %v1839 = vunpack.c.l.b16 %v491
        %v1840 = vunpack.c.l.b16 %v492
        %v1841 = vunpack.c.l.b16 %v493
        %v1842 = vunpack.c.l.b16 %v494
        %v1843 = vunpack.c.l.b16 %v496
        %v1844 = vunpack.c.l.b16 %v497
        %v1845 = vunpack.c.l.b16 %v498
        %v1846 = vunpack.c.l.b16 %v499
        %v1847 = vunpack.c.l.b16 %v501
        %v1848 = vunpack.c.l.b16 %v502
        %v1849 = vunpack.c.l.b16 %v503
        %v1850 = vunpack.c.l.b16 %v504
        %v1851 = vunpack.c.l.b16 %v506
        %v1852 = vunpack.c.l.b16 %v507
        %v1853 = vunpack.c.l.b16 %v508
        %v1854 = vunpack.c.l.b16 %v509
        %v1855 = vunpack.c.l.b16 %v511
        %v1856 = vunpack.c.l.b16 %v512
        %v1857 = vunpack.c.l.b16 %v513
        %v1858 = vunpack.c.l.b16 %v514
        %v1859 = vunpack.c.l.b16 %v516
        %v1860 = vunpack.c.l.b16 %v517
        %v1861 = vunpack.c.l.b16 %v518
        %v1862 = vunpack.c.l.b16 %v519
        %v1863 = vunpack.c.l.b16 %v521
        %v1864 = vunpack.c.l.b16 %v522
        %v1865 = vunpack.c.l.b16 %v523
        %v1866 = vunpack.c.l.b16 %v524
        %v1867 = vunpack.c.l.b16 %v526
        %v1868 = vunpack.c.l.b16 %v527
        %v1869 = vunpack.c.l.b16 %v528
        %v1870 = vunpack.c.l.b16 %v529
        %v1871 = vunpack.c.l.b16 %v531
        %v1872 = vunpack.c.l.b16 %v532
        %v1873 = vunpack.c.l.b16 %v533
        %v1874 = vunpack.c.l.b16 %v534
        %v1875 = vunpack.c.l.b16 %v536
        %v1876 = vunpack.c.l.b16 %v537
        %v1877 = vunpack.c.l.b16 %v538
        %v1878 = vunpack.c.l.b16 %v539
        %v1879 = vunpack.c.l.b16 %v541
        %v1880 = vunpack.c.l.b16 %v542
        %v1881 = vunpack.c.l.b16 %v543
        %v1882 = vunpack.c.l.b16 %v544
        %v1883 = vunpack.c.l.b16 %v546
        %v1884 = vunpack.c.l.b16 %v547
        %v1885 = vunpack.c.l.b16 %v548
        %v1886 = vunpack.c.l.b16 %v549
        %v1887 = vpack.c.b16 %v1824, %v1823
        %v1888 = vpack.c.b16 %v1826, %v1825
        %v1889 = vpack.c.b16 %v1828, %v1827
        %v1890 = vpack.c.b16 %v1830, %v1829
        %v1891 = vpack.c.b16 %v1832, %v1831
        %v1892 = vpack.c.b16 %v1834, %v1833
        %v1893 = vpack.c.b16 %v1836, %v1835
        %v1894 = vpack.c.b16 %v1838, %v1837
        %v1895 = vpack.c.b16 %v1840, %v1839
        %v1896 = vpack.c.b16 %v1842, %v1841
        %v1897 = vpack.c.b16 %v1844, %v1843
        %v1898 = vpack.c.b16 %v1846, %v1845
        %v1899 = vpack.c.b16 %v1848, %v1847
        %v1900 = vpack.c.b16 %v1850, %v1849
        %v1901 = vpack.c.b16 %v1852, %v1851
        %v1902 = vpack.c.b16 %v1854, %v1853
        %v1903 = vpack.c.b16 %v1856, %v1855
        %v1904 = vpack.c.b16 %v1858, %v1857
        %v1905 = vpack.c.b16 %v1860, %v1859
        %v1906 = vpack.c.b16 %v1862, %v1861
        %v1907 = vpack.c.b16 %v1864, %v1863
        %v1908 = vpack.c.b16 %v1866, %v1865
        %v1909 = vpack.c.b16 %v1868, %v1867
        %v1910 = vpack.c.b16 %v1870, %v1869
        %v1911 = vpack.c.b16 %v1872, %v1871
        %v1912 = vpack.c.b16 %v1874, %v1873
        %v1913 = vpack.c.b16 %v1876, %v1875
        %v1914 = vpack.c.b16 %v1878, %v1877
        %v1915 = vpack.c.b16 %v1880, %v1879
        %v1916 = vpack.c.b16 %v1882, %v1881
        %v1917 = vpack.c.b16 %v1884, %v1883
        %v1918 = vpack.c.b16 %v1886, %v1885
        %1919 = vrot.lane.b32.xlu0 %v1887, 72
        %v1920 = vpop.permute.xlu0 %1919
        %1921 = vrot.lane.b32.xlu0 %v1888, 72
        %v1922 = vpop.permute.xlu0 %1921
        %1923 = vrot.lane.b32.xlu0 %v1889, 72
        %v1924 = vpop.permute.xlu0 %1923
        %1925 = vrot.lane.b32.xlu0 %v1890, 72
        %v1926 = vpop.permute.xlu0 %1925
        %1927 = vrot.lane.b32.xlu0 %v1891, 72
        %v1928 = vpop.permute.xlu0 %1927
        %1929 = vrot.lane.b32.xlu0 %v1892, 72
        %v1930 = vpop.permute.xlu0 %1929
        %1931 = vrot.lane.b32.xlu0 %v1893, 72
        %v1932 = vpop.permute.xlu0 %1931
        %1933 = vrot.lane.b32.xlu0 %v1894, 72
        %v1934 = vpop.permute.xlu0 %1933
        %1935 = vrot.lane.b32.xlu0 %v1895, 72
        %v1936 = vpop.permute.xlu0 %1935
        %1937 = vrot.lane.b32.xlu0 %v1896, 72
        %v1938 = vpop.permute.xlu0 %1937
        %1939 = vrot.lane.b32.xlu0 %v1897, 72
        %v1940 = vpop.permute.xlu0 %1939
        %1941 = vrot.lane.b32.xlu0 %v1898, 72
        %v1942 = vpop.permute.xlu0 %1941
        %1943 = vrot.lane.b32.xlu0 %v1899, 72
        %v1944 = vpop.permute.xlu0 %1943
        %1945 = vrot.lane.b32.xlu0 %v1900, 72
        %v1946 = vpop.permute.xlu0 %1945
        %1947 = vrot.lane.b32.xlu0 %v1901, 72
        %v1948 = vpop.permute.xlu0 %1947
        %1949 = vrot.lane.b32.xlu0 %v1902, 72
        %v1950 = vpop.permute.xlu0 %1949
        %1951 = vrot.lane.b32.xlu0 %v1903, 72
        %v1952 = vpop.permute.xlu0 %1951
        %1953 = vrot.lane.b32.xlu0 %v1904, 72
        %v1954 = vpop.permute.xlu0 %1953
        %1955 = vrot.lane.b32.xlu0 %v1905, 72
        %v1956 = vpop.permute.xlu0 %1955
        %1957 = vrot.lane.b32.xlu0 %v1906, 72
        %v1958 = vpop.permute.xlu0 %1957
        %1959 = vrot.lane.b32.xlu0 %v1907, 72
        %v1960 = vpop.permute.xlu0 %1959
        %1961 = vrot.lane.b32.xlu0 %v1908, 72
        %v1962 = vpop.permute.xlu0 %1961
        %1963 = vrot.lane.b32.xlu0 %v1909, 72
        %v1964 = vpop.permute.xlu0 %1963
        %1965 = vrot.lane.b32.xlu0 %v1910, 72
        %v1966 = vpop.permute.xlu0 %1965
        %1967 = vrot.lane.b32.xlu0 %v1911, 72
        %v1968 = vpop.permute.xlu0 %1967
        %1969 = vrot.lane.b32.xlu0 %v1912, 72
        %v1970 = vpop.permute.xlu0 %1969
        %1971 = vrot.lane.b32.xlu0 %v1913, 72
        %v1972 = vpop.permute.xlu0 %1971
        %1973 = vrot.lane.b32.xlu0 %v1914, 72
        %v1974 = vpop.permute.xlu0 %1973
        %1975 = vrot.lane.b32.xlu0 %v1915, 72
        %v1976 = vpop.permute.xlu0 %1975
        %1977 = vrot.lane.b32.xlu0 %v1916, 72
        %v1978 = vpop.permute.xlu0 %1977
        %1979 = vrot.lane.b32.xlu0 %v1917, 72
        %v1980 = vpop.permute.xlu0 %1979
        %1981 = vrot.lane.b32.xlu0 %v1918, 72
        %v1982 = vpop.permute.xlu0 %1981
        %v1999 = vunpack.c.l.b16 %v475
        %v2000 = vunpack.c.l.b16 %v480
        %v2001 = vunpack.c.l.b16 %v485
        %v2002 = vunpack.c.l.b16 %v490
        %v2003 = vunpack.c.l.b16 %v495
        %v2004 = vunpack.c.l.b16 %v500
        %v2005 = vunpack.c.l.b16 %v505
        %v2006 = vunpack.c.l.b16 %v510
        %v2007 = vunpack.c.l.b16 %v515
        %v2008 = vunpack.c.l.b16 %v520
        %v2009 = vunpack.c.l.b16 %v525
        %v2010 = vunpack.c.l.b16 %v530
        %v2011 = vunpack.c.l.b16 %v535
        %v2012 = vunpack.c.l.b16 %v540
        %v2013 = vunpack.c.l.b16 %v545
        %v2014 = vunpack.c.l.b16 %v550
        %v2015 = vpack.c.b16 %v1999, %v1999
        %v2016 = vpack.c.b16 %v2000, %v2000
        %v2017 = vpack.c.b16 %v2001, %v2001
        %v2018 = vpack.c.b16 %v2002, %v2002
        %v2019 = vpack.c.b16 %v2003, %v2003
        %v2020 = vpack.c.b16 %v2004, %v2004
        %v2021 = vpack.c.b16 %v2005, %v2005
        %v2022 = vpack.c.b16 %v2006, %v2006
        %v2023 = vpack.c.b16 %v2007, %v2007
        %v2024 = vpack.c.b16 %v2008, %v2008
        %v2025 = vpack.c.b16 %v2009, %v2009
        %v2026 = vpack.c.b16 %v2010, %v2010
        %v2027 = vpack.c.b16 %v2011, %v2011
        %v2028 = vpack.c.b16 %v2012, %v2012
        %v2029 = vpack.c.b16 %v2013, %v2013
        %v2030 = vpack.c.b16 %v2014, %v2014
        %v2032 = vshrl.u32 %v1887, 16
        %v2034 = vshll.u32 %v1887, 16
        %v2036 = vrot.slane %v2034, 1
        %v2037 = vor.u32 %v2032, %v2036
        %v2039 = vshll.u32 %v1888, 16
        %v2041 = vrot.slane %v2039, 1
        %v2042 = vsel %vm769, %v2037, %v2041
        %v2043 = vshrl.u32 %v1888, 16
        %v2045 = vor.u32 %v2043, %v2041
        %v2047 = vshll.u32 %v2015, 16
        %v2049 = vrot.slane %v2047, 1
        %v2050 = vsel %vm769, %v2045, %v2049
        %v2052 = vshrl.u32 %v1889, 16
        %v2054 = vshll.u32 %v1889, 16
        %v2056 = vrot.slane %v2054, 1
        %v2057 = vor.u32 %v2052, %v2056
        %v2059 = vshll.u32 %v1890, 16
        %v2061 = vrot.slane %v2059, 1
        %v2062 = vsel %vm769, %v2057, %v2061
        %v2063 = vshrl.u32 %v1890, 16
        %v2065 = vor.u32 %v2063, %v2061
        %v2067 = vshll.u32 %v2016, 16
        %v2069 = vrot.slane %v2067, 1
        %v2070 = vsel %vm769, %v2065, %v2069
        %v2072 = vshrl.u32 %v1891, 16
        %v2074 = vshll.u32 %v1891, 16
        %v2076 = vrot.slane %v2074, 1
        %v2077 = vor.u32 %v2072, %v2076
        %v2079 = vshll.u32 %v1892, 16
        %v2081 = vrot.slane %v2079, 1
        %v2082 = vsel %vm769, %v2077, %v2081
        %v2083 = vshrl.u32 %v1892, 16
        %v2085 = vor.u32 %v2083, %v2081
        %v2087 = vshll.u32 %v2017, 16
        %v2089 = vrot.slane %v2087, 1
        %v2090 = vsel %vm769, %v2085, %v2089
        %v2092 = vshrl.u32 %v1893, 16
        %v2094 = vshll.u32 %v1893, 16
        %v2096 = vrot.slane %v2094, 1
        %v2097 = vor.u32 %v2092, %v2096
        %v2099 = vshll.u32 %v1894, 16
        %v2101 = vrot.slane %v2099, 1
        %v2102 = vsel %vm769, %v2097, %v2101
        %v2103 = vshrl.u32 %v1894, 16
        %v2105 = vor.u32 %v2103, %v2101
        %v2107 = vshll.u32 %v2018, 16
        %v2109 = vrot.slane %v2107, 1
        %v2110 = vsel %vm769, %v2105, %v2109
        %v2112 = vshrl.u32 %v1895, 16
        %v2114 = vshll.u32 %v1895, 16
        %v2116 = vrot.slane %v2114, 1
        %v2117 = vor.u32 %v2112, %v2116
        %v2119 = vshll.u32 %v1896, 16
        %v2121 = vrot.slane %v2119, 1
        %v2122 = vsel %vm769, %v2117, %v2121
        %v2123 = vshrl.u32 %v1896, 16
        %v2125 = vor.u32 %v2123, %v2121
        %v2127 = vshll.u32 %v2019, 16
        %v2129 = vrot.slane %v2127, 1
        %v2130 = vsel %vm769, %v2125, %v2129
        %v2132 = vshrl.u32 %v1897, 16
        %v2134 = vshll.u32 %v1897, 16
        %v2136 = vrot.slane %v2134, 1
        %v2137 = vor.u32 %v2132, %v2136
        %v2139 = vshll.u32 %v1898, 16
        %v2141 = vrot.slane %v2139, 1
        %v2142 = vsel %vm769, %v2137, %v2141
        %v2143 = vshrl.u32 %v1898, 16
        %v2145 = vor.u32 %v2143, %v2141
        %v2147 = vshll.u32 %v2020, 16
        %v2149 = vrot.slane %v2147, 1
        %v2150 = vsel %vm769, %v2145, %v2149
        %v2152 = vshrl.u32 %v1899, 16
        %v2154 = vshll.u32 %v1899, 16
        %v2156 = vrot.slane %v2154, 1
        %v2157 = vor.u32 %v2152, %v2156
        %v2159 = vshll.u32 %v1900, 16
        %v2161 = vrot.slane %v2159, 1
        %v2162 = vsel %vm769, %v2157, %v2161
        %v2163 = vshrl.u32 %v1900, 16
        %v2165 = vor.u32 %v2163, %v2161
        %v2167 = vshll.u32 %v2021, 16
        %v2169 = vrot.slane %v2167, 1
        %v2170 = vsel %vm769, %v2165, %v2169
        %v2172 = vshrl.u32 %v1901, 16
        %v2174 = vshll.u32 %v1901, 16
        %v2176 = vrot.slane %v2174, 1
        %v2177 = vor.u32 %v2172, %v2176
        %v2179 = vshll.u32 %v1902, 16
        %v2181 = vrot.slane %v2179, 1
        %v2182 = vsel %vm769, %v2177, %v2181
        %v2183 = vshrl.u32 %v1902, 16
        %v2185 = vor.u32 %v2183, %v2181
        %v2187 = vshll.u32 %v2022, 16
        %v2189 = vrot.slane %v2187, 1
        %v2190 = vsel %vm769, %v2185, %v2189
        %v2192 = vshrl.u32 %v1903, 16
        %v2194 = vshll.u32 %v1903, 16
        %v2196 = vrot.slane %v2194, 1
        %v2197 = vor.u32 %v2192, %v2196
        %v2199 = vshll.u32 %v1904, 16
        %v2201 = vrot.slane %v2199, 1
        %v2202 = vsel %vm769, %v2197, %v2201
        %v2203 = vshrl.u32 %v1904, 16
        %v2205 = vor.u32 %v2203, %v2201
        %v2207 = vshll.u32 %v2023, 16
        %v2209 = vrot.slane %v2207, 1
        %v2210 = vsel %vm769, %v2205, %v2209
        %v2212 = vshrl.u32 %v1905, 16
        %v2214 = vshll.u32 %v1905, 16
        %v2216 = vrot.slane %v2214, 1
        %v2217 = vor.u32 %v2212, %v2216
        %v2219 = vshll.u32 %v1906, 16
        %v2221 = vrot.slane %v2219, 1
        %v2222 = vsel %vm769, %v2217, %v2221
        %v2223 = vshrl.u32 %v1906, 16
        %v2225 = vor.u32 %v2223, %v2221
        %v2227 = vshll.u32 %v2024, 16
        %v2229 = vrot.slane %v2227, 1
        %v2230 = vsel %vm769, %v2225, %v2229
        %v2232 = vshrl.u32 %v1907, 16
        %v2234 = vshll.u32 %v1907, 16
        %v2236 = vrot.slane %v2234, 1
        %v2237 = vor.u32 %v2232, %v2236
        %v2239 = vshll.u32 %v1908, 16
        %v2241 = vrot.slane %v2239, 1
        %v2242 = vsel %vm769, %v2237, %v2241
        %v2243 = vshrl.u32 %v1908, 16
        %v2245 = vor.u32 %v2243, %v2241
        %v2247 = vshll.u32 %v2025, 16
        %v2249 = vrot.slane %v2247, 1
        %v2250 = vsel %vm769, %v2245, %v2249
        %v2252 = vshrl.u32 %v1909, 16
        %v2254 = vshll.u32 %v1909, 16
        %v2256 = vrot.slane %v2254, 1
        %v2257 = vor.u32 %v2252, %v2256
        %v2259 = vshll.u32 %v1910, 16
        %v2261 = vrot.slane %v2259, 1
        %v2262 = vsel %vm769, %v2257, %v2261
        %v2263 = vshrl.u32 %v1910, 16
        %v2265 = vor.u32 %v2263, %v2261
        %v2267 = vshll.u32 %v2026, 16
        %v2269 = vrot.slane %v2267, 1
        %v2270 = vsel %vm769, %v2265, %v2269
        %v2272 = vshrl.u32 %v1911, 16
        %v2274 = vshll.u32 %v1911, 16
        %v2276 = vrot.slane %v2274, 1
        %v2277 = vor.u32 %v2272, %v2276
        %v2279 = vshll.u32 %v1912, 16
        %v2281 = vrot.slane %v2279, 1
        %v2282 = vsel %vm769, %v2277, %v2281
        %v2283 = vshrl.u32 %v1912, 16
        %v2285 = vor.u32 %v2283, %v2281
        %v2287 = vshll.u32 %v2027, 16
        %v2289 = vrot.slane %v2287, 1
        %v2290 = vsel %vm769, %v2285, %v2289
        %v2292 = vshrl.u32 %v1913, 16
        %v2294 = vshll.u32 %v1913, 16
        %v2296 = vrot.slane %v2294, 1
        %v2297 = vor.u32 %v2292, %v2296
        %v2299 = vshll.u32 %v1914, 16
        %v2301 = vrot.slane %v2299, 1
        %v2302 = vsel %vm769, %v2297, %v2301
        %v2303 = vshrl.u32 %v1914, 16
        %v2305 = vor.u32 %v2303, %v2301
        %v2307 = vshll.u32 %v2028, 16
        %v2309 = vrot.slane %v2307, 1
        %v2310 = vsel %vm769, %v2305, %v2309
        %v2312 = vshrl.u32 %v1915, 16
        %v2314 = vshll.u32 %v1915, 16
        %v2316 = vrot.slane %v2314, 1
        %v2317 = vor.u32 %v2312, %v2316
        %v2319 = vshll.u32 %v1916, 16
        %v2321 = vrot.slane %v2319, 1
        %v2322 = vsel %vm769, %v2317, %v2321
        %v2323 = vshrl.u32 %v1916, 16
        %v2325 = vor.u32 %v2323, %v2321
        %v2327 = vshll.u32 %v2029, 16
        %v2329 = vrot.slane %v2327, 1
        %v2330 = vsel %vm769, %v2325, %v2329
        %v2332 = vshrl.u32 %v1917, 16
        %v2334 = vshll.u32 %v1917, 16
        %v2336 = vrot.slane %v2334, 1
        %v2337 = vor.u32 %v2332, %v2336
        %v2339 = vshll.u32 %v1918, 16
        %v2341 = vrot.slane %v2339, 1
        %v2342 = vsel %vm769, %v2337, %v2341
        %v2343 = vshrl.u32 %v1918, 16
        %v2345 = vor.u32 %v2343, %v2341
        %v2347 = vshll.u32 %v2030, 16
        %v2349 = vrot.slane %v2347, 1
        %v2350 = vsel %vm769, %v2345, %v2349
        %2351 = vrot.lane.b32.xlu0 %v2042, 80
        %v2352 = vpop.permute.xlu0 %2351
        %2353 = vrot.lane.b32.xlu0 %v2050, 80
        %v2354 = vpop.permute.xlu0 %2353
        %2355 = vrot.lane.b32.xlu0 %v2062, 80
        %v2356 = vpop.permute.xlu0 %2355
        %2357 = vrot.lane.b32.xlu0 %v2070, 80
        %v2358 = vpop.permute.xlu0 %2357
        %2359 = vrot.lane.b32.xlu0 %v2082, 80
        %v2360 = vpop.permute.xlu0 %2359
        %2361 = vrot.lane.b32.xlu0 %v2090, 80
        %v2362 = vpop.permute.xlu0 %2361
        %2363 = vrot.lane.b32.xlu0 %v2102, 80
        %v2364 = vpop.permute.xlu0 %2363
        %2365 = vrot.lane.b32.xlu0 %v2110, 80
        %v2366 = vpop.permute.xlu0 %2365
        %2367 = vrot.lane.b32.xlu0 %v2122, 80
        %v2368 = vpop.permute.xlu0 %2367
        %2369 = vrot.lane.b32.xlu0 %v2130, 80
        %v2370 = vpop.permute.xlu0 %2369
        %2371 = vrot.lane.b32.xlu0 %v2142, 80
        %v2372 = vpop.permute.xlu0 %2371
        %2373 = vrot.lane.b32.xlu0 %v2150, 80
        %v2374 = vpop.permute.xlu0 %2373
        %2375 = vrot.lane.b32.xlu0 %v2162, 80
        %v2376 = vpop.permute.xlu0 %2375
        %2377 = vrot.lane.b32.xlu0 %v2170, 80
        %v2378 = vpop.permute.xlu0 %2377
        %2379 = vrot.lane.b32.xlu0 %v2182, 80
        %v2380 = vpop.permute.xlu0 %2379
        %2381 = vrot.lane.b32.xlu0 %v2190, 80
        %v2382 = vpop.permute.xlu0 %2381
        %2383 = vrot.lane.b32.xlu0 %v2202, 80
        %v2384 = vpop.permute.xlu0 %2383
        %2385 = vrot.lane.b32.xlu0 %v2210, 80
        %v2386 = vpop.permute.xlu0 %2385
        %2387 = vrot.lane.b32.xlu0 %v2222, 80
        %v2388 = vpop.permute.xlu0 %2387
        %2389 = vrot.lane.b32.xlu0 %v2230, 80
        %v2390 = vpop.permute.xlu0 %2389
        %2391 = vrot.lane.b32.xlu0 %v2242, 80
        %v2392 = vpop.permute.xlu0 %2391
        %2393 = vrot.lane.b32.xlu0 %v2250, 80
        %v2394 = vpop.permute.xlu0 %2393
        %2395 = vrot.lane.b32.xlu0 %v2262, 80
        %v2396 = vpop.permute.xlu0 %2395
        %2397 = vrot.lane.b32.xlu0 %v2270, 80
        %v2398 = vpop.permute.xlu0 %2397
        %2399 = vrot.lane.b32.xlu0 %v2282, 80
        %v2400 = vpop.permute.xlu0 %2399
        %2401 = vrot.lane.b32.xlu0 %v2290, 80
        %v2402 = vpop.permute.xlu0 %2401
        %2403 = vrot.lane.b32.xlu0 %v2302, 80
        %v2404 = vpop.permute.xlu0 %2403
        %2405 = vrot.lane.b32.xlu0 %v2310, 80
        %v2406 = vpop.permute.xlu0 %2405
        %2407 = vrot.lane.b32.xlu0 %v2322, 80
        %v2408 = vpop.permute.xlu0 %2407
        %2409 = vrot.lane.b32.xlu0 %v2330, 80
        %v2410 = vpop.permute.xlu0 %2409
        %2411 = vrot.lane.b32.xlu0 %v2342, 80
        %v2412 = vpop.permute.xlu0 %2411
        %2413 = vrot.lane.b32.xlu0 %v2350, 80
        %v2414 = vpop.permute.xlu0 %2413
        %v2415 = vrot.slane %v1887, 1
        %v2416 = vrot.slane %v1888, 1
        %v2417 = vsel %vm1154, %v2415, %v2416
        %v2418 = vrot.slane %v2015, 1
        %v2419 = vsel %vm1154, %v2416, %v2418
        %v2420 = vrot.slane %v1889, 1
        %v2421 = vrot.slane %v1890, 1
        %v2422 = vsel %vm1154, %v2420, %v2421
        %v2423 = vrot.slane %v2016, 1
        %v2424 = vsel %vm1154, %v2421, %v2423
        %v2425 = vrot.slane %v1891, 1
        %v2426 = vrot.slane %v1892, 1
        %v2427 = vsel %vm1154, %v2425, %v2426
        %v2428 = vrot.slane %v2017, 1
        %v2429 = vsel %vm1154, %v2426, %v2428
        %v2430 = vrot.slane %v1893, 1
        %v2431 = vrot.slane %v1894, 1
        %v2432 = vsel %vm1154, %v2430, %v2431
        %v2433 = vrot.slane %v2018, 1
        %v2434 = vsel %vm1154, %v2431, %v2433
        %v2435 = vrot.slane %v1895, 1
        %v2436 = vrot.slane %v1896, 1
        %v2437 = vsel %vm1154, %v2435, %v2436
        %v2438 = vrot.slane %v2019, 1
        %v2439 = vsel %vm1154, %v2436, %v2438
        %v2440 = vrot.slane %v1897, 1
        %v2441 = vrot.slane %v1898, 1
        %v2442 = vsel %vm1154, %v2440, %v2441
        %v2443 = vrot.slane %v2020, 1
        %v2444 = vsel %vm1154, %v2441, %v2443
        %v2445 = vrot.slane %v1899, 1
        %v2446 = vrot.slane %v1900, 1
        %v2447 = vsel %vm1154, %v2445, %v2446
        %v2448 = vrot.slane %v2021, 1
        %v2449 = vsel %vm1154, %v2446, %v2448
        %v2450 = vrot.slane %v1901, 1
        %v2451 = vrot.slane %v1902, 1
        %v2452 = vsel %vm1154, %v2450, %v2451
        %v2453 = vrot.slane %v2022, 1
        %v2454 = vsel %vm1154, %v2451, %v2453
        %v2455 = vrot.slane %v1903, 1
        %v2456 = vrot.slane %v1904, 1
        %v2457 = vsel %vm1154, %v2455, %v2456
        %v2458 = vrot.slane %v2023, 1
        %v2459 = vsel %vm1154, %v2456, %v2458
        %v2460 = vrot.slane %v1905, 1
        %v2461 = vrot.slane %v1906, 1
        %v2462 = vsel %vm1154, %v2460, %v2461
        %v2463 = vrot.slane %v2024, 1
        %v2464 = vsel %vm1154, %v2461, %v2463
        %v2465 = vrot.slane %v1907, 1
        %v2466 = vrot.slane %v1908, 1
        %v2467 = vsel %vm1154, %v2465, %v2466
        %v2468 = vrot.slane %v2025, 1
        %v2469 = vsel %vm1154, %v2466, %v2468
        %v2470 = vrot.slane %v1909, 1
        %v2471 = vrot.slane %v1910, 1
        %v2472 = vsel %vm1154, %v2470, %v2471
        %v2473 = vrot.slane %v2026, 1
        %v2474 = vsel %vm1154, %v2471, %v2473
        %v2475 = vrot.slane %v1911, 1
        %v2476 = vrot.slane %v1912, 1
        %v2477 = vsel %vm1154, %v2475, %v2476
        %v2478 = vrot.slane %v2027, 1
        %v2479 = vsel %vm1154, %v2476, %v2478
        %v2480 = vrot.slane %v1913, 1
        %v2481 = vrot.slane %v1914, 1
        %v2482 = vsel %vm1154, %v2480, %v2481
        %v2483 = vrot.slane %v2028, 1
        %v2484 = vsel %vm1154, %v2481, %v2483
        %v2485 = vrot.slane %v1915, 1
        %v2486 = vrot.slane %v1916, 1
        %v2487 = vsel %vm1154, %v2485, %v2486
        %v2488 = vrot.slane %v2029, 1
        %v2489 = vsel %vm1154, %v2486, %v2488
        %v2490 = vrot.slane %v1917, 1
        %v2491 = vrot.slane %v1918, 1
        %v2492 = vsel %vm1154, %v2490, %v2491
        %v2493 = vrot.slane %v2030, 1
        %v2494 = vsel %vm1154, %v2491, %v2493
        %2495 = vrot.lane.b32.xlu0 %v2417, 88
        %v2496 = vpop.permute.xlu0 %2495
        %2497 = vrot.lane.b32.xlu0 %v2419, 88
        %v2498 = vpop.permute.xlu0 %2497
        %2499 = vrot.lane.b32.xlu0 %v2422, 88
        %v2500 = vpop.permute.xlu0 %2499
        %2501 = vrot.lane.b32.xlu0 %v2424, 88
        %v2502 = vpop.permute.xlu0 %2501
        %2503 = vrot.lane.b32.xlu0 %v2427, 88
        %v2504 = vpop.permute.xlu0 %2503
        %2505 = vrot.lane.b32.xlu0 %v2429, 88
        %v2506 = vpop.permute.xlu0 %2505
        %2507 = vrot.lane.b32.xlu0 %v2432, 88
        %v2508 = vpop.permute.xlu0 %2507
        %2509 = vrot.lane.b32.xlu0 %v2434, 88
        %v2510 = vpop.permute.xlu0 %2509
        %2511 = vrot.lane.b32.xlu0 %v2437, 88
        %v2512 = vpop.permute.xlu0 %2511
        %2513 = vrot.lane.b32.xlu0 %v2439, 88
        %v2514 = vpop.permute.xlu0 %2513
        %2515 = vrot.lane.b32.xlu0 %v2442, 88
        %v2516 = vpop.permute.xlu0 %2515
        %2517 = vrot.lane.b32.xlu0 %v2444, 88
        %v2518 = vpop.permute.xlu0 %2517
        %2519 = vrot.lane.b32.xlu0 %v2447, 88
        %v2520 = vpop.permute.xlu0 %2519
        %2521 = vrot.lane.b32.xlu0 %v2449, 88
        %v2522 = vpop.permute.xlu0 %2521
        %2523 = vrot.lane.b32.xlu0 %v2452, 88
        %v2524 = vpop.permute.xlu0 %2523
        %2525 = vrot.lane.b32.xlu0 %v2454, 88
        %v2526 = vpop.permute.xlu0 %2525
        %2527 = vrot.lane.b32.xlu0 %v2457, 88
        %v2528 = vpop.permute.xlu0 %2527
        %2529 = vrot.lane.b32.xlu0 %v2459, 88
        %v2530 = vpop.permute.xlu0 %2529
        %2531 = vrot.lane.b32.xlu0 %v2462, 88
        %v2532 = vpop.permute.xlu0 %2531
        %2533 = vrot.lane.b32.xlu0 %v2464, 88
        %v2534 = vpop.permute.xlu0 %2533
        %2535 = vrot.lane.b32.xlu0 %v2467, 88
        %v2536 = vpop.permute.xlu0 %2535
        %2537 = vrot.lane.b32.xlu0 %v2469, 88
        %v2538 = vpop.permute.xlu0 %2537
        %2539 = vrot.lane.b32.xlu0 %v2472, 88
        %v2540 = vpop.permute.xlu0 %2539
        %2541 = vrot.lane.b32.xlu0 %v2474, 88
        %v2542 = vpop.permute.xlu0 %2541
        %2543 = vrot.lane.b32.xlu0 %v2477, 88
        %v2544 = vpop.permute.xlu0 %2543
        %2545 = vrot.lane.b32.xlu0 %v2479, 88
        %v2546 = vpop.permute.xlu0 %2545
        %2547 = vrot.lane.b32.xlu0 %v2482, 88
        %v2548 = vpop.permute.xlu0 %2547
        %2549 = vrot.lane.b32.xlu0 %v2484, 88
        %v2550 = vpop.permute.xlu0 %2549
        %2551 = vrot.lane.b32.xlu0 %v2487, 88
        %v2552 = vpop.permute.xlu0 %2551
        %2553 = vrot.lane.b32.xlu0 %v2489, 88
        %v2554 = vpop.permute.xlu0 %2553
        %2555 = vrot.lane.b32.xlu0 %v2492, 88
        %v2556 = vpop.permute.xlu0 %2555
        %2557 = vrot.lane.b32.xlu0 %v2494, 88
        %v2558 = vpop.permute.xlu0 %2557
        %v2563 = vunpack.c.l.b16 %v551
        %v2564 = vunpack.c.l.b16 %v552
        %v2565 = vunpack.c.l.b16 %v553
        %v2566 = vunpack.c.l.b16 %v554
        %v2567 = vpack.c.b16 %v2564, %v2563
        %v2568 = vpack.c.b16 %v2566, %v2565
        %2569 = vrot.lane.b32.xlu0 %v1889, 96
        %v2570 = vpop.permute.xlu0 %2569
        %2571 = vrot.lane.b32.xlu0 %v1890, 96
        %v2572 = vpop.permute.xlu0 %2571
        %2573 = vrot.lane.b32.xlu0 %v1891, 96
        %v2574 = vpop.permute.xlu0 %2573
        %2575 = vrot.lane.b32.xlu0 %v1892, 96
        %v2576 = vpop.permute.xlu0 %2575
        %2577 = vrot.lane.b32.xlu0 %v1893, 96
        %v2578 = vpop.permute.xlu0 %2577
        %2579 = vrot.lane.b32.xlu0 %v1894, 96
        %v2580 = vpop.permute.xlu0 %2579
        %2581 = vrot.lane.b32.xlu0 %v1895, 96
        %v2582 = vpop.permute.xlu0 %2581
        %2583 = vrot.lane.b32.xlu0 %v1896, 96
        %v2584 = vpop.permute.xlu0 %2583
        %2585 = vrot.lane.b32.xlu0 %v1897, 96
        %v2586 = vpop.permute.xlu0 %2585
        %2587 = vrot.lane.b32.xlu0 %v1898, 96
        %v2588 = vpop.permute.xlu0 %2587
        %2589 = vrot.lane.b32.xlu0 %v1899, 96
        %v2590 = vpop.permute.xlu0 %2589
        %2591 = vrot.lane.b32.xlu0 %v1900, 96
        %v2592 = vpop.permute.xlu0 %2591
        %2593 = vrot.lane.b32.xlu0 %v1901, 96
        %v2594 = vpop.permute.xlu0 %2593
        %2595 = vrot.lane.b32.xlu0 %v1902, 96
        %v2596 = vpop.permute.xlu0 %2595
        %2597 = vrot.lane.b32.xlu0 %v1903, 96
        %v2598 = vpop.permute.xlu0 %2597
        %2599 = vrot.lane.b32.xlu0 %v1904, 96
        %v2600 = vpop.permute.xlu0 %2599
        %2601 = vrot.lane.b32.xlu0 %v1905, 96
        %v2602 = vpop.permute.xlu0 %2601
        %2603 = vrot.lane.b32.xlu0 %v1906, 96
        %v2604 = vpop.permute.xlu0 %2603
        %2605 = vrot.lane.b32.xlu0 %v1907, 96
        %v2606 = vpop.permute.xlu0 %2605
        %2607 = vrot.lane.b32.xlu0 %v1908, 96
        %v2608 = vpop.permute.xlu0 %2607
        %2609 = vrot.lane.b32.xlu0 %v1909, 96
        %v2610 = vpop.permute.xlu0 %2609
        %2611 = vrot.lane.b32.xlu0 %v1910, 96
        %v2612 = vpop.permute.xlu0 %2611
        %2613 = vrot.lane.b32.xlu0 %v1911, 96
        %v2614 = vpop.permute.xlu0 %2613
        %2615 = vrot.lane.b32.xlu0 %v1912, 96
        %v2616 = vpop.permute.xlu0 %2615
        %2617 = vrot.lane.b32.xlu0 %v1913, 96
        %v2618 = vpop.permute.xlu0 %2617
        %2619 = vrot.lane.b32.xlu0 %v1914, 96
        %v2620 = vpop.permute.xlu0 %2619
        %2621 = vrot.lane.b32.xlu0 %v1915, 96
        %v2622 = vpop.permute.xlu0 %2621
        %2623 = vrot.lane.b32.xlu0 %v1916, 96
        %v2624 = vpop.permute.xlu0 %2623
        %2625 = vrot.lane.b32.xlu0 %v1917, 96
        %v2626 = vpop.permute.xlu0 %2625
        %2627 = vrot.lane.b32.xlu0 %v1918, 96
        %v2628 = vpop.permute.xlu0 %2627
        %2629 = vrot.lane.b32.xlu0 %v2567, 96
        %v2630 = vpop.permute.xlu0 %2629
        %2631 = vrot.lane.b32.xlu0 %v2568, 96
        %v2632 = vpop.permute.xlu0 %2631
        %v2634 = vunpack.c.l.b16 %v555
        %v2635 = vpack.c.b16 %v2634, %v2634
        %v2637 = vshrl.u32 %v2567, 16
        %v2639 = vshll.u32 %v2567, 16
        %v2641 = vrot.slane %v2639, 1
        %v2642 = vor.u32 %v2637, %v2641
        %v2644 = vshll.u32 %v2568, 16
        %v2646 = vrot.slane %v2644, 1
        %v2647 = vsel %vm769, %v2642, %v2646
        %v2648 = vshrl.u32 %v2568, 16
        %v2650 = vor.u32 %v2648, %v2646
        %v2652 = vshll.u32 %v2635, 16
        %v2654 = vrot.slane %v2652, 1
        %v2655 = vsel %vm769, %v2650, %v2654
        %2656 = vrot.lane.b32.xlu0 %v2062, 104
        %v2657 = vpop.permute.xlu0 %2656
        %2658 = vrot.lane.b32.xlu0 %v2070, 104
        %v2659 = vpop.permute.xlu0 %2658
        %2660 = vrot.lane.b32.xlu0 %v2082, 104
        %v2661 = vpop.permute.xlu0 %2660
        %2662 = vrot.lane.b32.xlu0 %v2090, 104
        %v2663 = vpop.permute.xlu0 %2662
        %2664 = vrot.lane.b32.xlu0 %v2102, 104
        %v2665 = vpop.permute.xlu0 %2664
        %2666 = vrot.lane.b32.xlu0 %v2110, 104
        %v2667 = vpop.permute.xlu0 %2666
        %2668 = vrot.lane.b32.xlu0 %v2122, 104
        %v2669 = vpop.permute.xlu0 %2668
        %2670 = vrot.lane.b32.xlu0 %v2130, 104
        %v2671 = vpop.permute.xlu0 %2670
        %2672 = vrot.lane.b32.xlu0 %v2142, 104
        %v2673 = vpop.permute.xlu0 %2672
        %2674 = vrot.lane.b32.xlu0 %v2150, 104
        %v2675 = vpop.permute.xlu0 %2674
        %2676 = vrot.lane.b32.xlu0 %v2162, 104
        %v2677 = vpop.permute.xlu0 %2676
        %2678 = vrot.lane.b32.xlu0 %v2170, 104
        %v2679 = vpop.permute.xlu0 %2678
        %2680 = vrot.lane.b32.xlu0 %v2182, 104
        %v2681 = vpop.permute.xlu0 %2680
        %2682 = vrot.lane.b32.xlu0 %v2190, 104
        %v2683 = vpop.permute.xlu0 %2682
        %2684 = vrot.lane.b32.xlu0 %v2202, 104
        %v2685 = vpop.permute.xlu0 %2684
        %2686 = vrot.lane.b32.xlu0 %v2210, 104
        %v2687 = vpop.permute.xlu0 %2686
        %2688 = vrot.lane.b32.xlu0 %v2222, 104
        %v2689 = vpop.permute.xlu0 %2688
        %2690 = vrot.lane.b32.xlu0 %v2230, 104
        %v2691 = vpop.permute.xlu0 %2690
        %2692 = vrot.lane.b32.xlu0 %v2242, 104
        %v2693 = vpop.permute.xlu0 %2692
        %2694 = vrot.lane.b32.xlu0 %v2250, 104
        %v2695 = vpop.permute.xlu0 %2694
        %2696 = vrot.lane.b32.xlu0 %v2262, 104
        %v2697 = vpop.permute.xlu0 %2696
        %2698 = vrot.lane.b32.xlu0 %v2270, 104
        %v2699 = vpop.permute.xlu0 %2698
        %2700 = vrot.lane.b32.xlu0 %v2282, 104
        %v2701 = vpop.permute.xlu0 %2700
        %2702 = vrot.lane.b32.xlu0 %v2290, 104
        %v2703 = vpop.permute.xlu0 %2702
        %2704 = vrot.lane.b32.xlu0 %v2302, 104
        %v2705 = vpop.permute.xlu0 %2704
        %2706 = vrot.lane.b32.xlu0 %v2310, 104
        %v2707 = vpop.permute.xlu0 %2706
        %2708 = vrot.lane.b32.xlu0 %v2322, 104
        %v2709 = vpop.permute.xlu0 %2708
        %2710 = vrot.lane.b32.xlu0 %v2330, 104
        %v2711 = vpop.permute.xlu0 %2710
        %2712 = vrot.lane.b32.xlu0 %v2342, 104
        %v2713 = vpop.permute.xlu0 %2712
        %2714 = vrot.lane.b32.xlu0 %v2350, 104
        %v2715 = vpop.permute.xlu0 %2714
        %2716 = vrot.lane.b32.xlu0 %v2647, 104
        %v2717 = vpop.permute.xlu0 %2716
        %2718 = vrot.lane.b32.xlu0 %v2655, 104
        %v2719 = vpop.permute.xlu0 %2718
        %v2720 = vrot.slane %v2567, 1
        %v2721 = vrot.slane %v2568, 1
        %v2722 = vsel %vm1154, %v2720, %v2721
        %v2723 = vrot.slane %v2635, 1
        %v2724 = vsel %vm1154, %v2721, %v2723
        %2725 = vrot.lane.b32.xlu0 %v2422, 112
        %v2726 = vpop.permute.xlu0 %2725
        %2727 = vrot.lane.b32.xlu0 %v2424, 112
        %v2728 = vpop.permute.xlu0 %2727
        %2729 = vrot.lane.b32.xlu0 %v2427, 112
        %v2730 = vpop.permute.xlu0 %2729
        %2731 = vrot.lane.b32.xlu0 %v2429, 112
        %v2732 = vpop.permute.xlu0 %2731
        %2733 = vrot.lane.b32.xlu0 %v2432, 112
        %v2734 = vpop.permute.xlu0 %2733
        %2735 = vrot.lane.b32.xlu0 %v2434, 112
        %v2736 = vpop.permute.xlu0 %2735
        %2737 = vrot.lane.b32.xlu0 %v2437, 112
        %v2738 = vpop.permute.xlu0 %2737
        %2739 = vrot.lane.b32.xlu0 %v2439, 112
        %v2740 = vpop.permute.xlu0 %2739
        %2741 = vrot.lane.b32.xlu0 %v2442, 112
        %v2742 = vpop.permute.xlu0 %2741
        %2743 = vrot.lane.b32.xlu0 %v2444, 112
        %v2744 = vpop.permute.xlu0 %2743
        %2745 = vrot.lane.b32.xlu0 %v2447, 112
        %v2746 = vpop.permute.xlu0 %2745
        %2747 = vrot.lane.b32.xlu0 %v2449, 112
        %v2748 = vpop.permute.xlu0 %2747
        %2749 = vrot.lane.b32.xlu0 %v2452, 112
        %v2750 = vpop.permute.xlu0 %2749
        %2751 = vrot.lane.b32.xlu0 %v2454, 112
        %v2752 = vpop.permute.xlu0 %2751
        %2753 = vrot.lane.b32.xlu0 %v2457, 112
        %v2754 = vpop.permute.xlu0 %2753
        %2755 = vrot.lane.b32.xlu0 %v2459, 112
        %v2756 = vpop.permute.xlu0 %2755
        %2757 = vrot.lane.b32.xlu0 %v2462, 112
        %v2758 = vpop.permute.xlu0 %2757
        %2759 = vrot.lane.b32.xlu0 %v2464, 112
        %v2760 = vpop.permute.xlu0 %2759
        %2761 = vrot.lane.b32.xlu0 %v2467, 112
        %v2762 = vpop.permute.xlu0 %2761
        %2763 = vrot.lane.b32.xlu0 %v2469, 112
        %v2764 = vpop.permute.xlu0 %2763
        %2765 = vrot.lane.b32.xlu0 %v2472, 112
        %v2766 = vpop.permute.xlu0 %2765
        %2767 = vrot.lane.b32.xlu0 %v2474, 112
        %v2768 = vpop.permute.xlu0 %2767
        %2769 = vrot.lane.b32.xlu0 %v2477, 112
        %v2770 = vpop.permute.xlu0 %2769
        %2771 = vrot.lane.b32.xlu0 %v2479, 112
        %v2772 = vpop.permute.xlu0 %2771
        %2773 = vrot.lane.b32.xlu0 %v2482, 112
        %v2774 = vpop.permute.xlu0 %2773
        %2775 = vrot.lane.b32.xlu0 %v2484, 112
        %v2776 = vpop.permute.xlu0 %2775
        %2777 = vrot.lane.b32.xlu0 %v2487, 112
        %v2778 = vpop.permute.xlu0 %2777
        %2779 = vrot.lane.b32.xlu0 %v2489, 112
        %v2780 = vpop.permute.xlu0 %2779
        %2781 = vrot.lane.b32.xlu0 %v2492, 112
        %v2782 = vpop.permute.xlu0 %2781
        %2783 = vrot.lane.b32.xlu0 %v2494, 112
        %v2784 = vpop.permute.xlu0 %2783
        %2785 = vrot.lane.b32.xlu0 %v2722, 112
        %v2786 = vpop.permute.xlu0 %2785
        %2787 = vrot.lane.b32.xlu0 %v2724, 112
        %v2788 = vpop.permute.xlu0 %2787
        %v2793 = vunpack.c.l.b16 %v556
        %v2794 = vunpack.c.l.b16 %v557
        %v2795 = vunpack.c.l.b16 %v558
        %v2796 = vunpack.c.l.b16 %v559
        %v2797 = vpack.c.b16 %v2794, %v2793
        %v2798 = vpack.c.b16 %v2796, %v2795
        %2799 = vrot.lane.b32.xlu0 %v1891, 120
        %v2800 = vpop.permute.xlu0 %2799
        %2801 = vrot.lane.b32.xlu0 %v1892, 120
        %v2802 = vpop.permute.xlu0 %2801
        %2803 = vrot.lane.b32.xlu0 %v1893, 120
        %v2804 = vpop.permute.xlu0 %2803
        %2805 = vrot.lane.b32.xlu0 %v1894, 120
        %v2806 = vpop.permute.xlu0 %2805
        %2807 = vrot.lane.b32.xlu0 %v1895, 120
        %v2808 = vpop.permute.xlu0 %2807
        %2809 = vrot.lane.b32.xlu0 %v1896, 120
        %v2810 = vpop.permute.xlu0 %2809
        %2811 = vrot.lane.b32.xlu0 %v1897, 120
        %v2812 = vpop.permute.xlu0 %2811
        %2813 = vrot.lane.b32.xlu0 %v1898, 120
        %v2814 = vpop.permute.xlu0 %2813
        %2815 = vrot.lane.b32.xlu0 %v1899, 120
        %v2816 = vpop.permute.xlu0 %2815
        %2817 = vrot.lane.b32.xlu0 %v1900, 120
        %v2818 = vpop.permute.xlu0 %2817
        %2819 = vrot.lane.b32.xlu0 %v1901, 120
        %v2820 = vpop.permute.xlu0 %2819
        %2821 = vrot.lane.b32.xlu0 %v1902, 120
        %v2822 = vpop.permute.xlu0 %2821
        %2823 = vrot.lane.b32.xlu0 %v1903, 120
        %v2824 = vpop.permute.xlu0 %2823
        %2825 = vrot.lane.b32.xlu0 %v1904, 120
        %v2826 = vpop.permute.xlu0 %2825
        %2827 = vrot.lane.b32.xlu0 %v1905, 120
        %v2828 = vpop.permute.xlu0 %2827
        %2829 = vrot.lane.b32.xlu0 %v1906, 120
        %v2830 = vpop.permute.xlu0 %2829
        %2831 = vrot.lane.b32.xlu0 %v1907, 120
        %v2832 = vpop.permute.xlu0 %2831
        %2833 = vrot.lane.b32.xlu0 %v1908, 120
        %v2834 = vpop.permute.xlu0 %2833
        %2835 = vrot.lane.b32.xlu0 %v1909, 120
        %v2836 = vpop.permute.xlu0 %2835
        %2837 = vrot.lane.b32.xlu0 %v1910, 120
        %v2838 = vpop.permute.xlu0 %2837
        %2839 = vrot.lane.b32.xlu0 %v1911, 120
        %v2840 = vpop.permute.xlu0 %2839
        %2841 = vrot.lane.b32.xlu0 %v1912, 120
        %v2842 = vpop.permute.xlu0 %2841
        %2843 = vrot.lane.b32.xlu0 %v1913, 120
        %v2844 = vpop.permute.xlu0 %2843
        %2845 = vrot.lane.b32.xlu0 %v1914, 120
        %v2846 = vpop.permute.xlu0 %2845
        %2847 = vrot.lane.b32.xlu0 %v1915, 120
        %v2848 = vpop.permute.xlu0 %2847
        %2849 = vrot.lane.b32.xlu0 %v1916, 120
        %v2850 = vpop.permute.xlu0 %2849
        %2851 = vrot.lane.b32.xlu0 %v1917, 120
        %v2852 = vpop.permute.xlu0 %2851
        %2853 = vrot.lane.b32.xlu0 %v1918, 120
        %v2854 = vpop.permute.xlu0 %2853
        %2855 = vrot.lane.b32.xlu0 %v2567, 120
        %v2856 = vpop.permute.xlu0 %2855
        %2857 = vrot.lane.b32.xlu0 %v2568, 120
        %v2858 = vpop.permute.xlu0 %2857
        %2859 = vrot.lane.b32.xlu0 %v2797, 120
        %v2860 = vpop.permute.xlu0 %2859
        %2861 = vrot.lane.b32.xlu0 %v2798, 120
        %v2862 = vpop.permute.xlu0 %2861
        %vm2863 = vcmask 64512
        %v2865 = vsel %vm2863, %v689, %v1091
        %v2867 = vsel %vm2863, %v690, %v1093
        %v2869 = vsel %vm2863, %v691, %v1095
        %v2871 = vsel %vm2863, %v692, %v1097
        %v2873 = vsel %vm2863, %v693, %v1099
        %v2875 = vsel %vm2863, %v694, %v1101
        %v2877 = vsel %vm2863, %v695, %v1103
        %v2879 = vsel %vm2863, %v696, %v1105
        %v2881 = vsel %vm2863, %v697, %v1107
        %v2883 = vsel %vm2863, %v698, %v1109
        %v2885 = vsel %vm2863, %v699, %v1111
        %v2887 = vsel %vm2863, %v700, %v1113
        %v2889 = vsel %vm2863, %v701, %v1115
        %v2891 = vsel %vm2863, %v702, %v1117
        %v2893 = vsel %vm2863, %v703, %v1119
        %v2895 = vsel %vm2863, %v704, %v1121
        %v2897 = vsel %vm2863, %v705, %v1123
        %v2899 = vsel %vm2863, %v706, %v1125
        %v2901 = vsel %vm2863, %v707, %v1127
        %v2903 = vsel %vm2863, %v708, %v1129
        %v2905 = vsel %vm2863, %v709, %v1131
        %v2907 = vsel %vm2863, %v710, %v1133
        %v2909 = vsel %vm2863, %v711, %v1135
        %v2911 = vsel %vm2863, %v712, %v1137
        %v2913 = vsel %vm2863, %v713, %v1139
        %v2915 = vsel %vm2863, %v714, %v1141
        %v2917 = vsel %vm2863, %v715, %v1143
        %v2919 = vsel %vm2863, %v716, %v1145
        %v2921 = vsel %vm2863, %v717, %v1147
        %v2923 = vsel %vm2863, %v718, %v1149
        %v2925 = vsel %vm2863, %v719, %v1151
        %v2927 = vsel %vm2863, %v720, %v1153
        %vm2928 = vcmask 130048
        %v2930 = vsel %vm2928, %v2865, %v1236
        %v2932 = vsel %vm2928, %v2867, %v1238
        %v2934 = vsel %vm2928, %v2869, %v1240
        %v2936 = vsel %vm2928, %v2871, %v1242
        %v2938 = vsel %vm2928, %v2873, %v1244
        %v2940 = vsel %vm2928, %v2875, %v1246
        %v2942 = vsel %vm2928, %v2877, %v1248
        %v2944 = vsel %vm2928, %v2879, %v1250
        %v2946 = vsel %vm2928, %v2881, %v1252
        %v2948 = vsel %vm2928, %v2883, %v1254
        %v2950 = vsel %vm2928, %v2885, %v1256
        %v2952 = vsel %vm2928, %v2887, %v1258
        %v2954 = vsel %vm2928, %v2889, %v1260
        %v2956 = vsel %vm2928, %v2891, %v1262
        %v2958 = vsel %vm2928, %v2893, %v1264
        %v2960 = vsel %vm2928, %v2895, %v1266
        %v2962 = vsel %vm2928, %v2897, %v1268
        %v2964 = vsel %vm2928, %v2899, %v1270
        %v2966 = vsel %vm2928, %v2901, %v1272
        %v2968 = vsel %vm2928, %v2903, %v1274
        %v2970 = vsel %vm2928, %v2905, %v1276
        %v2972 = vsel %vm2928, %v2907, %v1278
        %v2974 = vsel %vm2928, %v2909, %v1280
        %v2976 = vsel %vm2928, %v2911, %v1282
        %v2978 = vsel %vm2928, %v2913, %v1284
        %v2980 = vsel %vm2928, %v2915, %v1286
        %v2982 = vsel %vm2928, %v2917, %v1288
        %v2984 = vsel %vm2928, %v2919, %v1290
        %v2986 = vsel %vm2928, %v2921, %v1292
        %v2988 = vsel %vm2928, %v2923, %v1294
        %v2990 = vsel %vm2928, %v2925, %v1296
        %v2992 = vsel %vm2928, %v2927, %v1298
        %vm2993 = vcmask 195584
        %v2995 = vsel %vm2993, %v2930, %v1310
        %v2997 = vsel %vm2993, %v2932, %v1312
        %v2999 = vsel %vm2993, %v2934, %v1314
        %v3001 = vsel %vm2993, %v2936, %v1316
        %v3003 = vsel %vm2993, %v2938, %v1318
        %v3005 = vsel %vm2993, %v2940, %v1320
        %v3007 = vsel %vm2993, %v2942, %v1322
        %v3009 = vsel %vm2993, %v2944, %v1324
        %v3011 = vsel %vm2993, %v2946, %v1326
        %v3013 = vsel %vm2993, %v2948, %v1328
        %v3015 = vsel %vm2993, %v2950, %v1330
        %v3017 = vsel %vm2993, %v2952, %v1332
        %v3019 = vsel %vm2993, %v2954, %v1334
        %v3021 = vsel %vm2993, %v2956, %v1336
        %v3023 = vsel %vm2993, %v2958, %v1338
        %v3025 = vsel %vm2993, %v2960, %v1340
        %v3027 = vsel %vm2993, %v2962, %v1342
        %v3029 = vsel %vm2993, %v2964, %v1344
        %v3031 = vsel %vm2993, %v2966, %v1346
        %v3033 = vsel %vm2993, %v2968, %v1348
        %v3035 = vsel %vm2993, %v2970, %v1350
        %v3037 = vsel %vm2993, %v2972, %v1352
        %v3039 = vsel %vm2993, %v2974, %v1354
        %v3041 = vsel %vm2993, %v2976, %v1356
        %v3043 = vsel %vm2993, %v2978, %v1358
        %v3045 = vsel %vm2993, %v2980, %v1360
        %v3047 = vsel %vm2993, %v2982, %v1362
        %v3049 = vsel %vm2993, %v2984, %v1364
        %v3051 = vsel %vm2993, %v2986, %v1366
        %v3053 = vsel %vm2993, %v2988, %v1368
        %v3055 = vsel %vm2993, %v2990, %v1370
        %v3057 = vsel %vm2993, %v2992, %v1372
        %vm3058 = vcmask 261120
        %v3060 = vsel %vm3058, %v2995, %v1397
        %v3062 = vsel %vm3058, %v2997, %v1399
        %v3064 = vsel %vm3058, %v2999, %v1401
        %v3066 = vsel %vm3058, %v3001, %v1403
        %v3068 = vsel %vm3058, %v3003, %v1405
        %v3070 = vsel %vm3058, %v3005, %v1407
        %v3072 = vsel %vm3058, %v3007, %v1409
        %v3074 = vsel %vm3058, %v3009, %v1411
        %v3076 = vsel %vm3058, %v3011, %v1413
        %v3078 = vsel %vm3058, %v3013, %v1415
        %v3080 = vsel %vm3058, %v3015, %v1417
        %v3082 = vsel %vm3058, %v3017, %v1419
        %v3084 = vsel %vm3058, %v3019, %v1421
        %v3086 = vsel %vm3058, %v3021, %v1423
        %v3088 = vsel %vm3058, %v3023, %v1425
        %v3090 = vsel %vm3058, %v3025, %v1427
        %v3092 = vsel %vm3058, %v3027, %v1429
        %v3094 = vsel %vm3058, %v3029, %v1431
        %v3096 = vsel %vm3058, %v3031, %v1433
        %v3098 = vsel %vm3058, %v3033, %v1435
        %v3100 = vsel %vm3058, %v3035, %v1437
        %v3102 = vsel %vm3058, %v3037, %v1439
        %v3104 = vsel %vm3058, %v3039, %v1441
        %v3106 = vsel %vm3058, %v3041, %v1443
        %v3108 = vsel %vm3058, %v3043, %v1445
        %v3110 = vsel %vm3058, %v3045, %v1447
        %v3112 = vsel %vm3058, %v3047, %v1449
        %v3114 = vsel %vm3058, %v3049, %v1451
        %v3116 = vsel %vm3058, %v3051, %v1453
        %v3118 = vsel %vm3058, %v3053, %v1455
        %v3120 = vsel %vm3058, %v3055, %v1457
        %v3122 = vsel %vm3058, %v3057, %v1459
        %vm3123 = vcmask 326656
        %v3125 = vsel %vm3123, %v3060, %v1466
        %v3127 = vsel %vm3123, %v3062, %v1468
        %v3129 = vsel %vm3123, %v3064, %v1470
        %v3131 = vsel %vm3123, %v3066, %v1472
        %v3133 = vsel %vm3123, %v3068, %v1474
        %v3135 = vsel %vm3123, %v3070, %v1476
        %v3137 = vsel %vm3123, %v3072, %v1478
        %v3139 = vsel %vm3123, %v3074, %v1480
        %v3141 = vsel %vm3123, %v3076, %v1482
        %v3143 = vsel %vm3123, %v3078, %v1484
        %v3145 = vsel %vm3123, %v3080, %v1486
        %v3147 = vsel %vm3123, %v3082, %v1488
        %v3149 = vsel %vm3123, %v3084, %v1490
        %v3151 = vsel %vm3123, %v3086, %v1492
        %v3153 = vsel %vm3123, %v3088, %v1494
        %v3155 = vsel %vm3123, %v3090, %v1496
        %v3157 = vsel %vm3123, %v3092, %v1498
        %v3159 = vsel %vm3123, %v3094, %v1500
        %v3161 = vsel %vm3123, %v3096, %v1502
        %v3163 = vsel %vm3123, %v3098, %v1504
        %v3165 = vsel %vm3123, %v3100, %v1506
        %v3167 = vsel %vm3123, %v3102, %v1508
        %v3169 = vsel %vm3123, %v3104, %v1510
        %v3171 = vsel %vm3123, %v3106, %v1512
        %v3173 = vsel %vm3123, %v3108, %v1514
        %v3175 = vsel %vm3123, %v3110, %v1516
        %v3177 = vsel %vm3123, %v3112, %v1518
        %v3179 = vsel %vm3123, %v3114, %v1520
        %v3181 = vsel %vm3123, %v3116, %v1522
        %v3183 = vsel %vm3123, %v3118, %v1524
        %v3185 = vsel %vm3123, %v3120, %v1526
        %v3187 = vsel %vm3123, %v3122, %v1528
        %vm3188 = vcmask 392192
        %v3190 = vsel %vm3188, %v3125, %v1540
        %v3192 = vsel %vm3188, %v3127, %v1542
        %v3194 = vsel %vm3188, %v3129, %v1544
        %v3196 = vsel %vm3188, %v3131, %v1546
        %v3198 = vsel %vm3188, %v3133, %v1548
        %v3200 = vsel %vm3188, %v3135, %v1550
        %v3202 = vsel %vm3188, %v3137, %v1552
        %v3204 = vsel %vm3188, %v3139, %v1554
        %v3206 = vsel %vm3188, %v3141, %v1556
        %v3208 = vsel %vm3188, %v3143, %v1558
        %v3210 = vsel %vm3188, %v3145, %v1560
        %v3212 = vsel %vm3188, %v3147, %v1562
        %v3214 = vsel %vm3188, %v3149, %v1564
        %v3216 = vsel %vm3188, %v3151, %v1566
        %v3218 = vsel %vm3188, %v3153, %v1568
        %v3220 = vsel %vm3188, %v3155, %v1570
        %v3222 = vsel %vm3188, %v3157, %v1572
        %v3224 = vsel %vm3188, %v3159, %v1574
        %v3226 = vsel %vm3188, %v3161, %v1576
        %v3228 = vsel %vm3188, %v3163, %v1578
        %v3230 = vsel %vm3188, %v3165, %v1580
        %v3232 = vsel %vm3188, %v3167, %v1582
        %v3234 = vsel %vm3188, %v3169, %v1584
        %v3236 = vsel %vm3188, %v3171, %v1586
        %v3238 = vsel %vm3188, %v3173, %v1588
        %v3240 = vsel %vm3188, %v3175, %v1590
        %v3242 = vsel %vm3188, %v3177, %v1592
        %v3244 = vsel %vm3188, %v3179, %v1594
        %v3246 = vsel %vm3188, %v3181, %v1596
        %v3248 = vsel %vm3188, %v3183, %v1598
        %v3250 = vsel %vm3188, %v3185, %v1600
        %v3252 = vsel %vm3188, %v3187, %v1602
        %vm3253 = vcmask 457728
        %v3255 = vsel %vm3253, %v3190, %v1627
        %v3257 = vsel %vm3253, %v3192, %v1629
        %v3259 = vsel %vm3253, %v3194, %v1631
        %v3261 = vsel %vm3253, %v3196, %v1633
        %v3263 = vsel %vm3253, %v3198, %v1635
        %v3265 = vsel %vm3253, %v3200, %v1637
        %v3267 = vsel %vm3253, %v3202, %v1639
        %v3269 = vsel %vm3253, %v3204, %v1641
        %v3271 = vsel %vm3253, %v3206, %v1643
        %v3273 = vsel %vm3253, %v3208, %v1645
        %v3275 = vsel %vm3253, %v3210, %v1647
        %v3277 = vsel %vm3253, %v3212, %v1649
        %v3279 = vsel %vm3253, %v3214, %v1651
        %v3281 = vsel %vm3253, %v3216, %v1653
        %v3283 = vsel %vm3253, %v3218, %v1655
        %v3285 = vsel %vm3253, %v3220, %v1657
        %v3287 = vsel %vm3253, %v3222, %v1659
        %v3289 = vsel %vm3253, %v3224, %v1661
        %v3291 = vsel %vm3253, %v3226, %v1663
        %v3293 = vsel %vm3253, %v3228, %v1665
        %v3295 = vsel %vm3253, %v3230, %v1667
        %v3297 = vsel %vm3253, %v3232, %v1669
        %v3299 = vsel %vm3253, %v3234, %v1671
        %v3301 = vsel %vm3253, %v3236, %v1673
        %v3303 = vsel %vm3253, %v3238, %v1675
        %v3305 = vsel %vm3253, %v3240, %v1677
        %v3307 = vsel %vm3253, %v3242, %v1679
        %v3309 = vsel %vm3253, %v3244, %v1681
        %v3311 = vsel %vm3253, %v3246, %v1683
        %v3313 = vsel %vm3253, %v3248, %v1685
        %v3315 = vsel %vm3253, %v3250, %v1687
        %v3317 = vsel %vm3253, %v3252, %v1689
        %vm3318 = vcmask 523264
        %v3320 = vsel %vm3318, %v3255, %v1696
        %v3322 = vsel %vm3318, %v3257, %v1698
        %v3324 = vsel %vm3318, %v3259, %v1700
        %v3326 = vsel %vm3318, %v3261, %v1702
        %v3328 = vsel %vm3318, %v3263, %v1704
        %v3330 = vsel %vm3318, %v3265, %v1706
        %v3332 = vsel %vm3318, %v3267, %v1708
        %v3334 = vsel %vm3318, %v3269, %v1710
        %v3336 = vsel %vm3318, %v3271, %v1712
        %v3338 = vsel %vm3318, %v3273, %v1714
        %v3340 = vsel %vm3318, %v3275, %v1716
        %v3342 = vsel %vm3318, %v3277, %v1718
        %v3344 = vsel %vm3318, %v3279, %v1720
        %v3346 = vsel %vm3318, %v3281, %v1722
        %v3348 = vsel %vm3318, %v3283, %v1724
        %v3350 = vsel %vm3318, %v3285, %v1726
        %v3352 = vsel %vm3318, %v3287, %v1728
        %v3354 = vsel %vm3318, %v3289, %v1730
        %v3356 = vsel %vm3318, %v3291, %v1732
        %v3358 = vsel %vm3318, %v3293, %v1734
        %v3360 = vsel %vm3318, %v3295, %v1736
        %v3362 = vsel %vm3318, %v3297, %v1738
        %v3364 = vsel %vm3318, %v3299, %v1740
        %v3366 = vsel %vm3318, %v3301, %v1742
        %v3368 = vsel %vm3318, %v3303, %v1744
        %v3370 = vsel %vm3318, %v3305, %v1746
        %v3372 = vsel %vm3318, %v3307, %v1748
        %v3374 = vsel %vm3318, %v3309, %v1750
        %v3376 = vsel %vm3318, %v3311, %v1752
        %v3378 = vsel %vm3318, %v3313, %v1754
        %v3380 = vsel %vm3318, %v3315, %v1756
        %v3382 = vsel %vm3318, %v3317, %v1758
        %vm3383 = vcmask 588800
        %v3385 = vsel %vm3383, %v3320, %v1920
        %v3387 = vsel %vm3383, %v3322, %v1922
        %v3389 = vsel %vm3383, %v3324, %v1924
        %v3391 = vsel %vm3383, %v3326, %v1926
        %v3393 = vsel %vm3383, %v3328, %v1928
        %v3395 = vsel %vm3383, %v3330, %v1930
        %v3397 = vsel %vm3383, %v3332, %v1932
        %v3399 = vsel %vm3383, %v3334, %v1934
        %v3401 = vsel %vm3383, %v3336, %v1936
        %v3403 = vsel %vm3383, %v3338, %v1938
        %v3405 = vsel %vm3383, %v3340, %v1940
        %v3407 = vsel %vm3383, %v3342, %v1942
        %v3409 = vsel %vm3383, %v3344, %v1944
        %v3411 = vsel %vm3383, %v3346, %v1946
        %v3413 = vsel %vm3383, %v3348, %v1948
        %v3415 = vsel %vm3383, %v3350, %v1950
        %v3417 = vsel %vm3383, %v3352, %v1952
        %v3419 = vsel %vm3383, %v3354, %v1954
        %v3421 = vsel %vm3383, %v3356, %v1956
        %v3423 = vsel %vm3383, %v3358, %v1958
        %v3425 = vsel %vm3383, %v3360, %v1960
        %v3427 = vsel %vm3383, %v3362, %v1962
        %v3429 = vsel %vm3383, %v3364, %v1964
        %v3431 = vsel %vm3383, %v3366, %v1966
        %v3433 = vsel %vm3383, %v3368, %v1968
        %v3435 = vsel %vm3383, %v3370, %v1970
        %v3437 = vsel %vm3383, %v3372, %v1972
        %v3439 = vsel %vm3383, %v3374, %v1974
        %v3441 = vsel %vm3383, %v3376, %v1976
        %v3443 = vsel %vm3383, %v3378, %v1978
        %v3445 = vsel %vm3383, %v3380, %v1980
        %v3447 = vsel %vm3383, %v3382, %v1982
        %vm3448 = vcmask 654336
        %v3450 = vsel %vm3448, %v3385, %v2352
        %v3452 = vsel %vm3448, %v3387, %v2354
        %v3454 = vsel %vm3448, %v3389, %v2356
        %v3456 = vsel %vm3448, %v3391, %v2358
        %v3458 = vsel %vm3448, %v3393, %v2360
        %v3460 = vsel %vm3448, %v3395, %v2362
        %v3462 = vsel %vm3448, %v3397, %v2364
        %v3464 = vsel %vm3448, %v3399, %v2366
        %v3466 = vsel %vm3448, %v3401, %v2368
        %v3468 = vsel %vm3448, %v3403, %v2370
        %v3470 = vsel %vm3448, %v3405, %v2372
        %v3472 = vsel %vm3448, %v3407, %v2374
        %v3474 = vsel %vm3448, %v3409, %v2376
        %v3476 = vsel %vm3448, %v3411, %v2378
        %v3478 = vsel %vm3448, %v3413, %v2380
        %v3480 = vsel %vm3448, %v3415, %v2382
        %v3482 = vsel %vm3448, %v3417, %v2384
        %v3484 = vsel %vm3448, %v3419, %v2386
        %v3486 = vsel %vm3448, %v3421, %v2388
        %v3488 = vsel %vm3448, %v3423, %v2390
        %v3490 = vsel %vm3448, %v3425, %v2392
        %v3492 = vsel %vm3448, %v3427, %v2394
        %v3494 = vsel %vm3448, %v3429, %v2396
        %v3496 = vsel %vm3448, %v3431, %v2398
        %v3498 = vsel %vm3448, %v3433, %v2400
        %v3500 = vsel %vm3448, %v3435, %v2402
        %v3502 = vsel %vm3448, %v3437, %v2404
        %v3504 = vsel %vm3448, %v3439, %v2406
        %v3506 = vsel %vm3448, %v3441, %v2408
        %v3508 = vsel %vm3448, %v3443, %v2410
        %v3510 = vsel %vm3448, %v3445, %v2412
        %v3512 = vsel %vm3448, %v3447, %v2414
        %vm3513 = vcmask 719872
        %v3515 = vsel %vm3513, %v3450, %v2496
        %v3517 = vsel %vm3513, %v3452, %v2498
        %v3519 = vsel %vm3513, %v3454, %v2500
        %v3521 = vsel %vm3513, %v3456, %v2502
        %v3523 = vsel %vm3513, %v3458, %v2504
        %v3525 = vsel %vm3513, %v3460, %v2506
        %v3527 = vsel %vm3513, %v3462, %v2508
        %v3529 = vsel %vm3513, %v3464, %v2510
        %v3531 = vsel %vm3513, %v3466, %v2512
        %v3533 = vsel %vm3513, %v3468, %v2514
        %v3535 = vsel %vm3513, %v3470, %v2516
        %v3537 = vsel %vm3513, %v3472, %v2518
        %v3539 = vsel %vm3513, %v3474, %v2520
        %v3541 = vsel %vm3513, %v3476, %v2522
        %v3543 = vsel %vm3513, %v3478, %v2524
        %v3545 = vsel %vm3513, %v3480, %v2526
        %v3547 = vsel %vm3513, %v3482, %v2528
        %v3549 = vsel %vm3513, %v3484, %v2530
        %v3551 = vsel %vm3513, %v3486, %v2532
        %v3553 = vsel %vm3513, %v3488, %v2534
        %v3555 = vsel %vm3513, %v3490, %v2536
        %v3557 = vsel %vm3513, %v3492, %v2538
        %v3559 = vsel %vm3513, %v3494, %v2540
        %v3561 = vsel %vm3513, %v3496, %v2542
        %v3563 = vsel %vm3513, %v3498, %v2544
        %v3565 = vsel %vm3513, %v3500, %v2546
        %v3567 = vsel %vm3513, %v3502, %v2548
        %v3569 = vsel %vm3513, %v3504, %v2550
        %v3571 = vsel %vm3513, %v3506, %v2552
        %v3573 = vsel %vm3513, %v3508, %v2554
        %v3575 = vsel %vm3513, %v3510, %v2556
        %v3577 = vsel %vm3513, %v3512, %v2558
        %vm3578 = vcmask 785408
        %v3580 = vsel %vm3578, %v3515, %v2570
        %v3582 = vsel %vm3578, %v3517, %v2572
        %v3584 = vsel %vm3578, %v3519, %v2574
        %v3586 = vsel %vm3578, %v3521, %v2576
        %v3588 = vsel %vm3578, %v3523, %v2578
        %v3590 = vsel %vm3578, %v3525, %v2580
        %v3592 = vsel %vm3578, %v3527, %v2582
        %v3594 = vsel %vm3578, %v3529, %v2584
        %v3596 = vsel %vm3578, %v3531, %v2586
        %v3598 = vsel %vm3578, %v3533, %v2588
        %v3600 = vsel %vm3578, %v3535, %v2590
        %v3602 = vsel %vm3578, %v3537, %v2592
        %v3604 = vsel %vm3578, %v3539, %v2594
        %v3606 = vsel %vm3578, %v3541, %v2596
        %v3608 = vsel %vm3578, %v3543, %v2598
        %v3610 = vsel %vm3578, %v3545, %v2600
        %v3612 = vsel %vm3578, %v3547, %v2602
        %v3614 = vsel %vm3578, %v3549, %v2604
        %v3616 = vsel %vm3578, %v3551, %v2606
        %v3618 = vsel %vm3578, %v3553, %v2608
        %v3620 = vsel %vm3578, %v3555, %v2610
        %v3622 = vsel %vm3578, %v3557, %v2612
        %v3624 = vsel %vm3578, %v3559, %v2614
        %v3626 = vsel %vm3578, %v3561, %v2616
        %v3628 = vsel %vm3578, %v3563, %v2618
        %v3630 = vsel %vm3578, %v3565, %v2620
        %v3632 = vsel %vm3578, %v3567, %v2622
        %v3634 = vsel %vm3578, %v3569, %v2624
        %v3636 = vsel %vm3578, %v3571, %v2626
        %v3638 = vsel %vm3578, %v3573, %v2628
        %v3640 = vsel %vm3578, %v3575, %v2630
        %v3642 = vsel %vm3578, %v3577, %v2632
        %vm3643 = vcmask 850944
        %v3645 = vsel %vm3643, %v3580, %v2657
        %v3647 = vsel %vm3643, %v3582, %v2659
        %v3649 = vsel %vm3643, %v3584, %v2661
        %v3651 = vsel %vm3643, %v3586, %v2663
        %v3653 = vsel %vm3643, %v3588, %v2665
        %v3655 = vsel %vm3643, %v3590, %v2667
        %v3657 = vsel %vm3643, %v3592, %v2669
        %v3659 = vsel %vm3643, %v3594, %v2671
        %v3661 = vsel %vm3643, %v3596, %v2673
        %v3663 = vsel %vm3643, %v3598, %v2675
        %v3665 = vsel %vm3643, %v3600, %v2677
        %v3667 = vsel %vm3643, %v3602, %v2679
        %v3669 = vsel %vm3643, %v3604, %v2681
        %v3671 = vsel %vm3643, %v3606, %v2683
        %v3673 = vsel %vm3643, %v3608, %v2685
        %v3675 = vsel %vm3643, %v3610, %v2687
        %v3677 = vsel %vm3643, %v3612, %v2689
        %v3679 = vsel %vm3643, %v3614, %v2691
        %v3681 = vsel %vm3643, %v3616, %v2693
        %v3683 = vsel %vm3643, %v3618, %v2695
        %v3685 = vsel %vm3643, %v3620, %v2697
        %v3687 = vsel %vm3643, %v3622, %v2699
        %v3689 = vsel %vm3643, %v3624, %v2701
        %v3691 = vsel %vm3643, %v3626, %v2703
        %v3693 = vsel %vm3643, %v3628, %v2705
        %v3695 = vsel %vm3643, %v3630, %v2707
        %v3697 = vsel %vm3643, %v3632, %v2709
        %v3699 = vsel %vm3643, %v3634, %v2711
        %v3701 = vsel %vm3643, %v3636, %v2713
        %v3703 = vsel %vm3643, %v3638, %v2715
        %v3705 = vsel %vm3643, %v3640, %v2717
        %v3707 = vsel %vm3643, %v3642, %v2719
        %vm3708 = vcmask 916480
        %v3710 = vsel %vm3708, %v3645, %v2726
        %v3712 = vsel %vm3708, %v3647, %v2728
        %v3714 = vsel %vm3708, %v3649, %v2730
        %v3716 = vsel %vm3708, %v3651, %v2732
        %v3718 = vsel %vm3708, %v3653, %v2734
        %v3720 = vsel %vm3708, %v3655, %v2736
        %v3722 = vsel %vm3708, %v3657, %v2738
        %v3724 = vsel %vm3708, %v3659, %v2740
        %v3726 = vsel %vm3708, %v3661, %v2742
        %v3728 = vsel %vm3708, %v3663, %v2744
        %v3730 = vsel %vm3708, %v3665, %v2746
        %v3732 = vsel %vm3708, %v3667, %v2748
        %v3734 = vsel %vm3708, %v3669, %v2750
        %v3736 = vsel %vm3708, %v3671, %v2752
        %v3738 = vsel %vm3708, %v3673, %v2754
        %v3740 = vsel %vm3708, %v3675, %v2756
        %v3742 = vsel %vm3708, %v3677, %v2758
        %v3744 = vsel %vm3708, %v3679, %v2760
        %v3746 = vsel %vm3708, %v3681, %v2762
        %v3748 = vsel %vm3708, %v3683, %v2764
        %v3750 = vsel %vm3708, %v3685, %v2766
        %v3752 = vsel %vm3708, %v3687, %v2768
        %v3754 = vsel %vm3708, %v3689, %v2770
        %v3756 = vsel %vm3708, %v3691, %v2772
        %v3758 = vsel %vm3708, %v3693, %v2774
        %v3760 = vsel %vm3708, %v3695, %v2776
        %v3762 = vsel %vm3708, %v3697, %v2778
        %v3764 = vsel %vm3708, %v3699, %v2780
        %v3766 = vsel %vm3708, %v3701, %v2782
        %v3768 = vsel %vm3708, %v3703, %v2784
        %v3770 = vsel %vm3708, %v3705, %v2786
        %v3772 = vsel %vm3708, %v3707, %v2788
        %vm3773 = vcmask 982016
        %v3775 = vsel %vm3773, %v3710, %v2800
        %v3778 = vsel %vm3773, %v3712, %v2802
        %v3781 = vsel %vm3773, %v3714, %v2804
        %v3784 = vsel %vm3773, %v3716, %v2806
        %v3787 = vsel %vm3773, %v3718, %v2808
        %v3790 = vsel %vm3773, %v3720, %v2810
        %v3793 = vsel %vm3773, %v3722, %v2812
        %v3796 = vsel %vm3773, %v3724, %v2814
        %v3799 = vsel %vm3773, %v3726, %v2816
        %v3802 = vsel %vm3773, %v3728, %v2818
        %v3805 = vsel %vm3773, %v3730, %v2820
        %v3808 = vsel %vm3773, %v3732, %v2822
        %v3811 = vsel %vm3773, %v3734, %v2824
        %v3814 = vsel %vm3773, %v3736, %v2826
        %v3817 = vsel %vm3773, %v3738, %v2828
        %v3820 = vsel %vm3773, %v3740, %v2830
        %v3823 = vsel %vm3773, %v3742, %v2832
        %v3826 = vsel %vm3773, %v3744, %v2834
        %v3829 = vsel %vm3773, %v3746, %v2836
        %v3832 = vsel %vm3773, %v3748, %v2838
        %v3835 = vsel %vm3773, %v3750, %v2840
        %v3838 = vsel %vm3773, %v3752, %v2842
        %v3841 = vsel %vm3773, %v3754, %v2844
        %v3844 = vsel %vm3773, %v3756, %v2846
        %v3847 = vsel %vm3773, %v3758, %v2848
        %v3850 = vsel %vm3773, %v3760, %v2850
        %v3853 = vsel %vm3773, %v3762, %v2852
        %v3856 = vsel %vm3773, %v3764, %v2854
        %v3859 = vsel %vm3773, %v3766, %v2856
        %v3862 = vsel %vm3773, %v3768, %v2858
        %v3865 = vsel %vm3773, %v3770, %v2860
        %v3868 = vsel %vm3773, %v3772, %v2862
        %v3871 = vunpack.c.l.b16 %v560
        %v3872 = vpack.c.b16 %v3871, %v3871
        %v3873 = vshrl.u32 %v2017, 16
        %v3875 = vshrl.u32 %v2018, 16
        %v3877 = vshrl.u32 %v2019, 16
        %v3879 = vshrl.u32 %v2020, 16
        %v3881 = vshrl.u32 %v2021, 16
        %v3883 = vshrl.u32 %v2022, 16
        %v3885 = vshrl.u32 %v2023, 16
        %v3887 = vshrl.u32 %v2024, 16
        %v3889 = vshrl.u32 %v2025, 16
        %v3891 = vshrl.u32 %v2026, 16
        %v3893 = vshrl.u32 %v2027, 16
        %v3895 = vshrl.u32 %v2028, 16
        %v3897 = vshrl.u32 %v2029, 16
        %v3899 = vshrl.u32 %v2030, 16
        %v3901 = vshrl.u32 %v2635, 16
        %v3904 = vshrl.u32 %v2797, 16
        %v3906 = vshll.u32 %v2797, 16
        %v3908 = vrot.slane %v3906, 1
        %v3909 = vor.u32 %v3904, %v3908
        %v3911 = vshll.u32 %v2798, 16
        %v3913 = vrot.slane %v3911, 1
        %v3914 = vsel %vm769, %v3909, %v3913
        %v3915 = vshrl.u32 %v2798, 16
        %v3917 = vor.u32 %v3915, %v3913
        %v3919 = vshll.u32 %v3872, 16
        %v3921 = vrot.slane %v3919, 1
        %v3922 = vsel %vm769, %v3917, %v3921
        %v3923 = vshrl.u32 %v3872, 16
        %3925 = vrot.lane.b32.xlu0 %v2082, 8
        %v3926 = vpop.permute.xlu0 %3925
        %3927 = vrot.lane.b32.xlu0 %v2090, 8
        %v3928 = vpop.permute.xlu0 %3927
        %3929 = vrot.lane.b32.xlu0 %v3873, 8
        %v3930 = vpop.permute.xlu0 %3929
        %3931 = vrot.lane.b32.xlu0 %v2102, 8
        %v3932 = vpop.permute.xlu0 %3931
        %3933 = vrot.lane.b32.xlu0 %v2110, 8
        %v3934 = vpop.permute.xlu0 %3933
        %3935 = vrot.lane.b32.xlu0 %v3875, 8
        %v3936 = vpop.permute.xlu0 %3935
        %3937 = vrot.lane.b32.xlu0 %v2122, 8
        %v3938 = vpop.permute.xlu0 %3937
        %3939 = vrot.lane.b32.xlu0 %v2130, 8
        %v3940 = vpop.permute.xlu0 %3939
        %3941 = vrot.lane.b32.xlu0 %v3877, 8
        %v3942 = vpop.permute.xlu0 %3941
        %3943 = vrot.lane.b32.xlu0 %v2142, 8
        %v3944 = vpop.permute.xlu0 %3943
        %3945 = vrot.lane.b32.xlu0 %v2150, 8
        %v3946 = vpop.permute.xlu0 %3945
        %3947 = vrot.lane.b32.xlu0 %v3879, 8
        %v3948 = vpop.permute.xlu0 %3947
        %3949 = vrot.lane.b32.xlu0 %v2162, 8
        %v3950 = vpop.permute.xlu0 %3949
        %3951 = vrot.lane.b32.xlu0 %v2170, 8
        %v3952 = vpop.permute.xlu0 %3951
        %3953 = vrot.lane.b32.xlu0 %v3881, 8
        %v3954 = vpop.permute.xlu0 %3953
        %3955 = vrot.lane.b32.xlu0 %v2182, 8
        %v3956 = vpop.permute.xlu0 %3955
        %3957 = vrot.lane.b32.xlu0 %v2190, 8
        %v3958 = vpop.permute.xlu0 %3957
        %3959 = vrot.lane.b32.xlu0 %v3883, 8
        %v3960 = vpop.permute.xlu0 %3959
        %3961 = vrot.lane.b32.xlu0 %v2202, 8
        %v3962 = vpop.permute.xlu0 %3961
        %3963 = vrot.lane.b32.xlu0 %v2210, 8
        %v3964 = vpop.permute.xlu0 %3963
        %3965 = vrot.lane.b32.xlu0 %v3885, 8
        %v3966 = vpop.permute.xlu0 %3965
        %3967 = vrot.lane.b32.xlu0 %v2222, 8
        %v3968 = vpop.permute.xlu0 %3967
        %3969 = vrot.lane.b32.xlu0 %v2230, 8
        %v3970 = vpop.permute.xlu0 %3969
        %3971 = vrot.lane.b32.xlu0 %v3887, 8
        %v3972 = vpop.permute.xlu0 %3971
        %3973 = vrot.lane.b32.xlu0 %v2242, 8
        %v3974 = vpop.permute.xlu0 %3973
        %3975 = vrot.lane.b32.xlu0 %v2250, 8
        %v3976 = vpop.permute.xlu0 %3975
        %3977 = vrot.lane.b32.xlu0 %v3889, 8
        %v3978 = vpop.permute.xlu0 %3977
        %3979 = vrot.lane.b32.xlu0 %v2262, 8
        %v3980 = vpop.permute.xlu0 %3979
        %3981 = vrot.lane.b32.xlu0 %v2270, 8
        %v3982 = vpop.permute.xlu0 %3981
        %3983 = vrot.lane.b32.xlu0 %v3891, 8
        %v3984 = vpop.permute.xlu0 %3983
        %3985 = vrot.lane.b32.xlu0 %v2282, 8
        %v3986 = vpop.permute.xlu0 %3985
        %3987 = vrot.lane.b32.xlu0 %v2290, 8
        %v3988 = vpop.permute.xlu0 %3987
        %3989 = vrot.lane.b32.xlu0 %v3893, 8
        %v3990 = vpop.permute.xlu0 %3989
        %3991 = vrot.lane.b32.xlu0 %v2302, 8
        %v3992 = vpop.permute.xlu0 %3991
        %3993 = vrot.lane.b32.xlu0 %v2310, 8
        %v3994 = vpop.permute.xlu0 %3993
        %3995 = vrot.lane.b32.xlu0 %v3895, 8
        %v3996 = vpop.permute.xlu0 %3995
        %3997 = vrot.lane.b32.xlu0 %v2322, 8
        %v3998 = vpop.permute.xlu0 %3997
        %3999 = vrot.lane.b32.xlu0 %v2330, 8
        %v4000 = vpop.permute.xlu0 %3999
        %4001 = vrot.lane.b32.xlu0 %v3897, 8
        %v4002 = vpop.permute.xlu0 %4001
        %4003 = vrot.lane.b32.xlu0 %v2342, 8
        %v4004 = vpop.permute.xlu0 %4003
        %4005 = vrot.lane.b32.xlu0 %v2350, 8
        %v4006 = vpop.permute.xlu0 %4005
        %4007 = vrot.lane.b32.xlu0 %v3899, 8
        %v4008 = vpop.permute.xlu0 %4007
        %4009 = vrot.lane.b32.xlu0 %v2647, 8
        %v4010 = vpop.permute.xlu0 %4009
        %4011 = vrot.lane.b32.xlu0 %v2655, 8
        %v4012 = vpop.permute.xlu0 %4011
        %4013 = vrot.lane.b32.xlu0 %v3901, 8
        %v4014 = vpop.permute.xlu0 %4013
        %4015 = vrot.lane.b32.xlu0 %v3914, 8
        %v4016 = vpop.permute.xlu0 %4015
        %4017 = vrot.lane.b32.xlu0 %v3922, 8
        %v4018 = vpop.permute.xlu0 %4017
        %4019 = vrot.lane.b32.xlu0 %v3923, 8
        %v4020 = vpop.permute.xlu0 %4019
        %v4022 = vsel %vm2863, %v1891, %v3926
        %v4024 = vsel %vm2863, %v1892, %v3928
        %v4026 = vsel %vm2863, %v2017, %v3930
        %v4028 = vsel %vm2863, %v1893, %v3932
        %v4030 = vsel %vm2863, %v1894, %v3934
        %v4032 = vsel %vm2863, %v2018, %v3936
        %v4034 = vsel %vm2863, %v1895, %v3938
        %v4036 = vsel %vm2863, %v1896, %v3940
        %v4038 = vsel %vm2863, %v2019, %v3942
        %v4040 = vsel %vm2863, %v1897, %v3944
        %v4042 = vsel %vm2863, %v1898, %v3946
        %v4044 = vsel %vm2863, %v2020, %v3948
        %v4046 = vsel %vm2863, %v1899, %v3950
        %v4048 = vsel %vm2863, %v1900, %v3952
        %v4050 = vsel %vm2863, %v2021, %v3954
        %v4052 = vsel %vm2863, %v1901, %v3956
        %v4054 = vsel %vm2863, %v1902, %v3958
        %v4056 = vsel %vm2863, %v2022, %v3960
        %v4058 = vsel %vm2863, %v1903, %v3962
        %v4060 = vsel %vm2863, %v1904, %v3964
        %v4062 = vsel %vm2863, %v2023, %v3966
        %v4064 = vsel %vm2863, %v1905, %v3968
        %v4066 = vsel %vm2863, %v1906, %v3970
        %v4068 = vsel %vm2863, %v2024, %v3972
        %v4070 = vsel %vm2863, %v1907, %v3974
        %v4072 = vsel %vm2863, %v1908, %v3976
        %v4074 = vsel %vm2863, %v2025, %v3978
        %v4076 = vsel %vm2863, %v1909, %v3980
        %v4078 = vsel %vm2863, %v1910, %v3982
        %v4080 = vsel %vm2863, %v2026, %v3984
        %v4082 = vsel %vm2863, %v1911, %v3986
        %v4084 = vsel %vm2863, %v1912, %v3988
        %v4086 = vsel %vm2863, %v2027, %v3990
        %v4088 = vsel %vm2863, %v1913, %v3992
        %v4090 = vsel %vm2863, %v1914, %v3994
        %v4092 = vsel %vm2863, %v2028, %v3996
        %v4094 = vsel %vm2863, %v1915, %v3998
        %v4096 = vsel %vm2863, %v1916, %v4000
        %v4098 = vsel %vm2863, %v2029, %v4002
        %v4100 = vsel %vm2863, %v1917, %v4004
        %v4102 = vsel %vm2863, %v1918, %v4006
        %v4104 = vsel %vm2863, %v2030, %v4008
        %v4106 = vsel %vm2863, %v2567, %v4010
        %v4108 = vsel %vm2863, %v2568, %v4012
        %v4110 = vsel %vm2863, %v2635, %v4014
        %v4112 = vsel %vm2863, %v2797, %v4016
        %v4114 = vsel %vm2863, %v2798, %v4018
        %v4116 = vsel %vm2863, %v3872, %v4020
        %v4117 = vshrl.u32 %v4022, 16
        %v4119 = vshll.u32 %v4022, 16
        %v4121 = vrot.slane %v4119, 1
        %v4122 = vor.u32 %v4117, %v4121
        %v4123 = vshll.u32 %v4024, 16
        %v4125 = vrot.slane %v4123, 1
        %v4126 = vsel %vm769, %v4122, %v4125
        %v4127 = vshrl.u32 %v4024, 16
        %v4129 = vor.u32 %v4127, %v4125
        %v4130 = vshll.u32 %v4026, 16
        %v4132 = vrot.slane %v4130, 1
        %v4133 = vsel %vm769, %v4129, %v4132
        %v4134 = vshrl.u32 %v4028, 16
        %v4136 = vshll.u32 %v4028, 16
        %v4138 = vrot.slane %v4136, 1
        %v4139 = vor.u32 %v4134, %v4138
        %v4140 = vshll.u32 %v4030, 16
        %v4142 = vrot.slane %v4140, 1
        %v4143 = vsel %vm769, %v4139, %v4142
        %v4144 = vshrl.u32 %v4030, 16
        %v4146 = vor.u32 %v4144, %v4142
        %v4147 = vshll.u32 %v4032, 16
        %v4149 = vrot.slane %v4147, 1
        %v4150 = vsel %vm769, %v4146, %v4149
        %v4151 = vshrl.u32 %v4034, 16
        %v4153 = vshll.u32 %v4034, 16
        %v4155 = vrot.slane %v4153, 1
        %v4156 = vor.u32 %v4151, %v4155
        %v4157 = vshll.u32 %v4036, 16
        %v4159 = vrot.slane %v4157, 1
        %v4160 = vsel %vm769, %v4156, %v4159
        %v4161 = vshrl.u32 %v4036, 16
        %v4163 = vor.u32 %v4161, %v4159
        %v4164 = vshll.u32 %v4038, 16
        %v4166 = vrot.slane %v4164, 1
        %v4167 = vsel %vm769, %v4163, %v4166
        %v4168 = vshrl.u32 %v4040, 16
        %v4170 = vshll.u32 %v4040, 16
        %v4172 = vrot.slane %v4170, 1
        %v4173 = vor.u32 %v4168, %v4172
        %v4174 = vshll.u32 %v4042, 16
        %v4176 = vrot.slane %v4174, 1
        %v4177 = vsel %vm769, %v4173, %v4176
        %v4178 = vshrl.u32 %v4042, 16
        %v4180 = vor.u32 %v4178, %v4176
        %v4181 = vshll.u32 %v4044, 16
        %v4183 = vrot.slane %v4181, 1
        %v4184 = vsel %vm769, %v4180, %v4183
        %v4185 = vshrl.u32 %v4046, 16
        %v4187 = vshll.u32 %v4046, 16
        %v4189 = vrot.slane %v4187, 1
        %v4190 = vor.u32 %v4185, %v4189
        %v4191 = vshll.u32 %v4048, 16
        %v4193 = vrot.slane %v4191, 1
        %v4194 = vsel %vm769, %v4190, %v4193
        %v4195 = vshrl.u32 %v4048, 16
        %v4197 = vor.u32 %v4195, %v4193
        %v4198 = vshll.u32 %v4050, 16
        %v4200 = vrot.slane %v4198, 1
        %v4201 = vsel %vm769, %v4197, %v4200
        %v4202 = vshrl.u32 %v4052, 16
        %v4204 = vshll.u32 %v4052, 16
        %v4206 = vrot.slane %v4204, 1
        %v4207 = vor.u32 %v4202, %v4206
        %v4208 = vshll.u32 %v4054, 16
        %v4210 = vrot.slane %v4208, 1
        %v4211 = vsel %vm769, %v4207, %v4210
        %v4212 = vshrl.u32 %v4054, 16
        %v4214 = vor.u32 %v4212, %v4210
        %v4215 = vshll.u32 %v4056, 16
        %v4217 = vrot.slane %v4215, 1
        %v4218 = vsel %vm769, %v4214, %v4217
        %v4219 = vshrl.u32 %v4058, 16
        %v4221 = vshll.u32 %v4058, 16
        %v4223 = vrot.slane %v4221, 1
        %v4224 = vor.u32 %v4219, %v4223
        %v4225 = vshll.u32 %v4060, 16
        %v4227 = vrot.slane %v4225, 1
        %v4228 = vsel %vm769, %v4224, %v4227
        %v4229 = vshrl.u32 %v4060, 16
        %v4231 = vor.u32 %v4229, %v4227
        %v4232 = vshll.u32 %v4062, 16
        %v4234 = vrot.slane %v4232, 1
        %v4235 = vsel %vm769, %v4231, %v4234
        %v4236 = vshrl.u32 %v4064, 16
        %v4238 = vshll.u32 %v4064, 16
        %v4240 = vrot.slane %v4238, 1
        %v4241 = vor.u32 %v4236, %v4240
        %v4242 = vshll.u32 %v4066, 16
        %v4244 = vrot.slane %v4242, 1
        %v4245 = vsel %vm769, %v4241, %v4244
        %v4246 = vshrl.u32 %v4066, 16
        %v4248 = vor.u32 %v4246, %v4244
        %v4249 = vshll.u32 %v4068, 16
        %v4251 = vrot.slane %v4249, 1
        %v4252 = vsel %vm769, %v4248, %v4251
        %v4253 = vshrl.u32 %v4070, 16
        %v4255 = vshll.u32 %v4070, 16
        %v4257 = vrot.slane %v4255, 1
        %v4258 = vor.u32 %v4253, %v4257
        %v4259 = vshll.u32 %v4072, 16
        %v4261 = vrot.slane %v4259, 1
        %v4262 = vsel %vm769, %v4258, %v4261
        %v4263 = vshrl.u32 %v4072, 16
        %v4265 = vor.u32 %v4263, %v4261
        %v4266 = vshll.u32 %v4074, 16
        %v4268 = vrot.slane %v4266, 1
        %v4269 = vsel %vm769, %v4265, %v4268
        %v4270 = vshrl.u32 %v4076, 16
        %v4272 = vshll.u32 %v4076, 16
        %v4274 = vrot.slane %v4272, 1
        %v4275 = vor.u32 %v4270, %v4274
        %v4276 = vshll.u32 %v4078, 16
        %v4278 = vrot.slane %v4276, 1
        %v4279 = vsel %vm769, %v4275, %v4278
        %v4280 = vshrl.u32 %v4078, 16
        %v4282 = vor.u32 %v4280, %v4278
        %v4283 = vshll.u32 %v4080, 16
        %v4285 = vrot.slane %v4283, 1
        %v4286 = vsel %vm769, %v4282, %v4285
        %v4287 = vshrl.u32 %v4082, 16
        %v4289 = vshll.u32 %v4082, 16
        %v4291 = vrot.slane %v4289, 1
        %v4292 = vor.u32 %v4287, %v4291
        %v4293 = vshll.u32 %v4084, 16
        %v4295 = vrot.slane %v4293, 1
        %v4296 = vsel %vm769, %v4292, %v4295
        %v4297 = vshrl.u32 %v4084, 16
        %v4299 = vor.u32 %v4297, %v4295
        %v4300 = vshll.u32 %v4086, 16
        %v4302 = vrot.slane %v4300, 1
        %v4303 = vsel %vm769, %v4299, %v4302
        %v4304 = vshrl.u32 %v4088, 16
        %v4306 = vshll.u32 %v4088, 16
        %v4308 = vrot.slane %v4306, 1
        %v4309 = vor.u32 %v4304, %v4308
        %v4310 = vshll.u32 %v4090, 16
        %v4312 = vrot.slane %v4310, 1
        %v4313 = vsel %vm769, %v4309, %v4312
        %v4314 = vshrl.u32 %v4090, 16
        %v4316 = vor.u32 %v4314, %v4312
        %v4317 = vshll.u32 %v4092, 16
        %v4319 = vrot.slane %v4317, 1
        %v4320 = vsel %vm769, %v4316, %v4319
        %v4321 = vshrl.u32 %v4094, 16
        %v4323 = vshll.u32 %v4094, 16
        %v4325 = vrot.slane %v4323, 1
        %v4326 = vor.u32 %v4321, %v4325
        %v4327 = vshll.u32 %v4096, 16
        %v4329 = vrot.slane %v4327, 1
        %v4330 = vsel %vm769, %v4326, %v4329
        %v4331 = vshrl.u32 %v4096, 16
        %v4333 = vor.u32 %v4331, %v4329
        %v4334 = vshll.u32 %v4098, 16
        %v4336 = vrot.slane %v4334, 1
        %v4337 = vsel %vm769, %v4333, %v4336
        %v4338 = vshrl.u32 %v4100, 16
        %v4340 = vshll.u32 %v4100, 16
        %v4342 = vrot.slane %v4340, 1
        %v4343 = vor.u32 %v4338, %v4342
        %v4344 = vshll.u32 %v4102, 16
        %v4346 = vrot.slane %v4344, 1
        %v4347 = vsel %vm769, %v4343, %v4346
        %v4348 = vshrl.u32 %v4102, 16
        %v4350 = vor.u32 %v4348, %v4346
        %v4351 = vshll.u32 %v4104, 16
        %v4353 = vrot.slane %v4351, 1
        %v4354 = vsel %vm769, %v4350, %v4353
        %v4355 = vshrl.u32 %v4106, 16
        %v4357 = vshll.u32 %v4106, 16
        %v4359 = vrot.slane %v4357, 1
        %v4360 = vor.u32 %v4355, %v4359
        %v4361 = vshll.u32 %v4108, 16
        %v4363 = vrot.slane %v4361, 1
        %v4364 = vsel %vm769, %v4360, %v4363
        %v4365 = vshrl.u32 %v4108, 16
        %v4367 = vor.u32 %v4365, %v4363
        %v4368 = vshll.u32 %v4110, 16
        %v4370 = vrot.slane %v4368, 1
        %v4371 = vsel %vm769, %v4367, %v4370
        %v4372 = vshrl.u32 %v4112, 16
        %v4374 = vshll.u32 %v4112, 16
        %v4376 = vrot.slane %v4374, 1
        %v4377 = vor.u32 %v4372, %v4376
        %v4378 = vshll.u32 %v4114, 16
        %v4380 = vrot.slane %v4378, 1
        %v4381 = vsel %vm769, %v4377, %v4380
        %v4382 = vshrl.u32 %v4114, 16
        %v4384 = vor.u32 %v4382, %v4380
        %v4385 = vshll.u32 %v4116, 16
        %v4387 = vrot.slane %v4385, 1
        %v4388 = vsel %vm769, %v4384, %v4387
        %v4389 = vld [vmem:[#allocation7] sm:$0xf]
        %v4390 = vld [vmem:[#allocation7 + $0x4] sm:$0xf]
        %v4391 = vld [vmem:[#allocation7 + $0x8] sm:$0xf]
        %v4392 = vld [vmem:[#allocation7 + $0xc] sm:$0xf]
        %v4393 = vld [vmem:[#allocation7 + $0x10] sm:$0xf]
        %v4394 = vld [vmem:[#allocation7 + $0x14] sm:$0xf]
        %v4395 = vld [vmem:[#allocation7 + $0x18] sm:$0xf]
        %v4396 = vld [vmem:[#allocation7 + $0x1c] sm:$0xf]
        %v4397 = vld [vmem:[#allocation7 + $0x20] sm:$0xf]
        %v4398 = vld [vmem:[#allocation7 + $0x24] sm:$0xf]
        %v4399 = vld [vmem:[#allocation7 + $0x28] sm:$0xf]
        %v4400 = vld [vmem:[#allocation7 + $0x2c] sm:$0xf]
        %v4401 = vld [vmem:[#allocation7 + $0x30] sm:$0xf]
        %v4402 = vld [vmem:[#allocation7 + $0x34] sm:$0xf]
        %v4403 = vld [vmem:[#allocation7 + $0x38] sm:$0xf]
        %v4404 = vld [vmem:[#allocation7 + $0x3c] sm:$0xf]
        %v4405 = vld [vmem:[#allocation7 + $0x40] sm:$0xf]
        %v4406 = vld [vmem:[#allocation7 + $0x44] sm:$0xf]
        %v4407 = vld [vmem:[#allocation8] sm:$0x1]
        %v4409 = vlaneseq
        %v4410 = vshrl.u32 %v4409, 7
        %v4411 = vsub.s32 0, %v4410
        %v4412 = vrot.slane %v4407, %v4411
        %v4432 = vunpack.c.l.b16 %v4389
        %v4433 = vunpack.c.l.b16 %v4390
        %v4434 = vunpack.c.l.b16 %v4391
        %v4435 = vunpack.c.l.b16 %v4392
        %v4436 = vunpack.c.l.b16 %v4393
        %v4437 = vunpack.c.l.b16 %v4394
        %v4438 = vunpack.c.l.b16 %v4395
        %v4439 = vunpack.c.l.b16 %v4396
        %v4440 = vunpack.c.l.b16 %v4397
        %v4441 = vunpack.c.l.b16 %v4398
        %v4442 = vunpack.c.l.b16 %v4399
        %v4443 = vunpack.c.l.b16 %v4400
        %v4444 = vunpack.c.l.b16 %v4401
        %v4445 = vunpack.c.l.b16 %v4402
        %v4446 = vunpack.c.l.b16 %v4403
        %v4447 = vunpack.c.l.b16 %v4404
        %v4448 = vunpack.c.l.b16 %v4405
        %v4449 = vunpack.c.l.b16 %v4406
        %v4450 = vpack.c.b16 %v4433, %v4432
        %v4451 = vpack.c.b16 %v4435, %v4434
        %v4452 = vpack.c.b16 %v4437, %v4436
        %v4453 = vpack.c.b16 %v4439, %v4438
        %v4454 = vpack.c.b16 %v4441, %v4440
        %v4455 = vpack.c.b16 %v4443, %v4442
        %v4456 = vpack.c.b16 %v4445, %v4444
        %v4457 = vpack.c.b16 %v4447, %v4446
        %v4458 = vpack.c.b16 %v4449, %v4448
        %v4469 = vsel %vm2928, %v4126, 0
        %v4472 = vsel %vm2928, %v4133, 0
        %v4475 = vsel %vm2928, %v4143, 0
        %v4478 = vsel %vm2928, %v4150, 0
        %v4481 = vsel %vm2928, %v4160, 0
        %v4484 = vsel %vm2928, %v4167, 0
        %v4487 = vsel %vm2928, %v4177, 0
        %v4490 = vsel %vm2928, %v4184, 0
        %v4493 = vsel %vm2928, %v4194, 0
        %v4496 = vsel %vm2928, %v4201, 0
        %v4499 = vsel %vm2928, %v4211, 0
        %v4502 = vsel %vm2928, %v4218, 0
        %v4505 = vsel %vm2928, %v4228, 0
        %v4508 = vsel %vm2928, %v4235, 0
        %v4511 = vsel %vm2928, %v4245, 0
        %v4514 = vsel %vm2928, %v4252, 0
        %v4517 = vsel %vm2928, %v4262, 0
        %v4520 = vsel %vm2928, %v4269, 0
        %v4523 = vsel %vm2928, %v4279, 0
        %v4526 = vsel %vm2928, %v4286, 0
        %v4529 = vsel %vm2928, %v4296, 0
        %v4532 = vsel %vm2928, %v4303, 0
        %v4535 = vsel %vm2928, %v4313, 0
        %v4538 = vsel %vm2928, %v4320, 0
        %v4541 = vsel %vm2928, %v4330, 0
        %v4544 = vsel %vm2928, %v4337, 0
        %v4547 = vsel %vm2928, %v4347, 0
        %v4550 = vsel %vm2928, %v4354, 0
        %v4553 = vsel %vm2928, %v4364, 0
        %v4556 = vsel %vm2928, %v4371, 0
        %v4559 = vsel %vm2928, %v4381, 0
        %v4562 = vsel %vm2928, %v4388, 0
        %4564 = vmatprep.subr.bf16.mxu0 0
        %4565 = vmatpush1.bf16.msra.mxu0 %v4450
        %4566 = vmatprep.subr.bf16.mxu0 0
        %4567 = vmatpush1.bf16.msra.mxu0 %v4451
        %4568 = vmatprep.subr.bf16.mxu0 0
        %4569 = vmatpush1.bf16.msra.mxu0 %v4452
        %4570 = vmatprep.subr.bf16.mxu0 0
        %4571 = vmatpush1.bf16.msra.mxu0 %v4453
        %4572 = vmatprep.subr.bf16.mxu0 0
        %4573 = vmatpush1.bf16.msra.mxu0 %v4454
        %4574 = vmatprep.subr.bf16.mxu0 0
        %4575 = vmatpush1.bf16.msra.mxu0 %v4455
        %4576 = vmatprep.subr.bf16.mxu0 0
        %4577 = vmatpush1.bf16.msra.mxu0 %v4456
        %4578 = vmatprep.subr.bf16.mxu0 0
        %4579 = vmatpush1.bf16.msra.mxu0 %v4457
        %4580 = vmatprep.subr.bf16.mxu0 0
        %4581 = vmatpush1.bf16.msra.mxu0 %v4458
        %4582 = vmatprep.subr.bf16.mxu0 0
        %4583 = vmatpush1.bf16.msra.mxu0 0
        %4584 = vmatprep.subr.bf16.mxu0 0
        %4585 = vmatpush1.bf16.msra.mxu0 0
        %4586 = vmatprep.subr.bf16.mxu0 0
        %4587 = vmatpush1.bf16.msra.mxu0 0
        %4588 = vmatprep.subr.bf16.mxu0 0
        %4589 = vmatpush1.bf16.msra.mxu0 0
        %4590 = vmatprep.subr.bf16.mxu0 0
        %4591 = vmatpush1.bf16.msra.mxu0 0
        %4592 = vmatprep.subr.bf16.mxu0 0
        %4593 = vmatpush1.bf16.msra.mxu0 0
        %4594 = vmatprep.subr.bf16.mxu0 0
        %4595 = vmatpush1.bf16.msra.mxu0 0
        %4596 = vmatprep.mubr.bf16.mxu0 %v4469
        %4597 = vmatmul.mubr.bf16.gmra.mrb[0].mxu0 %v3775
        %v4598 = vpop.f32.mrb[0].mxu0
        %v4599 = vadd.f32 %v4412, %v4598
        %v4600 = vpop.f32.mrb[0].mxu0
        %v4601 = vpop.f32.mrb[0].mxu0
        %v4602 = vadd.f32 %v4412, %v4601
        %v4603 = vpop.f32.mrb[0].mxu0
        %4604 = vmatprep.mubr.bf16.mxu0 %v4472
        %4605 = vmatmul.mubr.bf16.gmra.mrb[0].mxu0 %v3778
        %v4606 = vpop.f32.mrb[0].mxu0
        %v4607 = vadd.f32 %v4412, %v4606
        %v4608 = vpop.f32.mrb[0].mxu0
        %v4609 = vpop.f32.mrb[0].mxu0
        %v4610 = vadd.f32 %v4412, %v4609
        %v4611 = vpop.f32.mrb[0].mxu0
        %4612 = vmatprep.mubr.bf16.mxu0 %v4475
        %4613 = vmatmul.mubr.bf16.gmra.mrb[0].mxu0 %v3781
        %v4614 = vpop.f32.mrb[0].mxu0
        %v4615 = vadd.f32 %v4412, %v4614
        %v4616 = vpop.f32.mrb[0].mxu0
        %v4617 = vpop.f32.mrb[0].mxu0
        %v4618 = vadd.f32 %v4412, %v4617
        %v4619 = vpop.f32.mrb[0].mxu0
        %4620 = vmatprep.mubr.bf16.mxu0 %v4478
        %4621 = vmatmul.mubr.bf16.gmra.mrb[0].mxu0 %v3784
        %v4622 = vpop.f32.mrb[0].mxu0
        %v4623 = vadd.f32 %v4412, %v4622
        %v4624 = vpop.f32.mrb[0].mxu0
        %v4625 = vpop.f32.mrb[0].mxu0
        %v4626 = vadd.f32 %v4412, %v4625
        %v4627 = vpop.f32.mrb[0].mxu0
        %4628 = vmatprep.mubr.bf16.mxu0 %v4481
        %4629 = vmatmul.mubr.bf16.gmra.mrb[0].mxu0 %v3787
        %v4630 = vpop.f32.mrb[0].mxu0
        %v4631 = vadd.f32 %v4412, %v4630
        %v4632 = vpop.f32.mrb[0].mxu0
        %v4633 = vpop.f32.mrb[0].mxu0
        %v4634 = vadd.f32 %v4412, %v4633
        %v4635 = vpop.f32.mrb[0].mxu0
        %4636 = vmatprep.mubr.bf16.mxu0 %v4484
        %4637 = vmatmul.mubr.bf16.gmra.mrb[0].mxu0 %v3790
        %v4638 = vpop.f32.mrb[0].mxu0
        %v4639 = vadd.f32 %v4412, %v4638
        %v4640 = vpop.f32.mrb[0].mxu0
        %v4641 = vpop.f32.mrb[0].mxu0
        %v4642 = vadd.f32 %v4412, %v4641
        %v4643 = vpop.f32.mrb[0].mxu0
        %4644 = vmatprep.mubr.bf16.mxu0 %v4487
        %4645 = vmatmul.mubr.bf16.gmra.mrb[0].mxu0 %v3793
        %v4646 = vpop.f32.mrb[0].mxu0
        %v4647 = vadd.f32 %v4412, %v4646
        %v4648 = vpop.f32.mrb[0].mxu0
        %v4649 = vpop.f32.mrb[0].mxu0
        %v4650 = vadd.f32 %v4412, %v4649
        %v4651 = vpop.f32.mrb[0].mxu0
        %4652 = vmatprep.mubr.bf16.mxu0 %v4490
        %4653 = vmatmul.mubr.bf16.gmra.mrb[0].mxu0 %v3796
        %v4654 = vpop.f32.mrb[0].mxu0
        %v4655 = vadd.f32 %v4412, %v4654
        %v4656 = vpop.f32.mrb[0].mxu0
        %v4657 = vpop.f32.mrb[0].mxu0
        %v4658 = vadd.f32 %v4412, %v4657
        %v4659 = vpop.f32.mrb[0].mxu0
        %4660 = vmatprep.mubr.bf16.mxu0 %v4493
        %4661 = vmatmul.mubr.bf16.gmra.mrb[0].mxu0 %v3799
        %v4662 = vpop.f32.mrb[0].mxu0
        %v4663 = vadd.f32 %v4412, %v4662
        %v4664 = vpop.f32.mrb[0].mxu0
        %v4665 = vpop.f32.mrb[0].mxu0
        %v4666 = vadd.f32 %v4412, %v4665
        %v4667 = vpop.f32.mrb[0].mxu0
        %4668 = vmatprep.mubr.bf16.mxu0 %v4496
        %4669 = vmatmul.mubr.bf16.gmra.mrb[0].mxu0 %v3802
        %v4670 = vpop.f32.mrb[0].mxu0
        %v4671 = vadd.f32 %v4412, %v4670
        %v4672 = vpop.f32.mrb[0].mxu0
        %v4673 = vpop.f32.mrb[0].mxu0
        %v4674 = vadd.f32 %v4412, %v4673
        %v4675 = vpop.f32.mrb[0].mxu0
        %4676 = vmatprep.mubr.bf16.mxu0 %v4499
        %4677 = vmatmul.mubr.bf16.gmra.mrb[0].mxu0 %v3805
        %v4678 = vpop.f32.mrb[0].mxu0
        %v4679 = vadd.f32 %v4412, %v4678
        %v4680 = vpop.f32.mrb[0].mxu0
        %v4681 = vpop.f32.mrb[0].mxu0
        %v4682 = vadd.f32 %v4412, %v4681
        %v4683 = vpop.f32.mrb[0].mxu0
        %4684 = vmatprep.mubr.bf16.mxu0 %v4502
        %4685 = vmatmul.mubr.bf16.gmra.mrb[0].mxu0 %v3808
        %v4686 = vpop.f32.mrb[0].mxu0
        %v4687 = vadd.f32 %v4412, %v4686
        %v4688 = vpop.f32.mrb[0].mxu0
        %v4689 = vpop.f32.mrb[0].mxu0
        %v4690 = vadd.f32 %v4412, %v4689
        %v4691 = vpop.f32.mrb[0].mxu0
        %4692 = vmatprep.mubr.bf16.mxu0 %v4505
        %4693 = vmatmul.mubr.bf16.gmra.mrb[0].mxu0 %v3811
        %v4694 = vpop.f32.mrb[0].mxu0
        %v4695 = vadd.f32 %v4412, %v4694
        %v4696 = vpop.f32.mrb[0].mxu0
        %v4697 = vpop.f32.mrb[0].mxu0
        %v4698 = vadd.f32 %v4412, %v4697
        %v4699 = vpop.f32.mrb[0].mxu0
        %4700 = vmatprep.mubr.bf16.mxu0 %v4508
        %4701 = vmatmul.mubr.bf16.gmra.mrb[0].mxu0 %v3814
        %v4702 = vpop.f32.mrb[0].mxu0
        %v4703 = vadd.f32 %v4412, %v4702
        %v4704 = vpop.f32.mrb[0].mxu0
        %v4705 = vpop.f32.mrb[0].mxu0
        %v4706 = vadd.f32 %v4412, %v4705
        %v4707 = vpop.f32.mrb[0].mxu0
        %4708 = vmatprep.mubr.bf16.mxu0 %v4511
        %4709 = vmatmul.mubr.bf16.gmra.mrb[0].mxu0 %v3817
        %v4710 = vpop.f32.mrb[0].mxu0
        %v4711 = vadd.f32 %v4412, %v4710
        %v4712 = vpop.f32.mrb[0].mxu0
        %v4713 = vpop.f32.mrb[0].mxu0
        %v4714 = vadd.f32 %v4412, %v4713
        %v4715 = vpop.f32.mrb[0].mxu0
        %4716 = vmatprep.mubr.bf16.mxu0 %v4514
        %4717 = vmatmul.mubr.bf16.gmra.mrb[0].mxu0 %v3820
        %v4718 = vpop.f32.mrb[0].mxu0
        %v4719 = vadd.f32 %v4412, %v4718
        %v4720 = vpop.f32.mrb[0].mxu0
        %v4721 = vpop.f32.mrb[0].mxu0
        %v4722 = vadd.f32 %v4412, %v4721
        %v4723 = vpop.f32.mrb[0].mxu0
        %4724 = vmatprep.mubr.bf16.mxu0 %v4517
        %4725 = vmatmul.mubr.bf16.gmra.mrb[0].mxu0 %v3823
        %v4726 = vpop.f32.mrb[0].mxu0
        %v4727 = vadd.f32 %v4412, %v4726
        %v4728 = vpop.f32.mrb[0].mxu0
        %v4729 = vpop.f32.mrb[0].mxu0
        %v4730 = vadd.f32 %v4412, %v4729
        %v4731 = vpop.f32.mrb[0].mxu0
        %4732 = vmatprep.mubr.bf16.mxu0 %v4520
        %4733 = vmatmul.mubr.bf16.gmra.mrb[0].mxu0 %v3826
        %v4734 = vpop.f32.mrb[0].mxu0
        %v4735 = vadd.f32 %v4412, %v4734
        %v4736 = vpop.f32.mrb[0].mxu0
        %v4737 = vpop.f32.mrb[0].mxu0
        %v4738 = vadd.f32 %v4412, %v4737
        %v4739 = vpop.f32.mrb[0].mxu0
        %4740 = vmatprep.mubr.bf16.mxu0 %v4523
        %4741 = vmatmul.mubr.bf16.gmra.mrb[0].mxu0 %v3829
        %v4742 = vpop.f32.mrb[0].mxu0
        %v4743 = vadd.f32 %v4412, %v4742
        %v4744 = vpop.f32.mrb[0].mxu0
        %v4745 = vpop.f32.mrb[0].mxu0
        %v4746 = vadd.f32 %v4412, %v4745
        %v4747 = vpop.f32.mrb[0].mxu0
        %4748 = vmatprep.mubr.bf16.mxu0 %v4526
        %4749 = vmatmul.mubr.bf16.gmra.mrb[0].mxu0 %v3832
        %v4750 = vpop.f32.mrb[0].mxu0
        %v4751 = vadd.f32 %v4412, %v4750
        %v4752 = vpop.f32.mrb[0].mxu0
        %v4753 = vpop.f32.mrb[0].mxu0
        %v4754 = vadd.f32 %v4412, %v4753
        %v4755 = vpop.f32.mrb[0].mxu0
        %4756 = vmatprep.mubr.bf16.mxu0 %v4529
        %4757 = vmatmul.mubr.bf16.gmra.mrb[0].mxu0 %v3835
        %v4758 = vpop.f32.mrb[0].mxu0
        %v4759 = vadd.f32 %v4412, %v4758
        %v4760 = vpop.f32.mrb[0].mxu0
        %v4761 = vpop.f32.mrb[0].mxu0
        %v4762 = vadd.f32 %v4412, %v4761
        %v4763 = vpop.f32.mrb[0].mxu0
        %4764 = vmatprep.mubr.bf16.mxu0 %v4532
        %4765 = vmatmul.mubr.bf16.gmra.mrb[0].mxu0 %v3838
        %v4766 = vpop.f32.mrb[0].mxu0
        %v4767 = vadd.f32 %v4412, %v4766
        %v4768 = vpop.f32.mrb[0].mxu0
        %v4769 = vpop.f32.mrb[0].mxu0
        %v4770 = vadd.f32 %v4412, %v4769
        %v4771 = vpop.f32.mrb[0].mxu0
        %4772 = vmatprep.mubr.bf16.mxu0 %v4535
        %4773 = vmatmul.mubr.bf16.gmra.mrb[0].mxu0 %v3841
        %v4774 = vpop.f32.mrb[0].mxu0
        %v4775 = vadd.f32 %v4412, %v4774
        %v4776 = vpop.f32.mrb[0].mxu0
        %v4777 = vpop.f32.mrb[0].mxu0
        %v4778 = vadd.f32 %v4412, %v4777
        %v4779 = vpop.f32.mrb[0].mxu0
        %4780 = vmatprep.mubr.bf16.mxu0 %v4538
        %4781 = vmatmul.mubr.bf16.gmra.mrb[0].mxu0 %v3844
        %v4782 = vpop.f32.mrb[0].mxu0
        %v4783 = vadd.f32 %v4412, %v4782
        %v4784 = vpop.f32.mrb[0].mxu0
        %v4785 = vpop.f32.mrb[0].mxu0
        %v4786 = vadd.f32 %v4412, %v4785
        %v4787 = vpop.f32.mrb[0].mxu0
        %4788 = vmatprep.mubr.bf16.mxu0 %v4541
        %4789 = vmatmul.mubr.bf16.gmra.mrb[0].mxu0 %v3847
        %v4790 = vpop.f32.mrb[0].mxu0
        %v4791 = vadd.f32 %v4412, %v4790
        %v4792 = vpop.f32.mrb[0].mxu0
        %v4793 = vpop.f32.mrb[0].mxu0
        %v4794 = vadd.f32 %v4412, %v4793
        %v4795 = vpop.f32.mrb[0].mxu0
        %4796 = vmatprep.mubr.bf16.mxu0 %v4544
        %4797 = vmatmul.mubr.bf16.gmra.mrb[0].mxu0 %v3850
        %v4798 = vpop.f32.mrb[0].mxu0
        %v4799 = vadd.f32 %v4412, %v4798
        %v4800 = vpop.f32.mrb[0].mxu0
        %v4801 = vpop.f32.mrb[0].mxu0
        %v4802 = vadd.f32 %v4412, %v4801
        %v4803 = vpop.f32.mrb[0].mxu0
        %4804 = vmatprep.mubr.bf16.mxu0 %v4547
        %4805 = vmatmul.mubr.bf16.gmra.mrb[0].mxu0 %v3853
        %v4806 = vpop.f32.mrb[0].mxu0
        %v4807 = vadd.f32 %v4412, %v4806
        %v4808 = vpop.f32.mrb[0].mxu0
        %v4809 = vpop.f32.mrb[0].mxu0
        %v4810 = vadd.f32 %v4412, %v4809
        %v4811 = vpop.f32.mrb[0].mxu0
        %4812 = vmatprep.mubr.bf16.mxu0 %v4550
        %4813 = vmatmul.mubr.bf16.gmra.mrb[0].mxu0 %v3856
        %v4814 = vpop.f32.mrb[0].mxu0
        %v4815 = vadd.f32 %v4412, %v4814
        %v4816 = vpop.f32.mrb[0].mxu0
        %v4817 = vpop.f32.mrb[0].mxu0
        %v4818 = vadd.f32 %v4412, %v4817
        %v4819 = vpop.f32.mrb[0].mxu0
        %4820 = vmatprep.mubr.bf16.mxu0 %v4553
        %4821 = vmatmul.mubr.bf16.gmra.mrb[0].mxu0 %v3859
        %v4822 = vpop.f32.mrb[0].mxu0
        %v4823 = vadd.f32 %v4412, %v4822
        %v4824 = vpop.f32.mrb[0].mxu0
        %v4825 = vpop.f32.mrb[0].mxu0
        %v4826 = vadd.f32 %v4412, %v4825
        %v4827 = vpop.f32.mrb[0].mxu0
        %4828 = vmatprep.mubr.bf16.mxu0 %v4556
        %4829 = vmatmul.mubr.bf16.gmra.mrb[0].mxu0 %v3862
        %v4830 = vpop.f32.mrb[0].mxu0
        %v4831 = vadd.f32 %v4412, %v4830
        %v4832 = vpop.f32.mrb[0].mxu0
        %v4833 = vpop.f32.mrb[0].mxu0
        %v4834 = vadd.f32 %v4412, %v4833
        %v4835 = vpop.f32.mrb[0].mxu0
        %4836 = vmatprep.mubr.bf16.mxu0 %v4559
        %4837 = vmatmul.mubr.bf16.gmra.mrb[0].mxu0 %v3865
        %v4838 = vpop.f32.mrb[0].mxu0
        %v4839 = vadd.f32 %v4412, %v4838
        %v4840 = vpop.f32.mrb[0].mxu0
        %v4841 = vpop.f32.mrb[0].mxu0
        %v4842 = vadd.f32 %v4412, %v4841
        %v4843 = vpop.f32.mrb[0].mxu0
        %4844 = vmatprep.mubr.bf16.mxu0 %v4562
        %4845 = vmatmul.mubr.bf16.gmra.mrb[0].mxu0 %v3868
        %v4846 = vpop.f32.mrb[0].mxu0
        %v4847 = vadd.f32 %v4412, %v4846
        %v4848 = vpop.f32.mrb[0].mxu0
        %v4849 = vpop.f32.mrb[0].mxu0
        %v4850 = vadd.f32 %v4412, %v4849
        %v4851 = vpop.f32.mrb[0].mxu0
        %4852 = vdwg.mxu0
        %v4853 = vpack.c.bf16 %v4602, %v4599
        %v4854 = vpack.c.bf16 %v4610, %v4607
        %v4855 = vpack.c.bf16 %v4618, %v4615
        %v4856 = vpack.c.bf16 %v4626, %v4623
        %v4857 = vpack.c.bf16 %v4634, %v4631
        %v4858 = vpack.c.bf16 %v4642, %v4639
        %v4859 = vpack.c.bf16 %v4650, %v4647
        %v4860 = vpack.c.bf16 %v4658, %v4655
        %v4861 = vpack.c.bf16 %v4666, %v4663
        %v4862 = vpack.c.bf16 %v4674, %v4671
        %v4863 = vpack.c.bf16 %v4682, %v4679
        %v4864 = vpack.c.bf16 %v4690, %v4687
        %v4865 = vpack.c.bf16 %v4698, %v4695
        %v4866 = vpack.c.bf16 %v4706, %v4703
        %v4867 = vpack.c.bf16 %v4714, %v4711
        %v4868 = vpack.c.bf16 %v4722, %v4719
        %v4869 = vpack.c.bf16 %v4730, %v4727
        %v4870 = vpack.c.bf16 %v4738, %v4735
        %v4871 = vpack.c.bf16 %v4746, %v4743
        %v4872 = vpack.c.bf16 %v4754, %v4751
        %v4873 = vpack.c.bf16 %v4762, %v4759
        %v4874 = vpack.c.bf16 %v4770, %v4767
        %v4875 = vpack.c.bf16 %v4778, %v4775
        %v4876 = vpack.c.bf16 %v4786, %v4783
        %v4877 = vpack.c.bf16 %v4794, %v4791
        %v4878 = vpack.c.bf16 %v4802, %v4799
        %v4879 = vpack.c.bf16 %v4810, %v4807
        %v4880 = vpack.c.bf16 %v4818, %v4815
        %v4881 = vpack.c.bf16 %v4826, %v4823
        %v4882 = vpack.c.bf16 %v4834, %v4831
        %v4883 = vpack.c.bf16 %v4842, %v4839
        %v4884 = vpack.c.bf16 %v4850, %v4847
        %v4917 = vunpack.c.l.b16 %v4853
        %v4918 = vunpack.c.h.b16 %v4853
        %v4919 = vunpack.c.l.b16 %v4854
        %v4920 = vunpack.c.h.b16 %v4854
        %v4921 = vunpack.c.l.b16 %v4855
        %v4922 = vunpack.c.h.b16 %v4855
        %v4923 = vunpack.c.l.b16 %v4856
        %v4924 = vunpack.c.h.b16 %v4856
        %v4925 = vunpack.c.l.b16 %v4857
        %v4926 = vunpack.c.h.b16 %v4857
        %v4927 = vunpack.c.l.b16 %v4858
        %v4928 = vunpack.c.h.b16 %v4858
        %v4929 = vunpack.c.l.b16 %v4859
        %v4930 = vunpack.c.h.b16 %v4859
        %v4931 = vunpack.c.l.b16 %v4860
        %v4932 = vunpack.c.h.b16 %v4860
        %v4933 = vunpack.c.l.b16 %v4861
        %v4934 = vunpack.c.h.b16 %v4861
        %v4935 = vunpack.c.l.b16 %v4862
        %v4936 = vunpack.c.h.b16 %v4862
        %v4937 = vunpack.c.l.b16 %v4863
        %v4938 = vunpack.c.h.b16 %v4863
        %v4939 = vunpack.c.l.b16 %v4864
        %v4940 = vunpack.c.h.b16 %v4864
        %v4941 = vunpack.c.l.b16 %v4865
        %v4942 = vunpack.c.h.b16 %v4865
        %v4943 = vunpack.c.l.b16 %v4866
        %v4944 = vunpack.c.h.b16 %v4866
        %v4945 = vunpack.c.l.b16 %v4867
        %v4946 = vunpack.c.h.b16 %v4867
        %v4947 = vunpack.c.l.b16 %v4868
        %v4948 = vunpack.c.h.b16 %v4868
        %v4949 = vunpack.c.l.b16 %v4869
        %v4950 = vunpack.c.h.b16 %v4869
        %v4951 = vunpack.c.l.b16 %v4870
        %v4952 = vunpack.c.h.b16 %v4870
        %v4953 = vunpack.c.l.b16 %v4871
        %v4954 = vunpack.c.h.b16 %v4871
        %v4955 = vunpack.c.l.b16 %v4872
        %v4956 = vunpack.c.h.b16 %v4872
        %v4957 = vunpack.c.l.b16 %v4873
        %v4958 = vunpack.c.h.b16 %v4873
        %v4959 = vunpack.c.l.b16 %v4874
        %v4960 = vunpack.c.h.b16 %v4874
        %v4961 = vunpack.c.l.b16 %v4875
        %v4962 = vunpack.c.h.b16 %v4875
        %v4963 = vunpack.c.l.b16 %v4876
        %v4964 = vunpack.c.h.b16 %v4876
        %v4965 = vunpack.c.l.b16 %v4877
        %v4966 = vunpack.c.h.b16 %v4877
        %v4967 = vunpack.c.l.b16 %v4878
        %v4968 = vunpack.c.h.b16 %v4878
        %v4969 = vunpack.c.l.b16 %v4879
        %v4970 = vunpack.c.h.b16 %v4879
        %v4971 = vunpack.c.l.b16 %v4880
        %v4972 = vunpack.c.h.b16 %v4880
        %v4973 = vunpack.c.l.b16 %v4881
        %v4974 = vunpack.c.h.b16 %v4881
        %v4975 = vunpack.c.l.b16 %v4882
        %v4976 = vunpack.c.h.b16 %v4882
        %v4977 = vunpack.c.l.b16 %v4883
        %v4978 = vunpack.c.h.b16 %v4883
        %v4979 = vunpack.c.l.b16 %v4884
        %v4980 = vunpack.c.h.b16 %v4884
        %v4981 = vpack.c.b16 %v4917, %v4917
        %v4982 = vpack.c.b16 %v4918, %v4918
        %v4983 = vpack.c.b16 %v4919, %v4919
        %v4984 = vpack.c.b16 %v4920, %v4920
        %v4985 = vpack.c.b16 %v4921, %v4921
        %v4986 = vpack.c.b16 %v4922, %v4922
        %v4987 = vpack.c.b16 %v4923, %v4923
        %v4988 = vpack.c.b16 %v4924, %v4924
        %v4989 = vpack.c.b16 %v4925, %v4925
        %v4990 = vpack.c.b16 %v4926, %v4926
        %v4991 = vpack.c.b16 %v4927, %v4927
        %v4992 = vpack.c.b16 %v4928, %v4928
        %v4993 = vpack.c.b16 %v4929, %v4929
        %v4994 = vpack.c.b16 %v4930, %v4930
        %v4995 = vpack.c.b16 %v4931, %v4931
        %v4996 = vpack.c.b16 %v4932, %v4932
        %v4997 = vpack.c.b16 %v4933, %v4933
        %v4998 = vpack.c.b16 %v4934, %v4934
        %v4999 = vpack.c.b16 %v4935, %v4935
        %v5000 = vpack.c.b16 %v4936, %v4936
        %v5001 = vpack.c.b16 %v4937, %v4937
        %v5002 = vpack.c.b16 %v4938, %v4938
        %v5003 = vpack.c.b16 %v4939, %v4939
        %v5004 = vpack.c.b16 %v4940, %v4940
        %v5005 = vpack.c.b16 %v4941, %v4941
        %v5006 = vpack.c.b16 %v4942, %v4942
        %v5007 = vpack.c.b16 %v4943, %v4943
        %v5008 = vpack.c.b16 %v4944, %v4944
        %v5009 = vpack.c.b16 %v4945, %v4945
        %v5010 = vpack.c.b16 %v4946, %v4946
        %v5011 = vpack.c.b16 %v4947, %v4947
        %v5012 = vpack.c.b16 %v4948, %v4948
        %v5013 = vpack.c.b16 %v4949, %v4949
        %v5014 = vpack.c.b16 %v4950, %v4950
        %v5015 = vpack.c.b16 %v4951, %v4951
        %v5016 = vpack.c.b16 %v4952, %v4952
        %v5017 = vpack.c.b16 %v4953, %v4953
        %v5018 = vpack.c.b16 %v4954, %v4954
        %v5019 = vpack.c.b16 %v4955, %v4955
        %v5020 = vpack.c.b16 %v4956, %v4956
        %v5021 = vpack.c.b16 %v4957, %v4957
        %v5022 = vpack.c.b16 %v4958, %v4958
        %v5023 = vpack.c.b16 %v4959, %v4959
        %v5024 = vpack.c.b16 %v4960, %v4960
        %v5025 = vpack.c.b16 %v4961, %v4961
        %v5026 = vpack.c.b16 %v4962, %v4962
        %v5027 = vpack.c.b16 %v4963, %v4963
        %v5028 = vpack.c.b16 %v4964, %v4964
        %v5029 = vpack.c.b16 %v4965, %v4965
        %v5030 = vpack.c.b16 %v4966, %v4966
        %v5031 = vpack.c.b16 %v4967, %v4967
        %v5032 = vpack.c.b16 %v4968, %v4968
        %v5033 = vpack.c.b16 %v4969, %v4969
        %v5034 = vpack.c.b16 %v4970, %v4970
        %v5035 = vpack.c.b16 %v4971, %v4971
        %v5036 = vpack.c.b16 %v4972, %v4972
        %v5037 = vpack.c.b16 %v4973, %v4973
        %v5038 = vpack.c.b16 %v4974, %v4974
        %v5039 = vpack.c.b16 %v4975, %v4975
        %v5040 = vpack.c.b16 %v4976, %v4976
        %v5041 = vpack.c.b16 %v4977, %v4977
        %v5042 = vpack.c.b16 %v4978, %v4978
        %v5043 = vpack.c.b16 %v4979, %v4979
        %v5044 = vpack.c.b16 %v4980, %v4980
        %vm5109 = vcmask 60416
        %5110 = vst.msk [vmem:[%s366] sm:$0xf] %vm5109, %v4981
        %5111 = vst.msk [vmem:[%s366 + $0x4] sm:$0xf] %vm5109, %v4982
        %5112 = vst.msk [vmem:[%s366 + $0x8] sm:$0xf] %vm5109, %v4983
        %5113 = vst.msk [vmem:[%s366 + $0xc] sm:$0xf] %vm5109, %v4984
        %5114 = vst.msk [vmem:[%s366 + $0x10] sm:$0xf] %vm5109, %v4985
        %5115 = vst.msk [vmem:[%s366 + $0x14] sm:$0xf] %vm5109, %v4986
        %5116 = vst.msk [vmem:[%s366 + $0x18] sm:$0xf] %vm5109, %v4987
        %5117 = vst.msk [vmem:[%s366 + $0x1c] sm:$0xf] %vm5109, %v4988
        %5118 = vst.msk [vmem:[%s366 + $0x20] sm:$0xf] %vm5109, %v4989
        %5119 = vst.msk [vmem:[%s366 + $0x24] sm:$0xf] %vm5109, %v4990
        %5120 = vst.msk [vmem:[%s366 + $0x28] sm:$0xf] %vm5109, %v4991
        %5121 = vst.msk [vmem:[%s366 + $0x2c] sm:$0xf] %vm5109, %v4992
        %5122 = vst.msk [vmem:[%s366 + $0x30] sm:$0xf] %vm5109, %v4993
        %5123 = vst.msk [vmem:[%s366 + $0x34] sm:$0xf] %vm5109, %v4994
        %5124 = vst.msk [vmem:[%s366 + $0x38] sm:$0xf] %vm5109, %v4995
        %5125 = vst.msk [vmem:[%s366 + $0x3c] sm:$0xf] %vm5109, %v4996
        %5126 = vst.msk [vmem:[%s366 + $0x40] sm:$0xf] %vm5109, %v4997
        %5127 = vst.msk [vmem:[%s366 + $0x44] sm:$0xf] %vm5109, %v4998
        %5128 = vst.msk [vmem:[%s366 + $0x48] sm:$0xf] %vm5109, %v4999
        %5129 = vst.msk [vmem:[%s366 + $0x4c] sm:$0xf] %vm5109, %v5000
        %5130 = vst.msk [vmem:[%s366 + $0x50] sm:$0xf] %vm5109, %v5001
        %5131 = vst.msk [vmem:[%s366 + $0x54] sm:$0xf] %vm5109, %v5002
        %5132 = vst.msk [vmem:[%s366 + $0x58] sm:$0xf] %vm5109, %v5003
        %5133 = vst.msk [vmem:[%s366 + $0x5c] sm:$0xf] %vm5109, %v5004
        %5134 = vst.msk [vmem:[%s366 + $0x60] sm:$0xf] %vm5109, %v5005
        %5135 = vst.msk [vmem:[%s366 + $0x64] sm:$0xf] %vm5109, %v5006
        %5136 = vst.msk [vmem:[%s366 + $0x68] sm:$0xf] %vm5109, %v5007
        %5137 = vst.msk [vmem:[%s366 + $0x6c] sm:$0xf] %vm5109, %v5008
        %5138 = vst.msk [vmem:[%s366 + $0x70] sm:$0xf] %vm5109, %v5009
        %5139 = vst.msk [vmem:[%s366 + $0x74] sm:$0xf] %vm5109, %v5010
        %5140 = vst.msk [vmem:[%s366 + $0x78] sm:$0xf] %vm5109, %v5011
        %5141 = vst.msk [vmem:[%s366 + $0x7c] sm:$0xf] %vm5109, %v5012
        %5142 = vst.msk [vmem:[%s366 + $0x80] sm:$0xf] %vm5109, %v5013
        %5143 = vst.msk [vmem:[%s366 + $0x84] sm:$0xf] %vm5109, %v5014
        %5144 = vst.msk [vmem:[%s366 + $0x88] sm:$0xf] %vm5109, %v5015
        %5145 = vst.msk [vmem:[%s366 + $0x8c] sm:$0xf] %vm5109, %v5016
        %5146 = vst.msk [vmem:[%s366 + $0x90] sm:$0xf] %vm5109, %v5017
        %5147 = vst.msk [vmem:[%s366 + $0x94] sm:$0xf] %vm5109, %v5018
        %5148 = vst.msk [vmem:[%s366 + $0x98] sm:$0xf] %vm5109, %v5019
        %5149 = vst.msk [vmem:[%s366 + $0x9c] sm:$0xf] %vm5109, %v5020
        %5150 = vst.msk [vmem:[%s366 + $0xa0] sm:$0xf] %vm5109, %v5021
        %5151 = vst.msk [vmem:[%s366 + $0xa4] sm:$0xf] %vm5109, %v5022
        %5152 = vst.msk [vmem:[%s366 + $0xa8] sm:$0xf] %vm5109, %v5023
        %5153 = vst.msk [vmem:[%s366 + $0xac] sm:$0xf] %vm5109, %v5024
        %5154 = vst.msk [vmem:[%s366 + $0xb0] sm:$0xf] %vm5109, %v5025
        %5155 = vst.msk [vmem:[%s366 + $0xb4] sm:$0xf] %vm5109, %v5026
        %5156 = vst.msk [vmem:[%s366 + $0xb8] sm:$0xf] %vm5109, %v5027
        %5157 = vst.msk [vmem:[%s366 + $0xbc] sm:$0xf] %vm5109, %v5028
        %5158 = vst.msk [vmem:[%s366 + $0xc0] sm:$0xf] %vm5109, %v5029
        %5159 = vst.msk [vmem:[%s366 + $0xc4] sm:$0xf] %vm5109, %v5030
        %5160 = vst.msk [vmem:[%s366 + $0xc8] sm:$0xf] %vm5109, %v5031
        %5161 = vst.msk [vmem:[%s366 + $0xcc] sm:$0xf] %vm5109, %v5032
        %5162 = vst.msk [vmem:[%s366 + $0xd0] sm:$0xf] %vm5109, %v5033
        %5163 = vst.msk [vmem:[%s366 + $0xd4] sm:$0xf] %vm5109, %v5034
        %5164 = vst.msk [vmem:[%s366 + $0xd8] sm:$0xf] %vm5109, %v5035
        %5165 = vst.msk [vmem:[%s366 + $0xdc] sm:$0xf] %vm5109, %v5036
        %5166 = vst.msk [vmem:[%s366 + $0xe0] sm:$0xf] %vm5109, %v5037
        %5167 = vst.msk [vmem:[%s366 + $0xe4] sm:$0xf] %vm5109, %v5038
        %5168 = vst.msk [vmem:[%s366 + $0xe8] sm:$0xf] %vm5109, %v5039
        %5169 = vst.msk [vmem:[%s366 + $0xec] sm:$0xf] %vm5109, %v5040
        %5170 = vst.msk [vmem:[%s366 + $0xf0] sm:$0xf] %vm5109, %v5041
        %5171 = vst.msk [vmem:[%s366 + $0xf4] sm:$0xf] %vm5109, %v5042
        %5172 = vst.msk [vmem:[%s366 + $0xf8] sm:$0xf] %vm5109, %v5043
        %5173 = vst.msk [vmem:[%s366 + $0xfc] sm:$0xf] %vm5109, %v5044
        %v5174 = vsel %vm2863, %v4599, 0.0
        %v5175 = vsel %vm2863, %v4602, 0.0
        %v5176 = vadd.f32 %v5174, %v5175
        %v5177 = vsel %vm2863, %v4607, 0.0
        %v5178 = vadd.f32 %v5176, %v5177
        %v5179 = vsel %vm2863, %v4610, 0.0
        %v5180 = vadd.f32 %v5178, %v5179
        %v5181 = vsel %vm2863, %v4615, 0.0
        %v5182 = vadd.f32 %v5180, %v5181
        %v5183 = vsel %vm2863, %v4618, 0.0
        %v5184 = vadd.f32 %v5182, %v5183
        %v5185 = vsel %vm2863, %v4623, 0.0
        %v5186 = vadd.f32 %v5184, %v5185
        %v5187 = vsel %vm2863, %v4626, 0.0
        %v5188 = vadd.f32 %v5186, %v5187
        %v5189 = vsel %vm2863, %v4631, 0.0
        %v5190 = vadd.f32 %v5188, %v5189
        %v5191 = vsel %vm2863, %v4634, 0.0
        %v5192 = vadd.f32 %v5190, %v5191
        %v5193 = vsel %vm2863, %v4639, 0.0
        %v5194 = vadd.f32 %v5192, %v5193
        %v5195 = vsel %vm2863, %v4642, 0.0
        %v5196 = vadd.f32 %v5194, %v5195
        %v5197 = vsel %vm2863, %v4647, 0.0
        %v5198 = vadd.f32 %v5196, %v5197
        %v5199 = vsel %vm2863, %v4650, 0.0
        %v5200 = vadd.f32 %v5198, %v5199
        %v5201 = vsel %vm2863, %v4655, 0.0
        %v5202 = vadd.f32 %v5200, %v5201
        %v5203 = vsel %vm2863, %v4658, 0.0
        %v5204 = vadd.f32 %v5202, %v5203
        %v5205 = vsel %vm2863, %v4663, 0.0
        %v5206 = vadd.f32 %v5204, %v5205
        %v5207 = vsel %vm2863, %v4666, 0.0
        %v5208 = vadd.f32 %v5206, %v5207
        %v5209 = vsel %vm2863, %v4671, 0.0
        %v5210 = vadd.f32 %v5208, %v5209
        %v5211 = vsel %vm2863, %v4674, 0.0
        %v5212 = vadd.f32 %v5210, %v5211
        %v5213 = vsel %vm2863, %v4679, 0.0
        %v5214 = vadd.f32 %v5212, %v5213
        %v5215 = vsel %vm2863, %v4682, 0.0
        %v5216 = vadd.f32 %v5214, %v5215
        %v5217 = vsel %vm2863, %v4687, 0.0
        %v5218 = vadd.f32 %v5216, %v5217
        %v5219 = vsel %vm2863, %v4690, 0.0
        %v5220 = vadd.f32 %v5218, %v5219
        %v5221 = vsel %vm2863, %v4695, 0.0
        %v5222 = vadd.f32 %v5220, %v5221
        %v5223 = vsel %vm2863, %v4698, 0.0
        %v5224 = vadd.f32 %v5222, %v5223
        %v5225 = vsel %vm2863, %v4703, 0.0
        %v5226 = vadd.f32 %v5224, %v5225
        %v5227 = vsel %vm2863, %v4706, 0.0
        %v5228 = vadd.f32 %v5226, %v5227
        %v5229 = vsel %vm2863, %v4711, 0.0
        %v5230 = vadd.f32 %v5228, %v5229
        %v5231 = vsel %vm2863, %v4714, 0.0
        %v5232 = vadd.f32 %v5230, %v5231
        %v5233 = vsel %vm2863, %v4719, 0.0
        %v5234 = vadd.f32 %v5232, %v5233
        %v5235 = vsel %vm2863, %v4722, 0.0
        %v5236 = vadd.f32 %v5234, %v5235
        %v5237 = vsel %vm2863, %v4727, 0.0
        %v5238 = vadd.f32 %v5236, %v5237
        %v5239 = vsel %vm2863, %v4730, 0.0
        %v5240 = vadd.f32 %v5238, %v5239
        %v5241 = vsel %vm2863, %v4735, 0.0
        %v5242 = vadd.f32 %v5240, %v5241
        %v5243 = vsel %vm2863, %v4738, 0.0
        %v5244 = vadd.f32 %v5242, %v5243
        %v5245 = vsel %vm2863, %v4743, 0.0
        %v5246 = vadd.f32 %v5244, %v5245
        %v5247 = vsel %vm2863, %v4746, 0.0
        %v5248 = vadd.f32 %v5246, %v5247
        %v5249 = vsel %vm2863, %v4751, 0.0
        %v5250 = vadd.f32 %v5248, %v5249
        %v5251 = vsel %vm2863, %v4754, 0.0
        %v5252 = vadd.f32 %v5250, %v5251
        %v5253 = vsel %vm2863, %v4759, 0.0
        %v5254 = vadd.f32 %v5252, %v5253
        %v5255 = vsel %vm2863, %v4762, 0.0
        %v5256 = vadd.f32 %v5254, %v5255
        %v5257 = vsel %vm2863, %v4767, 0.0
        %v5258 = vadd.f32 %v5256, %v5257
        %v5259 = vsel %vm2863, %v4770, 0.0
        %v5260 = vadd.f32 %v5258, %v5259
        %v5261 = vsel %vm2863, %v4775, 0.0
        %v5262 = vadd.f32 %v5260, %v5261
        %v5263 = vsel %vm2863, %v4778, 0.0
        %v5264 = vadd.f32 %v5262, %v5263
        %v5265 = vsel %vm2863, %v4783, 0.0
        %v5266 = vadd.f32 %v5264, %v5265
        %v5267 = vsel %vm2863, %v4786, 0.0
        %v5268 = vadd.f32 %v5266, %v5267
        %v5269 = vsel %vm2863, %v4791, 0.0
        %v5270 = vadd.f32 %v5268, %v5269
        %v5271 = vsel %vm2863, %v4794, 0.0
        %v5272 = vadd.f32 %v5270, %v5271
        %v5273 = vsel %vm2863, %v4799, 0.0
        %v5274 = vadd.f32 %v5272, %v5273
        %v5275 = vsel %vm2863, %v4802, 0.0
        %v5276 = vadd.f32 %v5274, %v5275
        %v5277 = vsel %vm2863, %v4807, 0.0
        %v5278 = vadd.f32 %v5276, %v5277
        %v5279 = vsel %vm2863, %v4810, 0.0
        %v5280 = vadd.f32 %v5278, %v5279
        %v5281 = vsel %vm2863, %v4815, 0.0
        %v5282 = vadd.f32 %v5280, %v5281
        %v5283 = vsel %vm2863, %v4818, 0.0
        %v5284 = vadd.f32 %v5282, %v5283
        %v5285 = vsel %vm2863, %v4823, 0.0
        %v5286 = vadd.f32 %v5284, %v5285
        %v5287 = vsel %vm2863, %v4826, 0.0
        %v5288 = vadd.f32 %v5286, %v5287
        %v5289 = vsel %vm2863, %v4831, 0.0
        %v5290 = vadd.f32 %v5288, %v5289
        %v5291 = vsel %vm2863, %v4834, 0.0
        %v5292 = vadd.f32 %v5290, %v5291
        %v5293 = vsel %vm2863, %v4839, 0.0
        %v5294 = vadd.f32 %v5292, %v5293
        %v5295 = vsel %vm2863, %v4842, 0.0
        %v5296 = vadd.f32 %v5294, %v5295
        %v5297 = vsel %vm2863, %v4847, 0.0
        %v5298 = vadd.f32 %v5296, %v5297
        %v5299 = vsel %vm2863, %v4850, 0.0
        %v5300 = vadd.f32 %v5298, %v5299
        %v5301 = vrot.slane %v5300, 4
        %v5302 = vadd.f32 %v5300, %v5301
        %v5303 = vrot.slane %v5302, 2
        %v5304 = vadd.f32 %v5302, %v5303
        %v5305 = vrot.slane %v5304, 1
        %v5306 = vadd.f32 %v5304, %v5305
        %v5307 = vmul.f32 %v5306, 0.001953125
        %v5308 = vsub.f32 %v4599, %v5307
        %v5309 = vsub.f32 %v4602, %v5307
        %v5310 = vsub.f32 %v4607, %v5307
        %v5311 = vsub.f32 %v4610, %v5307
        %v5312 = vsub.f32 %v4615, %v5307
        %v5313 = vsub.f32 %v4618, %v5307
        %v5314 = vsub.f32 %v4623, %v5307
        %v5315 = vsub.f32 %v4626, %v5307
        %v5316 = vsub.f32 %v4631, %v5307
        %v5317 = vsub.f32 %v4634, %v5307
        %v5318 = vsub.f32 %v4639, %v5307
        %v5319 = vsub.f32 %v4642, %v5307
        %v5320 = vsub.f32 %v4647, %v5307
        %v5321 = vsub.f32 %v4650, %v5307
        %v5322 = vsub.f32 %v4655, %v5307
        %v5323 = vsub.f32 %v4658, %v5307
        %v5324 = vsub.f32 %v4663, %v5307
        %v5325 = vsub.f32 %v4666, %v5307
        %v5326 = vsub.f32 %v4671, %v5307
        %v5327 = vsub.f32 %v4674, %v5307
        %v5328 = vsub.f32 %v4679, %v5307
        %v5329 = vsub.f32 %v4682, %v5307
        %v5330 = vsub.f32 %v4687, %v5307
        %v5331 = vsub.f32 %v4690, %v5307
        %v5332 = vsub.f32 %v4695, %v5307
        %v5333 = vsub.f32 %v4698, %v5307
        %v5334 = vsub.f32 %v4703, %v5307
        %v5335 = vsub.f32 %v4706, %v5307
        %v5336 = vsub.f32 %v4711, %v5307
        %v5337 = vsub.f32 %v4714, %v5307
        %v5338 = vsub.f32 %v4719, %v5307
        %v5339 = vsub.f32 %v4722, %v5307
        %v5340 = vsub.f32 %v4727, %v5307
        %v5341 = vsub.f32 %v4730, %v5307
        %v5342 = vsub.f32 %v4735, %v5307
        %v5343 = vsub.f32 %v4738, %v5307
        %v5344 = vsub.f32 %v4743, %v5307
        %v5345 = vsub.f32 %v4746, %v5307
        %v5346 = vsub.f32 %v4751, %v5307
        %v5347 = vsub.f32 %v4754, %v5307
        %v5348 = vsub.f32 %v4759, %v5307
        %v5349 = vsub.f32 %v4762, %v5307
        %v5350 = vsub.f32 %v4767, %v5307
        %v5351 = vsub.f32 %v4770, %v5307
        %v5352 = vsub.f32 %v4775, %v5307
        %v5353 = vsub.f32 %v4778, %v5307
        %v5354 = vsub.f32 %v4783, %v5307
        %v5355 = vsub.f32 %v4786, %v5307
        %v5356 = vsub.f32 %v4791, %v5307
        %v5357 = vsub.f32 %v4794, %v5307
        %v5358 = vsub.f32 %v4799, %v5307
        %v5359 = vsub.f32 %v4802, %v5307
        %v5360 = vsub.f32 %v4807, %v5307
        %v5361 = vsub.f32 %v4810, %v5307
        %v5362 = vsub.f32 %v4815, %v5307
        %v5363 = vsub.f32 %v4818, %v5307
        %v5364 = vsub.f32 %v4823, %v5307
        %v5365 = vsub.f32 %v4826, %v5307
        %v5366 = vsub.f32 %v4831, %v5307
        %v5367 = vsub.f32 %v4834, %v5307
        %v5368 = vsub.f32 %v4839, %v5307
        %v5369 = vsub.f32 %v4842, %v5307
        %v5370 = vsub.f32 %v4847, %v5307
        %v5371 = vsub.f32 %v4850, %v5307
        %vm5372 = vcmask 57344
        %5373 = vst.msk [vmem:[%s372] sm:$0x1] %vm5372, %v5306
        %v5374 = vmul.f32 %v5308, %v5308
        %v5375 = vmul.f32 %v5309, %v5309
        %v5376 = vmul.f32 %v5310, %v5310
        %v5377 = vmul.f32 %v5311, %v5311
        %v5378 = vmul.f32 %v5312, %v5312
        %v5379 = vmul.f32 %v5313, %v5313
        %v5380 = vmul.f32 %v5314, %v5314
        %v5381 = vmul.f32 %v5315, %v5315
        %v5382 = vmul.f32 %v5316, %v5316
        %v5383 = vmul.f32 %v5317, %v5317
        %v5384 = vmul.f32 %v5318, %v5318
        %v5385 = vmul.f32 %v5319, %v5319
        %v5386 = vmul.f32 %v5320, %v5320
        %v5387 = vmul.f32 %v5321, %v5321
        %v5388 = vmul.f32 %v5322, %v5322
        %v5389 = vmul.f32 %v5323, %v5323
        %v5390 = vmul.f32 %v5324, %v5324
        %v5391 = vmul.f32 %v5325, %v5325
        %v5392 = vmul.f32 %v5326, %v5326
        %v5393 = vmul.f32 %v5327, %v5327
        %v5394 = vmul.f32 %v5328, %v5328
        %v5395 = vmul.f32 %v5329, %v5329
        %v5396 = vmul.f32 %v5330, %v5330
        %v5397 = vmul.f32 %v5331, %v5331
        %v5398 = vmul.f32 %v5332, %v5332
        %v5399 = vmul.f32 %v5333, %v5333
        %v5400 = vmul.f32 %v5334, %v5334
        %v5401 = vmul.f32 %v5335, %v5335
        %v5402 = vmul.f32 %v5336, %v5336
        %v5403 = vmul.f32 %v5337, %v5337
        %v5404 = vmul.f32 %v5338, %v5338
        %v5405 = vmul.f32 %v5339, %v5339
        %v5406 = vmul.f32 %v5340, %v5340
        %v5407 = vmul.f32 %v5341, %v5341
        %v5408 = vmul.f32 %v5342, %v5342
        %v5409 = vmul.f32 %v5343, %v5343
        %v5410 = vmul.f32 %v5344, %v5344
        %v5411 = vmul.f32 %v5345, %v5345
        %v5412 = vmul.f32 %v5346, %v5346
        %v5413 = vmul.f32 %v5347, %v5347
        %v5414 = vmul.f32 %v5348, %v5348
        %v5415 = vmul.f32 %v5349, %v5349
        %v5416 = vmul.f32 %v5350, %v5350
        %v5417 = vmul.f32 %v5351, %v5351
        %v5418 = vmul.f32 %v5352, %v5352
        %v5419 = vmul.f32 %v5353, %v5353
        %v5420 = vmul.f32 %v5354, %v5354
        %v5421 = vmul.f32 %v5355, %v5355
        %v5422 = vmul.f32 %v5356, %v5356
        %v5423 = vmul.f32 %v5357, %v5357
        %v5424 = vmul.f32 %v5358, %v5358
        %v5425 = vmul.f32 %v5359, %v5359
        %v5426 = vmul.f32 %v5360, %v5360
        %v5427 = vmul.f32 %v5361, %v5361
        %v5428 = vmul.f32 %v5362, %v5362
        %v5429 = vmul.f32 %v5363, %v5363
        %v5430 = vmul.f32 %v5364, %v5364
        %v5431 = vmul.f32 %v5365, %v5365
        %v5432 = vmul.f32 %v5366, %v5366
        %v5433 = vmul.f32 %v5367, %v5367
        %v5434 = vmul.f32 %v5368, %v5368
        %v5435 = vmul.f32 %v5369, %v5369
        %v5436 = vmul.f32 %v5370, %v5370
        %v5437 = vmul.f32 %v5371, %v5371
        %v5438 = vsel %vm2863, %v5374, 0.0
        %v5439 = vsel %vm2863, %v5375, 0.0
        %v5440 = vadd.f32 %v5438, %v5439
        %v5441 = vsel %vm2863, %v5376, 0.0
        %v5442 = vadd.f32 %v5440, %v5441
        %v5443 = vsel %vm2863, %v5377, 0.0
        %v5444 = vadd.f32 %v5442, %v5443
        %v5445 = vsel %vm2863, %v5378, 0.0
        %v5446 = vadd.f32 %v5444, %v5445
        %v5447 = vsel %vm2863, %v5379, 0.0
        %v5448 = vadd.f32 %v5446, %v5447
        %v5449 = vsel %vm2863, %v5380, 0.0
        %v5450 = vadd.f32 %v5448, %v5449
        %v5451 = vsel %vm2863, %v5381, 0.0
        %v5452 = vadd.f32 %v5450, %v5451
        %v5453 = vsel %vm2863, %v5382, 0.0
        %v5454 = vadd.f32 %v5452, %v5453
        %v5455 = vsel %vm2863, %v5383, 0.0
        %v5456 = vadd.f32 %v5454, %v5455
        %v5457 = vsel %vm2863, %v5384, 0.0
        %v5458 = vadd.f32 %v5456, %v5457
        %v5459 = vsel %vm2863, %v5385, 0.0
        %v5460 = vadd.f32 %v5458, %v5459
        %v5461 = vsel %vm2863, %v5386, 0.0
        %v5462 = vadd.f32 %v5460, %v5461
        %v5463 = vsel %vm2863, %v5387, 0.0
        %v5464 = vadd.f32 %v5462, %v5463
        %v5465 = vsel %vm2863, %v5388, 0.0
        %v5466 = vadd.f32 %v5464, %v5465
        %v5467 = vsel %vm2863, %v5389, 0.0
        %v5468 = vadd.f32 %v5466, %v5467
        %v5469 = vsel %vm2863, %v5390, 0.0
        %v5470 = vadd.f32 %v5468, %v5469
        %v5471 = vsel %vm2863, %v5391, 0.0
        %v5472 = vadd.f32 %v5470, %v5471
        %v5473 = vsel %vm2863, %v5392, 0.0
        %v5474 = vadd.f32 %v5472, %v5473
        %v5475 = vsel %vm2863, %v5393, 0.0
        %v5476 = vadd.f32 %v5474, %v5475
        %v5477 = vsel %vm2863, %v5394, 0.0
        %v5478 = vadd.f32 %v5476, %v5477
        %v5479 = vsel %vm2863, %v5395, 0.0
        %v5480 = vadd.f32 %v5478, %v5479
        %v5481 = vsel %vm2863, %v5396, 0.0
        %v5482 = vadd.f32 %v5480, %v5481
        %v5483 = vsel %vm2863, %v5397, 0.0
        %v5484 = vadd.f32 %v5482, %v5483
        %v5485 = vsel %vm2863, %v5398, 0.0
        %v5486 = vadd.f32 %v5484, %v5485
        %v5487 = vsel %vm2863, %v5399, 0.0
        %v5488 = vadd.f32 %v5486, %v5487
        %v5489 = vsel %vm2863, %v5400, 0.0
        %v5490 = vadd.f32 %v5488, %v5489
        %v5491 = vsel %vm2863, %v5401, 0.0
        %v5492 = vadd.f32 %v5490, %v5491
        %v5493 = vsel %vm2863, %v5402, 0.0
        %v5494 = vadd.f32 %v5492, %v5493
        %v5495 = vsel %vm2863, %v5403, 0.0
        %v5496 = vadd.f32 %v5494, %v5495
        %v5497 = vsel %vm2863, %v5404, 0.0
        %v5498 = vadd.f32 %v5496, %v5497
        %v5499 = vsel %vm2863, %v5405, 0.0
        %v5500 = vadd.f32 %v5498, %v5499
        %v5501 = vsel %vm2863, %v5406, 0.0
        %v5502 = vadd.f32 %v5500, %v5501
        %v5503 = vsel %vm2863, %v5407, 0.0
        %v5504 = vadd.f32 %v5502, %v5503
        %v5505 = vsel %vm2863, %v5408, 0.0
        %v5506 = vadd.f32 %v5504, %v5505
        %v5507 = vsel %vm2863, %v5409, 0.0
        %v5508 = vadd.f32 %v5506, %v5507
        %v5509 = vsel %vm2863, %v5410, 0.0
        %v5510 = vadd.f32 %v5508, %v5509
        %v5511 = vsel %vm2863, %v5411, 0.0
        %v5512 = vadd.f32 %v5510, %v5511
        %v5513 = vsel %vm2863, %v5412, 0.0
        %v5514 = vadd.f32 %v5512, %v5513
        %v5515 = vsel %vm2863, %v5413, 0.0
        %v5516 = vadd.f32 %v5514, %v5515
        %v5517 = vsel %vm2863, %v5414, 0.0
        %v5518 = vadd.f32 %v5516, %v5517
        %v5519 = vsel %vm2863, %v5415, 0.0
        %v5520 = vadd.f32 %v5518, %v5519
        %v5521 = vsel %vm2863, %v5416, 0.0
        %v5522 = vadd.f32 %v5520, %v5521
        %v5523 = vsel %vm2863, %v5417, 0.0
        %v5524 = vadd.f32 %v5522, %v5523
        %v5525 = vsel %vm2863, %v5418, 0.0
        %v5526 = vadd.f32 %v5524, %v5525
        %v5527 = vsel %vm2863, %v5419, 0.0
        %v5528 = vadd.f32 %v5526, %v5527
        %v5529 = vsel %vm2863, %v5420, 0.0
        %v5530 = vadd.f32 %v5528, %v5529
        %v5531 = vsel %vm2863, %v5421, 0.0
        %v5532 = vadd.f32 %v5530, %v5531
        %v5533 = vsel %vm2863, %v5422, 0.0
        %v5534 = vadd.f32 %v5532, %v5533
        %v5535 = vsel %vm2863, %v5423, 0.0
        %v5536 = vadd.f32 %v5534, %v5535
        %v5537 = vsel %vm2863, %v5424, 0.0
        %v5538 = vadd.f32 %v5536, %v5537
        %v5539 = vsel %vm2863, %v5425, 0.0
        %v5540 = vadd.f32 %v5538, %v5539
        %v5541 = vsel %vm2863, %v5426, 0.0
        %v5542 = vadd.f32 %v5540, %v5541
        %v5543 = vsel %vm2863, %v5427, 0.0
        %v5544 = vadd.f32 %v5542, %v5543
        %v5545 = vsel %vm2863, %v5428, 0.0
        %v5546 = vadd.f32 %v5544, %v5545
        %v5547 = vsel %vm2863, %v5429, 0.0
        %v5548 = vadd.f32 %v5546, %v5547
        %v5549 = vsel %vm2863, %v5430, 0.0
        %v5550 = vadd.f32 %v5548, %v5549
        %v5551 = vsel %vm2863, %v5431, 0.0
        %v5552 = vadd.f32 %v5550, %v5551
        %v5553 = vsel %vm2863, %v5432, 0.0
        %v5554 = vadd.f32 %v5552, %v5553
        %v5555 = vsel %vm2863, %v5433, 0.0
        %v5556 = vadd.f32 %v5554, %v5555
        %v5557 = vsel %vm2863, %v5434, 0.0
        %v5558 = vadd.f32 %v5556, %v5557
        %v5559 = vsel %vm2863, %v5435, 0.0
        %v5560 = vadd.f32 %v5558, %v5559
        %v5561 = vsel %vm2863, %v5436, 0.0
        %v5562 = vadd.f32 %v5560, %v5561
        %v5563 = vsel %vm2863, %v5437, 0.0
        %v5564 = vadd.f32 %v5562, %v5563
        %v5565 = vrot.slane %v5564, 4
        %v5566 = vadd.f32 %v5564, %v5565
        %v5567 = vrot.slane %v5566, 2
        %v5568 = vadd.f32 %v5566, %v5567
        %v5569 = vrot.slane %v5568, 1
        %v5570 = vadd.f32 %v5568, %v5569
        %5571 = vst.msk [vmem:[%s378] sm:$0x1] %vm5372, %v5570
        %s5572 = sand.u32 %s151, 1
        %s5573 = scalar_lea.sflag [#allocation4], %s5572
        %s5574 = sand.u32 %s151, 1
        %s5575 = smul.addr %s5574, 256
        %s5576 = scalar_lea.vmem [#allocation10], %s5575
        %s5577 = sand.u32 %s31, 1
        %s5578 = scalar_lea.sflag [#allocation12], %s5577
        %s5579 = sand.u32 %s179, 1
        %s5580 = scalar_lea.vmem [#allocation11], %s5579
        %s5581 = sand.u32 %s31, 1
        %s5582 = scalar_lea.sflag [#allocation12], %s5581
        %s5583 = sand.u32 %s207, 1
        %s5584 = scalar_lea.vmem [#allocation13], %s5583
        // Predicated region
        $region53: #{decoder_block_forward.5} parent=35 // pred_check
          %p5585 = pneg %p161
        $region54: #{decoder_block_forward.5} parent=35 // pred_check_branch
          %5587 = sbr.rel (%p5585) target = $region56
        $region55: #{decoder_block_forward.5} parent=35 // pred_region
          %s5588 = smul.u32 16, %s36
          %s5590 = ssub.s32 4096, 4096
          %5591 = vsyncadd %s5573, %s5590
          %s5592 = smul.addr %s5588, 4
          %s5593 = smul.addr %s35, 128
          %s5594 = sadd.s32 %s5592, %s5593
          %s5595 = smul.addr %s5594, 64
          %s5596 = scalar_lea.hbm %s4, %s5595
          %s5597 = sshll.u32 %s5576, 4
          %s5598 = int_to_ptr.vmem [resolvable:$true] %s5597
          %5603 = dma.vmem_to_hbm [thread:$0]  %s5598, 4096, %s5596, %s5573, 64, 64, 4
        $region56: #{decoder_block_forward.5} parent=35 // pred_fallthru
          _
        // Predicated region
        $region57: #{decoder_block_forward.5} parent=35 // pred_check
          %p5604 = pneg %p189
        $region58: #{decoder_block_forward.5} parent=35 // pred_check_branch
          %5606 = sbr.rel (%p5604) target = $region60
        $region59: #{decoder_block_forward.5} parent=35 // pred_region
          %s5608 = ssub.s32 16, 16
          %5609 = vsyncadd %s5578, %s5608
          %s5610 = smul.addr %s35, 2
          %s5611 = sadd.s32 %s36, %s5610
          %s5612 = smul.addr %s5611, 16
          %s5613 = scalar_lea.hbm %s5, %s5612
          %s5615 = sshll.u32 %s5580, 4
          %s5616 = int_to_ptr.vmem [resolvable:$true] %s5615
          %5618 = dma.vmem_to_hbm [thread:$0]  %s5616, 16, %s5613, %s5578
        $region60: #{decoder_block_forward.5} parent=35 // pred_fallthru
          _
        // Predicated region
        $region61: #{decoder_block_forward.5} parent=35 // pred_check
          %p5619 = pneg %p217
        $region62: #{decoder_block_forward.5} parent=35 // pred_check_branch
          %5621 = sbr.rel (%p5619) target = $region64
        $region63: #{decoder_block_forward.5} parent=35 // pred_region
          %s5623 = ssub.s32 16, 16
          %5624 = vsyncadd %s5582, %s5623
          %s5625 = smul.addr %s35, 2
          %s5626 = sadd.s32 %s36, %s5625
          %s5627 = smul.addr %s5626, 16
          %s5628 = scalar_lea.hbm %s6, %s5627
          %s5630 = sshll.u32 %s5584, 4
          %s5631 = int_to_ptr.vmem [resolvable:$true] %s5630
          %5633 = dma.vmem_to_hbm [thread:$0]  %s5631, 16, %s5628, %s5582
        $region64: #{decoder_block_forward.5} parent=35 // pred_fallthru
          _
      $region36: #{decoder_block_forward.5} parent=5 // pred_fallthru
        _
      %p5634 = scmp.le.s32.totalorder 2, %s26
      // Predicated region
      $region65: #{decoder_block_forward.5} parent=5 // pred_check
        %p5635 = pneg %p5634
      $region66: #{decoder_block_forward.5} parent=5 // pred_check_branch
        %5637 = sbr.rel (%p5635) target = $region68
      $region67: #{decoder_block_forward.5} parent=5 // pred_region
        %s5638 = ssub.s32 %s26, 2
        // Predicated region
        $region69: #{decoder_block_forward.5} parent=67 // pred_check
          %p5639 = pneg %p167
        $region70: #{decoder_block_forward.5} parent=67 // pred_check_branch
          %5641 = sbr.rel (%p5639) target = $region72
        $region71: #{decoder_block_forward.5} parent=67 // pred_region
          %s5642 = sand.u32 %s152, 1
          %s5643 = scalar_lea.sflag [#allocation4], %s5642
          %s5644 = sand.u32 %s152, 1
          %s5645 = smul.addr %s5644, 256
          %s5646 = scalar_lea.vmem [#allocation10], %s5645
          %5647 = dma.done %s5643, 4096
        $region72: #{decoder_block_forward.5} parent=67 // pred_fallthru
          _
        // Predicated region
        $region73: #{decoder_block_forward.5} parent=67 // pred_check
          %p5648 = pneg %p195
        $region74: #{decoder_block_forward.5} parent=67 // pred_check_branch
          %5650 = sbr.rel (%p5648) target = $region76
        $region75: #{decoder_block_forward.5} parent=67 // pred_region
          %s5651 = sand.u32 %s32, 1
          %s5652 = scalar_lea.sflag [#allocation12], %s5651
          %s5653 = sand.u32 %s180, 1
          %s5654 = scalar_lea.vmem [#allocation11], %s5653
          %5655 = dma.done %s5652, 16
        $region76: #{decoder_block_forward.5} parent=67 // pred_fallthru
          _
        // Predicated region
        $region77: #{decoder_block_forward.5} parent=67 // pred_check
          %p5656 = pneg %p223
        $region78: #{decoder_block_forward.5} parent=67 // pred_check_branch
          %5658 = sbr.rel (%p5656) target = $region80
        $region79: #{decoder_block_forward.5} parent=67 // pred_region
          %s5659 = sand.u32 %s32, 1
          %s5660 = scalar_lea.sflag [#allocation12], %s5659
          %s5661 = sand.u32 %s208, 1
          %s5662 = scalar_lea.vmem [#allocation13], %s5661
          %5663 = dma.done %s5660, 16
        $region80: #{decoder_block_forward.5} parent=67 // pred_fallthru
          _
      $region68: #{decoder_block_forward.5} parent=5 // pred_fallthru
        _
    $region6: #{decoder_block_forward.5} parent=1 // loop_footer
      %s30 = sadd.s32 1, %s26
    $region7: #{decoder_block_forward.5} parent=1 // loop_footer_branch
      %25 = sbr.rel target = $region3
    $region8: #{decoder_block_forward.5} parent=1 // loop_exit
      _
    %5664 = vsyncpa [#allocation3], 1
    %s5665 = scalar_lea.sflag [#allocation3], 1
    %5666 = vsyncpa %s5665, 1
    %5667 = vsyncpa [#allocation6], 1
    %s5668 = scalar_lea.sflag [#allocation6], 1
    %5669 = vsyncpa %s5668, 1
    %5670 = vsyncpa [#allocation9], 1
    %5671 = vsyncpa [#allocation4], 1
    %s5672 = scalar_lea.sflag [#allocation4], 1
    %5673 = vsyncpa %s5672, 1
    %5674 = vsyncpa [#allocation12], 1
    %s5675 = scalar_lea.sflag [#allocation12], 1
    %5676 = vsyncpa %s5675, 1

// kernel: decoder_block_forward.6
$region0: #{decoder_block_forward.6}
  #allocation0 [shape = 'u32[]', space=smem, size = 0x4, offset = 0x4, fixed_abs, tag = 'smem constant byte address 0x4 - core index']
  #allocation1 [shape = 'u32[144,128]{1,0:T(1,128)}', space=vmem, size = 0x12000, scoped, tag = 'internal scratch']
  %s0 = inlined_call_operand.hbm [shape: bf16[2,2,18,34,8], index: 0, kind: input, shape index: {}]
  %s1 = inlined_call_operand.hbm [shape: f32[1,8], index: 1, kind: input, shape index: {}]
  %s2 = inlined_call_operand.hbm [shape: f32[1,8], index: 2, kind: input, shape index: {}]
  %s3 = inlined_call_operand.hbm [shape: bf16[72,8], index: 3, kind: input, shape index: {}]
  %s4 = inlined_call_operand.hbm [shape: f32[1,8], index: 4, kind: input, shape index: {}]
  %s5 = inlined_call_operand.hbm [shape: f32[2,32,32,8], index: 5, kind: output, shape index: {0}]
  %s6 = inlined_call_operand.hbm [shape: f32[2,2,1,8], index: 6, kind: output, shape index: {1}]
  %s7 = inlined_call_operand.hbm [shape: f32[2,2,1,8], index: 7, kind: output, shape index: {2}]
  %8 = xla_tuple %s5, %s6, %s7
  %s9 = sld [smem:[#allocation0]]
  $region89: #{decoder_block_forward.6} parent=0
    _
  %s11 = ssub.s32 1, %s9
  %s12 = scalar_select 0, %s11, %s9
  $region1: #{decoder_block_forward.6} parent=0
    #allocation2 [shape = 'u8[368640]{0}', space=vmem, size = 0x5a000, scoped, tag = 'input window, operand 0']
    #allocation3 [shape = 's32[2]{0}', space=sflag, size = 0x8, scoped, tag = 'scoped memory for decoder_block_forward.6']
    #allocation4 [shape = 's32[2]{0}', space=sflag, size = 0x8, scoped, tag = 'scoped memory for decoder_block_forward.6']
    #allocation5 [shape = 'u8[512]{0}', space=vmem, size = 0x400, scoped, tag = 'input window, operand 1, single buffered']
    #allocation6 [shape = 's32[1]{0}', space=sflag, size = 0x4, scoped, tag = 'scoped memory for decoder_block_forward.6']
    #allocation7 [shape = 'u8[512]{0}', space=vmem, size = 0x400, scoped, tag = 'input window, operand 2, single buffered']
    #allocation8 [shape = 'u8[18432]{0}', space=vmem, size = 0x4800, scoped, tag = 'input window, operand 3, single buffered']
    #allocation9 [shape = 's32[1]{0}', space=sflag, size = 0x4, scoped, tag = 'scoped memory for decoder_block_forward.6']
    #allocation10 [shape = 'u8[512]{0}', space=vmem, size = 0x400, scoped, tag = 'input window, operand 4, single buffered']
    #allocation11 [shape = 'u8[524288]{0}', space=vmem, size = 0x80000, scoped, tag = 'output window, operand 0']
    #allocation12 [shape = 'u8[1024]{0}', space=vmem, size = 0x400, scoped, tag = 'output window, operand 1']
    #allocation13 [shape = 's32[2]{0}', space=sflag, size = 0x8, scoped, tag = 'scoped memory for decoder_block_forward.6']
    #allocation14 [shape = 'u8[1024]{0}', space=vmem, size = 0x400, scoped, tag = 'output window, operand 2']
    %13 = vsyncpa [#allocation3], 0
    %s14 = scalar_lea.sflag [#allocation3], 1
    %15 = vsyncpa %s14, 0
    %16 = vsyncpa [#allocation6], 0
    %17 = vsyncpa [#allocation9], 0
    %18 = vsyncpa [#allocation4], 0
    %s19 = scalar_lea.sflag [#allocation4], 1
    %20 = vsyncpa %s19, 0
    %21 = vsyncpa [#allocation13], 0
    %s22 = scalar_lea.sflag [#allocation13], 1
    %23 = vsyncpa %s22, 0
    loop: start=0, step=1, limit=6
    $region2: #{decoder_block_forward.6} parent=1 // loop_pre_header
      _
    $region3: #{decoder_block_forward.6} parent=1 // loop_header
      %s25 = sphi 0, %s29
      %p26 = scmp.ge.s32.totalorder %s25, 6
      %s32 = sphi 0, %s44
      %s33 = sphi 0, %s40
      %s34 = sphi 0, %s32
      %s35 = sphi 0, %s33
      %s36 = sphi 0, %s34
      %s37 = sphi 0, %s35
      %s49 = sphi 0, %s51
      %s52 = sphi 0, %s49
      %s53 = sphi 0, %s52
      %s69 = sphi 0, %s53
      %s73 = sphi 0, %s73
      %s75 = sphi 0, %s73
      %s76 = sphi 0, %s75
      %s90 = sphi 0, %s76
      %s94 = sphi 0, %s94
      %s96 = sphi 0, %s94
      %s97 = sphi 0, %s96
      %s111 = sphi 0, %s97
      %s115 = sphi 0, %s115
      %s117 = sphi 0, %s115
      %s118 = sphi 0, %s117
      %s132 = sphi 0, %s118
      %s136 = sphi 0, %s136
      %s138 = sphi 0, %s136
      %s139 = sphi 0, %s138
      %s153 = sphi 0, %s139
      %s161 = sphi 0, %s163
      %s164 = sphi 0, %s161
      %s165 = sphi 0, %s164
      %s181 = sphi 0, %s165
      %s189 = sphi 0, %s191
      %s192 = sphi 0, %s189
      %s193 = sphi 0, %s192
      %s209 = sphi 0, %s193
      %s217 = sphi 0, %s219
      %s220 = sphi 0, %s217
      %s221 = sphi 0, %s220
      %s237 = sphi 0, %s221
    $region4: #{decoder_block_forward.6} parent=1 // loop_header_branch
      %28 = sbr.rel (%p26) target = $region8
    $region5: #{decoder_block_forward.6} parent=1 // loop_body
      %s30 = ssub.s32 %s25, 1
      %s31 = ssub.s32 %s25, 2
      %s38 = sadd.s32 1, %s33
      %p39 = scmp.ge.s32.totalorder %s38, 2
      %s40 = scalar_select %p39, 0, %s38
      %s41 = sadd.s32 1, %s32
      %s42 = scalar_select %p39, %s41, %s32
      %p43 = scmp.ge.s32.totalorder %s42, 2
      %s44 = scalar_select %p43, 0, %s42
      %s45 = ssub.s32 %s32, %s44
      %s46 = ssub.s32 %s33, %s40
      %s47 = sor.u32 %s45, %s46
      %p48 = scmp.eq.s32.totalorder %s47, 0
      %s50 = sadd.s32 %s49, 1
      %s51 = scalar_select %p48, %s49, %s50
      %p54 = pneg %p48
      %p55 = scmp.eq.s32.totalorder %s25, 3
      %p56 = por %p54, %p55
      %p57 = scmp.ne.s32.totalorder %s49, %s52
      %p58 = scmp.eq.s32.totalorder %s25, 0
      %p59 = por %p57, %p58
      %p60 = scmp.ne.s32.totalorder %s49, %s52
      %p61 = scmp.eq.s32.totalorder %s30, 3
      %p62 = por %p60, %p61
      %p63 = scmp.ne.s32.totalorder %s52, %s53
      %p64 = scmp.eq.s32.totalorder %s30, 0
      %p65 = por %p63, %p64
      %p66 = scmp.ne.s32.totalorder %s52, %s53
      %p67 = scmp.eq.s32.totalorder %s31, 3
      %p68 = por %p66, %p67
      %p70 = scmp.ne.s32.totalorder %s53, %s69
      %p71 = scmp.eq.s32.totalorder %s31, 0
      %p72 = por %p70, %p71
      %s74 = sadd.s32 %s73, 1
      %p77 = scmp.eq.s32.totalorder %s25, 3
      %p78 = scmp.ne.s32.totalorder %s73, %s75
      %p79 = scmp.eq.s32.totalorder %s25, 0
      %p80 = por %p78, %p79
      %p81 = scmp.ne.s32.totalorder %s73, %s75
      %p82 = scmp.eq.s32.totalorder %s30, 3
      %p83 = por %p81, %p82
      %p84 = scmp.ne.s32.totalorder %s75, %s76
      %p85 = scmp.eq.s32.totalorder %s30, 0
      %p86 = por %p84, %p85
      %p87 = scmp.ne.s32.totalorder %s75, %s76
      %p88 = scmp.eq.s32.totalorder %s31, 3
      %p89 = por %p87, %p88
      %p91 = scmp.ne.s32.totalorder %s76, %s90
      %p92 = scmp.eq.s32.totalorder %s31, 0
      %p93 = por %p91, %p92
      %s95 = sadd.s32 %s94, 1
      %p98 = scmp.eq.s32.totalorder %s25, 3
      %p99 = scmp.ne.s32.totalorder %s94, %s96
      %p100 = scmp.eq.s32.totalorder %s25, 0
      %p101 = por %p99, %p100
      %p102 = scmp.ne.s32.totalorder %s94, %s96
      %p103 = scmp.eq.s32.totalorder %s30, 3
      %p104 = por %p102, %p103
      %p105 = scmp.ne.s32.totalorder %s96, %s97
      %p106 = scmp.eq.s32.totalorder %s30, 0
      %p107 = por %p105, %p106
      %p108 = scmp.ne.s32.totalorder %s96, %s97
      %p109 = scmp.eq.s32.totalorder %s31, 3
      %p110 = por %p108, %p109
      %p112 = scmp.ne.s32.totalorder %s97, %s111
      %p113 = scmp.eq.s32.totalorder %s31, 0
      %p114 = por %p112, %p113
      %s116 = sadd.s32 %s115, 1
      %p119 = scmp.eq.s32.totalorder %s25, 3
      %p120 = scmp.ne.s32.totalorder %s115, %s117
      %p121 = scmp.eq.s32.totalorder %s25, 0
      %p122 = por %p120, %p121
      %p123 = scmp.ne.s32.totalorder %s115, %s117
      %p124 = scmp.eq.s32.totalorder %s30, 3
      %p125 = por %p123, %p124
      %p126 = scmp.ne.s32.totalorder %s117, %s118
      %p127 = scmp.eq.s32.totalorder %s30, 0
      %p128 = por %p126, %p127
      %p129 = scmp.ne.s32.totalorder %s117, %s118
      %p130 = scmp.eq.s32.totalorder %s31, 3
      %p131 = por %p129, %p130
      %p133 = scmp.ne.s32.totalorder %s118, %s132
      %p134 = scmp.eq.s32.totalorder %s31, 0
      %p135 = por %p133, %p134
      %s137 = sadd.s32 %s136, 1
      %p140 = scmp.eq.s32.totalorder %s25, 3
      %p141 = scmp.ne.s32.totalorder %s136, %s138
      %p142 = scmp.eq.s32.totalorder %s25, 0
      %p143 = por %p141, %p142
      %p144 = scmp.ne.s32.totalorder %s136, %s138
      %p145 = scmp.eq.s32.totalorder %s30, 3
      %p146 = por %p144, %p145
      %p147 = scmp.ne.s32.totalorder %s138, %s139
      %p148 = scmp.eq.s32.totalorder %s30, 0
      %p149 = por %p147, %p148
      %p150 = scmp.ne.s32.totalorder %s138, %s139
      %p151 = scmp.eq.s32.totalorder %s31, 3
      %p152 = por %p150, %p151
      %p154 = scmp.ne.s32.totalorder %s139, %s153
      %p155 = scmp.eq.s32.totalorder %s31, 0
      %p156 = por %p154, %p155
      %s157 = ssub.s32 %s32, %s44
      %s158 = ssub.s32 %s33, %s40
      %s159 = sor.u32 %s157, %s158
      %p160 = scmp.eq.s32.totalorder %s159, 0
      %s162 = sadd.s32 %s161, 1
      %s163 = scalar_select %p160, %s161, %s162
      %p166 = pneg %p160
      %p167 = scmp.eq.s32.totalorder %s25, 3
      %p168 = por %p166, %p167
      %p169 = scmp.ne.s32.totalorder %s161, %s164
      %p170 = scmp.eq.s32.totalorder %s25, 0
      %p171 = por %p169, %p170
      %p172 = scmp.ne.s32.totalorder %s161, %s164
      %p173 = scmp.eq.s32.totalorder %s30, 3
      %p174 = por %p172, %p173
      %p175 = scmp.ne.s32.totalorder %s164, %s165
      %p176 = scmp.eq.s32.totalorder %s30, 0
      %p177 = por %p175, %p176
      %p178 = scmp.ne.s32.totalorder %s164, %s165
      %p179 = scmp.eq.s32.totalorder %s31, 3
      %p180 = por %p178, %p179
      %p182 = scmp.ne.s32.totalorder %s165, %s181
      %p183 = scmp.eq.s32.totalorder %s31, 0
      %p184 = por %p182, %p183
      %s185 = ssub.s32 %s32, %s44
      %s186 = ssub.s32 %s33, %s40
      %s187 = sor.u32 %s185, %s186
      %p188 = scmp.eq.s32.totalorder %s187, 0
      %s190 = sadd.s32 %s189, 1
      %s191 = scalar_select %p188, %s189, %s190
      %p194 = pneg %p188
      %p195 = scmp.eq.s32.totalorder %s25, 3
      %p196 = por %p194, %p195
      %p197 = scmp.ne.s32.totalorder %s189, %s192
      %p198 = scmp.eq.s32.totalorder %s25, 0
      %p199 = por %p197, %p198
      %p200 = scmp.ne.s32.totalorder %s189, %s192
      %p201 = scmp.eq.s32.totalorder %s30, 3
      %p202 = por %p200, %p201
      %p203 = scmp.ne.s32.totalorder %s192, %s193
      %p204 = scmp.eq.s32.totalorder %s30, 0
      %p205 = por %p203, %p204
      %p206 = scmp.ne.s32.totalorder %s192, %s193
      %p207 = scmp.eq.s32.totalorder %s31, 3
      %p208 = por %p206, %p207
      %p210 = scmp.ne.s32.totalorder %s193, %s209
      %p211 = scmp.eq.s32.totalorder %s31, 0
      %p212 = por %p210, %p211
      %s213 = ssub.s32 %s32, %s44
      %s214 = ssub.s32 %s33, %s40
      %s215 = sor.u32 %s213, %s214
      %p216 = scmp.eq.s32.totalorder %s215, 0
      %s218 = sadd.s32 %s217, 1
      %s219 = scalar_select %p216, %s217, %s218
      %p222 = pneg %p216
      %p223 = scmp.eq.s32.totalorder %s25, 3
      %p224 = por %p222, %p223
      %p225 = scmp.ne.s32.totalorder %s217, %s220
      %p226 = scmp.eq.s32.totalorder %s25, 0
      %p227 = por %p225, %p226
      %p228 = scmp.ne.s32.totalorder %s217, %s220
      %p229 = scmp.eq.s32.totalorder %s30, 3
      %p230 = por %p228, %p229
      %p231 = scmp.ne.s32.totalorder %s220, %s221
      %p232 = scmp.eq.s32.totalorder %s30, 0
      %p233 = por %p231, %p232
      %p234 = scmp.ne.s32.totalorder %s220, %s221
      %p235 = scmp.eq.s32.totalorder %s31, 3
      %p236 = por %p234, %p235
      %p238 = scmp.ne.s32.totalorder %s221, %s237
      %p239 = scmp.eq.s32.totalorder %s31, 0
      %p240 = por %p238, %p239
      %p241 = scmp.le.s32.totalorder 1, %s25
      %p242 = scmp.lt.s32.totalorder %s25, 5
      %p243 = pnand %p241, %p242
      %p244 = pneg %p243
      // Predicated region
      $region9: #{decoder_block_forward.6} parent=5 // pred_check
        _
      $region10: #{decoder_block_forward.6} parent=5 // pred_check_branch
        %246 = sbr.rel (%p243) target = $region12
      $region11: #{decoder_block_forward.6} parent=5 // pred_region
        %s247 = ssub.s32 %s25, 1
        // Predicated region
        $region13: #{decoder_block_forward.6} parent=11 // pred_check
          %p248 = pneg %p86
        $region14: #{decoder_block_forward.6} parent=11 // pred_check_branch
          %250 = sbr.rel (%p248) target = $region16
        $region15: #{decoder_block_forward.6} parent=11 // pred_region
          %s252 = ssub.s32 16, 16
          %253 = vsyncadd [#allocation6], %s252
          %s255 = sshll.u32 [#allocation5], 4
          %s256 = int_to_ptr.vmem [resolvable:$true] %s255
          %258 = dma.hbm_to_vmem [thread:$0]  %s1, 16, %s256, [#allocation6]
        $region16: #{decoder_block_forward.6} parent=11 // pred_fallthru
          _
        // Predicated region
        $region17: #{decoder_block_forward.6} parent=11 // pred_check
          %p259 = pneg %p107
        $region18: #{decoder_block_forward.6} parent=11 // pred_check_branch
          %261 = sbr.rel (%p259) target = $region20
        $region19: #{decoder_block_forward.6} parent=11 // pred_region
          %s263 = ssub.s32 16, 16
          %264 = vsyncadd [#allocation6], %s263
          %s266 = sshll.u32 [#allocation7], 4
          %s267 = int_to_ptr.vmem [resolvable:$true] %s266
          %269 = dma.hbm_to_vmem [thread:$0]  %s2, 16, %s267, [#allocation6]
        $region20: #{decoder_block_forward.6} parent=11 // pred_fallthru
          _
        // Predicated region
        $region21: #{decoder_block_forward.6} parent=11 // pred_check
          %p270 = pneg %p128
        $region22: #{decoder_block_forward.6} parent=11 // pred_check_branch
          %272 = sbr.rel (%p270) target = $region24
        $region23: #{decoder_block_forward.6} parent=11 // pred_region
          %s274 = ssub.s32 576, 576
          %275 = vsyncadd [#allocation9], %s274
          %s276 = sshll.u32 [#allocation8], 4
          %s277 = int_to_ptr.vmem [resolvable:$true] %s276
          %282 = dma.hbm_to_vmem [thread:$0]  %s3, 576, %s277, [#allocation9], 64, 64, 4
        $region24: #{decoder_block_forward.6} parent=11 // pred_fallthru
          _
        // Predicated region
        $region25: #{decoder_block_forward.6} parent=11 // pred_check
          %p283 = pneg %p149
        $region26: #{decoder_block_forward.6} parent=11 // pred_check_branch
          %285 = sbr.rel (%p283) target = $region28
        $region27: #{decoder_block_forward.6} parent=11 // pred_region
          %s287 = ssub.s32 16, 16
          %288 = vsyncadd [#allocation9], %s287
          %s290 = sshll.u32 [#allocation10], 4
          %s291 = int_to_ptr.vmem [resolvable:$true] %s290
          %293 = dma.hbm_to_vmem [thread:$0]  %s4, 16, %s291, [#allocation9]
        $region28: #{decoder_block_forward.6} parent=11 // pred_fallthru
          _
      $region12: #{decoder_block_forward.6} parent=5 // pred_fallthru
        _
      %p294 = scmp.lt.s32.totalorder %s25, 4
      // Predicated region
      $region29: #{decoder_block_forward.6} parent=5 // pred_check
        %p295 = pneg %p294
      $region30: #{decoder_block_forward.6} parent=5 // pred_check_branch
        %297 = sbr.rel (%p295) target = $region32
      $region31: #{decoder_block_forward.6} parent=5 // pred_region
        // Predicated region
        $region33: #{decoder_block_forward.6} parent=31 // pred_check
          %p298 = pneg %p59
        $region34: #{decoder_block_forward.6} parent=31 // pred_check_branch
          %300 = sbr.rel (%p298) target = $region36
        $region35: #{decoder_block_forward.6} parent=31 // pred_region
          %s301 = sand.u32 %s49, 1
          %s302 = scalar_lea.sflag [#allocation3], %s301
          %s303 = sand.u32 %s49, 1
          %s304 = smul.addr %s303, 360
          %s305 = scalar_lea.vmem [#allocation2], %s304
          %s307 = ssub.s32 5760, 5760
          %308 = vsyncadd %s302, %s307
          %s309 = smul.addr %s33, 90
          %s310 = smul.addr %s32, 180
          %s311 = sadd.s32 %s309, %s310
          %s312 = smul.addr %s311, 64
          %s313 = scalar_lea.hbm %s0, %s312
          %s314 = sshll.u32 %s305, 4
          %s315 = int_to_ptr.vmem [resolvable:$true] %s314
          %320 = dma.hbm_to_vmem [thread:$0]  %s313, 5760, %s315, %s302, 64, 64, 4
        $region36: #{decoder_block_forward.6} parent=31 // pred_fallthru
          _
      $region32: #{decoder_block_forward.6} parent=5 // pred_fallthru
        _
      %p321 = scmp.le.s32.totalorder 1, %s25
      %p322 = scmp.lt.s32.totalorder %s25, 5
      %p323 = pnand %p321, %p322
      %p324 = pneg %p323
      // Predicated region
      $region37: #{decoder_block_forward.6} parent=5 // pred_check
        _
      $region38: #{decoder_block_forward.6} parent=5 // pred_check_branch
        %326 = sbr.rel (%p323) target = $region40
      $region39: #{decoder_block_forward.6} parent=5 // pred_region
        %s327 = ssub.s32 %s25, 1
        %s328 = sand.u32 %s52, 1
        %s329 = scalar_lea.sflag [#allocation3], %s328
        %s330 = sand.u32 %s52, 1
        %s331 = smul.addr %s330, 360
        %s332 = scalar_lea.vmem [#allocation2], %s331
        // Predicated region
        $region41: #{decoder_block_forward.6} parent=39 // pred_check
          %p333 = pneg %p65
        $region42: #{decoder_block_forward.6} parent=39 // pred_check_branch
          %335 = sbr.rel (%p333) target = $region44
        $region43: #{decoder_block_forward.6} parent=39 // pred_region
          %336 = dma.done %s329, 5760
        $region44: #{decoder_block_forward.6} parent=39 // pred_fallthru
          _
        // Predicated region
        $region45: #{decoder_block_forward.6} parent=39 // pred_check
          %p337 = pneg %p86
        $region46: #{decoder_block_forward.6} parent=39 // pred_check_branch
          %339 = sbr.rel (%p337) target = $region48
        $region47: #{decoder_block_forward.6} parent=39 // pred_region
          %340 = dma.done [#allocation6], 16
        $region48: #{decoder_block_forward.6} parent=39 // pred_fallthru
          _
        // Predicated region
        $region49: #{decoder_block_forward.6} parent=39 // pred_check
          %p341 = pneg %p107
        $region50: #{decoder_block_forward.6} parent=39 // pred_check_branch
          %343 = sbr.rel (%p341) target = $region52
        $region51: #{decoder_block_forward.6} parent=39 // pred_region
          %344 = dma.done [#allocation6], 16
        $region52: #{decoder_block_forward.6} parent=39 // pred_fallthru
          _
        // Predicated region
        $region53: #{decoder_block_forward.6} parent=39 // pred_check
          %p345 = pneg %p128
        $region54: #{decoder_block_forward.6} parent=39 // pred_check_branch
          %347 = sbr.rel (%p345) target = $region56
        $region55: #{decoder_block_forward.6} parent=39 // pred_region
          %348 = dma.done [#allocation9], 576
        $region56: #{decoder_block_forward.6} parent=39 // pred_fallthru
          _
        // Predicated region
        $region57: #{decoder_block_forward.6} parent=39 // pred_check
          %p349 = pneg %p149
        $region58: #{decoder_block_forward.6} parent=39 // pred_check_branch
          %351 = sbr.rel (%p349) target = $region60
        $region59: #{decoder_block_forward.6} parent=39 // pred_region
          %352 = dma.done [#allocation9], 16
        $region60: #{decoder_block_forward.6} parent=39 // pred_fallthru
          _
        %s353 = sand.u32 %s52, 1
        %s354 = scalar_lea.sflag [#allocation3], %s353
        %s355 = sand.u32 %s52, 1
        %s356 = smul.addr %s355, 360
        %s357 = scalar_lea.vmem [#allocation2], %s356
        %p358 = pneg %p65
        %p359 = pneg %p62
        %p360 = pneg %p86
        %p361 = pneg %p83
        %p362 = pneg %p107
        %p363 = pneg %p104
        %p364 = pneg %p128
        %p365 = pneg %p125
        %p366 = pneg %p149
        %p367 = pneg %p146
        %p368 = pneg %p177
        %p369 = pneg %p174
        %s370 = sand.u32 %s164, 1
        %s371 = scalar_lea.sflag [#allocation4], %s370
        %s372 = sand.u32 %s164, 1
        %s373 = smul.addr %s372, 512
        %s374 = scalar_lea.vmem [#allocation11], %s373
        %p375 = pneg %p205
        %p376 = pneg %p202
        %s377 = sand.u32 %s30, 1
        %s378 = scalar_lea.sflag [#allocation13], %s377
        %s379 = sand.u32 %s192, 1
        %s380 = scalar_lea.vmem [#allocation12], %s379
        %p381 = pneg %p233
        %p382 = pneg %p230
        %s383 = sand.u32 %s30, 1
        %s384 = scalar_lea.sflag [#allocation13], %s383
        %s385 = sand.u32 %s220, 1
        %s386 = scalar_lea.vmem [#allocation14], %s385
        %s387 = smul.u32 16, %s35
        %v389 = vld [vmem:[%s332] sm:$0xf]
        %v390 = vld [vmem:[%s332 + $0x4] sm:$0xf]
        %v391 = vld [vmem:[%s332 + $0x8] sm:$0xf]
        %v392 = vld [vmem:[%s332 + $0xc] sm:$0xf]
        %v393 = vld [vmem:[%s332 + $0x10] sm:$0x1]
        %v394 = vld [vmem:[%s332 + $0x14] sm:$0xf]
        %v395 = vld [vmem:[%s332 + $0x18] sm:$0xf]
        %v396 = vld [vmem:[%s332 + $0x1c] sm:$0xf]
        %v397 = vld [vmem:[%s332 + $0x20] sm:$0xf]
        %v398 = vld [vmem:[%s332 + $0x24] sm:$0x1]
        %v399 = vld [vmem:[%s332 + $0x28] sm:$0xf]
        %v400 = vld [vmem:[%s332 + $0x2c] sm:$0xf]
        %v401 = vld [vmem:[%s332 + $0x30] sm:$0xf]
        %v402 = vld [vmem:[%s332 + $0x34] sm:$0xf]
        %v403 = vld [vmem:[%s332 + $0x38] sm:$0x1]
        %v404 = vld [vmem:[%s332 + $0x3c] sm:$0xf]
        %v405 = vld [vmem:[%s332 + $0x40] sm:$0xf]
        %v406 = vld [vmem:[%s332 + $0x44] sm:$0xf]
        %v407 = vld [vmem:[%s332 + $0x48] sm:$0xf]
        %v408 = vld [vmem:[%s332 + $0x4c] sm:$0x1]
        %v409 = vld [vmem:[%s332 + $0x50] sm:$0xf]
        %v410 = vld [vmem:[%s332 + $0x54] sm:$0xf]
        %v411 = vld [vmem:[%s332 + $0x58] sm:$0xf]
        %v412 = vld [vmem:[%s332 + $0x5c] sm:$0xf]
        %v413 = vld [vmem:[%s332 + $0x60] sm:$0x1]
        %v414 = vld [vmem:[%s332 + $0x64] sm:$0xf]
        %v415 = vld [vmem:[%s332 + $0x68] sm:$0xf]
        %v416 = vld [vmem:[%s332 + $0x6c] sm:$0xf]
        %v417 = vld [vmem:[%s332 + $0x70] sm:$0xf]
        %v418 = vld [vmem:[%s332 + $0x74] sm:$0x1]
        %v419 = vld [vmem:[%s332 + $0x78] sm:$0xf]
        %v420 = vld [vmem:[%s332 + $0x7c] sm:$0xf]
        %v421 = vld [vmem:[%s332 + $0x80] sm:$0xf]
        %v422 = vld [vmem:[%s332 + $0x84] sm:$0xf]
        %v423 = vld [vmem:[%s332 + $0x88] sm:$0x1]
        %v424 = vld [vmem:[%s332 + $0x8c] sm:$0xf]
        %v425 = vld [vmem:[%s332 + $0x90] sm:$0xf]
        %v426 = vld [vmem:[%s332 + $0x94] sm:$0xf]
        %v427 = vld [vmem:[%s332 + $0x98] sm:$0xf]
        %v428 = vld [vmem:[%s332 + $0x9c] sm:$0x1]
        %v429 = vld [vmem:[%s332 + $0xa0] sm:$0xf]
        %v430 = vld [vmem:[%s332 + $0xa4] sm:$0xf]
        %v431 = vld [vmem:[%s332 + $0xa8] sm:$0xf]
        %v432 = vld [vmem:[%s332 + $0xac] sm:$0xf]
        %v433 = vld [vmem:[%s332 + $0xb0] sm:$0x1]
        %v434 = vld [vmem:[%s332 + $0xb4] sm:$0xf]
        %v435 = vld [vmem:[%s332 + $0xb8] sm:$0xf]
        %v436 = vld [vmem:[%s332 + $0xbc] sm:$0xf]
        %v437 = vld [vmem:[%s332 + $0xc0] sm:$0xf]
        %v438 = vld [vmem:[%s332 + $0xc4] sm:$0x1]
        %v439 = vld [vmem:[%s332 + $0xc8] sm:$0xf]
        %v440 = vld [vmem:[%s332 + $0xcc] sm:$0xf]
        %v441 = vld [vmem:[%s332 + $0xd0] sm:$0xf]
        %v442 = vld [vmem:[%s332 + $0xd4] sm:$0xf]
        %v443 = vld [vmem:[%s332 + $0xd8] sm:$0x1]
        %v444 = vld [vmem:[%s332 + $0xdc] sm:$0xf]
        %v445 = vld [vmem:[%s332 + $0xe0] sm:$0xf]
        %v446 = vld [vmem:[%s332 + $0xe4] sm:$0xf]
        %v447 = vld [vmem:[%s332 + $0xe8] sm:$0xf]
        %v448 = vld [vmem:[%s332 + $0xec] sm:$0x1]
        %v449 = vld [vmem:[%s332 + $0xf0] sm:$0xf]
        %v450 = vld [vmem:[%s332 + $0xf4] sm:$0xf]
        %v451 = vld [vmem:[%s332 + $0xf8] sm:$0xf]
        %v452 = vld [vmem:[%s332 + $0xfc] sm:$0xf]
        %v453 = vld [vmem:[%s332 + $0x100] sm:$0x1]
        %v454 = vld [vmem:[%s332 + $0x104] sm:$0xf]
        %v455 = vld [vmem:[%s332 + $0x108] sm:$0xf]
        %v456 = vld [vmem:[%s332 + $0x10c] sm:$0xf]
        %v457 = vld [vmem:[%s332 + $0x110] sm:$0xf]
        %v458 = vld [vmem:[%s332 + $0x114] sm:$0x1]
        %v459 = vld [vmem:[%s332 + $0x118] sm:$0xf]
        %v460 = vld [vmem:[%s332 + $0x11c] sm:$0xf]
        %v461 = vld [vmem:[%s332 + $0x120] sm:$0xf]
        %v462 = vld [vmem:[%s332 + $0x124] sm:$0xf]
        %v463 = vld [vmem:[%s332 + $0x128] sm:$0x1]
        %v464 = vld [vmem:[%s332 + $0x12c] sm:$0xf]
        %v465 = vld [vmem:[%s332 + $0x130] sm:$0xf]
        %v466 = vld [vmem:[%s332 + $0x134] sm:$0xf]
        %v467 = vld [vmem:[%s332 + $0x138] sm:$0xf]
        %v468 = vld [vmem:[%s332 + $0x13c] sm:$0x1]
        %v469 = vld [vmem:[%s332 + $0x140] sm:$0xf]
        %v470 = vld [vmem:[%s332 + $0x144] sm:$0xf]
        %v471 = vld [vmem:[%s332 + $0x148] sm:$0xf]
        %v472 = vld [vmem:[%s332 + $0x14c] sm:$0xf]
        %v473 = vld [vmem:[%s332 + $0x150] sm:$0x1]
        %v474 = vld [vmem:[%s332 + $0x154] sm:$0xf]
        %v475 = vld [vmem:[%s332 + $0x158] sm:$0xf]
        %v476 = vld [vmem:[%s332 + $0x15c] sm:$0xf]
        %v477 = vld [vmem:[%s332 + $0x160] sm:$0xf]
        %v478 = vld [vmem:[%s332 + $0x164] sm:$0x1]
        %v479 = vunpack.c.l.bf16 %v389
        %v480 = vunpack.c.l.bf16 %v390
        %v481 = vunpack.c.l.bf16 %v391
        %v482 = vunpack.c.l.bf16 %v392
        %v483 = vunpack.c.l.bf16 %v393
        %v484 = vunpack.c.l.bf16 %v394
        %v485 = vunpack.c.l.bf16 %v395
        %v486 = vunpack.c.l.bf16 %v396
        %v487 = vunpack.c.l.bf16 %v397
        %v488 = vunpack.c.l.bf16 %v398
        %v489 = vunpack.c.l.bf16 %v399
        %v490 = vunpack.c.l.bf16 %v400
        %v491 = vunpack.c.l.bf16 %v401
        %v492 = vunpack.c.l.bf16 %v402
        %v493 = vunpack.c.l.bf16 %v403
        %v494 = vunpack.c.l.bf16 %v404
        %v495 = vunpack.c.l.bf16 %v405
        %v496 = vunpack.c.l.bf16 %v406
        %v497 = vunpack.c.l.bf16 %v407
        %v498 = vunpack.c.l.bf16 %v408
        %v499 = vunpack.c.l.bf16 %v409
        %v500 = vunpack.c.l.bf16 %v410
        %v501 = vunpack.c.l.bf16 %v411
        %v502 = vunpack.c.l.bf16 %v412
        %v503 = vunpack.c.l.bf16 %v413
        %v504 = vunpack.c.l.bf16 %v414
        %v505 = vunpack.c.l.bf16 %v415
        %v506 = vunpack.c.l.bf16 %v416
        %v507 = vunpack.c.l.bf16 %v417
        %v508 = vunpack.c.l.bf16 %v418
        %v509 = vunpack.c.l.bf16 %v419
        %v510 = vunpack.c.l.bf16 %v420
        %v511 = vunpack.c.l.bf16 %v421
        %v512 = vunpack.c.l.bf16 %v422
        %v513 = vunpack.c.l.bf16 %v423
        %v514 = vunpack.c.l.bf16 %v424
        %v515 = vunpack.c.l.bf16 %v425
        %v516 = vunpack.c.l.bf16 %v426
        %v517 = vunpack.c.l.bf16 %v427
        %v518 = vunpack.c.l.bf16 %v428
        %v519 = vunpack.c.l.bf16 %v429
        %v520 = vunpack.c.l.bf16 %v430
        %v521 = vunpack.c.l.bf16 %v431
        %v522 = vunpack.c.l.bf16 %v432
        %v523 = vunpack.c.l.bf16 %v433
        %v524 = vunpack.c.l.bf16 %v434
        %v525 = vunpack.c.l.bf16 %v435
        %v526 = vunpack.c.l.bf16 %v436
        %v527 = vunpack.c.l.bf16 %v437
        %v528 = vunpack.c.l.bf16 %v438
        %v529 = vunpack.c.l.bf16 %v439
        %v530 = vunpack.c.l.bf16 %v440
        %v531 = vunpack.c.l.bf16 %v441
        %v532 = vunpack.c.l.bf16 %v442
        %v533 = vunpack.c.l.bf16 %v443
        %v534 = vunpack.c.l.bf16 %v444
        %v535 = vunpack.c.l.bf16 %v445
        %v536 = vunpack.c.l.bf16 %v446
        %v537 = vunpack.c.l.bf16 %v447
        %v538 = vunpack.c.l.bf16 %v448
        %v539 = vunpack.c.l.bf16 %v449
        %v540 = vunpack.c.l.bf16 %v450
        %v541 = vunpack.c.l.bf16 %v451
        %v542 = vunpack.c.l.bf16 %v452
        %v543 = vunpack.c.l.bf16 %v453
        %v544 = vunpack.c.l.bf16 %v454
        %v545 = vunpack.c.l.bf16 %v455
        %v546 = vunpack.c.l.bf16 %v456
        %v547 = vunpack.c.l.bf16 %v457
        %v548 = vunpack.c.l.bf16 %v458
        %v549 = vunpack.c.l.bf16 %v459
        %v550 = vunpack.c.l.bf16 %v460
        %v551 = vunpack.c.l.bf16 %v461
        %v552 = vunpack.c.l.bf16 %v462
        %v553 = vunpack.c.l.bf16 %v463
        %v554 = vunpack.c.l.bf16 %v464
        %v555 = vunpack.c.l.bf16 %v465
        %v556 = vunpack.c.l.bf16 %v466
        %v557 = vunpack.c.l.bf16 %v467
        %v558 = vunpack.c.l.bf16 %v468
        %v559 = vunpack.c.l.bf16 %v469
        %v560 = vunpack.c.l.bf16 %v470
        %v561 = vunpack.c.l.bf16 %v471
        %v562 = vunpack.c.l.bf16 %v472
        %v563 = vunpack.c.l.bf16 %v473
        %v564 = vunpack.c.l.bf16 %v474
        %v565 = vunpack.c.l.bf16 %v475
        %v566 = vunpack.c.l.bf16 %v476
        %v567 = vunpack.c.l.bf16 %v477
        %v568 = vunpack.c.l.bf16 %v478
        %v569 = vld [vmem:[#allocation5] sm:$0x1]
        %v571 = vlaneseq
        %v572 = vshrl.u32 %v571, 7
        %v573 = vsub.s32 0, %v572
        %v574 = vrot.slane %v569, %v573
        %v576 = vmul.f32 %v479, %v574
        %v577 = vmul.f32 %v480, %v574
        %v578 = vmul.f32 %v481, %v574
        %v579 = vmul.f32 %v482, %v574
        %v580 = vmul.f32 %v483, %v574
        %v581 = vmul.f32 %v484, %v574
        %v582 = vmul.f32 %v485, %v574
        %v583 = vmul.f32 %v486, %v574
        %v584 = vmul.f32 %v487, %v574
        %v585 = vmul.f32 %v488, %v574
        %v586 = vmul.f32 %v489, %v574
        %v587 = vmul.f32 %v490, %v574
        %v588 = vmul.f32 %v491, %v574
        %v589 = vmul.f32 %v492, %v574
        %v590 = vmul.f32 %v493, %v574
        %v591 = vmul.f32 %v494, %v574
        %v592 = vmul.f32 %v495, %v574
        %v593 = vmul.f32 %v496, %v574
        %v594 = vmul.f32 %v497, %v574
        %v595 = vmul.f32 %v498, %v574
        %v596 = vmul.f32 %v499, %v574
        %v597 = vmul.f32 %v500, %v574
        %v598 = vmul.f32 %v501, %v574
        %v599 = vmul.f32 %v502, %v574
        %v600 = vmul.f32 %v503, %v574
        %v601 = vmul.f32 %v504, %v574
        %v602 = vmul.f32 %v505, %v574
        %v603 = vmul.f32 %v506, %v574
        %v604 = vmul.f32 %v507, %v574
        %v605 = vmul.f32 %v508, %v574
        %v606 = vmul.f32 %v509, %v574
        %v607 = vmul.f32 %v510, %v574
        %v608 = vmul.f32 %v511, %v574
        %v609 = vmul.f32 %v512, %v574
        %v610 = vmul.f32 %v513, %v574
        %v611 = vmul.f32 %v514, %v574
        %v612 = vmul.f32 %v515, %v574
        %v613 = vmul.f32 %v516, %v574
        %v614 = vmul.f32 %v517, %v574
        %v615 = vmul.f32 %v518, %v574
        %v616 = vmul.f32 %v519, %v574
        %v617 = vmul.f32 %v520, %v574
        %v618 = vmul.f32 %v521, %v574
        %v619 = vmul.f32 %v522, %v574
        %v620 = vmul.f32 %v523, %v574
        %v621 = vmul.f32 %v524, %v574
        %v622 = vmul.f32 %v525, %v574
        %v623 = vmul.f32 %v526, %v574
        %v624 = vmul.f32 %v527, %v574
        %v625 = vmul.f32 %v528, %v574
        %v626 = vmul.f32 %v529, %v574
        %v627 = vmul.f32 %v530, %v574
        %v628 = vmul.f32 %v531, %v574
        %v629 = vmul.f32 %v532, %v574
        %v630 = vmul.f32 %v533, %v574
        %v631 = vmul.f32 %v534, %v574
        %v632 = vmul.f32 %v535, %v574
        %v633 = vmul.f32 %v536, %v574
        %v634 = vmul.f32 %v537, %v574
        %v635 = vmul.f32 %v538, %v574
        %v636 = vmul.f32 %v539, %v574
        %v637 = vmul.f32 %v540, %v574
        %v638 = vmul.f32 %v541, %v574
        %v639 = vmul.f32 %v542, %v574
        %v640 = vmul.f32 %v543, %v574
        %v641 = vmul.f32 %v544, %v574
        %v642 = vmul.f32 %v545, %v574
        %v643 = vmul.f32 %v546, %v574
        %v644 = vmul.f32 %v547, %v574
        %v645 = vmul.f32 %v548, %v574
        %v646 = vmul.f32 %v549, %v574
        %v647 = vmul.f32 %v550, %v574
        %v648 = vmul.f32 %v551, %v574
        %v649 = vmul.f32 %v552, %v574
        %v650 = vmul.f32 %v553, %v574
        %v651 = vmul.f32 %v554, %v574
        %v652 = vmul.f32 %v555, %v574
        %v653 = vmul.f32 %v556, %v574
        %v654 = vmul.f32 %v557, %v574
        %v655 = vmul.f32 %v558, %v574
        %v656 = vmul.f32 %v559, %v574
        %v657 = vmul.f32 %v560, %v574
        %v658 = vmul.f32 %v561, %v574
        %v659 = vmul.f32 %v562, %v574
        %v660 = vmul.f32 %v563, %v574
        %v661 = vmul.f32 %v564, %v574
        %v662 = vmul.f32 %v565, %v574
        %v663 = vmul.f32 %v566, %v574
        %v664 = vmul.f32 %v567, %v574
        %v665 = vmul.f32 %v568, %v574
        %v666 = vld [vmem:[#allocation7] sm:$0x1]
        %v668 = vlaneseq
        %v669 = vshrl.u32 %v668, 7
        %v670 = vsub.s32 0, %v669
        %v671 = vrot.slane %v666, %v670
        %v673 = vadd.f32 %v576, %v671
        %v674 = vadd.f32 %v577, %v671
        %v675 = vadd.f32 %v578, %v671
        %v676 = vadd.f32 %v579, %v671
        %v677 = vadd.f32 %v580, %v671
        %v678 = vadd.f32 %v581, %v671
        %v679 = vadd.f32 %v582, %v671
        %v680 = vadd.f32 %v583, %v671
        %v681 = vadd.f32 %v584, %v671
        %v682 = vadd.f32 %v585, %v671
        %v683 = vadd.f32 %v586, %v671
        %v684 = vadd.f32 %v587, %v671
        %v685 = vadd.f32 %v588, %v671
        %v686 = vadd.f32 %v589, %v671
        %v687 = vadd.f32 %v590, %v671
        %v688 = vadd.f32 %v591, %v671
        %v689 = vadd.f32 %v592, %v671
        %v690 = vadd.f32 %v593, %v671
        %v691 = vadd.f32 %v594, %v671
        %v692 = vadd.f32 %v595, %v671
        %v693 = vadd.f32 %v596, %v671
        %v694 = vadd.f32 %v597, %v671
        %v695 = vadd.f32 %v598, %v671
        %v696 = vadd.f32 %v599, %v671
        %v697 = vadd.f32 %v600, %v671
        %v698 = vadd.f32 %v601, %v671
        %v699 = vadd.f32 %v602, %v671
        %v700 = vadd.f32 %v603, %v671
        %v701 = vadd.f32 %v604, %v671
        %v702 = vadd.f32 %v605, %v671
        %v703 = vadd.f32 %v606, %v671
        %v704 = vadd.f32 %v607, %v671
        %v705 = vadd.f32 %v608, %v671
        %v706 = vadd.f32 %v609, %v671
        %v707 = vadd.f32 %v610, %v671
        %v708 = vadd.f32 %v611, %v671
        %v709 = vadd.f32 %v612, %v671
        %v710 = vadd.f32 %v613, %v671
        %v711 = vadd.f32 %v614, %v671
        %v712 = vadd.f32 %v615, %v671
        %v713 = vadd.f32 %v616, %v671
        %v714 = vadd.f32 %v617, %v671
        %v715 = vadd.f32 %v618, %v671
        %v716 = vadd.f32 %v619, %v671
        %v717 = vadd.f32 %v620, %v671
        %v718 = vadd.f32 %v621, %v671
        %v719 = vadd.f32 %v622, %v671
        %v720 = vadd.f32 %v623, %v671
        %v721 = vadd.f32 %v624, %v671
        %v722 = vadd.f32 %v625, %v671
        %v723 = vadd.f32 %v626, %v671
        %v724 = vadd.f32 %v627, %v671
        %v725 = vadd.f32 %v628, %v671
        %v726 = vadd.f32 %v629, %v671
        %v727 = vadd.f32 %v630, %v671
        %v728 = vadd.f32 %v631, %v671
        %v729 = vadd.f32 %v632, %v671
        %v730 = vadd.f32 %v633, %v671
        %v731 = vadd.f32 %v634, %v671
        %v732 = vadd.f32 %v635, %v671
        %v733 = vadd.f32 %v636, %v671
        %v734 = vadd.f32 %v637, %v671
        %v735 = vadd.f32 %v638, %v671
        %v736 = vadd.f32 %v639, %v671
        %v737 = vadd.f32 %v640, %v671
        %v738 = vadd.f32 %v641, %v671
        %v739 = vadd.f32 %v642, %v671
        %v740 = vadd.f32 %v643, %v671
        %v741 = vadd.f32 %v644, %v671
        %v742 = vadd.f32 %v645, %v671
        %v743 = vadd.f32 %v646, %v671
        %v744 = vadd.f32 %v647, %v671
        %v745 = vadd.f32 %v648, %v671
        %v746 = vadd.f32 %v649, %v671
        %v747 = vadd.f32 %v650, %v671
        %v748 = vadd.f32 %v651, %v671
        %v749 = vadd.f32 %v652, %v671
        %v750 = vadd.f32 %v653, %v671
        %v751 = vadd.f32 %v654, %v671
        %v752 = vadd.f32 %v655, %v671
        %v753 = vadd.f32 %v656, %v671
        %v754 = vadd.f32 %v657, %v671
        %v755 = vadd.f32 %v658, %v671
        %v756 = vadd.f32 %v659, %v671
        %v757 = vadd.f32 %v660, %v671
        %v758 = vadd.f32 %v661, %v671
        %v759 = vadd.f32 %v662, %v671
        %v760 = vadd.f32 %v663, %v671
        %v761 = vadd.f32 %v664, %v671
        %v762 = vadd.f32 %v665, %v671
        %v763 = vmax.f32 %v673, 0.0
        %v764 = vmax.f32 %v674, 0.0
        %v765 = vmax.f32 %v675, 0.0
        %v766 = vmax.f32 %v676, 0.0
        %v767 = vmax.f32 %v677, 0.0
        %v768 = vmax.f32 %v678, 0.0
        %v769 = vmax.f32 %v679, 0.0
        %v770 = vmax.f32 %v680, 0.0
        %v771 = vmax.f32 %v681, 0.0
        %v772 = vmax.f32 %v682, 0.0
        %v773 = vmax.f32 %v683, 0.0
        %v774 = vmax.f32 %v684, 0.0
        %v775 = vmax.f32 %v685, 0.0
        %v776 = vmax.f32 %v686, 0.0
        %v777 = vmax.f32 %v687, 0.0
        %v778 = vmax.f32 %v688, 0.0
        %v779 = vmax.f32 %v689, 0.0
        %v780 = vmax.f32 %v690, 0.0
        %v781 = vmax.f32 %v691, 0.0
        %v782 = vmax.f32 %v692, 0.0
        %v783 = vmax.f32 %v693, 0.0
        %v784 = vmax.f32 %v694, 0.0
        %v785 = vmax.f32 %v695, 0.0
        %v786 = vmax.f32 %v696, 0.0
        %v787 = vmax.f32 %v697, 0.0
        %v788 = vmax.f32 %v698, 0.0
        %v789 = vmax.f32 %v699, 0.0
        %v790 = vmax.f32 %v700, 0.0
        %v791 = vmax.f32 %v701, 0.0
        %v792 = vmax.f32 %v702, 0.0
        %v793 = vmax.f32 %v703, 0.0
        %v794 = vmax.f32 %v704, 0.0
        %v795 = vmax.f32 %v705, 0.0
        %v796 = vmax.f32 %v706, 0.0
        %v797 = vmax.f32 %v707, 0.0
        %v798 = vmax.f32 %v708, 0.0
        %v799 = vmax.f32 %v709, 0.0
        %v800 = vmax.f32 %v710, 0.0
        %v801 = vmax.f32 %v711, 0.0
        %v802 = vmax.f32 %v712, 0.0
        %v803 = vmax.f32 %v713, 0.0
        %v804 = vmax.f32 %v714, 0.0
        %v805 = vmax.f32 %v715, 0.0
        %v806 = vmax.f32 %v716, 0.0
        %v807 = vmax.f32 %v717, 0.0
        %v808 = vmax.f32 %v718, 0.0
        %v809 = vmax.f32 %v719, 0.0
        %v810 = vmax.f32 %v720, 0.0
        %v811 = vmax.f32 %v721, 0.0
        %v812 = vmax.f32 %v722, 0.0
        %v813 = vmax.f32 %v723, 0.0
        %v814 = vmax.f32 %v724, 0.0
        %v815 = vmax.f32 %v725, 0.0
        %v816 = vmax.f32 %v726, 0.0
        %v817 = vmax.f32 %v727, 0.0
        %v818 = vmax.f32 %v728, 0.0
        %v819 = vmax.f32 %v729, 0.0
        %v820 = vmax.f32 %v730, 0.0
        %v821 = vmax.f32 %v731, 0.0
        %v822 = vmax.f32 %v732, 0.0
        %v823 = vmax.f32 %v733, 0.0
        %v824 = vmax.f32 %v734, 0.0
        %v825 = vmax.f32 %v735, 0.0
        %v826 = vmax.f32 %v736, 0.0
        %v827 = vmax.f32 %v737, 0.0
        %v828 = vmax.f32 %v738, 0.0
        %v829 = vmax.f32 %v739, 0.0
        %v830 = vmax.f32 %v740, 0.0
        %v831 = vmax.f32 %v741, 0.0
        %v832 = vmax.f32 %v742, 0.0
        %v833 = vmax.f32 %v743, 0.0
        %v834 = vmax.f32 %v744, 0.0
        %v835 = vmax.f32 %v745, 0.0
        %v836 = vmax.f32 %v746, 0.0
        %v837 = vmax.f32 %v747, 0.0
        %v838 = vmax.f32 %v748, 0.0
        %v839 = vmax.f32 %v749, 0.0
        %v840 = vmax.f32 %v750, 0.0
        %v841 = vmax.f32 %v751, 0.0
        %v842 = vmax.f32 %v752, 0.0
        %v843 = vmax.f32 %v753, 0.0
        %v844 = vmax.f32 %v754, 0.0
        %v845 = vmax.f32 %v755, 0.0
        %v846 = vmax.f32 %v756, 0.0
        %v847 = vmax.f32 %v757, 0.0
        %v848 = vmax.f32 %v758, 0.0
        %v849 = vmax.f32 %v759, 0.0
        %v850 = vmax.f32 %v760, 0.0
        %v851 = vmax.f32 %v761, 0.0
        %v852 = vmax.f32 %v762, 0.0
        %s853 = smul.u32 %s35, 16
        %v854 = vstv %s853
        %v855 = vadd.s32 %v854, 1
        %v856 = vadd.s32 %v854, 2
        %v857 = vadd.s32 %v854, 3
        %v858 = vadd.s32 %v854, 4
        %v859 = vadd.s32 %v854, 5
        %v860 = vadd.s32 %v854, 6
        %v861 = vadd.s32 %v854, 7
        %v862 = vadd.s32 %v854, 8
        %v863 = vadd.s32 %v854, 9
        %v864 = vadd.s32 %v854, 10
        %v865 = vadd.s32 %v854, 11
        %v866 = vadd.s32 %v854, 12
        %v867 = vadd.s32 %v854, 13
        %v868 = vadd.s32 %v854, 14
        %v869 = vadd.s32 %v854, 15
        %v870 = vadd.s32 %v854, 16
        %v871 = vadd.s32 %v854, 17
        %v872 = vlaneseq
        %v873 = vshrl.u32 %v872, 7
        %v874 = vadd.s32 %v873, 8
        %v875 = vadd.s32 %v873, 16
        %v876 = vadd.s32 %v873, 24
        %v877 = vadd.s32 %v873, 32
        %vm878 = vcmp.ge.s32.totalorder %v854, 1
        %vm879 = vcmp.ge.s32.totalorder %v855, 1
        %vm880 = vcmp.ge.s32.totalorder %v856, 1
        %vm881 = vcmp.ge.s32.totalorder %v857, 1
        %vm882 = vcmp.ge.s32.totalorder %v858, 1
        %vm883 = vcmp.ge.s32.totalorder %v859, 1
        %vm884 = vcmp.ge.s32.totalorder %v860, 1
        %vm885 = vcmp.ge.s32.totalorder %v861, 1
        %vm886 = vcmp.ge.s32.totalorder %v862, 1
        %vm887 = vcmp.ge.s32.totalorder %v863, 1
        %vm888 = vcmp.ge.s32.totalorder %v864, 1
        %vm889 = vcmp.ge.s32.totalorder %v865, 1
        %vm890 = vcmp.ge.s32.totalorder %v866, 1
        %vm891 = vcmp.ge.s32.totalorder %v867, 1
        %vm892 = vcmp.ge.s32.totalorder %v868, 1
        %vm893 = vcmp.ge.s32.totalorder %v869, 1
        %vm894 = vcmp.ge.s32.totalorder %v870, 1
        %vm895 = vcmp.ge.s32.totalorder %v871, 1
        %vm896 = vcmp.le.s32.totalorder %v854, 32
        %vm897 = vcmp.le.s32.totalorder %v855, 32
        %vm898 = vcmp.le.s32.totalorder %v856, 32
        %vm899 = vcmp.le.s32.totalorder %v857, 32
        %vm900 = vcmp.le.s32.totalorder %v858, 32
        %vm901 = vcmp.le.s32.totalorder %v859, 32
        %vm902 = vcmp.le.s32.totalorder %v860, 32
        %vm903 = vcmp.le.s32.totalorder %v861, 32
        %vm904 = vcmp.le.s32.totalorder %v862, 32
        %vm905 = vcmp.le.s32.totalorder %v863, 32
        %vm906 = vcmp.le.s32.totalorder %v864, 32
        %vm907 = vcmp.le.s32.totalorder %v865, 32
        %vm908 = vcmp.le.s32.totalorder %v866, 32
        %vm909 = vcmp.le.s32.totalorder %v867, 32
        %vm910 = vcmp.le.s32.totalorder %v868, 32
        %vm911 = vcmp.le.s32.totalorder %v869, 32
        %vm912 = vcmp.le.s32.totalorder %v870, 32
        %vm913 = vcmp.le.s32.totalorder %v871, 32
        %vm914 = vmand %vm878, %vm896
        %vm915 = vmand %vm879, %vm897
        %vm916 = vmand %vm880, %vm898
        %vm917 = vmand %vm881, %vm899
        %vm918 = vmand %vm882, %vm900
        %vm919 = vmand %vm883, %vm901
        %vm920 = vmand %vm884, %vm902
        %vm921 = vmand %vm885, %vm903
        %vm922 = vmand %vm886, %vm904
        %vm923 = vmand %vm887, %vm905
        %vm924 = vmand %vm888, %vm906
        %vm925 = vmand %vm889, %vm907
        %vm926 = vmand %vm890, %vm908
        %vm927 = vmand %vm891, %vm909
        %vm928 = vmand %vm892, %vm910
        %vm929 = vmand %vm893, %vm911
        %vm930 = vmand %vm894, %vm912
        %vm931 = vmand %vm895, %vm913
        %vm932 = vcmp.ge.s32.totalorder %v873, 1
        %vm933 = vcmp.ge.s32.totalorder %v874, 1
        %vm934 = vcmp.ge.s32.totalorder %v875, 1
        %vm935 = vcmp.ge.s32.totalorder %v876, 1
        %vm936 = vcmp.ge.s32.totalorder %v877, 1
        %vm937 = vmand %vm914, %vm932
        %vm938 = vmand %vm914, %vm933
        %vm939 = vmand %vm914, %vm934
        %vm940 = vmand %vm914, %vm935
        %vm941 = vmand %vm914, %vm936
        %vm942 = vmand %vm915, %vm932
        %vm943 = vmand %vm915, %vm933
        %vm944 = vmand %vm915, %vm934
        %vm945 = vmand %vm915, %vm935
        %vm946 = vmand %vm915, %vm936
        %vm947 = vmand %vm916, %vm932
        %vm948 = vmand %vm916, %vm933
        %vm949 = vmand %vm916, %vm934
        %vm950 = vmand %vm916, %vm935
        %vm951 = vmand %vm916, %vm936
        %vm952 = vmand %vm917, %vm932
        %vm953 = vmand %vm917, %vm933
        %vm954 = vmand %vm917, %vm934
        %vm955 = vmand %vm917, %vm935
        %vm956 = vmand %vm917, %vm936
        %vm957 = vmand %vm918, %vm932
        %vm958 = vmand %vm918, %vm933
        %vm959 = vmand %vm918, %vm934
        %vm960 = vmand %vm918, %vm935
        %vm961 = vmand %vm918, %vm936
        %vm962 = vmand %vm919, %vm932
        %vm963 = vmand %vm919, %vm933
        %vm964 = vmand %vm919, %vm934
        %vm965 = vmand %vm919, %vm935
        %vm966 = vmand %vm919, %vm936
        %vm967 = vmand %vm920, %vm932
        %vm968 = vmand %vm920, %vm933
        %vm969 = vmand %vm920, %vm934
        %vm970 = vmand %vm920, %vm935
        %vm971 = vmand %vm920, %vm936
        %vm972 = vmand %vm921, %vm932
        %vm973 = vmand %vm921, %vm933
        %vm974 = vmand %vm921, %vm934
        %vm975 = vmand %vm921, %vm935
        %vm976 = vmand %vm921, %vm936
        %vm977 = vmand %vm922, %vm932
        %vm978 = vmand %vm922, %vm933
        %vm979 = vmand %vm922, %vm934
        %vm980 = vmand %vm922, %vm935
        %vm981 = vmand %vm922, %vm936
        %vm982 = vmand %vm923, %vm932
        %vm983 = vmand %vm923, %vm933
        %vm984 = vmand %vm923, %vm934
        %vm985 = vmand %vm923, %vm935
        %vm986 = vmand %vm923, %vm936
        %vm987 = vmand %vm924, %vm932
        %vm988 = vmand %vm924, %vm933
        %vm989 = vmand %vm924, %vm934
        %vm990 = vmand %vm924, %vm935
        %vm991 = vmand %vm924, %vm936
        %vm992 = vmand %vm925, %vm932
        %vm993 = vmand %vm925, %vm933
        %vm994 = vmand %vm925, %vm934
        %vm995 = vmand %vm925, %vm935
        %vm996 = vmand %vm925, %vm936
        %vm997 = vmand %vm926, %vm932
        %vm998 = vmand %vm926, %vm933
        %vm999 = vmand %vm926, %vm934
        %vm1000 = vmand %vm926, %vm935
        %vm1001 = vmand %vm926, %vm936
        %vm1002 = vmand %vm927, %vm932
        %vm1003 = vmand %vm927, %vm933
        %vm1004 = vmand %vm927, %vm934
        %vm1005 = vmand %vm927, %vm935
        %vm1006 = vmand %vm927, %vm936
        %vm1007 = vmand %vm928, %vm932
        %vm1008 = vmand %vm928, %vm933
        %vm1009 = vmand %vm928, %vm934
        %vm1010 = vmand %vm928, %vm935
        %vm1011 = vmand %vm928, %vm936
        %vm1012 = vmand %vm929, %vm932
        %vm1013 = vmand %vm929, %vm933
        %vm1014 = vmand %vm929, %vm934
        %vm1015 = vmand %vm929, %vm935
        %vm1016 = vmand %vm929, %vm936
        %vm1017 = vmand %vm930, %vm932
        %vm1018 = vmand %vm930, %vm933
        %vm1019 = vmand %vm930, %vm934
        %vm1020 = vmand %vm930, %vm935
        %vm1021 = vmand %vm930, %vm936
        %vm1022 = vmand %vm931, %vm932
        %vm1023 = vmand %vm931, %vm933
        %vm1024 = vmand %vm931, %vm934
        %vm1025 = vmand %vm931, %vm935
        %vm1026 = vmand %vm931, %vm936
        %vm1027 = vcmp.le.s32.totalorder %v873, 32
        %vm1028 = vcmp.le.s32.totalorder %v874, 32
        %vm1029 = vcmp.le.s32.totalorder %v875, 32
        %vm1030 = vcmp.le.s32.totalorder %v876, 32
        %vm1031 = vcmp.le.s32.totalorder %v877, 32
        %vm1032 = vmand %vm937, %vm1027
        %vm1033 = vmand %vm938, %vm1028
        %vm1034 = vmand %vm939, %vm1029
        %vm1035 = vmand %vm940, %vm1030
        %vm1036 = vmand %vm941, %vm1031
        %vm1037 = vmand %vm942, %vm1027
        %vm1038 = vmand %vm943, %vm1028
        %vm1039 = vmand %vm944, %vm1029
        %vm1040 = vmand %vm945, %vm1030
        %vm1041 = vmand %vm946, %vm1031
        %vm1042 = vmand %vm947, %vm1027
        %vm1043 = vmand %vm948, %vm1028
        %vm1044 = vmand %vm949, %vm1029
        %vm1045 = vmand %vm950, %vm1030
        %vm1046 = vmand %vm951, %vm1031
        %vm1047 = vmand %vm952, %vm1027
        %vm1048 = vmand %vm953, %vm1028
        %vm1049 = vmand %vm954, %vm1029
        %vm1050 = vmand %vm955, %vm1030
        %vm1051 = vmand %vm956, %vm1031
        %vm1052 = vmand %vm957, %vm1027
        %vm1053 = vmand %vm958, %vm1028
        %vm1054 = vmand %vm959, %vm1029
        %vm1055 = vmand %vm960, %vm1030
        %vm1056 = vmand %vm961, %vm1031
        %vm1057 = vmand %vm962, %vm1027
        %vm1058 = vmand %vm963, %vm1028
        %vm1059 = vmand %vm964, %vm1029
        %vm1060 = vmand %vm965, %vm1030
        %vm1061 = vmand %vm966, %vm1031
        %vm1062 = vmand %vm967, %vm1027
        %vm1063 = vmand %vm968, %vm1028
        %vm1064 = vmand %vm969, %vm1029
        %vm1065 = vmand %vm970, %vm1030
        %vm1066 = vmand %vm971, %vm1031
        %vm1067 = vmand %vm972, %vm1027
        %vm1068 = vmand %vm973, %vm1028
        %vm1069 = vmand %vm974, %vm1029
        %vm1070 = vmand %vm975, %vm1030
        %vm1071 = vmand %vm976, %vm1031
        %vm1072 = vmand %vm977, %vm1027
        %vm1073 = vmand %vm978, %vm1028
        %vm1074 = vmand %vm979, %vm1029
        %vm1075 = vmand %vm980, %vm1030
        %vm1076 = vmand %vm981, %vm1031
        %vm1077 = vmand %vm982, %vm1027
        %vm1078 = vmand %vm983, %vm1028
        %vm1079 = vmand %vm984, %vm1029
        %vm1080 = vmand %vm985, %vm1030
        %vm1081 = vmand %vm986, %vm1031
        %vm1082 = vmand %vm987, %vm1027
        %vm1083 = vmand %vm988, %vm1028
        %vm1084 = vmand %vm989, %vm1029
        %vm1085 = vmand %vm990, %vm1030
        %vm1086 = vmand %vm991, %vm1031
        %vm1087 = vmand %vm992, %vm1027
        %vm1088 = vmand %vm993, %vm1028
        %vm1089 = vmand %vm994, %vm1029
        %vm1090 = vmand %vm995, %vm1030
        %vm1091 = vmand %vm996, %vm1031
        %vm1092 = vmand %vm997, %vm1027
        %vm1093 = vmand %vm998, %vm1028
        %vm1094 = vmand %vm999, %vm1029
        %vm1095 = vmand %vm1000, %vm1030
        %vm1096 = vmand %vm1001, %vm1031
        %vm1097 = vmand %vm1002, %vm1027
        %vm1098 = vmand %vm1003, %vm1028
        %vm1099 = vmand %vm1004, %vm1029
        %vm1100 = vmand %vm1005, %vm1030
        %vm1101 = vmand %vm1006, %vm1031
        %vm1102 = vmand %vm1007, %vm1027
        %vm1103 = vmand %vm1008, %vm1028
        %vm1104 = vmand %vm1009, %vm1029
        %vm1105 = vmand %vm1010, %vm1030
        %vm1106 = vmand %vm1011, %vm1031
        %vm1107 = vmand %vm1012, %vm1027
        %vm1108 = vmand %vm1013, %vm1028
        %vm1109 = vmand %vm1014, %vm1029
        %vm1110 = vmand %vm1015, %vm1030
        %vm1111 = vmand %vm1016, %vm1031
        %vm1112 = vmand %vm1017, %vm1027
        %vm1113 = vmand %vm1018, %vm1028
        %vm1114 = vmand %vm1019, %vm1029
        %vm1115 = vmand %vm1020, %vm1030
        %vm1116 = vmand %vm1021, %vm1031
        %vm1117 = vmand %vm1022, %vm1027
        %vm1118 = vmand %vm1023, %vm1028
        %vm1119 = vmand %vm1024, %vm1029
        %vm1120 = vmand %vm1025, %vm1030
        %vm1121 = vmand %vm1026, %vm1031
        %v1122 = vsel %vm1032, 1, 0
        %v1123 = vsel %vm1033, 1, 0
        %v1124 = vsel %vm1034, 1, 0
        %v1125 = vsel %vm1035, 1, 0
        %v1126 = vsel %vm1036, 1, 0
        %v1127 = vsel %vm1037, 1, 0
        %v1128 = vsel %vm1038, 1, 0
        %v1129 = vsel %vm1039, 1, 0
        %v1130 = vsel %vm1040, 1, 0
        %v1131 = vsel %vm1041, 1, 0
        %v1132 = vsel %vm1042, 1, 0
        %v1133 = vsel %vm1043, 1, 0
        %v1134 = vsel %vm1044, 1, 0
        %v1135 = vsel %vm1045, 1, 0
        %v1136 = vsel %vm1046, 1, 0
        %v1137 = vsel %vm1047, 1, 0
        %v1138 = vsel %vm1048, 1, 0
        %v1139 = vsel %vm1049, 1, 0
        %v1140 = vsel %vm1050, 1, 0
        %v1141 = vsel %vm1051, 1, 0
        %v1142 = vsel %vm1052, 1, 0
        %v1143 = vsel %vm1053, 1, 0
        %v1144 = vsel %vm1054, 1, 0
        %v1145 = vsel %vm1055, 1, 0
        %v1146 = vsel %vm1056, 1, 0
        %v1147 = vsel %vm1057, 1, 0
        %v1148 = vsel %vm1058, 1, 0
        %v1149 = vsel %vm1059, 1, 0
        %v1150 = vsel %vm1060, 1, 0
        %v1151 = vsel %vm1061, 1, 0
        %v1152 = vsel %vm1062, 1, 0
        %v1153 = vsel %vm1063, 1, 0
        %v1154 = vsel %vm1064, 1, 0
        %v1155 = vsel %vm1065, 1, 0
        %v1156 = vsel %vm1066, 1, 0
        %v1157 = vsel %vm1067, 1, 0
        %v1158 = vsel %vm1068, 1, 0
        %v1159 = vsel %vm1069, 1, 0
        %v1160 = vsel %vm1070, 1, 0
        %v1161 = vsel %vm1071, 1, 0
        %v1162 = vsel %vm1072, 1, 0
        %v1163 = vsel %vm1073, 1, 0
        %v1164 = vsel %vm1074, 1, 0
        %v1165 = vsel %vm1075, 1, 0
        %v1166 = vsel %vm1076, 1, 0
        %v1167 = vsel %vm1077, 1, 0
        %v1168 = vsel %vm1078, 1, 0
        %v1169 = vsel %vm1079, 1, 0
        %v1170 = vsel %vm1080, 1, 0
        %v1171 = vsel %vm1081, 1, 0
        %v1172 = vsel %vm1082, 1, 0
        %v1173 = vsel %vm1083, 1, 0
        %v1174 = vsel %vm1084, 1, 0
        %v1175 = vsel %vm1085, 1, 0
        %v1176 = vsel %vm1086, 1, 0
        %v1177 = vsel %vm1087, 1, 0
        %v1178 = vsel %vm1088, 1, 0
        %v1179 = vsel %vm1089, 1, 0
        %v1180 = vsel %vm1090, 1, 0
        %v1181 = vsel %vm1091, 1, 0
        %v1182 = vsel %vm1092, 1, 0
        %v1183 = vsel %vm1093, 1, 0
        %v1184 = vsel %vm1094, 1, 0
        %v1185 = vsel %vm1095, 1, 0
        %v1186 = vsel %vm1096, 1, 0
        %v1187 = vsel %vm1097, 1, 0
        %v1188 = vsel %vm1098, 1, 0
        %v1189 = vsel %vm1099, 1, 0
        %v1190 = vsel %vm1100, 1, 0
        %v1191 = vsel %vm1101, 1, 0
        %v1192 = vsel %vm1102, 1, 0
        %v1193 = vsel %vm1103, 1, 0
        %v1194 = vsel %vm1104, 1, 0
        %v1195 = vsel %vm1105, 1, 0
        %v1196 = vsel %vm1106, 1, 0
        %v1197 = vsel %vm1107, 1, 0
        %v1198 = vsel %vm1108, 1, 0
        %v1199 = vsel %vm1109, 1, 0
        %v1200 = vsel %vm1110, 1, 0
        %v1201 = vsel %vm1111, 1, 0
        %v1202 = vsel %vm1112, 1, 0
        %v1203 = vsel %vm1113, 1, 0
        %v1204 = vsel %vm1114, 1, 0
        %v1205 = vsel %vm1115, 1, 0
        %v1206 = vsel %vm1116, 1, 0
        %v1207 = vsel %vm1117, 1, 0
        %v1208 = vsel %vm1118, 1, 0
        %v1209 = vsel %vm1119, 1, 0
        %v1210 = vsel %vm1120, 1, 0
        %v1211 = vsel %vm1121, 1, 0
        %vm1212 = vcmp.eq.s32.totalorder %v1122, 1
        %vm1213 = vcmp.eq.s32.totalorder %v1123, 1
        %vm1214 = vcmp.eq.s32.totalorder %v1124, 1
        %vm1215 = vcmp.eq.s32.totalorder %v1125, 1
        %vm1216 = vcmp.eq.s32.totalorder %v1126, 1
        %vm1217 = vcmp.eq.s32.totalorder %v1127, 1
        %vm1218 = vcmp.eq.s32.totalorder %v1128, 1
        %vm1219 = vcmp.eq.s32.totalorder %v1129, 1
        %vm1220 = vcmp.eq.s32.totalorder %v1130, 1
        %vm1221 = vcmp.eq.s32.totalorder %v1131, 1
        %vm1222 = vcmp.eq.s32.totalorder %v1132, 1
        %vm1223 = vcmp.eq.s32.totalorder %v1133, 1
        %vm1224 = vcmp.eq.s32.totalorder %v1134, 1
        %vm1225 = vcmp.eq.s32.totalorder %v1135, 1
        %vm1226 = vcmp.eq.s32.totalorder %v1136, 1
        %vm1227 = vcmp.eq.s32.totalorder %v1137, 1
        %vm1228 = vcmp.eq.s32.totalorder %v1138, 1
        %vm1229 = vcmp.eq.s32.totalorder %v1139, 1
        %vm1230 = vcmp.eq.s32.totalorder %v1140, 1
        %vm1231 = vcmp.eq.s32.totalorder %v1141, 1
        %vm1232 = vcmp.eq.s32.totalorder %v1142, 1
        %vm1233 = vcmp.eq.s32.totalorder %v1143, 1
        %vm1234 = vcmp.eq.s32.totalorder %v1144, 1
        %vm1235 = vcmp.eq.s32.totalorder %v1145, 1
        %vm1236 = vcmp.eq.s32.totalorder %v1146, 1
        %vm1237 = vcmp.eq.s32.totalorder %v1147, 1
        %vm1238 = vcmp.eq.s32.totalorder %v1148, 1
        %vm1239 = vcmp.eq.s32.totalorder %v1149, 1
        %vm1240 = vcmp.eq.s32.totalorder %v1150, 1
        %vm1241 = vcmp.eq.s32.totalorder %v1151, 1
        %vm1242 = vcmp.eq.s32.totalorder %v1152, 1
        %vm1243 = vcmp.eq.s32.totalorder %v1153, 1
        %vm1244 = vcmp.eq.s32.totalorder %v1154, 1
        %vm1245 = vcmp.eq.s32.totalorder %v1155, 1
        %vm1246 = vcmp.eq.s32.totalorder %v1156, 1
        %vm1247 = vcmp.eq.s32.totalorder %v1157, 1
        %vm1248 = vcmp.eq.s32.totalorder %v1158, 1
        %vm1249 = vcmp.eq.s32.totalorder %v1159, 1
        %vm1250 = vcmp.eq.s32.totalorder %v1160, 1
        %vm1251 = vcmp.eq.s32.totalorder %v1161, 1
        %vm1252 = vcmp.eq.s32.totalorder %v1162, 1
        %vm1253 = vcmp.eq.s32.totalorder %v1163, 1
        %vm1254 = vcmp.eq.s32.totalorder %v1164, 1
        %vm1255 = vcmp.eq.s32.totalorder %v1165, 1
        %vm1256 = vcmp.eq.s32.totalorder %v1166, 1
        %vm1257 = vcmp.eq.s32.totalorder %v1167, 1
        %vm1258 = vcmp.eq.s32.totalorder %v1168, 1
        %vm1259 = vcmp.eq.s32.totalorder %v1169, 1
        %vm1260 = vcmp.eq.s32.totalorder %v1170, 1
        %vm1261 = vcmp.eq.s32.totalorder %v1171, 1
        %vm1262 = vcmp.eq.s32.totalorder %v1172, 1
        %vm1263 = vcmp.eq.s32.totalorder %v1173, 1
        %vm1264 = vcmp.eq.s32.totalorder %v1174, 1
        %vm1265 = vcmp.eq.s32.totalorder %v1175, 1
        %vm1266 = vcmp.eq.s32.totalorder %v1176, 1
        %vm1267 = vcmp.eq.s32.totalorder %v1177, 1
        %vm1268 = vcmp.eq.s32.totalorder %v1178, 1
        %vm1269 = vcmp.eq.s32.totalorder %v1179, 1
        %vm1270 = vcmp.eq.s32.totalorder %v1180, 1
        %vm1271 = vcmp.eq.s32.totalorder %v1181, 1
        %vm1272 = vcmp.eq.s32.totalorder %v1182, 1
        %vm1273 = vcmp.eq.s32.totalorder %v1183, 1
        %vm1274 = vcmp.eq.s32.totalorder %v1184, 1
        %vm1275 = vcmp.eq.s32.totalorder %v1185, 1
        %vm1276 = vcmp.eq.s32.totalorder %v1186, 1
        %vm1277 = vcmp.eq.s32.totalorder %v1187, 1
        %vm1278 = vcmp.eq.s32.totalorder %v1188, 1
        %vm1279 = vcmp.eq.s32.totalorder %v1189, 1
        %vm1280 = vcmp.eq.s32.totalorder %v1190, 1
        %vm1281 = vcmp.eq.s32.totalorder %v1191, 1
        %vm1282 = vcmp.eq.s32.totalorder %v1192, 1
        %vm1283 = vcmp.eq.s32.totalorder %v1193, 1
        %vm1284 = vcmp.eq.s32.totalorder %v1194, 1
        %vm1285 = vcmp.eq.s32.totalorder %v1195, 1
        %vm1286 = vcmp.eq.s32.totalorder %v1196, 1
        %vm1287 = vcmp.eq.s32.totalorder %v1197, 1
        %vm1288 = vcmp.eq.s32.totalorder %v1198, 1
        %vm1289 = vcmp.eq.s32.totalorder %v1199, 1
        %vm1290 = vcmp.eq.s32.totalorder %v1200, 1
        %vm1291 = vcmp.eq.s32.totalorder %v1201, 1
        %vm1292 = vcmp.eq.s32.totalorder %v1202, 1
        %vm1293 = vcmp.eq.s32.totalorder %v1203, 1
        %vm1294 = vcmp.eq.s32.totalorder %v1204, 1
        %vm1295 = vcmp.eq.s32.totalorder %v1205, 1
        %vm1296 = vcmp.eq.s32.totalorder %v1206, 1
        %vm1297 = vcmp.eq.s32.totalorder %v1207, 1
        %vm1298 = vcmp.eq.s32.totalorder %v1208, 1
        %vm1299 = vcmp.eq.s32.totalorder %v1209, 1
        %vm1300 = vcmp.eq.s32.totalorder %v1210, 1
        %vm1301 = vcmp.eq.s32.totalorder %v1211, 1
        %v1302 = vsel %vm1212, %v763, 0.0
        %v1303 = vsel %vm1213, %v764, 0.0
        %v1304 = vsel %vm1214, %v765, 0.0
        %v1305 = vsel %vm1215, %v766, 0.0
        %v1306 = vsel %vm1216, %v767, 0.0
        %v1307 = vsel %vm1217, %v768, 0.0
        %v1308 = vsel %vm1218, %v769, 0.0
        %v1309 = vsel %vm1219, %v770, 0.0
        %v1310 = vsel %vm1220, %v771, 0.0
        %v1311 = vsel %vm1221, %v772, 0.0
        %v1312 = vsel %vm1222, %v773, 0.0
        %v1313 = vsel %vm1223, %v774, 0.0
        %v1314 = vsel %vm1224, %v775, 0.0
        %v1315 = vsel %vm1225, %v776, 0.0
        %v1316 = vsel %vm1226, %v777, 0.0
        %v1317 = vsel %vm1227, %v778, 0.0
        %v1318 = vsel %vm1228, %v779, 0.0
        %v1319 = vsel %vm1229, %v780, 0.0
        %v1320 = vsel %vm1230, %v781, 0.0
        %v1321 = vsel %vm1231, %v782, 0.0
        %v1322 = vsel %vm1232, %v783, 0.0
        %v1323 = vsel %vm1233, %v784, 0.0
        %v1324 = vsel %vm1234, %v785, 0.0
        %v1325 = vsel %vm1235, %v786, 0.0
        %v1326 = vsel %vm1236, %v787, 0.0
        %v1327 = vsel %vm1237, %v788, 0.0
        %v1328 = vsel %vm1238, %v789, 0.0
        %v1329 = vsel %vm1239, %v790, 0.0
        %v1330 = vsel %vm1240, %v791, 0.0
        %v1331 = vsel %vm1241, %v792, 0.0
        %v1332 = vsel %vm1242, %v793, 0.0
        %v1333 = vsel %vm1243, %v794, 0.0
        %v1334 = vsel %vm1244, %v795, 0.0
        %v1335 = vsel %vm1245, %v796, 0.0
        %v1336 = vsel %vm1246, %v797, 0.0
        %v1337 = vsel %vm1247, %v798, 0.0
        %v1338 = vsel %vm1248, %v799, 0.0
        %v1339 = vsel %vm1249, %v800, 0.0
        %v1340 = vsel %vm1250, %v801, 0.0
        %v1341 = vsel %vm1251, %v802, 0.0
        %v1342 = vsel %vm1252, %v803, 0.0
        %v1343 = vsel %vm1253, %v804, 0.0
        %v1344 = vsel %vm1254, %v805, 0.0
        %v1345 = vsel %vm1255, %v806, 0.0
        %v1346 = vsel %vm1256, %v807, 0.0
        %v1347 = vsel %vm1257, %v808, 0.0
        %v1348 = vsel %vm1258, %v809, 0.0
        %v1349 = vsel %vm1259, %v810, 0.0
        %v1350 = vsel %vm1260, %v811, 0.0
        %v1351 = vsel %vm1261, %v812, 0.0
        %v1352 = vsel %vm1262, %v813, 0.0
        %v1353 = vsel %vm1263, %v814, 0.0
        %v1354 = vsel %vm1264, %v815, 0.0
        %v1355 = vsel %vm1265, %v816, 0.0
        %v1356 = vsel %vm1266, %v817, 0.0
        %v1357 = vsel %vm1267, %v818, 0.0
        %v1358 = vsel %vm1268, %v819, 0.0
        %v1359 = vsel %vm1269, %v820, 0.0
        %v1360 = vsel %vm1270, %v821, 0.0
        %v1361 = vsel %vm1271, %v822, 0.0
        %v1362 = vsel %vm1272, %v823, 0.0
        %v1363 = vsel %vm1273, %v824, 0.0
        %v1364 = vsel %vm1274, %v825, 0.0
        %v1365 = vsel %vm1275, %v826, 0.0
        %v1366 = vsel %vm1276, %v827, 0.0
        %v1367 = vsel %vm1277, %v828, 0.0
        %v1368 = vsel %vm1278, %v829, 0.0
        %v1369 = vsel %vm1279, %v830, 0.0
        %v1370 = vsel %vm1280, %v831, 0.0
        %v1371 = vsel %vm1281, %v832, 0.0
        %v1372 = vsel %vm1282, %v833, 0.0
        %v1373 = vsel %vm1283, %v834, 0.0
        %v1374 = vsel %vm1284, %v835, 0.0
        %v1375 = vsel %vm1285, %v836, 0.0
        %v1376 = vsel %vm1286, %v837, 0.0
        %v1377 = vsel %vm1287, %v838, 0.0
        %v1378 = vsel %vm1288, %v839, 0.0
        %v1379 = vsel %vm1289, %v840, 0.0
        %v1380 = vsel %vm1290, %v841, 0.0
        %v1381 = vsel %vm1291, %v842, 0.0
        %v1382 = vsel %vm1292, %v843, 0.0
        %v1383 = vsel %vm1293, %v844, 0.0
        %v1384 = vsel %vm1294, %v845, 0.0
        %v1385 = vsel %vm1295, %v846, 0.0
        %v1386 = vsel %vm1296, %v847, 0.0
        %v1387 = vsel %vm1297, %v848, 0.0
        %v1388 = vsel %vm1298, %v849, 0.0
        %v1389 = vsel %vm1299, %v850, 0.0
        %v1390 = vsel %vm1300, %v851, 0.0
        %v1391 = vsel %vm1301, %v852, 0.0
        %v1392 = vpack.c.bf16 %v1303, %v1302
        %v1393 = vpack.c.bf16 %v1305, %v1304
        %v1394 = vpack.c.bf16 %v1306, %v1306
        %v1395 = vpack.c.bf16 %v1308, %v1307
        %v1396 = vpack.c.bf16 %v1310, %v1309
        %v1397 = vpack.c.bf16 %v1311, %v1311
        %v1398 = vpack.c.bf16 %v1313, %v1312
        %v1399 = vpack.c.bf16 %v1315, %v1314
        %v1400 = vpack.c.bf16 %v1316, %v1316
        %v1401 = vpack.c.bf16 %v1318, %v1317
        %v1402 = vpack.c.bf16 %v1320, %v1319
        %v1403 = vpack.c.bf16 %v1321, %v1321
        %v1404 = vpack.c.bf16 %v1323, %v1322
        %v1405 = vpack.c.bf16 %v1325, %v1324
        %v1406 = vpack.c.bf16 %v1326, %v1326
        %v1407 = vpack.c.bf16 %v1328, %v1327
        %v1408 = vpack.c.bf16 %v1330, %v1329
        %v1409 = vpack.c.bf16 %v1331, %v1331
        %v1410 = vpack.c.bf16 %v1333, %v1332
        %v1411 = vpack.c.bf16 %v1335, %v1334
        %v1412 = vpack.c.bf16 %v1336, %v1336
        %v1413 = vpack.c.bf16 %v1338, %v1337
        %v1414 = vpack.c.bf16 %v1340, %v1339
        %v1415 = vpack.c.bf16 %v1341, %v1341
        %v1416 = vpack.c.bf16 %v1343, %v1342
        %v1417 = vpack.c.bf16 %v1345, %v1344
        %v1418 = vpack.c.bf16 %v1346, %v1346
        %v1419 = vpack.c.bf16 %v1348, %v1347
        %v1420 = vpack.c.bf16 %v1350, %v1349
        %v1421 = vpack.c.bf16 %v1351, %v1351
        %v1422 = vpack.c.bf16 %v1353, %v1352
        %v1423 = vpack.c.bf16 %v1355, %v1354
        %v1424 = vpack.c.bf16 %v1356, %v1356
        %v1425 = vpack.c.bf16 %v1358, %v1357
        %v1426 = vpack.c.bf16 %v1360, %v1359
        %v1427 = vpack.c.bf16 %v1361, %v1361
        %v1428 = vpack.c.bf16 %v1363, %v1362
        %v1429 = vpack.c.bf16 %v1365, %v1364
        %v1430 = vpack.c.bf16 %v1366, %v1366
        %v1431 = vpack.c.bf16 %v1368, %v1367
        %v1432 = vpack.c.bf16 %v1370, %v1369
        %v1433 = vpack.c.bf16 %v1371, %v1371
        %v1434 = vpack.c.bf16 %v1373, %v1372
        %v1435 = vpack.c.bf16 %v1375, %v1374
        %v1436 = vpack.c.bf16 %v1376, %v1376
        %v1437 = vpack.c.bf16 %v1378, %v1377
        %v1438 = vpack.c.bf16 %v1380, %v1379
        %v1439 = vpack.c.bf16 %v1381, %v1381
        %v1440 = vpack.c.bf16 %v1383, %v1382
        %v1441 = vpack.c.bf16 %v1385, %v1384
        %v1442 = vpack.c.bf16 %v1386, %v1386
        %v1443 = vpack.c.bf16 %v1388, %v1387
        %v1444 = vpack.c.bf16 %v1390, %v1389
        %v1445 = vpack.c.bf16 %v1391, %v1391
        %vm1446 = vsmask.f32 7424
        %v1448 = vshrl.u32 %v1392, 16
        %v1450 = vshll.u32 %v1392, 16
        %v1452 = vrot.slane %v1450, 1
        %v1453 = vor.u32 %v1448, %v1452
        %v1455 = vshll.u32 %v1393, 16
        %v1457 = vrot.slane %v1455, 1
        %v1458 = vsel %vm1446, %v1453, %v1457
        %v1459 = vshrl.u32 %v1393, 16
        %v1461 = vor.u32 %v1459, %v1457
        %v1463 = vshll.u32 %v1394, 16
        %v1465 = vrot.slane %v1463, 1
        %v1466 = vsel %vm1446, %v1461, %v1465
        %v1468 = vshrl.u32 %v1395, 16
        %v1470 = vshll.u32 %v1395, 16
        %v1472 = vrot.slane %v1470, 1
        %v1473 = vor.u32 %v1468, %v1472
        %v1475 = vshll.u32 %v1396, 16
        %v1477 = vrot.slane %v1475, 1
        %v1478 = vsel %vm1446, %v1473, %v1477
        %v1479 = vshrl.u32 %v1396, 16
        %v1481 = vor.u32 %v1479, %v1477
        %v1483 = vshll.u32 %v1397, 16
        %v1485 = vrot.slane %v1483, 1
        %v1486 = vsel %vm1446, %v1481, %v1485
        %v1488 = vshrl.u32 %v1398, 16
        %v1490 = vshll.u32 %v1398, 16
        %v1492 = vrot.slane %v1490, 1
        %v1493 = vor.u32 %v1488, %v1492
        %v1495 = vshll.u32 %v1399, 16
        %v1497 = vrot.slane %v1495, 1
        %v1498 = vsel %vm1446, %v1493, %v1497
        %v1499 = vshrl.u32 %v1399, 16
        %v1501 = vor.u32 %v1499, %v1497
        %v1503 = vshll.u32 %v1400, 16
        %v1505 = vrot.slane %v1503, 1
        %v1506 = vsel %vm1446, %v1501, %v1505
        %v1508 = vshrl.u32 %v1401, 16
        %v1510 = vshll.u32 %v1401, 16
        %v1512 = vrot.slane %v1510, 1
        %v1513 = vor.u32 %v1508, %v1512
        %v1515 = vshll.u32 %v1402, 16
        %v1517 = vrot.slane %v1515, 1
        %v1518 = vsel %vm1446, %v1513, %v1517
        %v1519 = vshrl.u32 %v1402, 16
        %v1521 = vor.u32 %v1519, %v1517
        %v1523 = vshll.u32 %v1403, 16
        %v1525 = vrot.slane %v1523, 1
        %v1526 = vsel %vm1446, %v1521, %v1525
        %v1528 = vshrl.u32 %v1404, 16
        %v1530 = vshll.u32 %v1404, 16
        %v1532 = vrot.slane %v1530, 1
        %v1533 = vor.u32 %v1528, %v1532
        %v1535 = vshll.u32 %v1405, 16
        %v1537 = vrot.slane %v1535, 1
        %v1538 = vsel %vm1446, %v1533, %v1537
        %v1539 = vshrl.u32 %v1405, 16
        %v1541 = vor.u32 %v1539, %v1537
        %v1543 = vshll.u32 %v1406, 16
        %v1545 = vrot.slane %v1543, 1
        %v1546 = vsel %vm1446, %v1541, %v1545
        %v1548 = vshrl.u32 %v1407, 16
        %v1550 = vshll.u32 %v1407, 16
        %v1552 = vrot.slane %v1550, 1
        %v1553 = vor.u32 %v1548, %v1552
        %v1555 = vshll.u32 %v1408, 16
        %v1557 = vrot.slane %v1555, 1
        %v1558 = vsel %vm1446, %v1553, %v1557
        %v1559 = vshrl.u32 %v1408, 16
        %v1561 = vor.u32 %v1559, %v1557
        %v1563 = vshll.u32 %v1409, 16
        %v1565 = vrot.slane %v1563, 1
        %v1566 = vsel %vm1446, %v1561, %v1565
        %v1568 = vshrl.u32 %v1410, 16
        %v1570 = vshll.u32 %v1410, 16
        %v1572 = vrot.slane %v1570, 1
        %v1573 = vor.u32 %v1568, %v1572
        %v1575 = vshll.u32 %v1411, 16
        %v1577 = vrot.slane %v1575, 1
        %v1578 = vsel %vm1446, %v1573, %v1577
        %v1579 = vshrl.u32 %v1411, 16
        %v1581 = vor.u32 %v1579, %v1577
        %v1583 = vshll.u32 %v1412, 16
        %v1585 = vrot.slane %v1583, 1
        %v1586 = vsel %vm1446, %v1581, %v1585
        %v1588 = vshrl.u32 %v1413, 16
        %v1590 = vshll.u32 %v1413, 16
        %v1592 = vrot.slane %v1590, 1
        %v1593 = vor.u32 %v1588, %v1592
        %v1595 = vshll.u32 %v1414, 16
        %v1597 = vrot.slane %v1595, 1
        %v1598 = vsel %vm1446, %v1593, %v1597
        %v1599 = vshrl.u32 %v1414, 16
        %v1601 = vor.u32 %v1599, %v1597
        %v1603 = vshll.u32 %v1415, 16
        %v1605 = vrot.slane %v1603, 1
        %v1606 = vsel %vm1446, %v1601, %v1605
        %v1608 = vshrl.u32 %v1416, 16
        %v1610 = vshll.u32 %v1416, 16
        %v1612 = vrot.slane %v1610, 1
        %v1613 = vor.u32 %v1608, %v1612
        %v1615 = vshll.u32 %v1417, 16
        %v1617 = vrot.slane %v1615, 1
        %v1618 = vsel %vm1446, %v1613, %v1617
        %v1619 = vshrl.u32 %v1417, 16
        %v1621 = vor.u32 %v1619, %v1617
        %v1623 = vshll.u32 %v1418, 16
        %v1625 = vrot.slane %v1623, 1
        %v1626 = vsel %vm1446, %v1621, %v1625
        %v1628 = vshrl.u32 %v1419, 16
        %v1630 = vshll.u32 %v1419, 16
        %v1632 = vrot.slane %v1630, 1
        %v1633 = vor.u32 %v1628, %v1632
        %v1635 = vshll.u32 %v1420, 16
        %v1637 = vrot.slane %v1635, 1
        %v1638 = vsel %vm1446, %v1633, %v1637
        %v1639 = vshrl.u32 %v1420, 16
        %v1641 = vor.u32 %v1639, %v1637
        %v1643 = vshll.u32 %v1421, 16
        %v1645 = vrot.slane %v1643, 1
        %v1646 = vsel %vm1446, %v1641, %v1645
        %v1648 = vshrl.u32 %v1422, 16
        %v1650 = vshll.u32 %v1422, 16
        %v1652 = vrot.slane %v1650, 1
        %v1653 = vor.u32 %v1648, %v1652
        %v1655 = vshll.u32 %v1423, 16
        %v1657 = vrot.slane %v1655, 1
        %v1658 = vsel %vm1446, %v1653, %v1657
        %v1659 = vshrl.u32 %v1423, 16
        %v1661 = vor.u32 %v1659, %v1657
        %v1663 = vshll.u32 %v1424, 16
        %v1665 = vrot.slane %v1663, 1
        %v1666 = vsel %vm1446, %v1661, %v1665
        %v1668 = vshrl.u32 %v1425, 16
        %v1670 = vshll.u32 %v1425, 16
        %v1672 = vrot.slane %v1670, 1
        %v1673 = vor.u32 %v1668, %v1672
        %v1675 = vshll.u32 %v1426, 16
        %v1677 = vrot.slane %v1675, 1
        %v1678 = vsel %vm1446, %v1673, %v1677
        %v1679 = vshrl.u32 %v1426, 16
        %v1681 = vor.u32 %v1679, %v1677
        %v1683 = vshll.u32 %v1427, 16
        %v1685 = vrot.slane %v1683, 1
        %v1686 = vsel %vm1446, %v1681, %v1685
        %v1688 = vshrl.u32 %v1428, 16
        %v1690 = vshll.u32 %v1428, 16
        %v1692 = vrot.slane %v1690, 1
        %v1693 = vor.u32 %v1688, %v1692
        %v1695 = vshll.u32 %v1429, 16
        %v1697 = vrot.slane %v1695, 1
        %v1698 = vsel %vm1446, %v1693, %v1697
        %v1699 = vshrl.u32 %v1429, 16
        %v1701 = vor.u32 %v1699, %v1697
        %v1703 = vshll.u32 %v1430, 16
        %v1705 = vrot.slane %v1703, 1
        %v1706 = vsel %vm1446, %v1701, %v1705
        %v1708 = vshrl.u32 %v1431, 16
        %v1710 = vshll.u32 %v1431, 16
        %v1712 = vrot.slane %v1710, 1
        %v1713 = vor.u32 %v1708, %v1712
        %v1715 = vshll.u32 %v1432, 16
        %v1717 = vrot.slane %v1715, 1
        %v1718 = vsel %vm1446, %v1713, %v1717
        %v1719 = vshrl.u32 %v1432, 16
        %v1721 = vor.u32 %v1719, %v1717
        %v1723 = vshll.u32 %v1433, 16
        %v1725 = vrot.slane %v1723, 1
        %v1726 = vsel %vm1446, %v1721, %v1725
        %v1728 = vshrl.u32 %v1434, 16
        %v1730 = vshll.u32 %v1434, 16
        %v1732 = vrot.slane %v1730, 1
        %v1733 = vor.u32 %v1728, %v1732
        %v1735 = vshll.u32 %v1435, 16
        %v1737 = vrot.slane %v1735, 1
        %v1738 = vsel %vm1446, %v1733, %v1737
        %v1739 = vshrl.u32 %v1435, 16
        %v1741 = vor.u32 %v1739, %v1737
        %v1743 = vshll.u32 %v1436, 16
        %v1745 = vrot.slane %v1743, 1
        %v1746 = vsel %vm1446, %v1741, %v1745
        %v1748 = vshrl.u32 %v1437, 16
        %v1750 = vshll.u32 %v1437, 16
        %v1752 = vrot.slane %v1750, 1
        %v1753 = vor.u32 %v1748, %v1752
        %v1755 = vshll.u32 %v1438, 16
        %v1757 = vrot.slane %v1755, 1
        %v1758 = vsel %vm1446, %v1753, %v1757
        %v1759 = vshrl.u32 %v1438, 16
        %v1761 = vor.u32 %v1759, %v1757
        %v1763 = vshll.u32 %v1439, 16
        %v1765 = vrot.slane %v1763, 1
        %v1766 = vsel %vm1446, %v1761, %v1765
        %1767 = vrot.lane.b32.xlu0 %v1458, 8
        %v1768 = vpop.permute.xlu0 %1767
        %1769 = vrot.lane.b32.xlu0 %v1466, 8
        %v1770 = vpop.permute.xlu0 %1769
        %1771 = vrot.lane.b32.xlu0 %v1478, 8
        %v1772 = vpop.permute.xlu0 %1771
        %1773 = vrot.lane.b32.xlu0 %v1486, 8
        %v1774 = vpop.permute.xlu0 %1773
        %1775 = vrot.lane.b32.xlu0 %v1498, 8
        %v1776 = vpop.permute.xlu0 %1775
        %1777 = vrot.lane.b32.xlu0 %v1506, 8
        %v1778 = vpop.permute.xlu0 %1777
        %1779 = vrot.lane.b32.xlu0 %v1518, 8
        %v1780 = vpop.permute.xlu0 %1779
        %1781 = vrot.lane.b32.xlu0 %v1526, 8
        %v1782 = vpop.permute.xlu0 %1781
        %1783 = vrot.lane.b32.xlu0 %v1538, 8
        %v1784 = vpop.permute.xlu0 %1783
        %1785 = vrot.lane.b32.xlu0 %v1546, 8
        %v1786 = vpop.permute.xlu0 %1785
        %1787 = vrot.lane.b32.xlu0 %v1558, 8
        %v1788 = vpop.permute.xlu0 %1787
        %1789 = vrot.lane.b32.xlu0 %v1566, 8
        %v1790 = vpop.permute.xlu0 %1789
        %1791 = vrot.lane.b32.xlu0 %v1578, 8
        %v1792 = vpop.permute.xlu0 %1791
        %1793 = vrot.lane.b32.xlu0 %v1586, 8
        %v1794 = vpop.permute.xlu0 %1793
        %1795 = vrot.lane.b32.xlu0 %v1598, 8
        %v1796 = vpop.permute.xlu0 %1795
        %1797 = vrot.lane.b32.xlu0 %v1606, 8
        %v1798 = vpop.permute.xlu0 %1797
        %1799 = vrot.lane.b32.xlu0 %v1618, 8
        %v1800 = vpop.permute.xlu0 %1799
        %1801 = vrot.lane.b32.xlu0 %v1626, 8
        %v1802 = vpop.permute.xlu0 %1801
        %1803 = vrot.lane.b32.xlu0 %v1638, 8
        %v1804 = vpop.permute.xlu0 %1803
        %1805 = vrot.lane.b32.xlu0 %v1646, 8
        %v1806 = vpop.permute.xlu0 %1805
        %1807 = vrot.lane.b32.xlu0 %v1658, 8
        %v1808 = vpop.permute.xlu0 %1807
        %1809 = vrot.lane.b32.xlu0 %v1666, 8
        %v1810 = vpop.permute.xlu0 %1809
        %1811 = vrot.lane.b32.xlu0 %v1678, 8
        %v1812 = vpop.permute.xlu0 %1811
        %1813 = vrot.lane.b32.xlu0 %v1686, 8
        %v1814 = vpop.permute.xlu0 %1813
        %1815 = vrot.lane.b32.xlu0 %v1698, 8
        %v1816 = vpop.permute.xlu0 %1815
        %1817 = vrot.lane.b32.xlu0 %v1706, 8
        %v1818 = vpop.permute.xlu0 %1817
        %1819 = vrot.lane.b32.xlu0 %v1718, 8
        %v1820 = vpop.permute.xlu0 %1819
        %1821 = vrot.lane.b32.xlu0 %v1726, 8
        %v1822 = vpop.permute.xlu0 %1821
        %1823 = vrot.lane.b32.xlu0 %v1738, 8
        %v1824 = vpop.permute.xlu0 %1823
        %1825 = vrot.lane.b32.xlu0 %v1746, 8
        %v1826 = vpop.permute.xlu0 %1825
        %1827 = vrot.lane.b32.xlu0 %v1758, 8
        %v1828 = vpop.permute.xlu0 %1827
        %1829 = vrot.lane.b32.xlu0 %v1766, 8
        %v1830 = vpop.permute.xlu0 %1829
        %vm1879 = vcmask 1046528
        %v1880 = vrot.slane %v1392, 1
        %v1881 = vrot.slane %v1393, 1
        %v1882 = vsel %vm1879, %v1880, %v1881
        %v1883 = vrot.slane %v1394, 1
        %v1884 = vsel %vm1879, %v1881, %v1883
        %v1885 = vrot.slane %v1395, 1
        %v1886 = vrot.slane %v1396, 1
        %v1887 = vsel %vm1879, %v1885, %v1886
        %v1888 = vrot.slane %v1397, 1
        %v1889 = vsel %vm1879, %v1886, %v1888
        %v1890 = vrot.slane %v1398, 1
        %v1891 = vrot.slane %v1399, 1
        %v1892 = vsel %vm1879, %v1890, %v1891
        %v1893 = vrot.slane %v1400, 1
        %v1894 = vsel %vm1879, %v1891, %v1893
        %v1895 = vrot.slane %v1401, 1
        %v1896 = vrot.slane %v1402, 1
        %v1897 = vsel %vm1879, %v1895, %v1896
        %v1898 = vrot.slane %v1403, 1
        %v1899 = vsel %vm1879, %v1896, %v1898
        %v1900 = vrot.slane %v1404, 1
        %v1901 = vrot.slane %v1405, 1
        %v1902 = vsel %vm1879, %v1900, %v1901
        %v1903 = vrot.slane %v1406, 1
        %v1904 = vsel %vm1879, %v1901, %v1903
        %v1905 = vrot.slane %v1407, 1
        %v1906 = vrot.slane %v1408, 1
        %v1907 = vsel %vm1879, %v1905, %v1906
        %v1908 = vrot.slane %v1409, 1
        %v1909 = vsel %vm1879, %v1906, %v1908
        %v1910 = vrot.slane %v1410, 1
        %v1911 = vrot.slane %v1411, 1
        %v1912 = vsel %vm1879, %v1910, %v1911
        %v1913 = vrot.slane %v1412, 1
        %v1914 = vsel %vm1879, %v1911, %v1913
        %v1915 = vrot.slane %v1413, 1
        %v1916 = vrot.slane %v1414, 1
        %v1917 = vsel %vm1879, %v1915, %v1916
        %v1918 = vrot.slane %v1415, 1
        %v1919 = vsel %vm1879, %v1916, %v1918
        %v1920 = vrot.slane %v1416, 1
        %v1921 = vrot.slane %v1417, 1
        %v1922 = vsel %vm1879, %v1920, %v1921
        %v1923 = vrot.slane %v1418, 1
        %v1924 = vsel %vm1879, %v1921, %v1923
        %v1925 = vrot.slane %v1419, 1
        %v1926 = vrot.slane %v1420, 1
        %v1927 = vsel %vm1879, %v1925, %v1926
        %v1928 = vrot.slane %v1421, 1
        %v1929 = vsel %vm1879, %v1926, %v1928
        %v1930 = vrot.slane %v1422, 1
        %v1931 = vrot.slane %v1423, 1
        %v1932 = vsel %vm1879, %v1930, %v1931
        %v1933 = vrot.slane %v1424, 1
        %v1934 = vsel %vm1879, %v1931, %v1933
        %v1935 = vrot.slane %v1425, 1
        %v1936 = vrot.slane %v1426, 1
        %v1937 = vsel %vm1879, %v1935, %v1936
        %v1938 = vrot.slane %v1427, 1
        %v1939 = vsel %vm1879, %v1936, %v1938
        %v1940 = vrot.slane %v1428, 1
        %v1941 = vrot.slane %v1429, 1
        %v1942 = vsel %vm1879, %v1940, %v1941
        %v1943 = vrot.slane %v1430, 1
        %v1944 = vsel %vm1879, %v1941, %v1943
        %v1945 = vrot.slane %v1431, 1
        %v1946 = vrot.slane %v1432, 1
        %v1947 = vsel %vm1879, %v1945, %v1946
        %v1948 = vrot.slane %v1433, 1
        %v1949 = vsel %vm1879, %v1946, %v1948
        %v1950 = vrot.slane %v1434, 1
        %v1951 = vrot.slane %v1435, 1
        %v1952 = vsel %vm1879, %v1950, %v1951
        %v1953 = vrot.slane %v1436, 1
        %v1954 = vsel %vm1879, %v1951, %v1953
        %v1955 = vrot.slane %v1437, 1
        %v1956 = vrot.slane %v1438, 1
        %v1957 = vsel %vm1879, %v1955, %v1956
        %v1958 = vrot.slane %v1439, 1
        %v1959 = vsel %vm1879, %v1956, %v1958
        %1960 = vrot.lane.b32.xlu0 %v1882, 16
        %v1961 = vpop.permute.xlu0 %1960
        %1962 = vrot.lane.b32.xlu0 %v1884, 16
        %v1963 = vpop.permute.xlu0 %1962
        %1964 = vrot.lane.b32.xlu0 %v1887, 16
        %v1965 = vpop.permute.xlu0 %1964
        %1966 = vrot.lane.b32.xlu0 %v1889, 16
        %v1967 = vpop.permute.xlu0 %1966
        %1968 = vrot.lane.b32.xlu0 %v1892, 16
        %v1969 = vpop.permute.xlu0 %1968
        %1970 = vrot.lane.b32.xlu0 %v1894, 16
        %v1971 = vpop.permute.xlu0 %1970
        %1972 = vrot.lane.b32.xlu0 %v1897, 16
        %v1973 = vpop.permute.xlu0 %1972
        %1974 = vrot.lane.b32.xlu0 %v1899, 16
        %v1975 = vpop.permute.xlu0 %1974
        %1976 = vrot.lane.b32.xlu0 %v1902, 16
        %v1977 = vpop.permute.xlu0 %1976
        %1978 = vrot.lane.b32.xlu0 %v1904, 16
        %v1979 = vpop.permute.xlu0 %1978
        %1980 = vrot.lane.b32.xlu0 %v1907, 16
        %v1981 = vpop.permute.xlu0 %1980
        %1982 = vrot.lane.b32.xlu0 %v1909, 16
        %v1983 = vpop.permute.xlu0 %1982
        %1984 = vrot.lane.b32.xlu0 %v1912, 16
        %v1985 = vpop.permute.xlu0 %1984
        %1986 = vrot.lane.b32.xlu0 %v1914, 16
        %v1987 = vpop.permute.xlu0 %1986
        %1988 = vrot.lane.b32.xlu0 %v1917, 16
        %v1989 = vpop.permute.xlu0 %1988
        %1990 = vrot.lane.b32.xlu0 %v1919, 16
        %v1991 = vpop.permute.xlu0 %1990
        %1992 = vrot.lane.b32.xlu0 %v1922, 16
        %v1993 = vpop.permute.xlu0 %1992
        %1994 = vrot.lane.b32.xlu0 %v1924, 16
        %v1995 = vpop.permute.xlu0 %1994
        %1996 = vrot.lane.b32.xlu0 %v1927, 16
        %v1997 = vpop.permute.xlu0 %1996
        %1998 = vrot.lane.b32.xlu0 %v1929, 16
        %v1999 = vpop.permute.xlu0 %1998
        %2000 = vrot.lane.b32.xlu0 %v1932, 16
        %v2001 = vpop.permute.xlu0 %2000
        %2002 = vrot.lane.b32.xlu0 %v1934, 16
        %v2003 = vpop.permute.xlu0 %2002
        %2004 = vrot.lane.b32.xlu0 %v1937, 16
        %v2005 = vpop.permute.xlu0 %2004
        %2006 = vrot.lane.b32.xlu0 %v1939, 16
        %v2007 = vpop.permute.xlu0 %2006
        %2008 = vrot.lane.b32.xlu0 %v1942, 16
        %v2009 = vpop.permute.xlu0 %2008
        %2010 = vrot.lane.b32.xlu0 %v1944, 16
        %v2011 = vpop.permute.xlu0 %2010
        %2012 = vrot.lane.b32.xlu0 %v1947, 16
        %v2013 = vpop.permute.xlu0 %2012
        %2014 = vrot.lane.b32.xlu0 %v1949, 16
        %v2015 = vpop.permute.xlu0 %2014
        %2016 = vrot.lane.b32.xlu0 %v1952, 16
        %v2017 = vpop.permute.xlu0 %2016
        %2018 = vrot.lane.b32.xlu0 %v1954, 16
        %v2019 = vpop.permute.xlu0 %2018
        %2020 = vrot.lane.b32.xlu0 %v1957, 16
        %v2021 = vpop.permute.xlu0 %2020
        %2022 = vrot.lane.b32.xlu0 %v1959, 16
        %v2023 = vpop.permute.xlu0 %2022
        %2026 = vrot.lane.b32.xlu0 %v1395, 24
        %v2027 = vpop.permute.xlu0 %2026
        %2028 = vrot.lane.b32.xlu0 %v1396, 24
        %v2029 = vpop.permute.xlu0 %2028
        %2030 = vrot.lane.b32.xlu0 %v1398, 24
        %v2031 = vpop.permute.xlu0 %2030
        %2032 = vrot.lane.b32.xlu0 %v1399, 24
        %v2033 = vpop.permute.xlu0 %2032
        %2034 = vrot.lane.b32.xlu0 %v1401, 24
        %v2035 = vpop.permute.xlu0 %2034
        %2036 = vrot.lane.b32.xlu0 %v1402, 24
        %v2037 = vpop.permute.xlu0 %2036
        %2038 = vrot.lane.b32.xlu0 %v1404, 24
        %v2039 = vpop.permute.xlu0 %2038
        %2040 = vrot.lane.b32.xlu0 %v1405, 24
        %v2041 = vpop.permute.xlu0 %2040
        %2042 = vrot.lane.b32.xlu0 %v1407, 24
        %v2043 = vpop.permute.xlu0 %2042
        %2044 = vrot.lane.b32.xlu0 %v1408, 24
        %v2045 = vpop.permute.xlu0 %2044
        %2046 = vrot.lane.b32.xlu0 %v1410, 24
        %v2047 = vpop.permute.xlu0 %2046
        %2048 = vrot.lane.b32.xlu0 %v1411, 24
        %v2049 = vpop.permute.xlu0 %2048
        %2050 = vrot.lane.b32.xlu0 %v1413, 24
        %v2051 = vpop.permute.xlu0 %2050
        %2052 = vrot.lane.b32.xlu0 %v1414, 24
        %v2053 = vpop.permute.xlu0 %2052
        %2054 = vrot.lane.b32.xlu0 %v1416, 24
        %v2055 = vpop.permute.xlu0 %2054
        %2056 = vrot.lane.b32.xlu0 %v1417, 24
        %v2057 = vpop.permute.xlu0 %2056
        %2058 = vrot.lane.b32.xlu0 %v1419, 24
        %v2059 = vpop.permute.xlu0 %2058
        %2060 = vrot.lane.b32.xlu0 %v1420, 24
        %v2061 = vpop.permute.xlu0 %2060
        %2062 = vrot.lane.b32.xlu0 %v1422, 24
        %v2063 = vpop.permute.xlu0 %2062
        %2064 = vrot.lane.b32.xlu0 %v1423, 24
        %v2065 = vpop.permute.xlu0 %2064
        %2066 = vrot.lane.b32.xlu0 %v1425, 24
        %v2067 = vpop.permute.xlu0 %2066
        %2068 = vrot.lane.b32.xlu0 %v1426, 24
        %v2069 = vpop.permute.xlu0 %2068
        %2070 = vrot.lane.b32.xlu0 %v1428, 24
        %v2071 = vpop.permute.xlu0 %2070
        %2072 = vrot.lane.b32.xlu0 %v1429, 24
        %v2073 = vpop.permute.xlu0 %2072
        %2074 = vrot.lane.b32.xlu0 %v1431, 24
        %v2075 = vpop.permute.xlu0 %2074
        %2076 = vrot.lane.b32.xlu0 %v1432, 24
        %v2077 = vpop.permute.xlu0 %2076
        %2078 = vrot.lane.b32.xlu0 %v1434, 24
        %v2079 = vpop.permute.xlu0 %2078
        %2080 = vrot.lane.b32.xlu0 %v1435, 24
        %v2081 = vpop.permute.xlu0 %2080
        %2082 = vrot.lane.b32.xlu0 %v1437, 24
        %v2083 = vpop.permute.xlu0 %2082
        %2084 = vrot.lane.b32.xlu0 %v1438, 24
        %v2085 = vpop.permute.xlu0 %2084
        %2086 = vrot.lane.b32.xlu0 %v1440, 24
        %v2087 = vpop.permute.xlu0 %2086
        %2088 = vrot.lane.b32.xlu0 %v1441, 24
        %v2089 = vpop.permute.xlu0 %2088
        %v2091 = vshrl.u32 %v1440, 16
        %v2093 = vshll.u32 %v1440, 16
        %v2095 = vrot.slane %v2093, 1
        %v2096 = vor.u32 %v2091, %v2095
        %v2098 = vshll.u32 %v1441, 16
        %v2100 = vrot.slane %v2098, 1
        %v2101 = vsel %vm1446, %v2096, %v2100
        %v2102 = vshrl.u32 %v1441, 16
        %v2104 = vor.u32 %v2102, %v2100
        %v2106 = vshll.u32 %v1442, 16
        %v2108 = vrot.slane %v2106, 1
        %v2109 = vsel %vm1446, %v2104, %v2108
        %2110 = vrot.lane.b32.xlu0 %v1478, 32
        %v2111 = vpop.permute.xlu0 %2110
        %2112 = vrot.lane.b32.xlu0 %v1486, 32
        %v2113 = vpop.permute.xlu0 %2112
        %2114 = vrot.lane.b32.xlu0 %v1498, 32
        %v2115 = vpop.permute.xlu0 %2114
        %2116 = vrot.lane.b32.xlu0 %v1506, 32
        %v2117 = vpop.permute.xlu0 %2116
        %2118 = vrot.lane.b32.xlu0 %v1518, 32
        %v2119 = vpop.permute.xlu0 %2118
        %2120 = vrot.lane.b32.xlu0 %v1526, 32
        %v2121 = vpop.permute.xlu0 %2120
        %2122 = vrot.lane.b32.xlu0 %v1538, 32
        %v2123 = vpop.permute.xlu0 %2122
        %2124 = vrot.lane.b32.xlu0 %v1546, 32
        %v2125 = vpop.permute.xlu0 %2124
        %2126 = vrot.lane.b32.xlu0 %v1558, 32
        %v2127 = vpop.permute.xlu0 %2126
        %2128 = vrot.lane.b32.xlu0 %v1566, 32
        %v2129 = vpop.permute.xlu0 %2128
        %2130 = vrot.lane.b32.xlu0 %v1578, 32
        %v2131 = vpop.permute.xlu0 %2130
        %2132 = vrot.lane.b32.xlu0 %v1586, 32
        %v2133 = vpop.permute.xlu0 %2132
        %2134 = vrot.lane.b32.xlu0 %v1598, 32
        %v2135 = vpop.permute.xlu0 %2134
        %2136 = vrot.lane.b32.xlu0 %v1606, 32
        %v2137 = vpop.permute.xlu0 %2136
        %2138 = vrot.lane.b32.xlu0 %v1618, 32
        %v2139 = vpop.permute.xlu0 %2138
        %2140 = vrot.lane.b32.xlu0 %v1626, 32
        %v2141 = vpop.permute.xlu0 %2140
        %2142 = vrot.lane.b32.xlu0 %v1638, 32
        %v2143 = vpop.permute.xlu0 %2142
        %2144 = vrot.lane.b32.xlu0 %v1646, 32
        %v2145 = vpop.permute.xlu0 %2144
        %2146 = vrot.lane.b32.xlu0 %v1658, 32
        %v2147 = vpop.permute.xlu0 %2146
        %2148 = vrot.lane.b32.xlu0 %v1666, 32
        %v2149 = vpop.permute.xlu0 %2148
        %2150 = vrot.lane.b32.xlu0 %v1678, 32
        %v2151 = vpop.permute.xlu0 %2150
        %2152 = vrot.lane.b32.xlu0 %v1686, 32
        %v2153 = vpop.permute.xlu0 %2152
        %2154 = vrot.lane.b32.xlu0 %v1698, 32
        %v2155 = vpop.permute.xlu0 %2154
        %2156 = vrot.lane.b32.xlu0 %v1706, 32
        %v2157 = vpop.permute.xlu0 %2156
        %2158 = vrot.lane.b32.xlu0 %v1718, 32
        %v2159 = vpop.permute.xlu0 %2158
        %2160 = vrot.lane.b32.xlu0 %v1726, 32
        %v2161 = vpop.permute.xlu0 %2160
        %2162 = vrot.lane.b32.xlu0 %v1738, 32
        %v2163 = vpop.permute.xlu0 %2162
        %2164 = vrot.lane.b32.xlu0 %v1746, 32
        %v2165 = vpop.permute.xlu0 %2164
        %2166 = vrot.lane.b32.xlu0 %v1758, 32
        %v2167 = vpop.permute.xlu0 %2166
        %2168 = vrot.lane.b32.xlu0 %v1766, 32
        %v2169 = vpop.permute.xlu0 %2168
        %2170 = vrot.lane.b32.xlu0 %v2101, 32
        %v2171 = vpop.permute.xlu0 %2170
        %2172 = vrot.lane.b32.xlu0 %v2109, 32
        %v2173 = vpop.permute.xlu0 %2172
        %v2175 = vrot.slane %v1440, 1
        %v2176 = vrot.slane %v1441, 1
        %v2177 = vsel %vm1879, %v2175, %v2176
        %v2178 = vrot.slane %v1442, 1
        %v2179 = vsel %vm1879, %v2176, %v2178
        %2180 = vrot.lane.b32.xlu0 %v1887, 40
        %v2181 = vpop.permute.xlu0 %2180
        %2182 = vrot.lane.b32.xlu0 %v1889, 40
        %v2183 = vpop.permute.xlu0 %2182
        %2184 = vrot.lane.b32.xlu0 %v1892, 40
        %v2185 = vpop.permute.xlu0 %2184
        %2186 = vrot.lane.b32.xlu0 %v1894, 40
        %v2187 = vpop.permute.xlu0 %2186
        %2188 = vrot.lane.b32.xlu0 %v1897, 40
        %v2189 = vpop.permute.xlu0 %2188
        %2190 = vrot.lane.b32.xlu0 %v1899, 40
        %v2191 = vpop.permute.xlu0 %2190
        %2192 = vrot.lane.b32.xlu0 %v1902, 40
        %v2193 = vpop.permute.xlu0 %2192
        %2194 = vrot.lane.b32.xlu0 %v1904, 40
        %v2195 = vpop.permute.xlu0 %2194
        %2196 = vrot.lane.b32.xlu0 %v1907, 40
        %v2197 = vpop.permute.xlu0 %2196
        %2198 = vrot.lane.b32.xlu0 %v1909, 40
        %v2199 = vpop.permute.xlu0 %2198
        %2200 = vrot.lane.b32.xlu0 %v1912, 40
        %v2201 = vpop.permute.xlu0 %2200
        %2202 = vrot.lane.b32.xlu0 %v1914, 40
        %v2203 = vpop.permute.xlu0 %2202
        %2204 = vrot.lane.b32.xlu0 %v1917, 40
        %v2205 = vpop.permute.xlu0 %2204
        %2206 = vrot.lane.b32.xlu0 %v1919, 40
        %v2207 = vpop.permute.xlu0 %2206
        %2208 = vrot.lane.b32.xlu0 %v1922, 40
        %v2209 = vpop.permute.xlu0 %2208
        %2210 = vrot.lane.b32.xlu0 %v1924, 40
        %v2211 = vpop.permute.xlu0 %2210
        %2212 = vrot.lane.b32.xlu0 %v1927, 40
        %v2213 = vpop.permute.xlu0 %2212
        %2214 = vrot.lane.b32.xlu0 %v1929, 40
        %v2215 = vpop.permute.xlu0 %2214
        %2216 = vrot.lane.b32.xlu0 %v1932, 40
        %v2217 = vpop.permute.xlu0 %2216
        %2218 = vrot.lane.b32.xlu0 %v1934, 40
        %v2219 = vpop.permute.xlu0 %2218
        %2220 = vrot.lane.b32.xlu0 %v1937, 40
        %v2221 = vpop.permute.xlu0 %2220
        %2222 = vrot.lane.b32.xlu0 %v1939, 40
        %v2223 = vpop.permute.xlu0 %2222
        %2224 = vrot.lane.b32.xlu0 %v1942, 40
        %v2225 = vpop.permute.xlu0 %2224
        %2226 = vrot.lane.b32.xlu0 %v1944, 40
        %v2227 = vpop.permute.xlu0 %2226
        %2228 = vrot.lane.b32.xlu0 %v1947, 40
        %v2229 = vpop.permute.xlu0 %2228
        %2230 = vrot.lane.b32.xlu0 %v1949, 40
        %v2231 = vpop.permute.xlu0 %2230
        %2232 = vrot.lane.b32.xlu0 %v1952, 40
        %v2233 = vpop.permute.xlu0 %2232
        %2234 = vrot.lane.b32.xlu0 %v1954, 40
        %v2235 = vpop.permute.xlu0 %2234
        %2236 = vrot.lane.b32.xlu0 %v1957, 40
        %v2237 = vpop.permute.xlu0 %2236
        %2238 = vrot.lane.b32.xlu0 %v1959, 40
        %v2239 = vpop.permute.xlu0 %2238
        %2240 = vrot.lane.b32.xlu0 %v2177, 40
        %v2241 = vpop.permute.xlu0 %2240
        %2242 = vrot.lane.b32.xlu0 %v2179, 40
        %v2243 = vpop.permute.xlu0 %2242
        %2246 = vrot.lane.b32.xlu0 %v1398, 48
        %v2247 = vpop.permute.xlu0 %2246
        %2248 = vrot.lane.b32.xlu0 %v1399, 48
        %v2249 = vpop.permute.xlu0 %2248
        %2250 = vrot.lane.b32.xlu0 %v1401, 48
        %v2251 = vpop.permute.xlu0 %2250
        %2252 = vrot.lane.b32.xlu0 %v1402, 48
        %v2253 = vpop.permute.xlu0 %2252
        %2254 = vrot.lane.b32.xlu0 %v1404, 48
        %v2255 = vpop.permute.xlu0 %2254
        %2256 = vrot.lane.b32.xlu0 %v1405, 48
        %v2257 = vpop.permute.xlu0 %2256
        %2258 = vrot.lane.b32.xlu0 %v1407, 48
        %v2259 = vpop.permute.xlu0 %2258
        %2260 = vrot.lane.b32.xlu0 %v1408, 48
        %v2261 = vpop.permute.xlu0 %2260
        %2262 = vrot.lane.b32.xlu0 %v1410, 48
        %v2263 = vpop.permute.xlu0 %2262
        %2264 = vrot.lane.b32.xlu0 %v1411, 48
        %v2265 = vpop.permute.xlu0 %2264
        %2266 = vrot.lane.b32.xlu0 %v1413, 48
        %v2267 = vpop.permute.xlu0 %2266
        %2268 = vrot.lane.b32.xlu0 %v1414, 48
        %v2269 = vpop.permute.xlu0 %2268
        %2270 = vrot.lane.b32.xlu0 %v1416, 48
        %v2271 = vpop.permute.xlu0 %2270
        %2272 = vrot.lane.b32.xlu0 %v1417, 48
        %v2273 = vpop.permute.xlu0 %2272
        %2274 = vrot.lane.b32.xlu0 %v1419, 48
        %v2275 = vpop.permute.xlu0 %2274
        %2276 = vrot.lane.b32.xlu0 %v1420, 48
        %v2277 = vpop.permute.xlu0 %2276
        %2278 = vrot.lane.b32.xlu0 %v1422, 48
        %v2279 = vpop.permute.xlu0 %2278
        %2280 = vrot.lane.b32.xlu0 %v1423, 48
        %v2281 = vpop.permute.xlu0 %2280
        %2282 = vrot.lane.b32.xlu0 %v1425, 48
        %v2283 = vpop.permute.xlu0 %2282
        %2284 = vrot.lane.b32.xlu0 %v1426, 48
        %v2285 = vpop.permute.xlu0 %2284
        %2286 = vrot.lane.b32.xlu0 %v1428, 48
        %v2287 = vpop.permute.xlu0 %2286
        %2288 = vrot.lane.b32.xlu0 %v1429, 48
        %v2289 = vpop.permute.xlu0 %2288
        %2290 = vrot.lane.b32.xlu0 %v1431, 48
        %v2291 = vpop.permute.xlu0 %2290
        %2292 = vrot.lane.b32.xlu0 %v1432, 48
        %v2293 = vpop.permute.xlu0 %2292
        %2294 = vrot.lane.b32.xlu0 %v1434, 48
        %v2295 = vpop.permute.xlu0 %2294
        %2296 = vrot.lane.b32.xlu0 %v1435, 48
        %v2297 = vpop.permute.xlu0 %2296
        %2298 = vrot.lane.b32.xlu0 %v1437, 48
        %v2299 = vpop.permute.xlu0 %2298
        %2300 = vrot.lane.b32.xlu0 %v1438, 48
        %v2301 = vpop.permute.xlu0 %2300
        %2302 = vrot.lane.b32.xlu0 %v1440, 48
        %v2303 = vpop.permute.xlu0 %2302
        %2304 = vrot.lane.b32.xlu0 %v1441, 48
        %v2305 = vpop.permute.xlu0 %2304
        %2306 = vrot.lane.b32.xlu0 %v1443, 48
        %v2307 = vpop.permute.xlu0 %2306
        %2308 = vrot.lane.b32.xlu0 %v1444, 48
        %v2309 = vpop.permute.xlu0 %2308
        %v2311 = vshrl.u32 %v1443, 16
        %v2313 = vshll.u32 %v1443, 16
        %v2315 = vrot.slane %v2313, 1
        %v2316 = vor.u32 %v2311, %v2315
        %v2318 = vshll.u32 %v1444, 16
        %v2320 = vrot.slane %v2318, 1
        %v2321 = vsel %vm1446, %v2316, %v2320
        %v2322 = vshrl.u32 %v1444, 16
        %v2324 = vor.u32 %v2322, %v2320
        %v2326 = vshll.u32 %v1445, 16
        %v2328 = vrot.slane %v2326, 1
        %v2329 = vsel %vm1446, %v2324, %v2328
        %2330 = vrot.lane.b32.xlu0 %v1498, 56
        %v2331 = vpop.permute.xlu0 %2330
        %2332 = vrot.lane.b32.xlu0 %v1506, 56
        %v2333 = vpop.permute.xlu0 %2332
        %2334 = vrot.lane.b32.xlu0 %v1518, 56
        %v2335 = vpop.permute.xlu0 %2334
        %2336 = vrot.lane.b32.xlu0 %v1526, 56
        %v2337 = vpop.permute.xlu0 %2336
        %2338 = vrot.lane.b32.xlu0 %v1538, 56
        %v2339 = vpop.permute.xlu0 %2338
        %2340 = vrot.lane.b32.xlu0 %v1546, 56
        %v2341 = vpop.permute.xlu0 %2340
        %2342 = vrot.lane.b32.xlu0 %v1558, 56
        %v2343 = vpop.permute.xlu0 %2342
        %2344 = vrot.lane.b32.xlu0 %v1566, 56
        %v2345 = vpop.permute.xlu0 %2344
        %2346 = vrot.lane.b32.xlu0 %v1578, 56
        %v2347 = vpop.permute.xlu0 %2346
        %2348 = vrot.lane.b32.xlu0 %v1586, 56
        %v2349 = vpop.permute.xlu0 %2348
        %2350 = vrot.lane.b32.xlu0 %v1598, 56
        %v2351 = vpop.permute.xlu0 %2350
        %2352 = vrot.lane.b32.xlu0 %v1606, 56
        %v2353 = vpop.permute.xlu0 %2352
        %2354 = vrot.lane.b32.xlu0 %v1618, 56
        %v2355 = vpop.permute.xlu0 %2354
        %2356 = vrot.lane.b32.xlu0 %v1626, 56
        %v2357 = vpop.permute.xlu0 %2356
        %2358 = vrot.lane.b32.xlu0 %v1638, 56
        %v2359 = vpop.permute.xlu0 %2358
        %2360 = vrot.lane.b32.xlu0 %v1646, 56
        %v2361 = vpop.permute.xlu0 %2360
        %2362 = vrot.lane.b32.xlu0 %v1658, 56
        %v2363 = vpop.permute.xlu0 %2362
        %2364 = vrot.lane.b32.xlu0 %v1666, 56
        %v2365 = vpop.permute.xlu0 %2364
        %2366 = vrot.lane.b32.xlu0 %v1678, 56
        %v2367 = vpop.permute.xlu0 %2366
        %2368 = vrot.lane.b32.xlu0 %v1686, 56
        %v2369 = vpop.permute.xlu0 %2368
        %2370 = vrot.lane.b32.xlu0 %v1698, 56
        %v2371 = vpop.permute.xlu0 %2370
        %2372 = vrot.lane.b32.xlu0 %v1706, 56
        %v2373 = vpop.permute.xlu0 %2372
        %2374 = vrot.lane.b32.xlu0 %v1718, 56
        %v2375 = vpop.permute.xlu0 %2374
        %2376 = vrot.lane.b32.xlu0 %v1726, 56
        %v2377 = vpop.permute.xlu0 %2376
        %2378 = vrot.lane.b32.xlu0 %v1738, 56
        %v2379 = vpop.permute.xlu0 %2378
        %2380 = vrot.lane.b32.xlu0 %v1746, 56
        %v2381 = vpop.permute.xlu0 %2380
        %2382 = vrot.lane.b32.xlu0 %v1758, 56
        %v2383 = vpop.permute.xlu0 %2382
        %2384 = vrot.lane.b32.xlu0 %v1766, 56
        %v2385 = vpop.permute.xlu0 %2384
        %2386 = vrot.lane.b32.xlu0 %v2101, 56
        %v2387 = vpop.permute.xlu0 %2386
        %2388 = vrot.lane.b32.xlu0 %v2109, 56
        %v2389 = vpop.permute.xlu0 %2388
        %2390 = vrot.lane.b32.xlu0 %v2321, 56
        %v2391 = vpop.permute.xlu0 %2390
        %2392 = vrot.lane.b32.xlu0 %v2329, 56
        %v2393 = vpop.permute.xlu0 %2392
        %v2395 = vrot.slane %v1443, 1
        %v2396 = vrot.slane %v1444, 1
        %v2397 = vsel %vm1879, %v2395, %v2396
        %v2398 = vrot.slane %v1445, 1
        %v2399 = vsel %vm1879, %v2396, %v2398
        %2400 = vrot.lane.b32.xlu0 %v1892, 64
        %v2401 = vpop.permute.xlu0 %2400
        %2402 = vrot.lane.b32.xlu0 %v1894, 64
        %v2403 = vpop.permute.xlu0 %2402
        %2404 = vrot.lane.b32.xlu0 %v1897, 64
        %v2405 = vpop.permute.xlu0 %2404
        %2406 = vrot.lane.b32.xlu0 %v1899, 64
        %v2407 = vpop.permute.xlu0 %2406
        %2408 = vrot.lane.b32.xlu0 %v1902, 64
        %v2409 = vpop.permute.xlu0 %2408
        %2410 = vrot.lane.b32.xlu0 %v1904, 64
        %v2411 = vpop.permute.xlu0 %2410
        %2412 = vrot.lane.b32.xlu0 %v1907, 64
        %v2413 = vpop.permute.xlu0 %2412
        %2414 = vrot.lane.b32.xlu0 %v1909, 64
        %v2415 = vpop.permute.xlu0 %2414
        %2416 = vrot.lane.b32.xlu0 %v1912, 64
        %v2417 = vpop.permute.xlu0 %2416
        %2418 = vrot.lane.b32.xlu0 %v1914, 64
        %v2419 = vpop.permute.xlu0 %2418
        %2420 = vrot.lane.b32.xlu0 %v1917, 64
        %v2421 = vpop.permute.xlu0 %2420
        %2422 = vrot.lane.b32.xlu0 %v1919, 64
        %v2423 = vpop.permute.xlu0 %2422
        %2424 = vrot.lane.b32.xlu0 %v1922, 64
        %v2425 = vpop.permute.xlu0 %2424
        %2426 = vrot.lane.b32.xlu0 %v1924, 64
        %v2427 = vpop.permute.xlu0 %2426
        %2428 = vrot.lane.b32.xlu0 %v1927, 64
        %v2429 = vpop.permute.xlu0 %2428
        %2430 = vrot.lane.b32.xlu0 %v1929, 64
        %v2431 = vpop.permute.xlu0 %2430
        %2432 = vrot.lane.b32.xlu0 %v1932, 64
        %v2433 = vpop.permute.xlu0 %2432
        %2434 = vrot.lane.b32.xlu0 %v1934, 64
        %v2435 = vpop.permute.xlu0 %2434
        %2436 = vrot.lane.b32.xlu0 %v1937, 64
        %v2437 = vpop.permute.xlu0 %2436
        %2438 = vrot.lane.b32.xlu0 %v1939, 64
        %v2439 = vpop.permute.xlu0 %2438
        %2440 = vrot.lane.b32.xlu0 %v1942, 64
        %v2441 = vpop.permute.xlu0 %2440
        %2442 = vrot.lane.b32.xlu0 %v1944, 64
        %v2443 = vpop.permute.xlu0 %2442
        %2444 = vrot.lane.b32.xlu0 %v1947, 64
        %v2445 = vpop.permute.xlu0 %2444
        %2446 = vrot.lane.b32.xlu0 %v1949, 64
        %v2447 = vpop.permute.xlu0 %2446
        %2448 = vrot.lane.b32.xlu0 %v1952, 64
        %v2449 = vpop.permute.xlu0 %2448
        %2450 = vrot.lane.b32.xlu0 %v1954, 64
        %v2451 = vpop.permute.xlu0 %2450
        %2452 = vrot.lane.b32.xlu0 %v1957, 64
        %v2453 = vpop.permute.xlu0 %2452
        %2454 = vrot.lane.b32.xlu0 %v1959, 64
        %v2455 = vpop.permute.xlu0 %2454
        %2456 = vrot.lane.b32.xlu0 %v2177, 64
        %v2457 = vpop.permute.xlu0 %2456
        %2458 = vrot.lane.b32.xlu0 %v2179, 64
        %v2459 = vpop.permute.xlu0 %2458
        %2460 = vrot.lane.b32.xlu0 %v2397, 64
        %v2461 = vpop.permute.xlu0 %2460
        %2462 = vrot.lane.b32.xlu0 %v2399, 64
        %v2463 = vpop.permute.xlu0 %2462
        %vm2464 = vcmask 64512
        %v2466 = vsel %vm2464, %v1392, %v1768
        %v2468 = vsel %vm2464, %v1393, %v1770
        %v2470 = vsel %vm2464, %v1395, %v1772
        %v2472 = vsel %vm2464, %v1396, %v1774
        %v2474 = vsel %vm2464, %v1398, %v1776
        %v2476 = vsel %vm2464, %v1399, %v1778
        %v2478 = vsel %vm2464, %v1401, %v1780
        %v2480 = vsel %vm2464, %v1402, %v1782
        %v2482 = vsel %vm2464, %v1404, %v1784
        %v2484 = vsel %vm2464, %v1405, %v1786
        %v2486 = vsel %vm2464, %v1407, %v1788
        %v2488 = vsel %vm2464, %v1408, %v1790
        %v2490 = vsel %vm2464, %v1410, %v1792
        %v2492 = vsel %vm2464, %v1411, %v1794
        %v2494 = vsel %vm2464, %v1413, %v1796
        %v2496 = vsel %vm2464, %v1414, %v1798
        %v2498 = vsel %vm2464, %v1416, %v1800
        %v2500 = vsel %vm2464, %v1417, %v1802
        %v2502 = vsel %vm2464, %v1419, %v1804
        %v2504 = vsel %vm2464, %v1420, %v1806
        %v2506 = vsel %vm2464, %v1422, %v1808
        %v2508 = vsel %vm2464, %v1423, %v1810
        %v2510 = vsel %vm2464, %v1425, %v1812
        %v2512 = vsel %vm2464, %v1426, %v1814
        %v2514 = vsel %vm2464, %v1428, %v1816
        %v2516 = vsel %vm2464, %v1429, %v1818
        %v2518 = vsel %vm2464, %v1431, %v1820
        %v2520 = vsel %vm2464, %v1432, %v1822
        %v2522 = vsel %vm2464, %v1434, %v1824
        %v2524 = vsel %vm2464, %v1435, %v1826
        %v2526 = vsel %vm2464, %v1437, %v1828
        %v2528 = vsel %vm2464, %v1438, %v1830
        %vm2529 = vcmask 130048
        %v2531 = vsel %vm2529, %v2466, %v1961
        %v2533 = vsel %vm2529, %v2468, %v1963
        %v2535 = vsel %vm2529, %v2470, %v1965
        %v2537 = vsel %vm2529, %v2472, %v1967
        %v2539 = vsel %vm2529, %v2474, %v1969
        %v2541 = vsel %vm2529, %v2476, %v1971
        %v2543 = vsel %vm2529, %v2478, %v1973
        %v2545 = vsel %vm2529, %v2480, %v1975
        %v2547 = vsel %vm2529, %v2482, %v1977
        %v2549 = vsel %vm2529, %v2484, %v1979
        %v2551 = vsel %vm2529, %v2486, %v1981
        %v2553 = vsel %vm2529, %v2488, %v1983
        %v2555 = vsel %vm2529, %v2490, %v1985
        %v2557 = vsel %vm2529, %v2492, %v1987
        %v2559 = vsel %vm2529, %v2494, %v1989
        %v2561 = vsel %vm2529, %v2496, %v1991
        %v2563 = vsel %vm2529, %v2498, %v1993
        %v2565 = vsel %vm2529, %v2500, %v1995
        %v2567 = vsel %vm2529, %v2502, %v1997
        %v2569 = vsel %vm2529, %v2504, %v1999
        %v2571 = vsel %vm2529, %v2506, %v2001
        %v2573 = vsel %vm2529, %v2508, %v2003
        %v2575 = vsel %vm2529, %v2510, %v2005
        %v2577 = vsel %vm2529, %v2512, %v2007
        %v2579 = vsel %vm2529, %v2514, %v2009
        %v2581 = vsel %vm2529, %v2516, %v2011
        %v2583 = vsel %vm2529, %v2518, %v2013
        %v2585 = vsel %vm2529, %v2520, %v2015
        %v2587 = vsel %vm2529, %v2522, %v2017
        %v2589 = vsel %vm2529, %v2524, %v2019
        %v2591 = vsel %vm2529, %v2526, %v2021
        %v2593 = vsel %vm2529, %v2528, %v2023
        %vm2594 = vcmask 195584
        %v2596 = vsel %vm2594, %v2531, %v2027
        %v2598 = vsel %vm2594, %v2533, %v2029
        %v2600 = vsel %vm2594, %v2535, %v2031
        %v2602 = vsel %vm2594, %v2537, %v2033
        %v2604 = vsel %vm2594, %v2539, %v2035
        %v2606 = vsel %vm2594, %v2541, %v2037
        %v2608 = vsel %vm2594, %v2543, %v2039
        %v2610 = vsel %vm2594, %v2545, %v2041
        %v2612 = vsel %vm2594, %v2547, %v2043
        %v2614 = vsel %vm2594, %v2549, %v2045
        %v2616 = vsel %vm2594, %v2551, %v2047
        %v2618 = vsel %vm2594, %v2553, %v2049
        %v2620 = vsel %vm2594, %v2555, %v2051
        %v2622 = vsel %vm2594, %v2557, %v2053
        %v2624 = vsel %vm2594, %v2559, %v2055
        %v2626 = vsel %vm2594, %v2561, %v2057
        %v2628 = vsel %vm2594, %v2563, %v2059
        %v2630 = vsel %vm2594, %v2565, %v2061
        %v2632 = vsel %vm2594, %v2567, %v2063
        %v2634 = vsel %vm2594, %v2569, %v2065
        %v2636 = vsel %vm2594, %v2571, %v2067
        %v2638 = vsel %vm2594, %v2573, %v2069
        %v2640 = vsel %vm2594, %v2575, %v2071
        %v2642 = vsel %vm2594, %v2577, %v2073
        %v2644 = vsel %vm2594, %v2579, %v2075
        %v2646 = vsel %vm2594, %v2581, %v2077
        %v2648 = vsel %vm2594, %v2583, %v2079
        %v2650 = vsel %vm2594, %v2585, %v2081
        %v2652 = vsel %vm2594, %v2587, %v2083
        %v2654 = vsel %vm2594, %v2589, %v2085
        %v2656 = vsel %vm2594, %v2591, %v2087
        %v2658 = vsel %vm2594, %v2593, %v2089
        %vm2659 = vcmask 261120
        %v2661 = vsel %vm2659, %v2596, %v2111
        %v2663 = vsel %vm2659, %v2598, %v2113
        %v2665 = vsel %vm2659, %v2600, %v2115
        %v2667 = vsel %vm2659, %v2602, %v2117
        %v2669 = vsel %vm2659, %v2604, %v2119
        %v2671 = vsel %vm2659, %v2606, %v2121
        %v2673 = vsel %vm2659, %v2608, %v2123
        %v2675 = vsel %vm2659, %v2610, %v2125
        %v2677 = vsel %vm2659, %v2612, %v2127
        %v2679 = vsel %vm2659, %v2614, %v2129
        %v2681 = vsel %vm2659, %v2616, %v2131
        %v2683 = vsel %vm2659, %v2618, %v2133
        %v2685 = vsel %vm2659, %v2620, %v2135
        %v2687 = vsel %vm2659, %v2622, %v2137
        %v2689 = vsel %vm2659, %v2624, %v2139
        %v2691 = vsel %vm2659, %v2626, %v2141
        %v2693 = vsel %vm2659, %v2628, %v2143
        %v2695 = vsel %vm2659, %v2630, %v2145
        %v2697 = vsel %vm2659, %v2632, %v2147
        %v2699 = vsel %vm2659, %v2634, %v2149
        %v2701 = vsel %vm2659, %v2636, %v2151
        %v2703 = vsel %vm2659, %v2638, %v2153
        %v2705 = vsel %vm2659, %v2640, %v2155
        %v2707 = vsel %vm2659, %v2642, %v2157
        %v2709 = vsel %vm2659, %v2644, %v2159
        %v2711 = vsel %vm2659, %v2646, %v2161
        %v2713 = vsel %vm2659, %v2648, %v2163
        %v2715 = vsel %vm2659, %v2650, %v2165
        %v2717 = vsel %vm2659, %v2652, %v2167
        %v2719 = vsel %vm2659, %v2654, %v2169
        %v2721 = vsel %vm2659, %v2656, %v2171
        %v2723 = vsel %vm2659, %v2658, %v2173
        %vm2724 = vcmask 326656
        %v2726 = vsel %vm2724, %v2661, %v2181
        %v2728 = vsel %vm2724, %v2663, %v2183
        %v2730 = vsel %vm2724, %v2665, %v2185
        %v2732 = vsel %vm2724, %v2667, %v2187
        %v2734 = vsel %vm2724, %v2669, %v2189
        %v2736 = vsel %vm2724, %v2671, %v2191
        %v2738 = vsel %vm2724, %v2673, %v2193
        %v2740 = vsel %vm2724, %v2675, %v2195
        %v2742 = vsel %vm2724, %v2677, %v2197
        %v2744 = vsel %vm2724, %v2679, %v2199
        %v2746 = vsel %vm2724, %v2681, %v2201
        %v2748 = vsel %vm2724, %v2683, %v2203
        %v2750 = vsel %vm2724, %v2685, %v2205
        %v2752 = vsel %vm2724, %v2687, %v2207
        %v2754 = vsel %vm2724, %v2689, %v2209
        %v2756 = vsel %vm2724, %v2691, %v2211
        %v2758 = vsel %vm2724, %v2693, %v2213
        %v2760 = vsel %vm2724, %v2695, %v2215
        %v2762 = vsel %vm2724, %v2697, %v2217
        %v2764 = vsel %vm2724, %v2699, %v2219
        %v2766 = vsel %vm2724, %v2701, %v2221
        %v2768 = vsel %vm2724, %v2703, %v2223
        %v2770 = vsel %vm2724, %v2705, %v2225
        %v2772 = vsel %vm2724, %v2707, %v2227
        %v2774 = vsel %vm2724, %v2709, %v2229
        %v2776 = vsel %vm2724, %v2711, %v2231
        %v2778 = vsel %vm2724, %v2713, %v2233
        %v2780 = vsel %vm2724, %v2715, %v2235
        %v2782 = vsel %vm2724, %v2717, %v2237
        %v2784 = vsel %vm2724, %v2719, %v2239
        %v2786 = vsel %vm2724, %v2721, %v2241
        %v2788 = vsel %vm2724, %v2723, %v2243
        %vm2789 = vcmask 392192
        %v2791 = vsel %vm2789, %v2726, %v2247
        %v2793 = vsel %vm2789, %v2728, %v2249
        %v2795 = vsel %vm2789, %v2730, %v2251
        %v2797 = vsel %vm2789, %v2732, %v2253
        %v2799 = vsel %vm2789, %v2734, %v2255
        %v2801 = vsel %vm2789, %v2736, %v2257
        %v2803 = vsel %vm2789, %v2738, %v2259
        %v2805 = vsel %vm2789, %v2740, %v2261
        %v2807 = vsel %vm2789, %v2742, %v2263
        %v2809 = vsel %vm2789, %v2744, %v2265
        %v2811 = vsel %vm2789, %v2746, %v2267
        %v2813 = vsel %vm2789, %v2748, %v2269
        %v2815 = vsel %vm2789, %v2750, %v2271
        %v2817 = vsel %vm2789, %v2752, %v2273
        %v2819 = vsel %vm2789, %v2754, %v2275
        %v2821 = vsel %vm2789, %v2756, %v2277
        %v2823 = vsel %vm2789, %v2758, %v2279
        %v2825 = vsel %vm2789, %v2760, %v2281
        %v2827 = vsel %vm2789, %v2762, %v2283
        %v2829 = vsel %vm2789, %v2764, %v2285
        %v2831 = vsel %vm2789, %v2766, %v2287
        %v2833 = vsel %vm2789, %v2768, %v2289
        %v2835 = vsel %vm2789, %v2770, %v2291
        %v2837 = vsel %vm2789, %v2772, %v2293
        %v2839 = vsel %vm2789, %v2774, %v2295
        %v2841 = vsel %vm2789, %v2776, %v2297
        %v2843 = vsel %vm2789, %v2778, %v2299
        %v2845 = vsel %vm2789, %v2780, %v2301
        %v2847 = vsel %vm2789, %v2782, %v2303
        %v2849 = vsel %vm2789, %v2784, %v2305
        %v2851 = vsel %vm2789, %v2786, %v2307
        %v2853 = vsel %vm2789, %v2788, %v2309
        %vm2854 = vcmask 457728
        %v2856 = vsel %vm2854, %v2791, %v2331
        %v2858 = vsel %vm2854, %v2793, %v2333
        %v2860 = vsel %vm2854, %v2795, %v2335
        %v2862 = vsel %vm2854, %v2797, %v2337
        %v2864 = vsel %vm2854, %v2799, %v2339
        %v2866 = vsel %vm2854, %v2801, %v2341
        %v2868 = vsel %vm2854, %v2803, %v2343
        %v2870 = vsel %vm2854, %v2805, %v2345
        %v2872 = vsel %vm2854, %v2807, %v2347
        %v2874 = vsel %vm2854, %v2809, %v2349
        %v2876 = vsel %vm2854, %v2811, %v2351
        %v2878 = vsel %vm2854, %v2813, %v2353
        %v2880 = vsel %vm2854, %v2815, %v2355
        %v2882 = vsel %vm2854, %v2817, %v2357
        %v2884 = vsel %vm2854, %v2819, %v2359
        %v2886 = vsel %vm2854, %v2821, %v2361
        %v2888 = vsel %vm2854, %v2823, %v2363
        %v2890 = vsel %vm2854, %v2825, %v2365
        %v2892 = vsel %vm2854, %v2827, %v2367
        %v2894 = vsel %vm2854, %v2829, %v2369
        %v2896 = vsel %vm2854, %v2831, %v2371
        %v2898 = vsel %vm2854, %v2833, %v2373
        %v2900 = vsel %vm2854, %v2835, %v2375
        %v2902 = vsel %vm2854, %v2837, %v2377
        %v2904 = vsel %vm2854, %v2839, %v2379
        %v2906 = vsel %vm2854, %v2841, %v2381
        %v2908 = vsel %vm2854, %v2843, %v2383
        %v2910 = vsel %vm2854, %v2845, %v2385
        %v2912 = vsel %vm2854, %v2847, %v2387
        %v2914 = vsel %vm2854, %v2849, %v2389
        %v2916 = vsel %vm2854, %v2851, %v2391
        %v2918 = vsel %vm2854, %v2853, %v2393
        %vm2919 = vcmask 523264
        %v2921 = vsel %vm2919, %v2856, %v2401
        %v2923 = vsel %vm2919, %v2858, %v2403
        %v2925 = vsel %vm2919, %v2860, %v2405
        %v2927 = vsel %vm2919, %v2862, %v2407
        %v2929 = vsel %vm2919, %v2864, %v2409
        %v2931 = vsel %vm2919, %v2866, %v2411
        %v2933 = vsel %vm2919, %v2868, %v2413
        %v2935 = vsel %vm2919, %v2870, %v2415
        %v2937 = vsel %vm2919, %v2872, %v2417
        %v2939 = vsel %vm2919, %v2874, %v2419
        %v2941 = vsel %vm2919, %v2876, %v2421
        %v2943 = vsel %vm2919, %v2878, %v2423
        %v2945 = vsel %vm2919, %v2880, %v2425
        %v2947 = vsel %vm2919, %v2882, %v2427
        %v2949 = vsel %vm2919, %v2884, %v2429
        %v2951 = vsel %vm2919, %v2886, %v2431
        %v2953 = vsel %vm2919, %v2888, %v2433
        %v2955 = vsel %vm2919, %v2890, %v2435
        %v2957 = vsel %vm2919, %v2892, %v2437
        %v2959 = vsel %vm2919, %v2894, %v2439
        %v2961 = vsel %vm2919, %v2896, %v2441
        %v2963 = vsel %vm2919, %v2898, %v2443
        %v2965 = vsel %vm2919, %v2900, %v2445
        %v2967 = vsel %vm2919, %v2902, %v2447
        %v2969 = vsel %vm2919, %v2904, %v2449
        %v2971 = vsel %vm2919, %v2906, %v2451
        %v2973 = vsel %vm2919, %v2908, %v2453
        %v2975 = vsel %vm2919, %v2910, %v2455
        %v2977 = vsel %vm2919, %v2912, %v2457
        %v2979 = vsel %vm2919, %v2914, %v2459
        %v2981 = vsel %vm2919, %v2916, %v2461
        %v2983 = vsel %vm2919, %v2918, %v2463
        %v2984 = vld [vmem:[#allocation8] sm:$0xf]
        %v2985 = vld [vmem:[#allocation8 + $0x4] sm:$0xf]
        %v2986 = vld [vmem:[#allocation8 + $0x8] sm:$0xf]
        %v2987 = vld [vmem:[#allocation8 + $0xc] sm:$0xf]
        %v2988 = vld [vmem:[#allocation8 + $0x10] sm:$0xf]
        %v2989 = vld [vmem:[#allocation8 + $0x14] sm:$0xf]
        %v2990 = vld [vmem:[#allocation8 + $0x18] sm:$0xf]
        %v2991 = vld [vmem:[#allocation8 + $0x1c] sm:$0xf]
        %v2992 = vld [vmem:[#allocation8 + $0x20] sm:$0xf]
        %v2993 = vld [vmem:[#allocation10] sm:$0x1]
        %v2995 = vlaneseq
        %v2996 = vshrl.u32 %v2995, 7
        %v2997 = vsub.s32 0, %v2996
        %v2998 = vrot.slane %v2993, %v2997
        %v3009 = vunpack.c.l.b16 %v2984
        %v3010 = vunpack.c.l.b16 %v2985
        %v3011 = vunpack.c.l.b16 %v2986
        %v3012 = vunpack.c.l.b16 %v2987
        %v3013 = vunpack.c.l.b16 %v2988
        %v3014 = vunpack.c.l.b16 %v2989
        %v3015 = vunpack.c.l.b16 %v2990
        %v3016 = vunpack.c.l.b16 %v2991
        %v3017 = vunpack.c.l.b16 %v2992
        %v3018 = vpack.c.b16 %v3010, %v3009
        %v3019 = vpack.c.b16 %v3012, %v3011
        %v3020 = vpack.c.b16 %v3014, %v3013
        %v3021 = vpack.c.b16 %v3016, %v3015
        %v3022 = vpack.c.b16 %v3017, %v3017
        %vm3027 = vcmask 588800
        %v3028 = vsel %vm3027, %v2921, 0
        %v3030 = vsel %vm3027, %v2923, 0
        %v3032 = vsel %vm3027, %v2925, 0
        %v3034 = vsel %vm3027, %v2927, 0
        %v3036 = vsel %vm3027, %v2929, 0
        %v3038 = vsel %vm3027, %v2931, 0
        %v3040 = vsel %vm3027, %v2933, 0
        %v3042 = vsel %vm3027, %v2935, 0
        %v3044 = vsel %vm3027, %v2937, 0
        %v3046 = vsel %vm3027, %v2939, 0
        %v3048 = vsel %vm3027, %v2941, 0
        %v3050 = vsel %vm3027, %v2943, 0
        %v3052 = vsel %vm3027, %v2945, 0
        %v3054 = vsel %vm3027, %v2947, 0
        %v3056 = vsel %vm3027, %v2949, 0
        %v3058 = vsel %vm3027, %v2951, 0
        %v3060 = vsel %vm3027, %v2953, 0
        %v3062 = vsel %vm3027, %v2955, 0
        %v3064 = vsel %vm3027, %v2957, 0
        %v3066 = vsel %vm3027, %v2959, 0
        %v3068 = vsel %vm3027, %v2961, 0
        %v3070 = vsel %vm3027, %v2963, 0
        %v3072 = vsel %vm3027, %v2965, 0
        %v3074 = vsel %vm3027, %v2967, 0
        %v3076 = vsel %vm3027, %v2969, 0
        %v3078 = vsel %vm3027, %v2971, 0
        %v3080 = vsel %vm3027, %v2973, 0
        %v3082 = vsel %vm3027, %v2975, 0
        %v3084 = vsel %vm3027, %v2977, 0
        %v3086 = vsel %vm3027, %v2979, 0
        %v3088 = vsel %vm3027, %v2981, 0
        %v3090 = vsel %vm3027, %v2983, 0
        %vm3092 = vcmask 1043456
        %v3094 = vsel %vm3092, %v3022, 0
        %3096 = vmatprep.subr.bf16.mxu0 0
        %3097 = vmatpush1.bf16.msra.mxu0 %v3018
        %3098 = vmatprep.subr.bf16.mxu0 0
        %3099 = vmatpush1.bf16.msra.mxu0 %v3019
        %3100 = vmatprep.subr.bf16.mxu0 0
        %3101 = vmatpush1.bf16.msra.mxu0 %v3020
        %3102 = vmatprep.subr.bf16.mxu0 0
        %3103 = vmatpush1.bf16.msra.mxu0 %v3021
        %3104 = vmatprep.subr.bf16.mxu0 0
        %3105 = vmatpush1.bf16.msra.mxu0 %v3094
        %3106 = vmatprep.subr.bf16.mxu0 0
        %3107 = vmatpush1.bf16.msra.mxu0 0
        %3108 = vmatprep.subr.bf16.mxu0 0
        %3109 = vmatpush1.bf16.msra.mxu0 0
        %3110 = vmatprep.subr.bf16.mxu0 0
        %3111 = vmatpush1.bf16.msra.mxu0 0
        %3112 = vmatprep.subr.bf16.mxu0 0
        %3113 = vmatpush1.bf16.msra.mxu0 0
        %3114 = vmatprep.subr.bf16.mxu0 0
        %3115 = vmatpush1.bf16.msra.mxu0 0
        %3116 = vmatprep.subr.bf16.mxu0 0
        %3117 = vmatpush1.bf16.msra.mxu0 0
        %3118 = vmatprep.subr.bf16.mxu0 0
        %3119 = vmatpush1.bf16.msra.mxu0 0
        %3120 = vmatprep.subr.bf16.mxu0 0
        %3121 = vmatpush1.bf16.msra.mxu0 0
        %3122 = vmatprep.subr.bf16.mxu0 0
        %3123 = vmatpush1.bf16.msra.mxu0 0
        %3124 = vmatprep.subr.bf16.mxu0 0
        %3125 = vmatpush1.bf16.msra.mxu0 0
        %3126 = vmatprep.subr.bf16.mxu0 0
        %3127 = vmatpush1.bf16.msra.mxu0 0
        %3128 = vmatprep.mubr.bf16.mxu0 0
        %3129 = vmatmul.mubr.bf16.gmra.mrb[0].mxu0 %v3028
        %v3130 = vpop.f32.mrb[0].mxu0
        %v3131 = vadd.f32 %v2998, %v3130
        %v3132 = vpop.f32.mrb[0].mxu0
        %v3133 = vpop.f32.mrb[0].mxu0
        %v3134 = vadd.f32 %v2998, %v3133
        %v3135 = vpop.f32.mrb[0].mxu0
        %3136 = vmatprep.mubr.bf16.mxu0 0
        %3137 = vmatmul.mubr.bf16.gmra.mrb[0].mxu0 %v3030
        %v3138 = vpop.f32.mrb[0].mxu0
        %v3139 = vadd.f32 %v2998, %v3138
        %v3140 = vpop.f32.mrb[0].mxu0
        %v3141 = vpop.f32.mrb[0].mxu0
        %v3142 = vadd.f32 %v2998, %v3141
        %v3143 = vpop.f32.mrb[0].mxu0
        %3144 = vmatprep.mubr.bf16.mxu0 0
        %3145 = vmatmul.mubr.bf16.gmra.mrb[0].mxu0 %v3032
        %v3146 = vpop.f32.mrb[0].mxu0
        %v3147 = vadd.f32 %v2998, %v3146
        %v3148 = vpop.f32.mrb[0].mxu0
        %v3149 = vpop.f32.mrb[0].mxu0
        %v3150 = vadd.f32 %v2998, %v3149
        %v3151 = vpop.f32.mrb[0].mxu0
        %3152 = vmatprep.mubr.bf16.mxu0 0
        %3153 = vmatmul.mubr.bf16.gmra.mrb[0].mxu0 %v3034
        %v3154 = vpop.f32.mrb[0].mxu0
        %v3155 = vadd.f32 %v2998, %v3154
        %v3156 = vpop.f32.mrb[0].mxu0
        %v3157 = vpop.f32.mrb[0].mxu0
        %v3158 = vadd.f32 %v2998, %v3157
        %v3159 = vpop.f32.mrb[0].mxu0
        %3160 = vmatprep.mubr.bf16.mxu0 0
        %3161 = vmatmul.mubr.bf16.gmra.mrb[0].mxu0 %v3036
        %v3162 = vpop.f32.mrb[0].mxu0
        %v3163 = vadd.f32 %v2998, %v3162
        %v3164 = vpop.f32.mrb[0].mxu0
        %v3165 = vpop.f32.mrb[0].mxu0
        %v3166 = vadd.f32 %v2998, %v3165
        %v3167 = vpop.f32.mrb[0].mxu0
        %3168 = vmatprep.mubr.bf16.mxu0 0
        %3169 = vmatmul.mubr.bf16.gmra.mrb[0].mxu0 %v3038
        %v3170 = vpop.f32.mrb[0].mxu0
        %v3171 = vadd.f32 %v2998, %v3170
        %v3172 = vpop.f32.mrb[0].mxu0
        %v3173 = vpop.f32.mrb[0].mxu0
        %v3174 = vadd.f32 %v2998, %v3173
        %v3175 = vpop.f32.mrb[0].mxu0
        %3176 = vmatprep.mubr.bf16.mxu0 0
        %3177 = vmatmul.mubr.bf16.gmra.mrb[0].mxu0 %v3040
        %v3178 = vpop.f32.mrb[0].mxu0
        %v3179 = vadd.f32 %v2998, %v3178
        %v3180 = vpop.f32.mrb[0].mxu0
        %v3181 = vpop.f32.mrb[0].mxu0
        %v3182 = vadd.f32 %v2998, %v3181
        %v3183 = vpop.f32.mrb[0].mxu0
        %3184 = vmatprep.mubr.bf16.mxu0 0
        %3185 = vmatmul.mubr.bf16.gmra.mrb[0].mxu0 %v3042
        %v3186 = vpop.f32.mrb[0].mxu0
        %v3187 = vadd.f32 %v2998, %v3186
        %v3188 = vpop.f32.mrb[0].mxu0
        %v3189 = vpop.f32.mrb[0].mxu0
        %v3190 = vadd.f32 %v2998, %v3189
        %v3191 = vpop.f32.mrb[0].mxu0
        %3192 = vmatprep.mubr.bf16.mxu0 0
        %3193 = vmatmul.mubr.bf16.gmra.mrb[0].mxu0 %v3044
        %v3194 = vpop.f32.mrb[0].mxu0
        %v3195 = vadd.f32 %v2998, %v3194
        %v3196 = vpop.f32.mrb[0].mxu0
        %v3197 = vpop.f32.mrb[0].mxu0
        %v3198 = vadd.f32 %v2998, %v3197
        %v3199 = vpop.f32.mrb[0].mxu0
        %3200 = vmatprep.mubr.bf16.mxu0 0
        %3201 = vmatmul.mubr.bf16.gmra.mrb[0].mxu0 %v3046
        %v3202 = vpop.f32.mrb[0].mxu0
        %v3203 = vadd.f32 %v2998, %v3202
        %v3204 = vpop.f32.mrb[0].mxu0
        %v3205 = vpop.f32.mrb[0].mxu0
        %v3206 = vadd.f32 %v2998, %v3205
        %v3207 = vpop.f32.mrb[0].mxu0
        %3208 = vmatprep.mubr.bf16.mxu0 0
        %3209 = vmatmul.mubr.bf16.gmra.mrb[0].mxu0 %v3048
        %v3210 = vpop.f32.mrb[0].mxu0
        %v3211 = vadd.f32 %v2998, %v3210
        %v3212 = vpop.f32.mrb[0].mxu0
        %v3213 = vpop.f32.mrb[0].mxu0
        %v3214 = vadd.f32 %v2998, %v3213
        %v3215 = vpop.f32.mrb[0].mxu0
        %3216 = vmatprep.mubr.bf16.mxu0 0
        %3217 = vmatmul.mubr.bf16.gmra.mrb[0].mxu0 %v3050
        %v3218 = vpop.f32.mrb[0].mxu0
        %v3219 = vadd.f32 %v2998, %v3218
        %v3220 = vpop.f32.mrb[0].mxu0
        %v3221 = vpop.f32.mrb[0].mxu0
        %v3222 = vadd.f32 %v2998, %v3221
        %v3223 = vpop.f32.mrb[0].mxu0
        %3224 = vmatprep.mubr.bf16.mxu0 0
        %3225 = vmatmul.mubr.bf16.gmra.mrb[0].mxu0 %v3052
        %v3226 = vpop.f32.mrb[0].mxu0
        %v3227 = vadd.f32 %v2998, %v3226
        %v3228 = vpop.f32.mrb[0].mxu0
        %v3229 = vpop.f32.mrb[0].mxu0
        %v3230 = vadd.f32 %v2998, %v3229
        %v3231 = vpop.f32.mrb[0].mxu0
        %3232 = vmatprep.mubr.bf16.mxu0 0
        %3233 = vmatmul.mubr.bf16.gmra.mrb[0].mxu0 %v3054
        %v3234 = vpop.f32.mrb[0].mxu0
        %v3235 = vadd.f32 %v2998, %v3234
        %v3236 = vpop.f32.mrb[0].mxu0
        %v3237 = vpop.f32.mrb[0].mxu0
        %v3238 = vadd.f32 %v2998, %v3237
        %v3239 = vpop.f32.mrb[0].mxu0
        %3240 = vmatprep.mubr.bf16.mxu0 0
        %3241 = vmatmul.mubr.bf16.gmra.mrb[0].mxu0 %v3056
        %v3242 = vpop.f32.mrb[0].mxu0
        %v3243 = vadd.f32 %v2998, %v3242
        %v3244 = vpop.f32.mrb[0].mxu0
        %v3245 = vpop.f32.mrb[0].mxu0
        %v3246 = vadd.f32 %v2998, %v3245
        %v3247 = vpop.f32.mrb[0].mxu0
        %3248 = vmatprep.mubr.bf16.mxu0 0
        %3249 = vmatmul.mubr.bf16.gmra.mrb[0].mxu0 %v3058
        %v3250 = vpop.f32.mrb[0].mxu0
        %v3251 = vadd.f32 %v2998, %v3250
        %v3252 = vpop.f32.mrb[0].mxu0
        %v3253 = vpop.f32.mrb[0].mxu0
        %v3254 = vadd.f32 %v2998, %v3253
        %v3255 = vpop.f32.mrb[0].mxu0
        %3256 = vmatprep.mubr.bf16.mxu0 0
        %3257 = vmatmul.mubr.bf16.gmra.mrb[0].mxu0 %v3060
        %v3258 = vpop.f32.mrb[0].mxu0
        %v3259 = vadd.f32 %v2998, %v3258
        %v3260 = vpop.f32.mrb[0].mxu0
        %v3261 = vpop.f32.mrb[0].mxu0
        %v3262 = vadd.f32 %v2998, %v3261
        %v3263 = vpop.f32.mrb[0].mxu0
        %3264 = vmatprep.mubr.bf16.mxu0 0
        %3265 = vmatmul.mubr.bf16.gmra.mrb[0].mxu0 %v3062
        %v3266 = vpop.f32.mrb[0].mxu0
        %v3267 = vadd.f32 %v2998, %v3266
        %v3268 = vpop.f32.mrb[0].mxu0
        %v3269 = vpop.f32.mrb[0].mxu0
        %v3270 = vadd.f32 %v2998, %v3269
        %v3271 = vpop.f32.mrb[0].mxu0
        %3272 = vmatprep.mubr.bf16.mxu0 0
        %3273 = vmatmul.mubr.bf16.gmra.mrb[0].mxu0 %v3064
        %v3274 = vpop.f32.mrb[0].mxu0
        %v3275 = vadd.f32 %v2998, %v3274
        %v3276 = vpop.f32.mrb[0].mxu0
        %v3277 = vpop.f32.mrb[0].mxu0
        %v3278 = vadd.f32 %v2998, %v3277
        %v3279 = vpop.f32.mrb[0].mxu0
        %3280 = vmatprep.mubr.bf16.mxu0 0
        %3281 = vmatmul.mubr.bf16.gmra.mrb[0].mxu0 %v3066
        %v3282 = vpop.f32.mrb[0].mxu0
        %v3283 = vadd.f32 %v2998, %v3282
        %v3284 = vpop.f32.mrb[0].mxu0
        %v3285 = vpop.f32.mrb[0].mxu0
        %v3286 = vadd.f32 %v2998, %v3285
        %v3287 = vpop.f32.mrb[0].mxu0
        %3288 = vmatprep.mubr.bf16.mxu0 0
        %3289 = vmatmul.mubr.bf16.gmra.mrb[0].mxu0 %v3068
        %v3290 = vpop.f32.mrb[0].mxu0
        %v3291 = vadd.f32 %v2998, %v3290
        %v3292 = vpop.f32.mrb[0].mxu0
        %v3293 = vpop.f32.mrb[0].mxu0
        %v3294 = vadd.f32 %v2998, %v3293
        %v3295 = vpop.f32.mrb[0].mxu0
        %3296 = vmatprep.mubr.bf16.mxu0 0
        %3297 = vmatmul.mubr.bf16.gmra.mrb[0].mxu0 %v3070
        %v3298 = vpop.f32.mrb[0].mxu0
        %v3299 = vadd.f32 %v2998, %v3298
        %v3300 = vpop.f32.mrb[0].mxu0
        %v3301 = vpop.f32.mrb[0].mxu0
        %v3302 = vadd.f32 %v2998, %v3301
        %v3303 = vpop.f32.mrb[0].mxu0
        %3304 = vmatprep.mubr.bf16.mxu0 0
        %3305 = vmatmul.mubr.bf16.gmra.mrb[0].mxu0 %v3072
        %v3306 = vpop.f32.mrb[0].mxu0
        %v3307 = vadd.f32 %v2998, %v3306
        %v3308 = vpop.f32.mrb[0].mxu0
        %v3309 = vpop.f32.mrb[0].mxu0
        %v3310 = vadd.f32 %v2998, %v3309
        %v3311 = vpop.f32.mrb[0].mxu0
        %3312 = vmatprep.mubr.bf16.mxu0 0
        %3313 = vmatmul.mubr.bf16.gmra.mrb[0].mxu0 %v3074
        %v3314 = vpop.f32.mrb[0].mxu0
        %v3315 = vadd.f32 %v2998, %v3314
        %v3316 = vpop.f32.mrb[0].mxu0
        %v3317 = vpop.f32.mrb[0].mxu0
        %v3318 = vadd.f32 %v2998, %v3317
        %v3319 = vpop.f32.mrb[0].mxu0
        %3320 = vmatprep.mubr.bf16.mxu0 0
        %3321 = vmatmul.mubr.bf16.gmra.mrb[0].mxu0 %v3076
        %v3322 = vpop.f32.mrb[0].mxu0
        %v3323 = vadd.f32 %v2998, %v3322
        %v3324 = vpop.f32.mrb[0].mxu0
        %v3325 = vpop.f32.mrb[0].mxu0
        %v3326 = vadd.f32 %v2998, %v3325
        %v3327 = vpop.f32.mrb[0].mxu0
        %3328 = vmatprep.mubr.bf16.mxu0 0
        %3329 = vmatmul.mubr.bf16.gmra.mrb[0].mxu0 %v3078
        %v3330 = vpop.f32.mrb[0].mxu0
        %v3331 = vadd.f32 %v2998, %v3330
        %v3332 = vpop.f32.mrb[0].mxu0
        %v3333 = vpop.f32.mrb[0].mxu0
        %v3334 = vadd.f32 %v2998, %v3333
        %v3335 = vpop.f32.mrb[0].mxu0
        %3336 = vmatprep.mubr.bf16.mxu0 0
        %3337 = vmatmul.mubr.bf16.gmra.mrb[0].mxu0 %v3080
        %v3338 = vpop.f32.mrb[0].mxu0
        %v3339 = vadd.f32 %v2998, %v3338
        %v3340 = vpop.f32.mrb[0].mxu0
        %v3341 = vpop.f32.mrb[0].mxu0
        %v3342 = vadd.f32 %v2998, %v3341
        %v3343 = vpop.f32.mrb[0].mxu0
        %3344 = vmatprep.mubr.bf16.mxu0 0
        %3345 = vmatmul.mubr.bf16.gmra.mrb[0].mxu0 %v3082
        %v3346 = vpop.f32.mrb[0].mxu0
        %v3347 = vadd.f32 %v2998, %v3346
        %v3348 = vpop.f32.mrb[0].mxu0
        %v3349 = vpop.f32.mrb[0].mxu0
        %v3350 = vadd.f32 %v2998, %v3349
        %v3351 = vpop.f32.mrb[0].mxu0
        %3352 = vmatprep.mubr.bf16.mxu0 0
        %3353 = vmatmul.mubr.bf16.gmra.mrb[0].mxu0 %v3084
        %v3354 = vpop.f32.mrb[0].mxu0
        %v3355 = vadd.f32 %v2998, %v3354
        %v3356 = vpop.f32.mrb[0].mxu0
        %v3357 = vpop.f32.mrb[0].mxu0
        %v3358 = vadd.f32 %v2998, %v3357
        %v3359 = vpop.f32.mrb[0].mxu0
        %3360 = vmatprep.mubr.bf16.mxu0 0
        %3361 = vmatmul.mubr.bf16.gmra.mrb[0].mxu0 %v3086
        %v3362 = vpop.f32.mrb[0].mxu0
        %v3363 = vadd.f32 %v2998, %v3362
        %v3364 = vpop.f32.mrb[0].mxu0
        %v3365 = vpop.f32.mrb[0].mxu0
        %v3366 = vadd.f32 %v2998, %v3365
        %v3367 = vpop.f32.mrb[0].mxu0
        %3368 = vmatprep.mubr.bf16.mxu0 0
        %3369 = vmatmul.mubr.bf16.gmra.mrb[0].mxu0 %v3088
        %v3370 = vpop.f32.mrb[0].mxu0
        %v3371 = vadd.f32 %v2998, %v3370
        %v3372 = vpop.f32.mrb[0].mxu0
        %v3373 = vpop.f32.mrb[0].mxu0
        %v3374 = vadd.f32 %v2998, %v3373
        %v3375 = vpop.f32.mrb[0].mxu0
        %3376 = vmatprep.mubr.bf16.mxu0 0
        %3377 = vmatmul.mubr.bf16.gmra.mrb[0].mxu0 %v3090
        %v3378 = vpop.f32.mrb[0].mxu0
        %v3379 = vadd.f32 %v2998, %v3378
        %v3380 = vpop.f32.mrb[0].mxu0
        %v3381 = vpop.f32.mrb[0].mxu0
        %v3382 = vadd.f32 %v2998, %v3381
        %v3383 = vpop.f32.mrb[0].mxu0
        %3384 = vdwg.mxu0
        %3385 = vst.msk [vmem:[%s374] sm:$0xff] %vm2464, %v3131
        %3386 = vst.msk [vmem:[%s374 + $0x8] sm:$0xff] %vm2464, %v3134
        %3387 = vst.msk [vmem:[%s374 + $0x10] sm:$0xff] %vm2464, %v3139
        %3388 = vst.msk [vmem:[%s374 + $0x18] sm:$0xff] %vm2464, %v3142
        %3389 = vst.msk [vmem:[%s374 + $0x20] sm:$0xff] %vm2464, %v3147
        %3390 = vst.msk [vmem:[%s374 + $0x28] sm:$0xff] %vm2464, %v3150
        %3391 = vst.msk [vmem:[%s374 + $0x30] sm:$0xff] %vm2464, %v3155
        %3392 = vst.msk [vmem:[%s374 + $0x38] sm:$0xff] %vm2464, %v3158
        %3393 = vst.msk [vmem:[%s374 + $0x40] sm:$0xff] %vm2464, %v3163
        %3394 = vst.msk [vmem:[%s374 + $0x48] sm:$0xff] %vm2464, %v3166
        %3395 = vst.msk [vmem:[%s374 + $0x50] sm:$0xff] %vm2464, %v3171
        %3396 = vst.msk [vmem:[%s374 + $0x58] sm:$0xff] %vm2464, %v3174
        %3397 = vst.msk [vmem:[%s374 + $0x60] sm:$0xff] %vm2464, %v3179
        %3398 = vst.msk [vmem:[%s374 + $0x68] sm:$0xff] %vm2464, %v3182
        %3399 = vst.msk [vmem:[%s374 + $0x70] sm:$0xff] %vm2464, %v3187
        %3400 = vst.msk [vmem:[%s374 + $0x78] sm:$0xff] %vm2464, %v3190
        %3401 = vst.msk [vmem:[%s374 + $0x80] sm:$0xff] %vm2464, %v3195
        %3402 = vst.msk [vmem:[%s374 + $0x88] sm:$0xff] %vm2464, %v3198
        %3403 = vst.msk [vmem:[%s374 + $0x90] sm:$0xff] %vm2464, %v3203
        %3404 = vst.msk [vmem:[%s374 + $0x98] sm:$0xff] %vm2464, %v3206
        %3405 = vst.msk [vmem:[%s374 + $0xa0] sm:$0xff] %vm2464, %v3211
        %3406 = vst.msk [vmem:[%s374 + $0xa8] sm:$0xff] %vm2464, %v3214
        %3407 = vst.msk [vmem:[%s374 + $0xb0] sm:$0xff] %vm2464, %v3219
        %3408 = vst.msk [vmem:[%s374 + $0xb8] sm:$0xff] %vm2464, %v3222
        %3409 = vst.msk [vmem:[%s374 + $0xc0] sm:$0xff] %vm2464, %v3227
        %3410 = vst.msk [vmem:[%s374 + $0xc8] sm:$0xff] %vm2464, %v3230
        %3411 = vst.msk [vmem:[%s374 + $0xd0] sm:$0xff] %vm2464, %v3235
        %3412 = vst.msk [vmem:[%s374 + $0xd8] sm:$0xff] %vm2464, %v3238
        %3413 = vst.msk [vmem:[%s374 + $0xe0] sm:$0xff] %vm2464, %v3243
        %3414 = vst.msk [vmem:[%s374 + $0xe8] sm:$0xff] %vm2464, %v3246
        %3415 = vst.msk [vmem:[%s374 + $0xf0] sm:$0xff] %vm2464, %v3251
        %3416 = vst.msk [vmem:[%s374 + $0xf8] sm:$0xff] %vm2464, %v3254
        %3417 = vst.msk [vmem:[%s374 + $0x100] sm:$0xff] %vm2464, %v3259
        %3418 = vst.msk [vmem:[%s374 + $0x108] sm:$0xff] %vm2464, %v3262
        %3419 = vst.msk [vmem:[%s374 + $0x110] sm:$0xff] %vm2464, %v3267
        %3420 = vst.msk [vmem:[%s374 + $0x118] sm:$0xff] %vm2464, %v3270
        %3421 = vst.msk [vmem:[%s374 + $0x120] sm:$0xff] %vm2464, %v3275
        %3422 = vst.msk [vmem:[%s374 + $0x128] sm:$0xff] %vm2464, %v3278
        %3423 = vst.msk [vmem:[%s374 + $0x130] sm:$0xff] %vm2464, %v3283
        %3424 = vst.msk [vmem:[%s374 + $0x138] sm:$0xff] %vm2464, %v3286
        %3425 = vst.msk [vmem:[%s374 + $0x140] sm:$0xff] %vm2464, %v3291
        %3426 = vst.msk [vmem:[%s374 + $0x148] sm:$0xff] %vm2464, %v3294
        %3427 = vst.msk [vmem:[%s374 + $0x150] sm:$0xff] %vm2464, %v3299
        %3428 = vst.msk [vmem:[%s374 + $0x158] sm:$0xff] %vm2464, %v3302
        %3429 = vst.msk [vmem:[%s374 + $0x160] sm:$0xff] %vm2464, %v3307
        %3430 = vst.msk [vmem:[%s374 + $0x168] sm:$0xff] %vm2464, %v3310
        %3431 = vst.msk [vmem:[%s374 + $0x170] sm:$0xff] %vm2464, %v3315
        %3432 = vst.msk [vmem:[%s374 + $0x178] sm:$0xff] %vm2464, %v3318
        %3433 = vst.msk [vmem:[%s374 + $0x180] sm:$0xff] %vm2464, %v3323
        %3434 = vst.msk [vmem:[%s374 + $0x188] sm:$0xff] %vm2464, %v3326
        %3435 = vst.msk [vmem:[%s374 + $0x190] sm:$0xff] %vm2464, %v3331
        %3436 = vst.msk [vmem:[%s374 + $0x198] sm:$0xff] %vm2464, %v3334
        %3437 = vst.msk [vmem:[%s374 + $0x1a0] sm:$0xff] %vm2464, %v3339
        %3438 = vst.msk [vmem:[%s374 + $0x1a8] sm:$0xff] %vm2464, %v3342
        %3439 = vst.msk [vmem:[%s374 + $0x1b0] sm:$0xff] %vm2464, %v3347
        %3440 = vst.msk [vmem:[%s374 + $0x1b8] sm:$0xff] %vm2464, %v3350
        %3441 = vst.msk [vmem:[%s374 + $0x1c0] sm:$0xff] %vm2464, %v3355
        %3442 = vst.msk [vmem:[%s374 + $0x1c8] sm:$0xff] %vm2464, %v3358
        %3443 = vst.msk [vmem:[%s374 + $0x1d0] sm:$0xff] %vm2464, %v3363
        %3444 = vst.msk [vmem:[%s374 + $0x1d8] sm:$0xff] %vm2464, %v3366
        %3445 = vst.msk [vmem:[%s374 + $0x1e0] sm:$0xff] %vm2464, %v3371
        %3446 = vst.msk [vmem:[%s374 + $0x1e8] sm:$0xff] %vm2464, %v3374
        %3447 = vst.msk [vmem:[%s374 + $0x1f0] sm:$0xff] %vm2464, %v3379
        %3448 = vst.msk [vmem:[%s374 + $0x1f8] sm:$0xff] %vm2464, %v3382
        %v3449 = vsel %vm2464, %v3131, 0.0
        %v3450 = vsel %vm2464, %v3134, 0.0
        %v3451 = vadd.f32 %v3449, %v3450
        %v3452 = vsel %vm2464, %v3139, 0.0
        %v3453 = vadd.f32 %v3451, %v3452
        %v3454 = vsel %vm2464, %v3142, 0.0
        %v3455 = vadd.f32 %v3453, %v3454
        %v3456 = vsel %vm2464, %v3147, 0.0
        %v3457 = vadd.f32 %v3455, %v3456
        %v3458 = vsel %vm2464, %v3150, 0.0
        %v3459 = vadd.f32 %v3457, %v3458
        %v3460 = vsel %vm2464, %v3155, 0.0
        %v3461 = vadd.f32 %v3459, %v3460
        %v3462 = vsel %vm2464, %v3158, 0.0
        %v3463 = vadd.f32 %v3461, %v3462
        %v3464 = vsel %vm2464, %v3163, 0.0
        %v3465 = vadd.f32 %v3463, %v3464
        %v3466 = vsel %vm2464, %v3166, 0.0
        %v3467 = vadd.f32 %v3465, %v3466
        %v3468 = vsel %vm2464, %v3171, 0.0
        %v3469 = vadd.f32 %v3467, %v3468
        %v3470 = vsel %vm2464, %v3174, 0.0
        %v3471 = vadd.f32 %v3469, %v3470
        %v3472 = vsel %vm2464, %v3179, 0.0
        %v3473 = vadd.f32 %v3471, %v3472
        %v3474 = vsel %vm2464, %v3182, 0.0
        %v3475 = vadd.f32 %v3473, %v3474
        %v3476 = vsel %vm2464, %v3187, 0.0
        %v3477 = vadd.f32 %v3475, %v3476
        %v3478 = vsel %vm2464, %v3190, 0.0
        %v3479 = vadd.f32 %v3477, %v3478
        %v3480 = vsel %vm2464, %v3195, 0.0
        %v3481 = vadd.f32 %v3479, %v3480
        %v3482 = vsel %vm2464, %v3198, 0.0
        %v3483 = vadd.f32 %v3481, %v3482
        %v3484 = vsel %vm2464, %v3203, 0.0
        %v3485 = vadd.f32 %v3483, %v3484
        %v3486 = vsel %vm2464, %v3206, 0.0
        %v3487 = vadd.f32 %v3485, %v3486
        %v3488 = vsel %vm2464, %v3211, 0.0
        %v3489 = vadd.f32 %v3487, %v3488
        %v3490 = vsel %vm2464, %v3214, 0.0
        %v3491 = vadd.f32 %v3489, %v3490
        %v3492 = vsel %vm2464, %v3219, 0.0
        %v3493 = vadd.f32 %v3491, %v3492
        %v3494 = vsel %vm2464, %v3222, 0.0
        %v3495 = vadd.f32 %v3493, %v3494
        %v3496 = vsel %vm2464, %v3227, 0.0
        %v3497 = vadd.f32 %v3495, %v3496
        %v3498 = vsel %vm2464, %v3230, 0.0
        %v3499 = vadd.f32 %v3497, %v3498
        %v3500 = vsel %vm2464, %v3235, 0.0
        %v3501 = vadd.f32 %v3499, %v3500
        %v3502 = vsel %vm2464, %v3238, 0.0
        %v3503 = vadd.f32 %v3501, %v3502
        %v3504 = vsel %vm2464, %v3243, 0.0
        %v3505 = vadd.f32 %v3503, %v3504
        %v3506 = vsel %vm2464, %v3246, 0.0
        %v3507 = vadd.f32 %v3505, %v3506
        %v3508 = vsel %vm2464, %v3251, 0.0
        %v3509 = vadd.f32 %v3507, %v3508
        %v3510 = vsel %vm2464, %v3254, 0.0
        %v3511 = vadd.f32 %v3509, %v3510
        %v3512 = vsel %vm2464, %v3259, 0.0
        %v3513 = vadd.f32 %v3511, %v3512
        %v3514 = vsel %vm2464, %v3262, 0.0
        %v3515 = vadd.f32 %v3513, %v3514
        %v3516 = vsel %vm2464, %v3267, 0.0
        %v3517 = vadd.f32 %v3515, %v3516
        %v3518 = vsel %vm2464, %v3270, 0.0
        %v3519 = vadd.f32 %v3517, %v3518
        %v3520 = vsel %vm2464, %v3275, 0.0
        %v3521 = vadd.f32 %v3519, %v3520
        %v3522 = vsel %vm2464, %v3278, 0.0
        %v3523 = vadd.f32 %v3521, %v3522
        %v3524 = vsel %vm2464, %v3283, 0.0
        %v3525 = vadd.f32 %v3523, %v3524
        %v3526 = vsel %vm2464, %v3286, 0.0
        %v3527 = vadd.f32 %v3525, %v3526
        %v3528 = vsel %vm2464, %v3291, 0.0
        %v3529 = vadd.f32 %v3527, %v3528
        %v3530 = vsel %vm2464, %v3294, 0.0
        %v3531 = vadd.f32 %v3529, %v3530
        %v3532 = vsel %vm2464, %v3299, 0.0
        %v3533 = vadd.f32 %v3531, %v3532
        %v3534 = vsel %vm2464, %v3302, 0.0
        %v3535 = vadd.f32 %v3533, %v3534
        %v3536 = vsel %vm2464, %v3307, 0.0
        %v3537 = vadd.f32 %v3535, %v3536
        %v3538 = vsel %vm2464, %v3310, 0.0
        %v3539 = vadd.f32 %v3537, %v3538
        %v3540 = vsel %vm2464, %v3315, 0.0
        %v3541 = vadd.f32 %v3539, %v3540
        %v3542 = vsel %vm2464, %v3318, 0.0
        %v3543 = vadd.f32 %v3541, %v3542
        %v3544 = vsel %vm2464, %v3323, 0.0
        %v3545 = vadd.f32 %v3543, %v3544
        %v3546 = vsel %vm2464, %v3326, 0.0
        %v3547 = vadd.f32 %v3545, %v3546
        %v3548 = vsel %vm2464, %v3331, 0.0
        %v3549 = vadd.f32 %v3547, %v3548
        %v3550 = vsel %vm2464, %v3334, 0.0
        %v3551 = vadd.f32 %v3549, %v3550
        %v3552 = vsel %vm2464, %v3339, 0.0
        %v3553 = vadd.f32 %v3551, %v3552
        %v3554 = vsel %vm2464, %v3342, 0.0
        %v3555 = vadd.f32 %v3553, %v3554
        %v3556 = vsel %vm2464, %v3347, 0.0
        %v3557 = vadd.f32 %v3555, %v3556
        %v3558 = vsel %vm2464, %v3350, 0.0
        %v3559 = vadd.f32 %v3557, %v3558
        %v3560 = vsel %vm2464, %v3355, 0.0
        %v3561 = vadd.f32 %v3559, %v3560
        %v3562 = vsel %vm2464, %v3358, 0.0
        %v3563 = vadd.f32 %v3561, %v3562
        %v3564 = vsel %vm2464, %v3363, 0.0
        %v3565 = vadd.f32 %v3563, %v3564
        %v3566 = vsel %vm2464, %v3366, 0.0
        %v3567 = vadd.f32 %v3565, %v3566
        %v3568 = vsel %vm2464, %v3371, 0.0
        %v3569 = vadd.f32 %v3567, %v3568
        %v3570 = vsel %vm2464, %v3374, 0.0
        %v3571 = vadd.f32 %v3569, %v3570
        %v3572 = vsel %vm2464, %v3379, 0.0
        %v3573 = vadd.f32 %v3571, %v3572
        %v3574 = vsel %vm2464, %v3382, 0.0
        %v3575 = vadd.f32 %v3573, %v3574
        %v3576 = vrot.slane %v3575, 4
        %v3577 = vadd.f32 %v3575, %v3576
        %v3578 = vrot.slane %v3577, 2
        %v3579 = vadd.f32 %v3577, %v3578
        %v3580 = vrot.slane %v3579, 1
        %v3581 = vadd.f32 %v3579, %v3580
        %v3582 = vmul.f32 %v3581, 0.001953125
        %v3583 = vsub.f32 %v3131, %v3582
        %v3584 = vsub.f32 %v3134, %v3582
        %v3585 = vsub.f32 %v3139, %v3582
        %v3586 = vsub.f32 %v3142, %v3582
        %v3587 = vsub.f32 %v3147, %v3582
        %v3588 = vsub.f32 %v3150, %v3582
        %v3589 = vsub.f32 %v3155, %v3582
        %v3590 = vsub.f32 %v3158, %v3582
        %v3591 = vsub.f32 %v3163, %v3582
        %v3592 = vsub.f32 %v3166, %v3582
        %v3593 = vsub.f32 %v3171, %v3582
        %v3594 = vsub.f32 %v3174, %v3582
        %v3595 = vsub.f32 %v3179, %v3582
        %v3596 = vsub.f32 %v3182, %v3582
        %v3597 = vsub.f32 %v3187, %v3582
        %v3598 = vsub.f32 %v3190, %v3582
        %v3599 = vsub.f32 %v3195, %v3582
        %v3600 = vsub.f32 %v3198, %v3582
        %v3601 = vsub.f32 %v3203, %v3582
        %v3602 = vsub.f32 %v3206, %v3582
        %v3603 = vsub.f32 %v3211, %v3582
        %v3604 = vsub.f32 %v3214, %v3582
        %v3605 = vsub.f32 %v3219, %v3582
        %v3606 = vsub.f32 %v3222, %v3582
        %v3607 = vsub.f32 %v3227, %v3582
        %v3608 = vsub.f32 %v3230, %v3582
        %v3609 = vsub.f32 %v3235, %v3582
        %v3610 = vsub.f32 %v3238, %v3582
        %v3611 = vsub.f32 %v3243, %v3582
        %v3612 = vsub.f32 %v3246, %v3582
        %v3613 = vsub.f32 %v3251, %v3582
        %v3614 = vsub.f32 %v3254, %v3582
        %v3615 = vsub.f32 %v3259, %v3582
        %v3616 = vsub.f32 %v3262, %v3582
        %v3617 = vsub.f32 %v3267, %v3582
        %v3618 = vsub.f32 %v3270, %v3582
        %v3619 = vsub.f32 %v3275, %v3582
        %v3620 = vsub.f32 %v3278, %v3582
        %v3621 = vsub.f32 %v3283, %v3582
        %v3622 = vsub.f32 %v3286, %v3582
        %v3623 = vsub.f32 %v3291, %v3582
        %v3624 = vsub.f32 %v3294, %v3582
        %v3625 = vsub.f32 %v3299, %v3582
        %v3626 = vsub.f32 %v3302, %v3582
        %v3627 = vsub.f32 %v3307, %v3582
        %v3628 = vsub.f32 %v3310, %v3582
        %v3629 = vsub.f32 %v3315, %v3582
        %v3630 = vsub.f32 %v3318, %v3582
        %v3631 = vsub.f32 %v3323, %v3582
        %v3632 = vsub.f32 %v3326, %v3582
        %v3633 = vsub.f32 %v3331, %v3582
        %v3634 = vsub.f32 %v3334, %v3582
        %v3635 = vsub.f32 %v3339, %v3582
        %v3636 = vsub.f32 %v3342, %v3582
        %v3637 = vsub.f32 %v3347, %v3582
        %v3638 = vsub.f32 %v3350, %v3582
        %v3639 = vsub.f32 %v3355, %v3582
        %v3640 = vsub.f32 %v3358, %v3582
        %v3641 = vsub.f32 %v3363, %v3582
        %v3642 = vsub.f32 %v3366, %v3582
        %v3643 = vsub.f32 %v3371, %v3582
        %v3644 = vsub.f32 %v3374, %v3582
        %v3645 = vsub.f32 %v3379, %v3582
        %v3646 = vsub.f32 %v3382, %v3582
        %vm3647 = vcmask 57344
        %3648 = vst.msk [vmem:[%s380] sm:$0x1] %vm3647, %v3581
        %v3649 = vmul.f32 %v3583, %v3583
        %v3650 = vmul.f32 %v3584, %v3584
        %v3651 = vmul.f32 %v3585, %v3585
        %v3652 = vmul.f32 %v3586, %v3586
        %v3653 = vmul.f32 %v3587, %v3587
        %v3654 = vmul.f32 %v3588, %v3588
        %v3655 = vmul.f32 %v3589, %v3589
        %v3656 = vmul.f32 %v3590, %v3590
        %v3657 = vmul.f32 %v3591, %v3591
        %v3658 = vmul.f32 %v3592, %v3592
        %v3659 = vmul.f32 %v3593, %v3593
        %v3660 = vmul.f32 %v3594, %v3594
        %v3661 = vmul.f32 %v3595, %v3595
        %v3662 = vmul.f32 %v3596, %v3596
        %v3663 = vmul.f32 %v3597, %v3597
        %v3664 = vmul.f32 %v3598, %v3598
        %v3665 = vmul.f32 %v3599, %v3599
        %v3666 = vmul.f32 %v3600, %v3600
        %v3667 = vmul.f32 %v3601, %v3601
        %v3668 = vmul.f32 %v3602, %v3602
        %v3669 = vmul.f32 %v3603, %v3603
        %v3670 = vmul.f32 %v3604, %v3604
        %v3671 = vmul.f32 %v3605, %v3605
        %v3672 = vmul.f32 %v3606, %v3606
        %v3673 = vmul.f32 %v3607, %v3607
        %v3674 = vmul.f32 %v3608, %v3608
        %v3675 = vmul.f32 %v3609, %v3609
        %v3676 = vmul.f32 %v3610, %v3610
        %v3677 = vmul.f32 %v3611, %v3611
        %v3678 = vmul.f32 %v3612, %v3612
        %v3679 = vmul.f32 %v3613, %v3613
        %v3680 = vmul.f32 %v3614, %v3614
        %v3681 = vmul.f32 %v3615, %v3615
        %v3682 = vmul.f32 %v3616, %v3616
        %v3683 = vmul.f32 %v3617, %v3617
        %v3684 = vmul.f32 %v3618, %v3618
        %v3685 = vmul.f32 %v3619, %v3619
        %v3686 = vmul.f32 %v3620, %v3620
        %v3687 = vmul.f32 %v3621, %v3621
        %v3688 = vmul.f32 %v3622, %v3622
        %v3689 = vmul.f32 %v3623, %v3623
        %v3690 = vmul.f32 %v3624, %v3624
        %v3691 = vmul.f32 %v3625, %v3625
        %v3692 = vmul.f32 %v3626, %v3626
        %v3693 = vmul.f32 %v3627, %v3627
        %v3694 = vmul.f32 %v3628, %v3628
        %v3695 = vmul.f32 %v3629, %v3629
        %v3696 = vmul.f32 %v3630, %v3630
        %v3697 = vmul.f32 %v3631, %v3631
        %v3698 = vmul.f32 %v3632, %v3632
        %v3699 = vmul.f32 %v3633, %v3633
        %v3700 = vmul.f32 %v3634, %v3634
        %v3701 = vmul.f32 %v3635, %v3635
        %v3702 = vmul.f32 %v3636, %v3636
        %v3703 = vmul.f32 %v3637, %v3637
        %v3704 = vmul.f32 %v3638, %v3638
        %v3705 = vmul.f32 %v3639, %v3639
        %v3706 = vmul.f32 %v3640, %v3640
        %v3707 = vmul.f32 %v3641, %v3641
        %v3708 = vmul.f32 %v3642, %v3642
        %v3709 = vmul.f32 %v3643, %v3643
        %v3710 = vmul.f32 %v3644, %v3644
        %v3711 = vmul.f32 %v3645, %v3645
        %v3712 = vmul.f32 %v3646, %v3646
        %v3713 = vsel %vm2464, %v3649, 0.0
        %v3714 = vsel %vm2464, %v3650, 0.0
        %v3715 = vadd.f32 %v3713, %v3714
        %v3716 = vsel %vm2464, %v3651, 0.0
        %v3717 = vadd.f32 %v3715, %v3716
        %v3718 = vsel %vm2464, %v3652, 0.0
        %v3719 = vadd.f32 %v3717, %v3718
        %v3720 = vsel %vm2464, %v3653, 0.0
        %v3721 = vadd.f32 %v3719, %v3720
        %v3722 = vsel %vm2464, %v3654, 0.0
        %v3723 = vadd.f32 %v3721, %v3722
        %v3724 = vsel %vm2464, %v3655, 0.0
        %v3725 = vadd.f32 %v3723, %v3724
        %v3726 = vsel %vm2464, %v3656, 0.0
        %v3727 = vadd.f32 %v3725, %v3726
        %v3728 = vsel %vm2464, %v3657, 0.0
        %v3729 = vadd.f32 %v3727, %v3728
        %v3730 = vsel %vm2464, %v3658, 0.0
        %v3731 = vadd.f32 %v3729, %v3730
        %v3732 = vsel %vm2464, %v3659, 0.0
        %v3733 = vadd.f32 %v3731, %v3732
        %v3734 = vsel %vm2464, %v3660, 0.0
        %v3735 = vadd.f32 %v3733, %v3734
        %v3736 = vsel %vm2464, %v3661, 0.0
        %v3737 = vadd.f32 %v3735, %v3736
        %v3738 = vsel %vm2464, %v3662, 0.0
        %v3739 = vadd.f32 %v3737, %v3738
        %v3740 = vsel %vm2464, %v3663, 0.0
        %v3741 = vadd.f32 %v3739, %v3740
        %v3742 = vsel %vm2464, %v3664, 0.0
        %v3743 = vadd.f32 %v3741, %v3742
        %v3744 = vsel %vm2464, %v3665, 0.0
        %v3745 = vadd.f32 %v3743, %v3744
        %v3746 = vsel %vm2464, %v3666, 0.0
        %v3747 = vadd.f32 %v3745, %v3746
        %v3748 = vsel %vm2464, %v3667, 0.0
        %v3749 = vadd.f32 %v3747, %v3748
        %v3750 = vsel %vm2464, %v3668, 0.0
        %v3751 = vadd.f32 %v3749, %v3750
        %v3752 = vsel %vm2464, %v3669, 0.0
        %v3753 = vadd.f32 %v3751, %v3752
        %v3754 = vsel %vm2464, %v3670, 0.0
        %v3755 = vadd.f32 %v3753, %v3754
        %v3756 = vsel %vm2464, %v3671, 0.0
        %v3757 = vadd.f32 %v3755, %v3756
        %v3758 = vsel %vm2464, %v3672, 0.0
        %v3759 = vadd.f32 %v3757, %v3758
        %v3760 = vsel %vm2464, %v3673, 0.0
        %v3761 = vadd.f32 %v3759, %v3760
        %v3762 = vsel %vm2464, %v3674, 0.0
        %v3763 = vadd.f32 %v3761, %v3762
        %v3764 = vsel %vm2464, %v3675, 0.0
        %v3765 = vadd.f32 %v3763, %v3764
        %v3766 = vsel %vm2464, %v3676, 0.0
        %v3767 = vadd.f32 %v3765, %v3766
        %v3768 = vsel %vm2464, %v3677, 0.0
        %v3769 = vadd.f32 %v3767, %v3768
        %v3770 = vsel %vm2464, %v3678, 0.0
        %v3771 = vadd.f32 %v3769, %v3770
        %v3772 = vsel %vm2464, %v3679, 0.0
        %v3773 = vadd.f32 %v3771, %v3772
        %v3774 = vsel %vm2464, %v3680, 0.0
        %v3775 = vadd.f32 %v3773, %v3774
        %v3776 = vsel %vm2464, %v3681, 0.0
        %v3777 = vadd.f32 %v3775, %v3776
        %v3778 = vsel %vm2464, %v3682, 0.0
        %v3779 = vadd.f32 %v3777, %v3778
        %v3780 = vsel %vm2464, %v3683, 0.0
        %v3781 = vadd.f32 %v3779, %v3780
        %v3782 = vsel %vm2464, %v3684, 0.0
        %v3783 = vadd.f32 %v3781, %v3782
        %v3784 = vsel %vm2464, %v3685, 0.0
        %v3785 = vadd.f32 %v3783, %v3784
        %v3786 = vsel %vm2464, %v3686, 0.0
        %v3787 = vadd.f32 %v3785, %v3786
        %v3788 = vsel %vm2464, %v3687, 0.0
        %v3789 = vadd.f32 %v3787, %v3788
        %v3790 = vsel %vm2464, %v3688, 0.0
        %v3791 = vadd.f32 %v3789, %v3790
        %v3792 = vsel %vm2464, %v3689, 0.0
        %v3793 = vadd.f32 %v3791, %v3792
        %v3794 = vsel %vm2464, %v3690, 0.0
        %v3795 = vadd.f32 %v3793, %v3794
        %v3796 = vsel %vm2464, %v3691, 0.0
        %v3797 = vadd.f32 %v3795, %v3796
        %v3798 = vsel %vm2464, %v3692, 0.0
        %v3799 = vadd.f32 %v3797, %v3798
        %v3800 = vsel %vm2464, %v3693, 0.0
        %v3801 = vadd.f32 %v3799, %v3800
        %v3802 = vsel %vm2464, %v3694, 0.0
        %v3803 = vadd.f32 %v3801, %v3802
        %v3804 = vsel %vm2464, %v3695, 0.0
        %v3805 = vadd.f32 %v3803, %v3804
        %v3806 = vsel %vm2464, %v3696, 0.0
        %v3807 = vadd.f32 %v3805, %v3806
        %v3808 = vsel %vm2464, %v3697, 0.0
        %v3809 = vadd.f32 %v3807, %v3808
        %v3810 = vsel %vm2464, %v3698, 0.0
        %v3811 = vadd.f32 %v3809, %v3810
        %v3812 = vsel %vm2464, %v3699, 0.0
        %v3813 = vadd.f32 %v3811, %v3812
        %v3814 = vsel %vm2464, %v3700, 0.0
        %v3815 = vadd.f32 %v3813, %v3814
        %v3816 = vsel %vm2464, %v3701, 0.0
        %v3817 = vadd.f32 %v3815, %v3816
        %v3818 = vsel %vm2464, %v3702, 0.0
        %v3819 = vadd.f32 %v3817, %v3818
        %v3820 = vsel %vm2464, %v3703, 0.0
        %v3821 = vadd.f32 %v3819, %v3820
        %v3822 = vsel %vm2464, %v3704, 0.0
        %v3823 = vadd.f32 %v3821, %v3822
        %v3824 = vsel %vm2464, %v3705, 0.0
        %v3825 = vadd.f32 %v3823, %v3824
        %v3826 = vsel %vm2464, %v3706, 0.0
        %v3827 = vadd.f32 %v3825, %v3826
        %v3828 = vsel %vm2464, %v3707, 0.0
        %v3829 = vadd.f32 %v3827, %v3828
        %v3830 = vsel %vm2464, %v3708, 0.0
        %v3831 = vadd.f32 %v3829, %v3830
        %v3832 = vsel %vm2464, %v3709, 0.0
        %v3833 = vadd.f32 %v3831, %v3832
        %v3834 = vsel %vm2464, %v3710, 0.0
        %v3835 = vadd.f32 %v3833, %v3834
        %v3836 = vsel %vm2464, %v3711, 0.0
        %v3837 = vadd.f32 %v3835, %v3836
        %v3838 = vsel %vm2464, %v3712, 0.0
        %v3839 = vadd.f32 %v3837, %v3838
        %v3840 = vrot.slane %v3839, 4
        %v3841 = vadd.f32 %v3839, %v3840
        %v3842 = vrot.slane %v3841, 2
        %v3843 = vadd.f32 %v3841, %v3842
        %v3844 = vrot.slane %v3843, 1
        %v3845 = vadd.f32 %v3843, %v3844
        %3846 = vst.msk [vmem:[%s386] sm:$0x1] %vm3647, %v3845
        %s3847 = sand.u32 %s164, 1
        %s3848 = scalar_lea.sflag [#allocation4], %s3847
        %s3849 = sand.u32 %s164, 1
        %s3850 = smul.addr %s3849, 512
        %s3851 = scalar_lea.vmem [#allocation11], %s3850
        %s3852 = sand.u32 %s30, 1
        %s3853 = scalar_lea.sflag [#allocation13], %s3852
        %s3854 = sand.u32 %s192, 1
        %s3855 = scalar_lea.vmem [#allocation12], %s3854
        %s3856 = sand.u32 %s30, 1
        %s3857 = scalar_lea.sflag [#allocation13], %s3856
        %s3858 = sand.u32 %s220, 1
        %s3859 = scalar_lea.vmem [#allocation14], %s3858
        // Predicated region
        $region61: #{decoder_block_forward.6} parent=39 // pred_check
          %p3860 = pneg %p174
        $region62: #{decoder_block_forward.6} parent=39 // pred_check_branch
          %3862 = sbr.rel (%p3860) target = $region64
        $region63: #{decoder_block_forward.6} parent=39 // pred_region
          %s3863 = smul.u32 16, %s35
          %s3865 = ssub.s32 8192, 8192
          %3866 = vsyncadd %s3848, %s3865
          %s3867 = smul.addr %s3863, 4
          %s3868 = smul.addr %s34, 128
          %s3869 = sadd.s32 %s3867, %s3868
          %s3870 = smul.addr %s3869, 128
          %s3871 = scalar_lea.hbm %s5, %s3870
          %s3872 = sshll.u32 %s3851, 4
          %s3873 = int_to_ptr.vmem [resolvable:$true] %s3872
          %3878 = dma.vmem_to_hbm [thread:$0]  %s3873, 8192, %s3871, %s3848, 128, 128, 8
        $region64: #{decoder_block_forward.6} parent=39 // pred_fallthru
          _
        // Predicated region
        $region65: #{decoder_block_forward.6} parent=39 // pred_check
          %p3879 = pneg %p202
        $region66: #{decoder_block_forward.6} parent=39 // pred_check_branch
          %3881 = sbr.rel (%p3879) target = $region68
        $region67: #{decoder_block_forward.6} parent=39 // pred_region
          %s3883 = ssub.s32 16, 16
          %3884 = vsyncadd %s3853, %s3883
          %s3885 = smul.addr %s34, 2
          %s3886 = sadd.s32 %s35, %s3885
          %s3887 = smul.addr %s3886, 16
          %s3888 = scalar_lea.hbm %s6, %s3887
          %s3890 = sshll.u32 %s3855, 4
          %s3891 = int_to_ptr.vmem [resolvable:$true] %s3890
          %3893 = dma.vmem_to_hbm [thread:$0]  %s3891, 16, %s3888, %s3853
        $region68: #{decoder_block_forward.6} parent=39 // pred_fallthru
          _
        // Predicated region
        $region69: #{decoder_block_forward.6} parent=39 // pred_check
          %p3894 = pneg %p230
        $region70: #{decoder_block_forward.6} parent=39 // pred_check_branch
          %3896 = sbr.rel (%p3894) target = $region72
        $region71: #{decoder_block_forward.6} parent=39 // pred_region
          %s3898 = ssub.s32 16, 16
          %3899 = vsyncadd %s3857, %s3898
          %s3900 = smul.addr %s34, 2
          %s3901 = sadd.s32 %s35, %s3900
          %s3902 = smul.addr %s3901, 16
          %s3903 = scalar_lea.hbm %s7, %s3902
          %s3905 = sshll.u32 %s3859, 4
          %s3906 = int_to_ptr.vmem [resolvable:$true] %s3905
          %3908 = dma.vmem_to_hbm [thread:$0]  %s3906, 16, %s3903, %s3857
        $region72: #{decoder_block_forward.6} parent=39 // pred_fallthru
          _
      $region40: #{decoder_block_forward.6} parent=5 // pred_fallthru
        _
      %p3909 = scmp.le.s32.totalorder 2, %s25
      // Predicated region
      $region73: #{decoder_block_forward.6} parent=5 // pred_check
        %p3910 = pneg %p3909
      $region74: #{decoder_block_forward.6} parent=5 // pred_check_branch
        %3912 = sbr.rel (%p3910) target = $region76
      $region75: #{decoder_block_forward.6} parent=5 // pred_region
        %s3913 = ssub.s32 %s25, 2
        // Predicated region
        $region77: #{decoder_block_forward.6} parent=75 // pred_check
          %p3914 = pneg %p180
        $region78: #{decoder_block_forward.6} parent=75 // pred_check_branch
          %3916 = sbr.rel (%p3914) target = $region80
        $region79: #{decoder_block_forward.6} parent=75 // pred_region
          %s3917 = sand.u32 %s165, 1
          %s3918 = scalar_lea.sflag [#allocation4], %s3917
          %s3919 = sand.u32 %s165, 1
          %s3920 = smul.addr %s3919, 512
          %s3921 = scalar_lea.vmem [#allocation11], %s3920
          %3922 = dma.done %s3918, 8192
        $region80: #{decoder_block_forward.6} parent=75 // pred_fallthru
          _
        // Predicated region
        $region81: #{decoder_block_forward.6} parent=75 // pred_check
          %p3923 = pneg %p208
        $region82: #{decoder_block_forward.6} parent=75 // pred_check_branch
          %3925 = sbr.rel (%p3923) target = $region84
        $region83: #{decoder_block_forward.6} parent=75 // pred_region
          %s3926 = sand.u32 %s31, 1
          %s3927 = scalar_lea.sflag [#allocation13], %s3926
          %s3928 = sand.u32 %s193, 1
          %s3929 = scalar_lea.vmem [#allocation12], %s3928
          %3930 = dma.done %s3927, 16
        $region84: #{decoder_block_forward.6} parent=75 // pred_fallthru
          _
        // Predicated region
        $region85: #{decoder_block_forward.6} parent=75 // pred_check
          %p3931 = pneg %p236
        $region86: #{decoder_block_forward.6} parent=75 // pred_check_branch
          %3933 = sbr.rel (%p3931) target = $region88
        $region87: #{decoder_block_forward.6} parent=75 // pred_region
          %s3934 = sand.u32 %s31, 1
          %s3935 = scalar_lea.sflag [#allocation13], %s3934
          %s3936 = sand.u32 %s221, 1
          %s3937 = scalar_lea.vmem [#allocation14], %s3936
          %3938 = dma.done %s3935, 16
        $region88: #{decoder_block_forward.6} parent=75 // pred_fallthru
          _
      $region76: #{decoder_block_forward.6} parent=5 // pred_fallthru
        _
    $region6: #{decoder_block_forward.6} parent=1 // loop_footer
      %s29 = sadd.s32 1, %s25
    $region7: #{decoder_block_forward.6} parent=1 // loop_footer_branch
      %24 = sbr.rel target = $region3
    $region8: #{decoder_block_forward.6} parent=1 // loop_exit
      _
    %3939 = vsyncpa [#allocation3], 1
    %s3940 = scalar_lea.sflag [#allocation3], 1
    %3941 = vsyncpa %s3940, 1
    %3942 = vsyncpa [#allocation6], 1
    %3943 = vsyncpa [#allocation9], 1
    %3944 = vsyncpa [#allocation4], 1
    %s3945 = scalar_lea.sflag [#allocation4], 1
    %3946 = vsyncpa %s3945, 1
    %3947 = vsyncpa [#allocation13], 1
    %s3948 = scalar_lea.sflag [#allocation13], 1
    %3949 = vsyncpa %s3948, 1

</llo_original>
